<compile_context>
chip_gen: v6e
topology: v6e:2x2x1
jax: 0.10.0
libtpu: 0.0.40
codegen_flags: <defaults>
</compile_context>

<pallas_src>
import functools

import jax
import jax.numpy as jnp
from jax.experimental import pallas as pl
from jax.experimental.pallas import tpu as pltpu


def _round_up(x, m):
    return (x + m - 1) // m * m


# ----------------------------------------------------------------------------
# Pallas kernels
# ----------------------------------------------------------------------------
def _conv_s2d_kernel(planes_ref, w_ref, out_ref, *stat_refs,
                     ow, m, activation, compute_stats):
    """Stride-2, k=4, pad=1 conv for one batch sample, as 16 tap matmuls.

    planes_ref: (8, Cin_p, Lp) bf16  -- space-to-depth'd, padded, kw-pre-shifted
                copies of the input; copy index = th*4 + tw*2 + kwh and
                copy[c, qh*OW + j] = x_pad[c, 2*qh + th, 2*(j + kwh) + tw].
    w_ref:      (16, Cout_p, Cin_p) bf16, tap index = kh*4 + kw.
    out_ref:    (Cout_p, M = OH*OW) bf16, lane-dense.
    stat_refs:  optional (Cout_p, 1) f32 channel sum / sum-of-squares
                (fused BatchNorm batch statistics; no extra pass needed).
    """
    cout_p = out_ref.shape[0]
    acc = jnp.zeros((cout_p, m), jnp.float32)
    for th in range(2):
        for tw in range(2):
            for kwh in range(2):
                idx = th * 4 + tw * 2 + kwh
                for khh in range(2):
                    kh = 2 * khh + th
                    kw = 2 * kwh + tw
                    # Contiguous lane window of the plane: qh = oh + khh.
                    x = planes_ref[idx, :, khh * ow: khh * ow + m]  # (Cin_p, m)
                    w = w_ref[kh * 4 + kw]                          # (Cout_p, Cin_p)
                    acc = acc + jnp.dot(w, x,
                                        preferred_element_type=jnp.float32)
    if compute_stats:
        sum_ref, sumsq_ref = stat_refs
        sum_ref[...] = jnp.sum(acc, axis=1, keepdims=True)
        sumsq_ref[...] = jnp.sum(acc * acc, axis=1, keepdims=True)
    if activation == "leaky_relu":
        acc = jnp.where(acc > 0, acc, 0.2 * acc)
    out_ref[...] = acc.astype(out_ref.dtype)


def _dense_sigmoid_kernel(w_ref, x_ref, o_ref):
    """Final 4x4 valid conv == one dense dot; sigmoid fused in the epilogue."""
    acc = jnp.dot(w_ref[...], x_ref[...], preferred_element_type=jnp.float32)
    o_ref[...] = 1.0 / (1.0 + jnp.exp(-acc))


# ----------------------------------------------------------------------------
# Pallas wrappers
# ----------------------------------------------------------------------------
def conv_s2d(planes, w_taps, ow, *, activation=None, compute_stats=False):
    """planes: (N, 8, Cin_p, Lp) bf16; w_taps: (16, Cout_p, Cin_p) bf16."""
    n, ncopies, cin_p, lp = planes.shape
    assert ncopies == 8
    _, cout_p, _ = w_taps.shape
    m = (lp // ow - 1) * ow          # Lp = (OH + 1) * OW  ->  M = OH * OW

    kernel = functools.partial(
        _conv_s2d_kernel, ow=ow, m=m,
        activation=activation, compute_stats=compute_stats)

    out_shape = [jax.ShapeDtypeStruct((n, cout_p, m), jnp.bfloat16)]
    out_specs = [pl.BlockSpec((None, cout_p, m), lambda i: (i, 0, 0))]
    if compute_stats:
        out_shape += [jax.ShapeDtypeStruct((n, cout_p, 1), jnp.float32)] * 2
        out_specs += [pl.BlockSpec((None, cout_p, 1), lambda i: (i, 0, 0))] * 2

    res = pl.pallas_call(
        kernel,
        out_shape=tuple(out_shape),
        grid=(n,),
        in_specs=[
            pl.BlockSpec((None, 8, cin_p, lp), lambda i: (i, 0, 0, 0)),
            pl.BlockSpec((16, cout_p, cin_p), lambda i: (0, 0, 0)),  # resident
        ],
        out_specs=tuple(out_specs),
        compiler_params=pltpu.CompilerParams(
            dimension_semantics=("parallel",)),   # batch -> v7x megacore
    )(planes, w_taps)

    if compute_stats:
        return res              # (out, sum, sumsq)
    return res[0]


def dense_sigmoid(wmat, xmat):
    """wmat: (8, Kp) bf16; xmat: (Kp, N) bf16 -> (8, N) f32 probabilities."""
    co, _ = wmat.shape
    _, nn = xmat.shape
    return pl.pallas_call(
        _dense_sigmoid_kernel,
        out_shape=jax.ShapeDtypeStruct((co, nn), jnp.float32),
    )(wmat, xmat)


# ----------------------------------------------------------------------------
# Thin XLA glue: plane building, weight prep, BN apply, params, forward
# ----------------------------------------------------------------------------
def make_planes(x, cin_p):
    """x: (N, C, H, W), even H/W.  Returns space-to-depth'd, spatially padded,
    kw-pre-shifted planes (N, 8, cin_p, (H//2 + 1) * (W//2)) bf16 and (OH, OW)
    of the stride-2 / k=4 / pad=1 conv that will consume them.  This is only a
    ~2x copy of the activation (vs 16x for a full im2col patch matrix)."""
    n, c, h, w = x.shape
    oh, ow = h // 2, w // 2
    xp = jnp.pad(x, ((0, 0), (0, cin_p - c), (1, 1), (1, 1)))
    hh, wh = oh + 1, ow + 1
    xs = xp.reshape(n, cin_p, hh, 2, wh, 2)          # [n, c, qh, th, qw, tw]
    copies = []
    for th in range(2):
        for tw in range(2):
            for kwh in range(2):                      # index = th*4 + tw*2 + kwh
                copies.append(xs[:, :, :, th, kwh:kwh + ow, tw])
    planes = jnp.stack(copies, axis=1)               # (n, 8, cin_p, hh, ow)
    planes = planes.reshape(n, 8, cin_p, hh * ow).astype(jnp.bfloat16)
    return planes, oh, ow


def prep_w_taps(w, cin_p):
    """w: (Cout, Cin, 4, 4) PyTorch layout -> (16, Cout_p8, cin_p) bf16 taps."""
    cout, cin, kh, kw = w.shape
    cout_p = _round_up(cout, 8)
    wp = jnp.pad(w, ((0, cout_p - cout), (0, cin_p - cin), (0, 0), (0, 0)))
    wp = jnp.transpose(wp, (2, 3, 0, 1)).reshape(kh * kw, cout_p, cin_p)
    return wp.astype(jnp.bfloat16)


def bn_lrelu_apply(y, s, ss, count):
    """Training-mode BatchNorm (gamma=1, beta=0, eps=1e-5, biased batch var)
    + LeakyReLU(0.2).  y: (N, C, M) bf16; s/ss: (N, C, 1) f32 per-sample sums.
    This is a tiny elementwise op that XLA fuses into the next layer's plane
    construction (no standalone Pallas pass, no extra HBM round trip)."""
    mean = jnp.sum(s, axis=0) / count                        # (C, 1)
    var = jnp.maximum(jnp.sum(ss, axis=0) / count - mean * mean, 0.0)
    scale = jax.lax.rsqrt(var + 1e-5)
    shift = -mean * scale
    x = y.astype(jnp.float32) * scale[None] + shift[None]
    return jnp.where(x > 0, x, 0.2 * x)


def init_params(key, in_channels, coef):
    keys = jax.random.split(key, 5)

    def w(k, cout, cin):
        return jax.random.normal(k, (cout, cin, 4, 4), jnp.float32) * 0.05

    return {
        "w1": w(keys[0], coef, in_channels),
        "w2": w(keys[1], coef * 2, coef),
        "w3": w(keys[2], coef * 4, coef * 2),
        "w4": w(keys[3], coef * 8, coef * 4),
        "w5": w(keys[4], 1, coef * 8),
    }


def discriminator_forward(x_nchw, params):
    x = x_nchw.astype(jnp.float32)
    n = x.shape[0]

    # ----- Layer 1: Conv(4, s=2, p=1) + LeakyReLU (fused in the epilogue) ----
    w1 = params["w1"]
    c1 = w1.shape[0]
    cin_p = _round_up(x.shape[1], 8)
    planes, oh, ow = make_planes(x, cin_p)
    y = conv_s2d(planes, prep_w_taps(w1, cin_p), ow, activation="leaky_relu")
    act = y[:, :c1, :].reshape(n, c1, oh, ow)        # bf16
    c = c1

    # ----- Layers 2-4: Conv(4,2,1) + BatchNorm2d (batch stats) + LeakyReLU ---
    # Stats come fused out of the conv kernel; the apply is folded into the
    # XLA fusion that builds the next layer's planes.
    for wkey in ("w2", "w3", "w4"):
        w = params[wkey]
        cout = w.shape[0]
        cin_p = _round_up(c, 8)
        planes, oh, ow = make_planes(act, cin_p)
        y, s, ss = conv_s2d(planes, prep_w_taps(w, cin_p), ow,
                            compute_stats=True)
        m = oh * ow
        a = bn_lrelu_apply(y[:, :cout, :], s[:, :cout, :], ss[:, :cout, :],
                           n * m)
        act = a.reshape(n, cout, oh, ow)             # f32 (tiny)
        c = cout

    # ----- Layer 5: Conv(4, s=1, p=0) on a 4x4 map -> (N, 1, 1, 1), Sigmoid --
    w5 = params["w5"]                                 # (1, C, 4, 4)
    k = c * w5.shape[2] * w5.shape[3]
    kp = _round_up(k, 8)
    wmat = jnp.pad(w5.reshape(1, k), ((0, 7), (0, kp - k))).astype(jnp.bfloat16)
    xmat = jnp.pad(act.reshape(n, k).T, ((0, kp - k), (0, 0))).astype(jnp.bfloat16)
    probs = dense_sigmoid(wmat, xmat)                 # (8, N) f32
    # PyTorch does .squeeze() on the (N, 1, 1, 1) output -> (N,)
    return probs[0]


if __name__ == "__main__":
    key = jax.random.PRNGKey(0)
    k_x, k_p = jax.random.split(key)

    image_shape = (3, 64, 64)   # (C, H, W); 64x64 -> final 4x4 valid conv -> 1x1
    coef = 8
    batch = 2

    x = jax.random.normal(k_x, (batch,) + image_shape, jnp.float32)
    params = init_params(k_p, image_shape[0], coef)

    out = jax.jit(discriminator_forward)(x, params)
    out = jax.block_until_ready(out)

    assert out.shape == (batch,), out.shape
    assert bool(jnp.all((out >= 0.0) & (out <= 1.0))), out
    print("KERNEL_OK")
</pallas_src>

<mosaic_0001>
module attributes {stable_mosaic.version = 11 : i64} {
  func.func @_conv_s2d_kernel(%arg0: i32, %arg1: memref<1x8x8x1056xbf16, #tpu.memory_space<vmem>>, %arg2: memref<16x8x8xbf16, #tpu.memory_space<vmem>>, %arg3: memref<1x8x1024xbf16, #tpu.memory_space<vmem>>) attributes {dimension_semantics = [#tpu.dimension_semantics<parallel>], iteration_bounds = array<i64: 2>, scalar_prefetch = 0 : i64, scratch_operands = 0 : i64, tpu.core_type = #tpu.core_type<tc>, window_params = [{transform_indices = @transform_0, window_bounds = array<i64: 1, 8, 8, 1056>}, {pipeline_mode = #tpu.pipeline_mode<synchronous>, transform_indices = @transform_1, window_bounds = array<i64: 16, 8, 8>}, {transform_indices = @transform_2, window_bounds = array<i64: 1, 8, 1024>}]} {
    %cst = arith.constant 0.000000e+00 : f32
    %0 = vector.broadcast %cst : f32 to vector<8x1024xf32>
    %c0 = arith.constant 0 : index
    %c0_0 = arith.constant 0 : index
    %c0_1 = arith.constant 0 : index
    %c0_2 = arith.constant 0 : index
    %1 = vector.load %arg1[%c0, %c0_0, %c0_1, %c0_2] : memref<1x8x8x1056xbf16, #tpu.memory_space<vmem>>, vector<1x1x8x1024xbf16>
    %2 = vector.shape_cast %1 : vector<1x1x8x1024xbf16> to vector<8x1024xbf16>
    %c0_3 = arith.constant 0 : index
    %c0_4 = arith.constant 0 : index
    %c0_5 = arith.constant 0 : index
    %3 = vector.load %arg2[%c0_3, %c0_4, %c0_5] : memref<16x8x8xbf16, #tpu.memory_space<vmem>>, vector<1x8x8xbf16>
    %4 = vector.shape_cast %3 : vector<1x8x8xbf16> to vector<8x8xbf16>
    %cst_6 = arith.constant dense<0.000000e+00> : vector<8x1024xf32>
    %5 = tpu.matmul %4, %2, %cst_6 {dimension_numbers = #tpu.dot_dimension_numbers<[1], [0], [0], [1], [0, 0, 1, 1], [], []>} : vector<8x8xbf16>, vector<8x1024xbf16>, vector<8x1024xf32> -> vector<8x1024xf32>
    %6 = arith.addf %0, %5 : vector<8x1024xf32>
    %c0_7 = arith.constant 0 : index
    %c0_8 = arith.constant 0 : index
    %c0_9 = arith.constant 0 : index
    %c32 = arith.constant 32 : index
    %7 = vector.load %arg1[%c0_7, %c0_8, %c0_9, %c32] : memref<1x8x8x1056xbf16, #tpu.memory_space<vmem>>, vector<1x1x8x1024xbf16>
    %8 = vector.shape_cast %7 : vector<1x1x8x1024xbf16> to vector<8x1024xbf16>
    %c8 = arith.constant 8 : index
    %c0_10 = arith.constant 0 : index
    %c0_11 = arith.constant 0 : index
    %9 = vector.load %arg2[%c8, %c0_10, %c0_11] : memref<16x8x8xbf16, #tpu.memory_space<vmem>>, vector<1x8x8xbf16>
    %10 = vector.shape_cast %9 : vector<1x8x8xbf16> to vector<8x8xbf16>
    %cst_12 = arith.constant dense<0.000000e+00> : vector<8x1024xf32>
    %11 = tpu.matmul %10, %8, %cst_12 {dimension_numbers = #tpu.dot_dimension_numbers<[1], [0], [0], [1], [0, 0, 1, 1], [], []>} : vector<8x8xbf16>, vector<8x1024xbf16>, vector<8x1024xf32> -> vector<8x1024xf32>
    %12 = arith.addf %6, %11 : vector<8x1024xf32>
    %c0_13 = arith.constant 0 : index
    %c1 = arith.constant 1 : index
    %c0_14 = arith.constant 0 : index
    %c0_15 = arith.constant 0 : index
    %13 = vector.load %arg1[%c0_13, %c1, %c0_14, %c0_15] : memref<1x8x8x1056xbf16, #tpu.memory_space<vmem>>, vector<1x1x8x1024xbf16>
    %14 = vector.shape_cast %13 : vector<1x1x8x1024xbf16> to vector<8x1024xbf16>
    %c2 = arith.constant 2 : index
    %c0_16 = arith.constant 0 : index
    %c0_17 = arith.constant 0 : index
    %15 = vector.load %arg2[%c2, %c0_16, %c0_17] : memref<16x8x8xbf16, #tpu.memory_space<vmem>>, vector<1x8x8xbf16>
    %16 = vector.shape_cast %15 : vector<1x8x8xbf16> to vector<8x8xbf16>
    %cst_18 = arith.constant dense<0.000000e+00> : vector<8x1024xf32>
    %17 = tpu.matmul %16, %14, %cst_18 {dimension_numbers = #tpu.dot_dimension_numbers<[1], [0], [0], [1], [0, 0, 1, 1], [], []>} : vector<8x8xbf16>, vector<8x1024xbf16>, vector<8x1024xf32> -> vector<8x1024xf32>
    %18 = arith.addf %12, %17 : vector<8x1024xf32>
    %c0_19 = arith.constant 0 : index
    %c1_20 = arith.constant 1 : index
    %c0_21 = arith.constant 0 : index
    %c32_22 = arith.constant 32 : index
    %19 = vector.load %arg1[%c0_19, %c1_20, %c0_21, %c32_22] : memref<1x8x8x1056xbf16, #tpu.memory_space<vmem>>, vector<1x1x8x1024xbf16>
    %20 = vector.shape_cast %19 : vector<1x1x8x1024xbf16> to vector<8x1024xbf16>
    %c10 = arith.constant 10 : index
    %c0_23 = arith.constant 0 : index
    %c0_24 = arith.constant 0 : index
    %21 = vector.load %arg2[%c10, %c0_23, %c0_24] : memref<16x8x8xbf16, #tpu.memory_space<vmem>>, vector<1x8x8xbf16>
    %22 = vector.shape_cast %21 : vector<1x8x8xbf16> to vector<8x8xbf16>
    %cst_25 = arith.constant dense<0.000000e+00> : vector<8x1024xf32>
    %23 = tpu.matmul %22, %20, %cst_25 {dimension_numbers = #tpu.dot_dimension_numbers<[1], [0], [0], [1], [0, 0, 1, 1], [], []>} : vector<8x8xbf16>, vector<8x1024xbf16>, vector<8x1024xf32> -> vector<8x1024xf32>
    %24 = arith.addf %18, %23 : vector<8x1024xf32>
    %c0_26 = arith.constant 0 : index
    %c2_27 = arith.constant 2 : index
    %c0_28 = arith.constant 0 : index
    %c0_29 = arith.constant 0 : index
    %25 = vector.load %arg1[%c0_26, %c2_27, %c0_28, %c0_29] : memref<1x8x8x1056xbf16, #tpu.memory_space<vmem>>, vector<1x1x8x1024xbf16>
    %26 = vector.shape_cast %25 : vector<1x1x8x1024xbf16> to vector<8x1024xbf16>
    %c1_30 = arith.constant 1 : index
    %c0_31 = arith.constant 0 : index
    %c0_32 = arith.constant 0 : index
    %27 = vector.load %arg2[%c1_30, %c0_31, %c0_32] : memref<16x8x8xbf16, #tpu.memory_space<vmem>>, vector<1x8x8xbf16>
    %28 = vector.shape_cast %27 : vector<1x8x8xbf16> to vector<8x8xbf16>
    %cst_33 = arith.constant dense<0.000000e+00> : vector<8x1024xf32>
    %29 = tpu.matmul %28, %26, %cst_33 {dimension_numbers = #tpu.dot_dimension_numbers<[1], [0], [0], [1], [0, 0, 1, 1], [], []>} : vector<8x8xbf16>, vector<8x1024xbf16>, vector<8x1024xf32> -> vector<8x1024xf32>
    %30 = arith.addf %24, %29 : vector<8x1024xf32>
    %c0_34 = arith.constant 0 : index
    %c2_35 = arith.constant 2 : index
    %c0_36 = arith.constant 0 : index
    %c32_37 = arith.constant 32 : index
    %31 = vector.load %arg1[%c0_34, %c2_35, %c0_36, %c32_37] : memref<1x8x8x1056xbf16, #tpu.memory_space<vmem>>, vector<1x1x8x1024xbf16>
    %32 = vector.shape_cast %31 : vector<1x1x8x1024xbf16> to vector<8x1024xbf16>
    %c9 = arith.constant 9 : index
    %c0_38 = arith.constant 0 : index
    %c0_39 = arith.constant 0 : index
    %33 = vector.load %arg2[%c9, %c0_38, %c0_39] : memref<16x8x8xbf16, #tpu.memory_space<vmem>>, vector<1x8x8xbf16>
    %34 = vector.shape_cast %33 : vector<1x8x8xbf16> to vector<8x8xbf16>
    %cst_40 = arith.constant dense<0.000000e+00> : vector<8x1024xf32>
    %35 = tpu.matmul %34, %32, %cst_40 {dimension_numbers = #tpu.dot_dimension_numbers<[1], [0], [0], [1], [0, 0, 1, 1], [], []>} : vector<8x8xbf16>, vector<8x1024xbf16>, vector<8x1024xf32> -> vector<8x1024xf32>
    %36 = arith.addf %30, %35 : vector<8x1024xf32>
    %c0_41 = arith.constant 0 : index
    %c3 = arith.constant 3 : index
    %c0_42 = arith.constant 0 : index
    %c0_43 = arith.constant 0 : index
    %37 = vector.load %arg1[%c0_41, %c3, %c0_42, %c0_43] : memref<1x8x8x1056xbf16, #tpu.memory_space<vmem>>, vector<1x1x8x1024xbf16>
    %38 = vector.shape_cast %37 : vector<1x1x8x1024xbf16> to vector<8x1024xbf16>
    %c3_44 = arith.constant 3 : index
    %c0_45 = arith.constant 0 : index
    %c0_46 = arith.constant 0 : index
    %39 = vector.load %arg2[%c3_44, %c0_45, %c0_46] : memref<16x8x8xbf16, #tpu.memory_space<vmem>>, vector<1x8x8xbf16>
    %40 = vector.shape_cast %39 : vector<1x8x8xbf16> to vector<8x8xbf16>
    %cst_47 = arith.constant dense<0.000000e+00> : vector<8x1024xf32>
    %41 = tpu.matmul %40, %38, %cst_47 {dimension_numbers = #tpu.dot_dimension_numbers<[1], [0], [0], [1], [0, 0, 1, 1], [], []>} : vector<8x8xbf16>, vector<8x1024xbf16>, vector<8x1024xf32> -> vector<8x1024xf32>
    %42 = arith.addf %36, %41 : vector<8x1024xf32>
    %c0_48 = arith.constant 0 : index
    %c3_49 = arith.constant 3 : index
    %c0_50 = arith.constant 0 : index
    %c32_51 = arith.constant 32 : index
    %43 = vector.load %arg1[%c0_48, %c3_49, %c0_50, %c32_51] : memref<1x8x8x1056xbf16, #tpu.memory_space<vmem>>, vector<1x1x8x1024xbf16>
    %44 = vector.shape_cast %43 : vector<1x1x8x1024xbf16> to vector<8x1024xbf16>
    %c11 = arith.constant 11 : index
    %c0_52 = arith.constant 0 : index
    %c0_53 = arith.constant 0 : index
    %45 = vector.load %arg2[%c11, %c0_52, %c0_53] : memref<16x8x8xbf16, #tpu.memory_space<vmem>>, vector<1x8x8xbf16>
    %46 = vector.shape_cast %45 : vector<1x8x8xbf16> to vector<8x8xbf16>
    %cst_54 = arith.constant dense<0.000000e+00> : vector<8x1024xf32>
    %47 = tpu.matmul %46, %44, %cst_54 {dimension_numbers = #tpu.dot_dimension_numbers<[1], [0], [0], [1], [0, 0, 1, 1], [], []>} : vector<8x8xbf16>, vector<8x1024xbf16>, vector<8x1024xf32> -> vector<8x1024xf32>
    %48 = arith.addf %42, %47 : vector<8x1024xf32>
    %c0_55 = arith.constant 0 : index
    %c4 = arith.constant 4 : index
    %c0_56 = arith.constant 0 : index
    %c0_57 = arith.constant 0 : index
    %49 = vector.load %arg1[%c0_55, %c4, %c0_56, %c0_57] : memref<1x8x8x1056xbf16, #tpu.memory_space<vmem>>, vector<1x1x8x1024xbf16>
    %50 = vector.shape_cast %49 : vector<1x1x8x1024xbf16> to vector<8x1024xbf16>
    %c4_58 = arith.constant 4 : index
    %c0_59 = arith.constant 0 : index
    %c0_60 = arith.constant 0 : index
    %51 = vector.load %arg2[%c4_58, %c0_59, %c0_60] : memref<16x8x8xbf16, #tpu.memory_space<vmem>>, vector<1x8x8xbf16>
    %52 = vector.shape_cast %51 : vector<1x8x8xbf16> to vector<8x8xbf16>
    %cst_61 = arith.constant dense<0.000000e+00> : vector<8x1024xf32>
    %53 = tpu.matmul %52, %50, %cst_61 {dimension_numbers = #tpu.dot_dimension_numbers<[1], [0], [0], [1], [0, 0, 1, 1], [], []>} : vector<8x8xbf16>, vector<8x1024xbf16>, vector<8x1024xf32> -> vector<8x1024xf32>
    %54 = arith.addf %48, %53 : vector<8x1024xf32>
    %c0_62 = arith.constant 0 : index
    %c4_63 = arith.constant 4 : index
    %c0_64 = arith.constant 0 : index
    %c32_65 = arith.constant 32 : index
    %55 = vector.load %arg1[%c0_62, %c4_63, %c0_64, %c32_65] : memref<1x8x8x1056xbf16, #tpu.memory_space<vmem>>, vector<1x1x8x1024xbf16>
    %56 = vector.shape_cast %55 : vector<1x1x8x1024xbf16> to vector<8x1024xbf16>
    %c12 = arith.constant 12 : index
    %c0_66 = arith.constant 0 : index
    %c0_67 = arith.constant 0 : index
    %57 = vector.load %arg2[%c12, %c0_66, %c0_67] : memref<16x8x8xbf16, #tpu.memory_space<vmem>>, vector<1x8x8xbf16>
    %58 = vector.shape_cast %57 : vector<1x8x8xbf16> to vector<8x8xbf16>
    %cst_68 = arith.constant dense<0.000000e+00> : vector<8x1024xf32>
    %59 = tpu.matmul %58, %56, %cst_68 {dimension_numbers = #tpu.dot_dimension_numbers<[1], [0], [0], [1], [0, 0, 1, 1], [], []>} : vector<8x8xbf16>, vector<8x1024xbf16>, vector<8x1024xf32> -> vector<8x1024xf32>
    %60 = arith.addf %54, %59 : vector<8x1024xf32>
    %c0_69 = arith.constant 0 : index
    %c5 = arith.constant 5 : index
    %c0_70 = arith.constant 0 : index
    %c0_71 = arith.constant 0 : index
    %61 = vector.load %arg1[%c0_69, %c5, %c0_70, %c0_71] : memref<1x8x8x1056xbf16, #tpu.memory_space<vmem>>, vector<1x1x8x1024xbf16>
    %62 = vector.shape_cast %61 : vector<1x1x8x1024xbf16> to vector<8x1024xbf16>
    %c6 = arith.constant 6 : index
    %c0_72 = arith.constant 0 : index
    %c0_73 = arith.constant 0 : index
    %63 = vector.load %arg2[%c6, %c0_72, %c0_73] : memref<16x8x8xbf16, #tpu.memory_space<vmem>>, vector<1x8x8xbf16>
    %64 = vector.shape_cast %63 : vector<1x8x8xbf16> to vector<8x8xbf16>
    %cst_74 = arith.constant dense<0.000000e+00> : vector<8x1024xf32>
    %65 = tpu.matmul %64, %62, %cst_74 {dimension_numbers = #tpu.dot_dimension_numbers<[1], [0], [0], [1], [0, 0, 1, 1], [], []>} : vector<8x8xbf16>, vector<8x1024xbf16>, vector<8x1024xf32> -> vector<8x1024xf32>
    %66 = arith.addf %60, %65 : vector<8x1024xf32>
    %c0_75 = arith.constant 0 : index
    %c5_76 = arith.constant 5 : index
    %c0_77 = arith.constant 0 : index
    %c32_78 = arith.constant 32 : index
    %67 = vector.load %arg1[%c0_75, %c5_76, %c0_77, %c32_78] : memref<1x8x8x1056xbf16, #tpu.memory_space<vmem>>, vector<1x1x8x1024xbf16>
    %68 = vector.shape_cast %67 : vector<1x1x8x1024xbf16> to vector<8x1024xbf16>
    %c14 = arith.constant 14 : index
    %c0_79 = arith.constant 0 : index
    %c0_80 = arith.constant 0 : index
    %69 = vector.load %arg2[%c14, %c0_79, %c0_80] : memref<16x8x8xbf16, #tpu.memory_space<vmem>>, vector<1x8x8xbf16>
    %70 = vector.shape_cast %69 : vector<1x8x8xbf16> to vector<8x8xbf16>
    %cst_81 = arith.constant dense<0.000000e+00> : vector<8x1024xf32>
    %71 = tpu.matmul %70, %68, %cst_81 {dimension_numbers = #tpu.dot_dimension_numbers<[1], [0], [0], [1], [0, 0, 1, 1], [], []>} : vector<8x8xbf16>, vector<8x1024xbf16>, vector<8x1024xf32> -> vector<8x1024xf32>
    %72 = arith.addf %66, %71 : vector<8x1024xf32>
    %c0_82 = arith.constant 0 : index
    %c6_83 = arith.constant 6 : index
    %c0_84 = arith.constant 0 : index
    %c0_85 = arith.constant 0 : index
    %73 = vector.load %arg1[%c0_82, %c6_83, %c0_84, %c0_85] : memref<1x8x8x1056xbf16, #tpu.memory_space<vmem>>, vector<1x1x8x1024xbf16>
    %74 = vector.shape_cast %73 : vector<1x1x8x1024xbf16> to vector<8x1024xbf16>
    %c5_86 = arith.constant 5 : index
    %c0_87 = arith.constant 0 : index
    %c0_88 = arith.constant 0 : index
    %75 = vector.load %arg2[%c5_86, %c0_87, %c0_88] : memref<16x8x8xbf16, #tpu.memory_space<vmem>>, vector<1x8x8xbf16>
    %76 = vector.shape_cast %75 : vector<1x8x8xbf16> to vector<8x8xbf16>
    %cst_89 = arith.constant dense<0.000000e+00> : vector<8x1024xf32>
    %77 = tpu.matmul %76, %74, %cst_89 {dimension_numbers = #tpu.dot_dimension_numbers<[1], [0], [0], [1], [0, 0, 1, 1], [], []>} : vector<8x8xbf16>, vector<8x1024xbf16>, vector<8x1024xf32> -> vector<8x1024xf32>
    %78 = arith.addf %72, %77 : vector<8x1024xf32>
    %c0_90 = arith.constant 0 : index
    %c6_91 = arith.constant 6 : index
    %c0_92 = arith.constant 0 : index
    %c32_93 = arith.constant 32 : index
    %79 = vector.load %arg1[%c0_90, %c6_91, %c0_92, %c32_93] : memref<1x8x8x1056xbf16, #tpu.memory_space<vmem>>, vector<1x1x8x1024xbf16>
    %80 = vector.shape_cast %79 : vector<1x1x8x1024xbf16> to vector<8x1024xbf16>
    %c13 = arith.constant 13 : index
    %c0_94 = arith.constant 0 : index
    %c0_95 = arith.constant 0 : index
    %81 = vector.load %arg2[%c13, %c0_94, %c0_95] : memref<16x8x8xbf16, #tpu.memory_space<vmem>>, vector<1x8x8xbf16>
    %82 = vector.shape_cast %81 : vector<1x8x8xbf16> to vector<8x8xbf16>
    %cst_96 = arith.constant dense<0.000000e+00> : vector<8x1024xf32>
    %83 = tpu.matmul %82, %80, %cst_96 {dimension_numbers = #tpu.dot_dimension_numbers<[1], [0], [0], [1], [0, 0, 1, 1], [], []>} : vector<8x8xbf16>, vector<8x1024xbf16>, vector<8x1024xf32> -> vector<8x1024xf32>
    %84 = arith.addf %78, %83 : vector<8x1024xf32>
    %c0_97 = arith.constant 0 : index
    %c7 = arith.constant 7 : index
    %c0_98 = arith.constant 0 : index
    %c0_99 = arith.constant 0 : index
    %85 = vector.load %arg1[%c0_97, %c7, %c0_98, %c0_99] : memref<1x8x8x1056xbf16, #tpu.memory_space<vmem>>, vector<1x1x8x1024xbf16>
    %86 = vector.shape_cast %85 : vector<1x1x8x1024xbf16> to vector<8x1024xbf16>
    %c7_100 = arith.constant 7 : index
    %c0_101 = arith.constant 0 : index
    %c0_102 = arith.constant 0 : index
    %87 = vector.load %arg2[%c7_100, %c0_101, %c0_102] : memref<16x8x8xbf16, #tpu.memory_space<vmem>>, vector<1x8x8xbf16>
    %88 = vector.shape_cast %87 : vector<1x8x8xbf16> to vector<8x8xbf16>
    %cst_103 = arith.constant dense<0.000000e+00> : vector<8x1024xf32>
    %89 = tpu.matmul %88, %86, %cst_103 {dimension_numbers = #tpu.dot_dimension_numbers<[1], [0], [0], [1], [0, 0, 1, 1], [], []>} : vector<8x8xbf16>, vector<8x1024xbf16>, vector<8x1024xf32> -> vector<8x1024xf32>
    %90 = arith.addf %84, %89 : vector<8x1024xf32>
    %c0_104 = arith.constant 0 : index
    %c7_105 = arith.constant 7 : index
    %c0_106 = arith.constant 0 : index
    %c32_107 = arith.constant 32 : index
    %91 = vector.load %arg1[%c0_104, %c7_105, %c0_106, %c32_107] : memref<1x8x8x1056xbf16, #tpu.memory_space<vmem>>, vector<1x1x8x1024xbf16>
    %92 = vector.shape_cast %91 : vector<1x1x8x1024xbf16> to vector<8x1024xbf16>
    %c15 = arith.constant 15 : index
    %c0_108 = arith.constant 0 : index
    %c0_109 = arith.constant 0 : index
    %93 = vector.load %arg2[%c15, %c0_108, %c0_109] : memref<16x8x8xbf16, #tpu.memory_space<vmem>>, vector<1x8x8xbf16>
    %94 = vector.shape_cast %93 : vector<1x8x8xbf16> to vector<8x8xbf16>
    %cst_110 = arith.constant dense<0.000000e+00> : vector<8x1024xf32>
    %95 = tpu.matmul %94, %92, %cst_110 {dimension_numbers = #tpu.dot_dimension_numbers<[1], [0], [0], [1], [0, 0, 1, 1], [], []>} : vector<8x8xbf16>, vector<8x1024xbf16>, vector<8x1024xf32> -> vector<8x1024xf32>
    %96 = arith.addf %90, %95 : vector<8x1024xf32>
    %cst_111 = arith.constant 0.000000e+00 : f32
    %97 = vector.broadcast %cst_111 : f32 to vector<8x1024xf32>
    %98 = arith.cmpf ogt, %96, %97 : vector<8x1024xf32>
    %cst_112 = arith.constant 2.000000e-01 : f32
    %99 = vector.broadcast %cst_112 : f32 to vector<8x1024xf32>
    %100 = arith.mulf %99, %96 : vector<8x1024xf32>
    %101 = arith.select %98, %96, %100 : vector<8x1024xi1>, vector<8x1024xf32>
    %102 = arith.truncf %101 : vector<8x1024xf32> to vector<8x1024xbf16>
    %c0_113 = arith.constant 0 : index
    %c0_114 = arith.constant 0 : index
    %c0_115 = arith.constant 0 : index
    %103 = vector.load %arg3[%c0_113, %c0_114, %c0_115] : memref<1x8x1024xbf16, #tpu.memory_space<vmem>>, vector<1x8x1024xbf16>
    %104 = vector.shape_cast %103 : vector<1x8x1024xbf16> to vector<8x1024xbf16>
    %105 = vector.shape_cast %102 : vector<8x1024xbf16> to vector<1x8x1024xbf16>
    tpu.vector_store %arg3[%c0_113, %c0_114, %c0_115], %105 {strides = array<i32>} : memref<1x8x1024xbf16, #tpu.memory_space<vmem>>, vector<1x8x1024xbf16>,
    return
  }
  func.func @transform_0(%arg0: i32) -> (i32, i32, i32, i32) {
    %c0_i32 = arith.constant 0 : i32
    %c0_i32_0 = arith.constant 0 : i32
    %c0_i32_1 = arith.constant 0 : i32
    %c0_i32_2 = arith.constant 0 : i32
    return %arg0, %c0_i32, %c0_i32_0, %c0_i32_1 : i32, i32, i32, i32
  }
  func.func @transform_1(%arg0: i32) -> (i32, i32, i32) {
    %c0_i32 = arith.constant 0 : i32
    %c0_i32_0 = arith.constant 0 : i32
    %c0_i32_1 = arith.constant 0 : i32
    %c0_i32_2 = arith.constant 0 : i32
    return %c0_i32, %c0_i32_0, %c0_i32_1 : i32, i32, i32
  }
  func.func @transform_2(%arg0: i32) -> (i32, i32, i32) {
    %c0_i32 = arith.constant 0 : i32
    %c0_i32_0 = arith.constant 0 : i32
    %c0_i32_1 = arith.constant 0 : i32
    return %arg0, %c0_i32, %c0_i32_0 : i32, i32, i32
  }
}

module attributes {stable_mosaic.version = 11 : i64} {
  func.func @_conv_s2d_kernel(%arg0: i32, %arg1: memref<1x8x8x272xbf16, #tpu.memory_space<vmem>>, %arg2: memref<16x16x8xbf16, #tpu.memory_space<vmem>>, %arg3: memref<1x16x256xbf16, #tpu.memory_space<vmem>>, %arg4: memref<1x16x1xf32, #tpu.memory_space<vmem>>, %arg5: memref<1x16x1xf32, #tpu.memory_space<vmem>>) attributes {dimension_semantics = [#tpu.dimension_semantics<parallel>], iteration_bounds = array<i64: 2>, scalar_prefetch = 0 : i64, scratch_operands = 0 : i64, tpu.core_type = #tpu.core_type<tc>, window_params = [{transform_indices = @transform_0, window_bounds = array<i64: 1, 8, 8, 272>}, {pipeline_mode = #tpu.pipeline_mode<synchronous>, transform_indices = @transform_1, window_bounds = array<i64: 16, 16, 8>}, {transform_indices = @transform_2, window_bounds = array<i64: 1, 16, 256>}, {transform_indices = @transform_3, window_bounds = array<i64: 1, 16, 1>}, {transform_indices = @transform_4, window_bounds = array<i64: 1, 16, 1>}]} {
    %cst = arith.constant 0.000000e+00 : f32
    %0 = vector.broadcast %cst : f32 to vector<16x256xf32>
    %c0 = arith.constant 0 : index
    %c0_0 = arith.constant 0 : index
    %c0_1 = arith.constant 0 : index
    %c0_2 = arith.constant 0 : index
    %1 = vector.load %arg1[%c0, %c0_0, %c0_1, %c0_2] : memref<1x8x8x272xbf16, #tpu.memory_space<vmem>>, vector<1x1x8x256xbf16>
    %2 = vector.shape_cast %1 : vector<1x1x8x256xbf16> to vector<8x256xbf16>
    %c0_3 = arith.constant 0 : index
    %c0_4 = arith.constant 0 : index
    %c0_5 = arith.constant 0 : index
    %3 = vector.load %arg2[%c0_3, %c0_4, %c0_5] : memref<16x16x8xbf16, #tpu.memory_space<vmem>>, vector<1x16x8xbf16>
    %4 = vector.shape_cast %3 : vector<1x16x8xbf16> to vector<16x8xbf16>
    %cst_6 = arith.constant dense<0.000000e+00> : vector<16x256xf32>
    %5 = tpu.matmul %4, %2, %cst_6 {dimension_numbers = #tpu.dot_dimension_numbers<[1], [0], [0], [1], [0, 0, 1, 1], [], []>} : vector<16x8xbf16>, vector<8x256xbf16>, vector<16x256xf32> -> vector<16x256xf32>
    %6 = arith.addf %0, %5 : vector<16x256xf32>
    %c0_7 = arith.constant 0 : index
    %c0_8 = arith.constant 0 : index
    %c0_9 = arith.constant 0 : index
    %c16 = arith.constant 16 : index
    %7 = vector.load %arg1[%c0_7, %c0_8, %c0_9, %c16] : memref<1x8x8x272xbf16, #tpu.memory_space<vmem>>, vector<1x1x8x256xbf16>
    %8 = vector.shape_cast %7 : vector<1x1x8x256xbf16> to vector<8x256xbf16>
    %c8 = arith.constant 8 : index
    %c0_10 = arith.constant 0 : index
    %c0_11 = arith.constant 0 : index
    %9 = vector.load %arg2[%c8, %c0_10, %c0_11] : memref<16x16x8xbf16, #tpu.memory_space<vmem>>, vector<1x16x8xbf16>
    %10 = vector.shape_cast %9 : vector<1x16x8xbf16> to vector<16x8xbf16>
    %cst_12 = arith.constant dense<0.000000e+00> : vector<16x256xf32>
    %11 = tpu.matmul %10, %8, %cst_12 {dimension_numbers = #tpu.dot_dimension_numbers<[1], [0], [0], [1], [0, 0, 1, 1], [], []>} : vector<16x8xbf16>, vector<8x256xbf16>, vector<16x256xf32> -> vector<16x256xf32>
    %12 = arith.addf %6, %11 : vector<16x256xf32>
    %c0_13 = arith.constant 0 : index
    %c1 = arith.constant 1 : index
    %c0_14 = arith.constant 0 : index
    %c0_15 = arith.constant 0 : index
    %13 = vector.load %arg1[%c0_13, %c1, %c0_14, %c0_15] : memref<1x8x8x272xbf16, #tpu.memory_space<vmem>>, vector<1x1x8x256xbf16>
    %14 = vector.shape_cast %13 : vector<1x1x8x256xbf16> to vector<8x256xbf16>
    %c2 = arith.constant 2 : index
    %c0_16 = arith.constant 0 : index
    %c0_17 = arith.constant 0 : index
    %15 = vector.load %arg2[%c2, %c0_16, %c0_17] : memref<16x16x8xbf16, #tpu.memory_space<vmem>>, vector<1x16x8xbf16>
    %16 = vector.shape_cast %15 : vector<1x16x8xbf16> to vector<16x8xbf16>
    %cst_18 = arith.constant dense<0.000000e+00> : vector<16x256xf32>
    %17 = tpu.matmul %16, %14, %cst_18 {dimension_numbers = #tpu.dot_dimension_numbers<[1], [0], [0], [1], [0, 0, 1, 1], [], []>} : vector<16x8xbf16>, vector<8x256xbf16>, vector<16x256xf32> -> vector<16x256xf32>
    %18 = arith.addf %12, %17 : vector<16x256xf32>
    %c0_19 = arith.constant 0 : index
    %c1_20 = arith.constant 1 : index
    %c0_21 = arith.constant 0 : index
    %c16_22 = arith.constant 16 : index
    %19 = vector.load %arg1[%c0_19, %c1_20, %c0_21, %c16_22] : memref<1x8x8x272xbf16, #tpu.memory_space<vmem>>, vector<1x1x8x256xbf16>
    %20 = vector.shape_cast %19 : vector<1x1x8x256xbf16> to vector<8x256xbf16>
    %c10 = arith.constant 10 : index
    %c0_23 = arith.constant 0 : index
    %c0_24 = arith.constant 0 : index
    %21 = vector.load %arg2[%c10, %c0_23, %c0_24] : memref<16x16x8xbf16, #tpu.memory_space<vmem>>, vector<1x16x8xbf16>
    %22 = vector.shape_cast %21 : vector<1x16x8xbf16> to vector<16x8xbf16>
    %cst_25 = arith.constant dense<0.000000e+00> : vector<16x256xf32>
    %23 = tpu.matmul %22, %20, %cst_25 {dimension_numbers = #tpu.dot_dimension_numbers<[1], [0], [0], [1], [0, 0, 1, 1], [], []>} : vector<16x8xbf16>, vector<8x256xbf16>, vector<16x256xf32> -> vector<16x256xf32>
    %24 = arith.addf %18, %23 : vector<16x256xf32>
    %c0_26 = arith.constant 0 : index
    %c2_27 = arith.constant 2 : index
    %c0_28 = arith.constant 0 : index
    %c0_29 = arith.constant 0 : index
    %25 = vector.load %arg1[%c0_26, %c2_27, %c0_28, %c0_29] : memref<1x8x8x272xbf16, #tpu.memory_space<vmem>>, vector<1x1x8x256xbf16>
    %26 = vector.shape_cast %25 : vector<1x1x8x256xbf16> to vector<8x256xbf16>
    %c1_30 = arith.constant 1 : index
    %c0_31 = arith.constant 0 : index
    %c0_32 = arith.constant 0 : index
    %27 = vector.load %arg2[%c1_30, %c0_31, %c0_32] : memref<16x16x8xbf16, #tpu.memory_space<vmem>>, vector<1x16x8xbf16>
    %28 = vector.shape_cast %27 : vector<1x16x8xbf16> to vector<16x8xbf16>
    %cst_33 = arith.constant dense<0.000000e+00> : vector<16x256xf32>
    %29 = tpu.matmul %28, %26, %cst_33 {dimension_numbers = #tpu.dot_dimension_numbers<[1], [0], [0], [1], [0, 0, 1, 1], [], []>} : vector<16x8xbf16>, vector<8x256xbf16>, vector<16x256xf32> -> vector<16x256xf32>
    %30 = arith.addf %24, %29 : vector<16x256xf32>
    %c0_34 = arith.constant 0 : index
    %c2_35 = arith.constant 2 : index
    %c0_36 = arith.constant 0 : index
    %c16_37 = arith.constant 16 : index
    %31 = vector.load %arg1[%c0_34, %c2_35, %c0_36, %c16_37] : memref<1x8x8x272xbf16, #tpu.memory_space<vmem>>, vector<1x1x8x256xbf16>
    %32 = vector.shape_cast %31 : vector<1x1x8x256xbf16> to vector<8x256xbf16>
    %c9 = arith.constant 9 : index
    %c0_38 = arith.constant 0 : index
    %c0_39 = arith.constant 0 : index
    %33 = vector.load %arg2[%c9, %c0_38, %c0_39] : memref<16x16x8xbf16, #tpu.memory_space<vmem>>, vector<1x16x8xbf16>
    %34 = vector.shape_cast %33 : vector<1x16x8xbf16> to vector<16x8xbf16>
    %cst_40 = arith.constant dense<0.000000e+00> : vector<16x256xf32>
    %35 = tpu.matmul %34, %32, %cst_40 {dimension_numbers = #tpu.dot_dimension_numbers<[1], [0], [0], [1], [0, 0, 1, 1], [], []>} : vector<16x8xbf16>, vector<8x256xbf16>, vector<16x256xf32> -> vector<16x256xf32>
    %36 = arith.addf %30, %35 : vector<16x256xf32>
    %c0_41 = arith.constant 0 : index
    %c3 = arith.constant 3 : index
    %c0_42 = arith.constant 0 : index
    %c0_43 = arith.constant 0 : index
    %37 = vector.load %arg1[%c0_41, %c3, %c0_42, %c0_43] : memref<1x8x8x272xbf16, #tpu.memory_space<vmem>>, vector<1x1x8x256xbf16>
    %38 = vector.shape_cast %37 : vector<1x1x8x256xbf16> to vector<8x256xbf16>
    %c3_44 = arith.constant 3 : index
    %c0_45 = arith.constant 0 : index
    %c0_46 = arith.constant 0 : index
    %39 = vector.load %arg2[%c3_44, %c0_45, %c0_46] : memref<16x16x8xbf16, #tpu.memory_space<vmem>>, vector<1x16x8xbf16>
    %40 = vector.shape_cast %39 : vector<1x16x8xbf16> to vector<16x8xbf16>
    %cst_47 = arith.constant dense<0.000000e+00> : vector<16x256xf32>
    %41 = tpu.matmul %40, %38, %cst_47 {dimension_numbers = #tpu.dot_dimension_numbers<[1], [0], [0], [1], [0, 0, 1, 1], [], []>} : vector<16x8xbf16>, vector<8x256xbf16>, vector<16x256xf32> -> vector<16x256xf32>
    %42 = arith.addf %36, %41 : vector<16x256xf32>
    %c0_48 = arith.constant 0 : index
    %c3_49 = arith.constant 3 : index
    %c0_50 = arith.constant 0 : index
    %c16_51 = arith.constant 16 : index
    %43 = vector.load %arg1[%c0_48, %c3_49, %c0_50, %c16_51] : memref<1x8x8x272xbf16, #tpu.memory_space<vmem>>, vector<1x1x8x256xbf16>
    %44 = vector.shape_cast %43 : vector<1x1x8x256xbf16> to vector<8x256xbf16>
    %c11 = arith.constant 11 : index
    %c0_52 = arith.constant 0 : index
    %c0_53 = arith.constant 0 : index
    %45 = vector.load %arg2[%c11, %c0_52, %c0_53] : memref<16x16x8xbf16, #tpu.memory_space<vmem>>, vector<1x16x8xbf16>
    %46 = vector.shape_cast %45 : vector<1x16x8xbf16> to vector<16x8xbf16>
    %cst_54 = arith.constant dense<0.000000e+00> : vector<16x256xf32>
    %47 = tpu.matmul %46, %44, %cst_54 {dimension_numbers = #tpu.dot_dimension_numbers<[1], [0], [0], [1], [0, 0, 1, 1], [], []>} : vector<16x8xbf16>, vector<8x256xbf16>, vector<16x256xf32> -> vector<16x256xf32>
    %48 = arith.addf %42, %47 : vector<16x256xf32>
    %c0_55 = arith.constant 0 : index
    %c4 = arith.constant 4 : index
    %c0_56 = arith.constant 0 : index
    %c0_57 = arith.constant 0 : index
    %49 = vector.load %arg1[%c0_55, %c4, %c0_56, %c0_57] : memref<1x8x8x272xbf16, #tpu.memory_space<vmem>>, vector<1x1x8x256xbf16>
    %50 = vector.shape_cast %49 : vector<1x1x8x256xbf16> to vector<8x256xbf16>
    %c4_58 = arith.constant 4 : index
    %c0_59 = arith.constant 0 : index
    %c0_60 = arith.constant 0 : index
    %51 = vector.load %arg2[%c4_58, %c0_59, %c0_60] : memref<16x16x8xbf16, #tpu.memory_space<vmem>>, vector<1x16x8xbf16>
    %52 = vector.shape_cast %51 : vector<1x16x8xbf16> to vector<16x8xbf16>
    %cst_61 = arith.constant dense<0.000000e+00> : vector<16x256xf32>
    %53 = tpu.matmul %52, %50, %cst_61 {dimension_numbers = #tpu.dot_dimension_numbers<[1], [0], [0], [1], [0, 0, 1, 1], [], []>} : vector<16x8xbf16>, vector<8x256xbf16>, vector<16x256xf32> -> vector<16x256xf32>
    %54 = arith.addf %48, %53 : vector<16x256xf32>
    %c0_62 = arith.constant 0 : index
    %c4_63 = arith.constant 4 : index
    %c0_64 = arith.constant 0 : index
    %c16_65 = arith.constant 16 : index
    %55 = vector.load %arg1[%c0_62, %c4_63, %c0_64, %c16_65] : memref<1x8x8x272xbf16, #tpu.memory_space<vmem>>, vector<1x1x8x256xbf16>
    %56 = vector.shape_cast %55 : vector<1x1x8x256xbf16> to vector<8x256xbf16>
    %c12 = arith.constant 12 : index
    %c0_66 = arith.constant 0 : index
    %c0_67 = arith.constant 0 : index
    %57 = vector.load %arg2[%c12, %c0_66, %c0_67] : memref<16x16x8xbf16, #tpu.memory_space<vmem>>, vector<1x16x8xbf16>
    %58 = vector.shape_cast %57 : vector<1x16x8xbf16> to vector<16x8xbf16>
    %cst_68 = arith.constant dense<0.000000e+00> : vector<16x256xf32>
    %59 = tpu.matmul %58, %56, %cst_68 {dimension_numbers = #tpu.dot_dimension_numbers<[1], [0], [0], [1], [0, 0, 1, 1], [], []>} : vector<16x8xbf16>, vector<8x256xbf16>, vector<16x256xf32> -> vector<16x256xf32>
    %60 = arith.addf %54, %59 : vector<16x256xf32>
    %c0_69 = arith.constant 0 : index
    %c5 = arith.constant 5 : index
    %c0_70 = arith.constant 0 : index
    %c0_71 = arith.constant 0 : index
    %61 = vector.load %arg1[%c0_69, %c5, %c0_70, %c0_71] : memref<1x8x8x272xbf16, #tpu.memory_space<vmem>>, vector<1x1x8x256xbf16>
    %62 = vector.shape_cast %61 : vector<1x1x8x256xbf16> to vector<8x256xbf16>
    %c6 = arith.constant 6 : index
    %c0_72 = arith.constant 0 : index
    %c0_73 = arith.constant 0 : index
    %63 = vector.load %arg2[%c6, %c0_72, %c0_73] : memref<16x16x8xbf16, #tpu.memory_space<vmem>>, vector<1x16x8xbf16>
    %64 = vector.shape_cast %63 : vector<1x16x8xbf16> to vector<16x8xbf16>
    %cst_74 = arith.constant dense<0.000000e+00> : vector<16x256xf32>
    %65 = tpu.matmul %64, %62, %cst_74 {dimension_numbers = #tpu.dot_dimension_numbers<[1], [0], [0], [1], [0, 0, 1, 1], [], []>} : vector<16x8xbf16>, vector<8x256xbf16>, vector<16x256xf32> -> vector<16x256xf32>
    %66 = arith.addf %60, %65 : vector<16x256xf32>
    %c0_75 = arith.constant 0 : index
    %c5_76 = arith.constant 5 : index
    %c0_77 = arith.constant 0 : index
    %c16_78 = arith.constant 16 : index
    %67 = vector.load %arg1[%c0_75, %c5_76, %c0_77, %c16_78] : memref<1x8x8x272xbf16, #tpu.memory_space<vmem>>, vector<1x1x8x256xbf16>
    %68 = vector.shape_cast %67 : vector<1x1x8x256xbf16> to vector<8x256xbf16>
    %c14 = arith.constant 14 : index
    %c0_79 = arith.constant 0 : index
    %c0_80 = arith.constant 0 : index
    %69 = vector.load %arg2[%c14, %c0_79, %c0_80] : memref<16x16x8xbf16, #tpu.memory_space<vmem>>, vector<1x16x8xbf16>
    %70 = vector.shape_cast %69 : vector<1x16x8xbf16> to vector<16x8xbf16>
    %cst_81 = arith.constant dense<0.000000e+00> : vector<16x256xf32>
    %71 = tpu.matmul %70, %68, %cst_81 {dimension_numbers = #tpu.dot_dimension_numbers<[1], [0], [0], [1], [0, 0, 1, 1], [], []>} : vector<16x8xbf16>, vector<8x256xbf16>, vector<16x256xf32> -> vector<16x256xf32>
    %72 = arith.addf %66, %71 : vector<16x256xf32>
    %c0_82 = arith.constant 0 : index
    %c6_83 = arith.constant 6 : index
    %c0_84 = arith.constant 0 : index
    %c0_85 = arith.constant 0 : index
    %73 = vector.load %arg1[%c0_82, %c6_83, %c0_84, %c0_85] : memref<1x8x8x272xbf16, #tpu.memory_space<vmem>>, vector<1x1x8x256xbf16>
    %74 = vector.shape_cast %73 : vector<1x1x8x256xbf16> to vector<8x256xbf16>
    %c5_86 = arith.constant 5 : index
    %c0_87 = arith.constant 0 : index
    %c0_88 = arith.constant 0 : index
    %75 = vector.load %arg2[%c5_86, %c0_87, %c0_88] : memref<16x16x8xbf16, #tpu.memory_space<vmem>>, vector<1x16x8xbf16>
    %76 = vector.shape_cast %75 : vector<1x16x8xbf16> to vector<16x8xbf16>
    %cst_89 = arith.constant dense<0.000000e+00> : vector<16x256xf32>
    %77 = tpu.matmul %76, %74, %cst_89 {dimension_numbers = #tpu.dot_dimension_numbers<[1], [0], [0], [1], [0, 0, 1, 1], [], []>} : vector<16x8xbf16>, vector<8x256xbf16>, vector<16x256xf32> -> vector<16x256xf32>
    %78 = arith.addf %72, %77 : vector<16x256xf32>
    %c0_90 = arith.constant 0 : index
    %c6_91 = arith.constant 6 : index
    %c0_92 = arith.constant 0 : index
    %c16_93 = arith.constant 16 : index
    %79 = vector.load %arg1[%c0_90, %c6_91, %c0_92, %c16_93] : memref<1x8x8x272xbf16, #tpu.memory_space<vmem>>, vector<1x1x8x256xbf16>
    %80 = vector.shape_cast %79 : vector<1x1x8x256xbf16> to vector<8x256xbf16>
    %c13 = arith.constant 13 : index
    %c0_94 = arith.constant 0 : index
    %c0_95 = arith.constant 0 : index
    %81 = vector.load %arg2[%c13, %c0_94, %c0_95] : memref<16x16x8xbf16, #tpu.memory_space<vmem>>, vector<1x16x8xbf16>
    %82 = vector.shape_cast %81 : vector<1x16x8xbf16> to vector<16x8xbf16>
    %cst_96 = arith.constant dense<0.000000e+00> : vector<16x256xf32>
    %83 = tpu.matmul %82, %80, %cst_96 {dimension_numbers = #tpu.dot_dimension_numbers<[1], [0], [0], [1], [0, 0, 1, 1], [], []>} : vector<16x8xbf16>, vector<8x256xbf16>, vector<16x256xf32> -> vector<16x256xf32>
    %84 = arith.addf %78, %83 : vector<16x256xf32>
    %c0_97 = arith.constant 0 : index
    %c7 = arith.constant 7 : index
    %c0_98 = arith.constant 0 : index
    %c0_99 = arith.constant 0 : index
    %85 = vector.load %arg1[%c0_97, %c7, %c0_98, %c0_99] : memref<1x8x8x272xbf16, #tpu.memory_space<vmem>>, vector<1x1x8x256xbf16>
    %86 = vector.shape_cast %85 : vector<1x1x8x256xbf16> to vector<8x256xbf16>
    %c7_100 = arith.constant 7 : index
    %c0_101 = arith.constant 0 : index
    %c0_102 = arith.constant 0 : index
    %87 = vector.load %arg2[%c7_100, %c0_101, %c0_102] : memref<16x16x8xbf16, #tpu.memory_space<vmem>>, vector<1x16x8xbf16>
    %88 = vector.shape_cast %87 : vector<1x16x8xbf16> to vector<16x8xbf16>
    %cst_103 = arith.constant dense<0.000000e+00> : vector<16x256xf32>
    %89 = tpu.matmul %88, %86, %cst_103 {dimension_numbers = #tpu.dot_dimension_numbers<[1], [0], [0], [1], [0, 0, 1, 1], [], []>} : vector<16x8xbf16>, vector<8x256xbf16>, vector<16x256xf32> -> vector<16x256xf32>
    %90 = arith.addf %84, %89 : vector<16x256xf32>
    %c0_104 = arith.constant 0 : index
    %c7_105 = arith.constant 7 : index
    %c0_106 = arith.constant 0 : index
    %c16_107 = arith.constant 16 : index
    %91 = vector.load %arg1[%c0_104, %c7_105, %c0_106, %c16_107] : memref<1x8x8x272xbf16, #tpu.memory_space<vmem>>, vector<1x1x8x256xbf16>
    %92 = vector.shape_cast %91 : vector<1x1x8x256xbf16> to vector<8x256xbf16>
    %c15 = arith.constant 15 : index
    %c0_108 = arith.constant 0 : index
    %c0_109 = arith.constant 0 : index
    %93 = vector.load %arg2[%c15, %c0_108, %c0_109] : memref<16x16x8xbf16, #tpu.memory_space<vmem>>, vector<1x16x8xbf16>
    %94 = vector.shape_cast %93 : vector<1x16x8xbf16> to vector<16x8xbf16>
    %cst_110 = arith.constant dense<0.000000e+00> : vector<16x256xf32>
    %95 = tpu.matmul %94, %92, %cst_110 {dimension_numbers = #tpu.dot_dimension_numbers<[1], [0], [0], [1], [0, 0, 1, 1], [], []>} : vector<16x8xbf16>, vector<8x256xbf16>, vector<16x256xf32> -> vector<16x256xf32>
    %96 = arith.addf %90, %95 : vector<16x256xf32>
    %cst_111 = arith.constant dense<0.000000e+00> : vector<16xf32>
    %97 = vector.multi_reduction <add>, %96, %cst_111 [1] : vector<16x256xf32> to vector<16xf32>
    %98 = vector.shape_cast %97 : vector<16xf32> to vector<16x1xf32>
    %c0_112 = arith.constant 0 : index
    %c0_113 = arith.constant 0 : index
    %c0_114 = arith.constant 0 : index
    %99 = vector.load %arg4[%c0_112, %c0_113, %c0_114] : memref<1x16x1xf32, #tpu.memory_space<vmem>>, vector<1x16x1xf32>
    %100 = vector.shape_cast %99 : vector<1x16x1xf32> to vector<16x1xf32>
    %101 = vector.shape_cast %98 : vector<16x1xf32> to vector<1x16x1xf32>
    tpu.vector_store %arg4[%c0_112, %c0_113, %c0_114], %101 {strides = array<i32>} : memref<1x16x1xf32, #tpu.memory_space<vmem>>, vector<1x16x1xf32>,
    %102 = arith.mulf %96, %96 : vector<16x256xf32>
    %cst_115 = arith.constant dense<0.000000e+00> : vector<16xf32>
    %103 = vector.multi_reduction <add>, %102, %cst_115 [1] : vector<16x256xf32> to vector<16xf32>
    %104 = vector.shape_cast %103 : vector<16xf32> to vector<16x1xf32>
    %c0_116 = arith.constant 0 : index
    %c0_117 = arith.constant 0 : index
    %c0_118 = arith.constant 0 : index
    %105 = vector.load %arg5[%c0_116, %c0_117, %c0_118] : memref<1x16x1xf32, #tpu.memory_space<vmem>>, vector<1x16x1xf32>
    %106 = vector.shape_cast %105 : vector<1x16x1xf32> to vector<16x1xf32>
    %107 = vector.shape_cast %104 : vector<16x1xf32> to vector<1x16x1xf32>
    tpu.vector_store %arg5[%c0_116, %c0_117, %c0_118], %107 {strides = array<i32>} : memref<1x16x1xf32, #tpu.memory_space<vmem>>, vector<1x16x1xf32>,
    %108 = arith.truncf %96 : vector<16x256xf32> to vector<16x256xbf16>
    %c0_119 = arith.constant 0 : index
    %c0_120 = arith.constant 0 : index
    %c0_121 = arith.constant 0 : index
    %109 = vector.load %arg3[%c0_119, %c0_120, %c0_121] : memref<1x16x256xbf16, #tpu.memory_space<vmem>>, vector<1x16x256xbf16>
    %110 = vector.shape_cast %109 : vector<1x16x256xbf16> to vector<16x256xbf16>
    %111 = vector.shape_cast %108 : vector<16x256xbf16> to vector<1x16x256xbf16>
    tpu.vector_store %arg3[%c0_119, %c0_120, %c0_121], %111 {strides = array<i32>} : memref<1x16x256xbf16, #tpu.memory_space<vmem>>, vector<1x16x256xbf16>,
    return
  }
  func.func @transform_0(%arg0: i32) -> (i32, i32, i32, i32) {
    %c0_i32 = arith.constant 0 : i32
    %c0_i32_0 = arith.constant 0 : i32
    %c0_i32_1 = arith.constant 0 : i32
    %c0_i32_2 = arith.constant 0 : i32
    return %arg0, %c0_i32, %c0_i32_0, %c0_i32_1 : i32, i32, i32, i32
  }
  func.func @transform_1(%arg0: i32) -> (i32, i32, i32) {
    %c0_i32 = arith.constant 0 : i32
    %c0_i32_0 = arith.constant 0 : i32
    %c0_i32_1 = arith.constant 0 : i32
    %c0_i32_2 = arith.constant 0 : i32
    return %c0_i32, %c0_i32_0, %c0_i32_1 : i32, i32, i32
  }
  func.func @transform_2(%arg0: i32) -> (i32, i32, i32) {
    %c0_i32 = arith.constant 0 : i32
    %c0_i32_0 = arith.constant 0 : i32
    %c0_i32_1 = arith.constant 0 : i32
    return %arg0, %c0_i32, %c0_i32_0 : i32, i32, i32
  }
  func.func @transform_3(%arg0: i32) -> (i32, i32, i32) {
    %c0_i32 = arith.constant 0 : i32
    %c0_i32_0 = arith.constant 0 : i32
    %c0_i32_1 = arith.constant 0 : i32
    return %arg0, %c0_i32, %c0_i32_0 : i32, i32, i32
  }
  func.func @transform_4(%arg0: i32) -> (i32, i32, i32) {
    %c0_i32 = arith.constant 0 : i32
    %c0_i32_0 = arith.constant 0 : i32
    %c0_i32_1 = arith.constant 0 : i32
    return %arg0, %c0_i32, %c0_i32_0 : i32, i32, i32
  }
}

module attributes {stable_mosaic.version = 11 : i64} {
  func.func @_conv_s2d_kernel(%arg0: i32, %arg1: memref<1x8x16x72xbf16, #tpu.memory_space<vmem>>, %arg2: memref<16x32x16xbf16, #tpu.memory_space<vmem>>, %arg3: memref<1x32x64xbf16, #tpu.memory_space<vmem>>, %arg4: memref<1x32x1xf32, #tpu.memory_space<vmem>>, %arg5: memref<1x32x1xf32, #tpu.memory_space<vmem>>) attributes {dimension_semantics = [#tpu.dimension_semantics<parallel>], iteration_bounds = array<i64: 2>, scalar_prefetch = 0 : i64, scratch_operands = 0 : i64, tpu.core_type = #tpu.core_type<tc>, window_params = [{transform_indices = @transform_0, window_bounds = array<i64: 1, 8, 16, 72>}, {pipeline_mode = #tpu.pipeline_mode<synchronous>, transform_indices = @transform_1, window_bounds = array<i64: 16, 32, 16>}, {transform_indices = @transform_2, window_bounds = array<i64: 1, 32, 64>}, {transform_indices = @transform_3, window_bounds = array<i64: 1, 32, 1>}, {transform_indices = @transform_4, window_bounds = array<i64: 1, 32, 1>}]} {
    %cst = arith.constant 0.000000e+00 : f32
    %0 = vector.broadcast %cst : f32 to vector<32x64xf32>
    %c0 = arith.constant 0 : index
    %c0_0 = arith.constant 0 : index
    %c0_1 = arith.constant 0 : index
    %c0_2 = arith.constant 0 : index
    %1 = vector.load %arg1[%c0, %c0_0, %c0_1, %c0_2] : memref<1x8x16x72xbf16, #tpu.memory_space<vmem>>, vector<1x1x16x64xbf16>
    %2 = vector.shape_cast %1 : vector<1x1x16x64xbf16> to vector<16x64xbf16>
    %c0_3 = arith.constant 0 : index
    %c0_4 = arith.constant 0 : index
    %c0_5 = arith.constant 0 : index
    %3 = vector.load %arg2[%c0_3, %c0_4, %c0_5] : memref<16x32x16xbf16, #tpu.memory_space<vmem>>, vector<1x32x16xbf16>
    %4 = vector.shape_cast %3 : vector<1x32x16xbf16> to vector<32x16xbf16>
    %cst_6 = arith.constant dense<0.000000e+00> : vector<32x64xf32>
    %5 = tpu.matmul %4, %2, %cst_6 {dimension_numbers = #tpu.dot_dimension_numbers<[1], [0], [0], [1], [0, 0, 1, 1], [], []>} : vector<32x16xbf16>, vector<16x64xbf16>, vector<32x64xf32> -> vector<32x64xf32>
    %6 = arith.addf %0, %5 : vector<32x64xf32>
    %c0_7 = arith.constant 0 : index
    %c0_8 = arith.constant 0 : index
    %c0_9 = arith.constant 0 : index
    %c8 = arith.constant 8 : index
    %7 = vector.load %arg1[%c0_7, %c0_8, %c0_9, %c8] : memref<1x8x16x72xbf16, #tpu.memory_space<vmem>>, vector<1x1x16x64xbf16>
    %8 = vector.shape_cast %7 : vector<1x1x16x64xbf16> to vector<16x64xbf16>
    %c8_10 = arith.constant 8 : index
    %c0_11 = arith.constant 0 : index
    %c0_12 = arith.constant 0 : index
    %9 = vector.load %arg2[%c8_10, %c0_11, %c0_12] : memref<16x32x16xbf16, #tpu.memory_space<vmem>>, vector<1x32x16xbf16>
    %10 = vector.shape_cast %9 : vector<1x32x16xbf16> to vector<32x16xbf16>
    %cst_13 = arith.constant dense<0.000000e+00> : vector<32x64xf32>
    %11 = tpu.matmul %10, %8, %cst_13 {dimension_numbers = #tpu.dot_dimension_numbers<[1], [0], [0], [1], [0, 0, 1, 1], [], []>} : vector<32x16xbf16>, vector<16x64xbf16>, vector<32x64xf32> -> vector<32x64xf32>
    %12 = arith.addf %6, %11 : vector<32x64xf32>
    %c0_14 = arith.constant 0 : index
    %c1 = arith.constant 1 : index
    %c0_15 = arith.constant 0 : index
    %c0_16 = arith.constant 0 : index
    %13 = vector.load %arg1[%c0_14, %c1, %c0_15, %c0_16] : memref<1x8x16x72xbf16, #tpu.memory_space<vmem>>, vector<1x1x16x64xbf16>
    %14 = vector.shape_cast %13 : vector<1x1x16x64xbf16> to vector<16x64xbf16>
    %c2 = arith.constant 2 : index
    %c0_17 = arith.constant 0 : index
    %c0_18 = arith.constant 0 : index
    %15 = vector.load %arg2[%c2, %c0_17, %c0_18] : memref<16x32x16xbf16, #tpu.memory_space<vmem>>, vector<1x32x16xbf16>
    %16 = vector.shape_cast %15 : vector<1x32x16xbf16> to vector<32x16xbf16>
    %cst_19 = arith.constant dense<0.000000e+00> : vector<32x64xf32>
    %17 = tpu.matmul %16, %14, %cst_19 {dimension_numbers = #tpu.dot_dimension_numbers<[1], [0], [0], [1], [0, 0, 1, 1], [], []>} : vector<32x16xbf16>, vector<16x64xbf16>, vector<32x64xf32> -> vector<32x64xf32>
    %18 = arith.addf %12, %17 : vector<32x64xf32>
    %c0_20 = arith.constant 0 : index
    %c1_21 = arith.constant 1 : index
    %c0_22 = arith.constant 0 : index
    %c8_23 = arith.constant 8 : index
    %19 = vector.load %arg1[%c0_20, %c1_21, %c0_22, %c8_23] : memref<1x8x16x72xbf16, #tpu.memory_space<vmem>>, vector<1x1x16x64xbf16>
    %20 = vector.shape_cast %19 : vector<1x1x16x64xbf16> to vector<16x64xbf16>
    %c10 = arith.constant 10 : index
    %c0_24 = arith.constant 0 : index
    %c0_25 = arith.constant 0 : index
    %21 = vector.load %arg2[%c10, %c0_24, %c0_25] : memref<16x32x16xbf16, #tpu.memory_space<vmem>>, vector<1x32x16xbf16>
    %22 = vector.shape_cast %21 : vector<1x32x16xbf16> to vector<32x16xbf16>
    %cst_26 = arith.constant dense<0.000000e+00> : vector<32x64xf32>
    %23 = tpu.matmul %22, %20, %cst_26 {dimension_numbers = #tpu.dot_dimension_numbers<[1], [0], [0], [1], [0, 0, 1, 1], [], []>} : vector<32x16xbf16>, vector<16x64xbf16>, vector<32x64xf32> -> vector<32x64xf32>
    %24 = arith.addf %18, %23 : vector<32x64xf32>
    %c0_27 = arith.constant 0 : index
    %c2_28 = arith.constant 2 : index
    %c0_29 = arith.constant 0 : index
    %c0_30 = arith.constant 0 : index
    %25 = vector.load %arg1[%c0_27, %c2_28, %c0_29, %c0_30] : memref<1x8x16x72xbf16, #tpu.memory_space<vmem>>, vector<1x1x16x64xbf16>
    %26 = vector.shape_cast %25 : vector<1x1x16x64xbf16> to vector<16x64xbf16>
    %c1_31 = arith.constant 1 : index
    %c0_32 = arith.constant 0 : index
    %c0_33 = arith.constant 0 : index
    %27 = vector.load %arg2[%c1_31, %c0_32, %c0_33] : memref<16x32x16xbf16, #tpu.memory_space<vmem>>, vector<1x32x16xbf16>
    %28 = vector.shape_cast %27 : vector<1x32x16xbf16> to vector<32x16xbf16>
    %cst_34 = arith.constant dense<0.000000e+00> : vector<32x64xf32>
    %29 = tpu.matmul %28, %26, %cst_34 {dimension_numbers = #tpu.dot_dimension_numbers<[1], [0], [0], [1], [0, 0, 1, 1], [], []>} : vector<32x16xbf16>, vector<16x64xbf16>, vector<32x64xf32> -> vector<32x64xf32>
    %30 = arith.addf %24, %29 : vector<32x64xf32>
    %c0_35 = arith.constant 0 : index
    %c2_36 = arith.constant 2 : index
    %c0_37 = arith.constant 0 : index
    %c8_38 = arith.constant 8 : index
    %31 = vector.load %arg1[%c0_35, %c2_36, %c0_37, %c8_38] : memref<1x8x16x72xbf16, #tpu.memory_space<vmem>>, vector<1x1x16x64xbf16>
    %32 = vector.shape_cast %31 : vector<1x1x16x64xbf16> to vector<16x64xbf16>
    %c9 = arith.constant 9 : index
    %c0_39 = arith.constant 0 : index
    %c0_40 = arith.constant 0 : index
    %33 = vector.load %arg2[%c9, %c0_39, %c0_40] : memref<16x32x16xbf16, #tpu.memory_space<vmem>>, vector<1x32x16xbf16>
    %34 = vector.shape_cast %33 : vector<1x32x16xbf16> to vector<32x16xbf16>
    %cst_41 = arith.constant dense<0.000000e+00> : vector<32x64xf32>
    %35 = tpu.matmul %34, %32, %cst_41 {dimension_numbers = #tpu.dot_dimension_numbers<[1], [0], [0], [1], [0, 0, 1, 1], [], []>} : vector<32x16xbf16>, vector<16x64xbf16>, vector<32x64xf32> -> vector<32x64xf32>
    %36 = arith.addf %30, %35 : vector<32x64xf32>
    %c0_42 = arith.constant 0 : index
    %c3 = arith.constant 3 : index
    %c0_43 = arith.constant 0 : index
    %c0_44 = arith.constant 0 : index
    %37 = vector.load %arg1[%c0_42, %c3, %c0_43, %c0_44] : memref<1x8x16x72xbf16, #tpu.memory_space<vmem>>, vector<1x1x16x64xbf16>
    %38 = vector.shape_cast %37 : vector<1x1x16x64xbf16> to vector<16x64xbf16>
    %c3_45 = arith.constant 3 : index
    %c0_46 = arith.constant 0 : index
    %c0_47 = arith.constant 0 : index
    %39 = vector.load %arg2[%c3_45, %c0_46, %c0_47] : memref<16x32x16xbf16, #tpu.memory_space<vmem>>, vector<1x32x16xbf16>
    %40 = vector.shape_cast %39 : vector<1x32x16xbf16> to vector<32x16xbf16>
    %cst_48 = arith.constant dense<0.000000e+00> : vector<32x64xf32>
    %41 = tpu.matmul %40, %38, %cst_48 {dimension_numbers = #tpu.dot_dimension_numbers<[1], [0], [0], [1], [0, 0, 1, 1], [], []>} : vector<32x16xbf16>, vector<16x64xbf16>, vector<32x64xf32> -> vector<32x64xf32>
    %42 = arith.addf %36, %41 : vector<32x64xf32>
    %c0_49 = arith.constant 0 : index
    %c3_50 = arith.constant 3 : index
    %c0_51 = arith.constant 0 : index
    %c8_52 = arith.constant 8 : index
    %43 = vector.load %arg1[%c0_49, %c3_50, %c0_51, %c8_52] : memref<1x8x16x72xbf16, #tpu.memory_space<vmem>>, vector<1x1x16x64xbf16>
    %44 = vector.shape_cast %43 : vector<1x1x16x64xbf16> to vector<16x64xbf16>
    %c11 = arith.constant 11 : index
    %c0_53 = arith.constant 0 : index
    %c0_54 = arith.constant 0 : index
    %45 = vector.load %arg2[%c11, %c0_53, %c0_54] : memref<16x32x16xbf16, #tpu.memory_space<vmem>>, vector<1x32x16xbf16>
    %46 = vector.shape_cast %45 : vector<1x32x16xbf16> to vector<32x16xbf16>
    %cst_55 = arith.constant dense<0.000000e+00> : vector<32x64xf32>
    %47 = tpu.matmul %46, %44, %cst_55 {dimension_numbers = #tpu.dot_dimension_numbers<[1], [0], [0], [1], [0, 0, 1, 1], [], []>} : vector<32x16xbf16>, vector<16x64xbf16>, vector<32x64xf32> -> vector<32x64xf32>
    %48 = arith.addf %42, %47 : vector<32x64xf32>
    %c0_56 = arith.constant 0 : index
    %c4 = arith.constant 4 : index
    %c0_57 = arith.constant 0 : index
    %c0_58 = arith.constant 0 : index
    %49 = vector.load %arg1[%c0_56, %c4, %c0_57, %c0_58] : memref<1x8x16x72xbf16, #tpu.memory_space<vmem>>, vector<1x1x16x64xbf16>
    %50 = vector.shape_cast %49 : vector<1x1x16x64xbf16> to vector<16x64xbf16>
    %c4_59 = arith.constant 4 : index
    %c0_60 = arith.constant 0 : index
    %c0_61 = arith.constant 0 : index
    %51 = vector.load %arg2[%c4_59, %c0_60, %c0_61] : memref<16x32x16xbf16, #tpu.memory_space<vmem>>, vector<1x32x16xbf16>
    %52 = vector.shape_cast %51 : vector<1x32x16xbf16> to vector<32x16xbf16>
    %cst_62 = arith.constant dense<0.000000e+00> : vector<32x64xf32>
    %53 = tpu.matmul %52, %50, %cst_62 {dimension_numbers = #tpu.dot_dimension_numbers<[1], [0], [0], [1], [0, 0, 1, 1], [], []>} : vector<32x16xbf16>, vector<16x64xbf16>, vector<32x64xf32> -> vector<32x64xf32>
    %54 = arith.addf %48, %53 : vector<32x64xf32>
    %c0_63 = arith.constant 0 : index
    %c4_64 = arith.constant 4 : index
    %c0_65 = arith.constant 0 : index
    %c8_66 = arith.constant 8 : index
    %55 = vector.load %arg1[%c0_63, %c4_64, %c0_65, %c8_66] : memref<1x8x16x72xbf16, #tpu.memory_space<vmem>>, vector<1x1x16x64xbf16>
    %56 = vector.shape_cast %55 : vector<1x1x16x64xbf16> to vector<16x64xbf16>
    %c12 = arith.constant 12 : index
    %c0_67 = arith.constant 0 : index
    %c0_68 = arith.constant 0 : index
    %57 = vector.load %arg2[%c12, %c0_67, %c0_68] : memref<16x32x16xbf16, #tpu.memory_space<vmem>>, vector<1x32x16xbf16>
    %58 = vector.shape_cast %57 : vector<1x32x16xbf16> to vector<32x16xbf16>
    %cst_69 = arith.constant dense<0.000000e+00> : vector<32x64xf32>
    %59 = tpu.matmul %58, %56, %cst_69 {dimension_numbers = #tpu.dot_dimension_numbers<[1], [0], [0], [1], [0, 0, 1, 1], [], []>} : vector<32x16xbf16>, vector<16x64xbf16>, vector<32x64xf32> -> vector<32x64xf32>
    %60 = arith.addf %54, %59 : vector<32x64xf32>
    %c0_70 = arith.constant 0 : index
    %c5 = arith.constant 5 : index
    %c0_71 = arith.constant 0 : index
    %c0_72 = arith.constant 0 : index
    %61 = vector.load %arg1[%c0_70, %c5, %c0_71, %c0_72] : memref<1x8x16x72xbf16, #tpu.memory_space<vmem>>, vector<1x1x16x64xbf16>
    %62 = vector.shape_cast %61 : vector<1x1x16x64xbf16> to vector<16x64xbf16>
    %c6 = arith.constant 6 : index
    %c0_73 = arith.constant 0 : index
    %c0_74 = arith.constant 0 : index
    %63 = vector.load %arg2[%c6, %c0_73, %c0_74] : memref<16x32x16xbf16, #tpu.memory_space<vmem>>, vector<1x32x16xbf16>
    %64 = vector.shape_cast %63 : vector<1x32x16xbf16> to vector<32x16xbf16>
    %cst_75 = arith.constant dense<0.000000e+00> : vector<32x64xf32>
    %65 = tpu.matmul %64, %62, %cst_75 {dimension_numbers = #tpu.dot_dimension_numbers<[1], [0], [0], [1], [0, 0, 1, 1], [], []>} : vector<32x16xbf16>, vector<16x64xbf16>, vector<32x64xf32> -> vector<32x64xf32>
    %66 = arith.addf %60, %65 : vector<32x64xf32>
    %c0_76 = arith.constant 0 : index
    %c5_77 = arith.constant 5 : index
    %c0_78 = arith.constant 0 : index
    %c8_79 = arith.constant 8 : index
    %67 = vector.load %arg1[%c0_76, %c5_77, %c0_78, %c8_79] : memref<1x8x16x72xbf16, #tpu.memory_space<vmem>>, vector<1x1x16x64xbf16>
    %68 = vector.shape_cast %67 : vector<1x1x16x64xbf16> to vector<16x64xbf16>
    %c14 = arith.constant 14 : index
    %c0_80 = arith.constant 0 : index
    %c0_81 = arith.constant 0 : index
    %69 = vector.load %arg2[%c14, %c0_80, %c0_81] : memref<16x32x16xbf16, #tpu.memory_space<vmem>>, vector<1x32x16xbf16>
    %70 = vector.shape_cast %69 : vector<1x32x16xbf16> to vector<32x16xbf16>
    %cst_82 = arith.constant dense<0.000000e+00> : vector<32x64xf32>
    %71 = tpu.matmul %70, %68, %cst_82 {dimension_numbers = #tpu.dot_dimension_numbers<[1], [0], [0], [1], [0, 0, 1, 1], [], []>} : vector<32x16xbf16>, vector<16x64xbf16>, vector<32x64xf32> -> vector<32x64xf32>
    %72 = arith.addf %66, %71 : vector<32x64xf32>
    %c0_83 = arith.constant 0 : index
    %c6_84 = arith.constant 6 : index
    %c0_85 = arith.constant 0 : index
    %c0_86 = arith.constant 0 : index
    %73 = vector.load %arg1[%c0_83, %c6_84, %c0_85, %c0_86] : memref<1x8x16x72xbf16, #tpu.memory_space<vmem>>, vector<1x1x16x64xbf16>
    %74 = vector.shape_cast %73 : vector<1x1x16x64xbf16> to vector<16x64xbf16>
    %c5_87 = arith.constant 5 : index
    %c0_88 = arith.constant 0 : index
    %c0_89 = arith.constant 0 : index
    %75 = vector.load %arg2[%c5_87, %c0_88, %c0_89] : memref<16x32x16xbf16, #tpu.memory_space<vmem>>, vector<1x32x16xbf16>
    %76 = vector.shape_cast %75 : vector<1x32x16xbf16> to vector<32x16xbf16>
    %cst_90 = arith.constant dense<0.000000e+00> : vector<32x64xf32>
    %77 = tpu.matmul %76, %74, %cst_90 {dimension_numbers = #tpu.dot_dimension_numbers<[1], [0], [0], [1], [0, 0, 1, 1], [], []>} : vector<32x16xbf16>, vector<16x64xbf16>, vector<32x64xf32> -> vector<32x64xf32>
    %78 = arith.addf %72, %77 : vector<32x64xf32>
    %c0_91 = arith.constant 0 : index
    %c6_92 = arith.constant 6 : index
    %c0_93 = arith.constant 0 : index
    %c8_94 = arith.constant 8 : index
    %79 = vector.load %arg1[%c0_91, %c6_92, %c0_93, %c8_94] : memref<1x8x16x72xbf16, #tpu.memory_space<vmem>>, vector<1x1x16x64xbf16>
    %80 = vector.shape_cast %79 : vector<1x1x16x64xbf16> to vector<16x64xbf16>
    %c13 = arith.constant 13 : index
    %c0_95 = arith.constant 0 : index
    %c0_96 = arith.constant 0 : index
    %81 = vector.load %arg2[%c13, %c0_95, %c0_96] : memref<16x32x16xbf16, #tpu.memory_space<vmem>>, vector<1x32x16xbf16>
    %82 = vector.shape_cast %81 : vector<1x32x16xbf16> to vector<32x16xbf16>
    %cst_97 = arith.constant dense<0.000000e+00> : vector<32x64xf32>
    %83 = tpu.matmul %82, %80, %cst_97 {dimension_numbers = #tpu.dot_dimension_numbers<[1], [0], [0], [1], [0, 0, 1, 1], [], []>} : vector<32x16xbf16>, vector<16x64xbf16>, vector<32x64xf32> -> vector<32x64xf32>
    %84 = arith.addf %78, %83 : vector<32x64xf32>
    %c0_98 = arith.constant 0 : index
    %c7 = arith.constant 7 : index
    %c0_99 = arith.constant 0 : index
    %c0_100 = arith.constant 0 : index
    %85 = vector.load %arg1[%c0_98, %c7, %c0_99, %c0_100] : memref<1x8x16x72xbf16, #tpu.memory_space<vmem>>, vector<1x1x16x64xbf16>
    %86 = vector.shape_cast %85 : vector<1x1x16x64xbf16> to vector<16x64xbf16>
    %c7_101 = arith.constant 7 : index
    %c0_102 = arith.constant 0 : index
    %c0_103 = arith.constant 0 : index
    %87 = vector.load %arg2[%c7_101, %c0_102, %c0_103] : memref<16x32x16xbf16, #tpu.memory_space<vmem>>, vector<1x32x16xbf16>
    %88 = vector.shape_cast %87 : vector<1x32x16xbf16> to vector<32x16xbf16>
    %cst_104 = arith.constant dense<0.000000e+00> : vector<32x64xf32>
    %89 = tpu.matmul %88, %86, %cst_104 {dimension_numbers = #tpu.dot_dimension_numbers<[1], [0], [0], [1], [0, 0, 1, 1], [], []>} : vector<32x16xbf16>, vector<16x64xbf16>, vector<32x64xf32> -> vector<32x64xf32>
    %90 = arith.addf %84, %89 : vector<32x64xf32>
    %c0_105 = arith.constant 0 : index
    %c7_106 = arith.constant 7 : index
    %c0_107 = arith.constant 0 : index
    %c8_108 = arith.constant 8 : index
    %91 = vector.load %arg1[%c0_105, %c7_106, %c0_107, %c8_108] : memref<1x8x16x72xbf16, #tpu.memory_space<vmem>>, vector<1x1x16x64xbf16>
    %92 = vector.shape_cast %91 : vector<1x1x16x64xbf16> to vector<16x64xbf16>
    %c15 = arith.constant 15 : index
    %c0_109 = arith.constant 0 : index
    %c0_110 = arith.constant 0 : index
    %93 = vector.load %arg2[%c15, %c0_109, %c0_110] : memref<16x32x16xbf16, #tpu.memory_space<vmem>>, vector<1x32x16xbf16>
    %94 = vector.shape_cast %93 : vector<1x32x16xbf16> to vector<32x16xbf16>
    %cst_111 = arith.constant dense<0.000000e+00> : vector<32x64xf32>
    %95 = tpu.matmul %94, %92, %cst_111 {dimension_numbers = #tpu.dot_dimension_numbers<[1], [0], [0], [1], [0, 0, 1, 1], [], []>} : vector<32x16xbf16>, vector<16x64xbf16>, vector<32x64xf32> -> vector<32x64xf32>
    %96 = arith.addf %90, %95 : vector<32x64xf32>
    %cst_112 = arith.constant dense<0.000000e+00> : vector<32xf32>
    %97 = vector.multi_reduction <add>, %96, %cst_112 [1] : vector<32x64xf32> to vector<32xf32>
    %98 = vector.shape_cast %97 : vector<32xf32> to vector<32x1xf32>
    %c0_113 = arith.constant 0 : index
    %c0_114 = arith.constant 0 : index
    %c0_115 = arith.constant 0 : index
    %99 = vector.load %arg4[%c0_113, %c0_114, %c0_115] : memref<1x32x1xf32, #tpu.memory_space<vmem>>, vector<1x32x1xf32>
    %100 = vector.shape_cast %99 : vector<1x32x1xf32> to vector<32x1xf32>
    %101 = vector.shape_cast %98 : vector<32x1xf32> to vector<1x32x1xf32>
    tpu.vector_store %arg4[%c0_113, %c0_114, %c0_115], %101 {strides = array<i32>} : memref<1x32x1xf32, #tpu.memory_space<vmem>>, vector<1x32x1xf32>,
    %102 = arith.mulf %96, %96 : vector<32x64xf32>
    %cst_116 = arith.constant dense<0.000000e+00> : vector<32xf32>
    %103 = vector.multi_reduction <add>, %102, %cst_116 [1] : vector<32x64xf32> to vector<32xf32>
    %104 = vector.shape_cast %103 : vector<32xf32> to vector<32x1xf32>
    %c0_117 = arith.constant 0 : index
    %c0_118 = arith.constant 0 : index
    %c0_119 = arith.constant 0 : index
    %105 = vector.load %arg5[%c0_117, %c0_118, %c0_119] : memref<1x32x1xf32, #tpu.memory_space<vmem>>, vector<1x32x1xf32>
    %106 = vector.shape_cast %105 : vector<1x32x1xf32> to vector<32x1xf32>
    %107 = vector.shape_cast %104 : vector<32x1xf32> to vector<1x32x1xf32>
    tpu.vector_store %arg5[%c0_117, %c0_118, %c0_119], %107 {strides = array<i32>} : memref<1x32x1xf32, #tpu.memory_space<vmem>>, vector<1x32x1xf32>,
    %108 = arith.truncf %96 : vector<32x64xf32> to vector<32x64xbf16>
    %c0_120 = arith.constant 0 : index
    %c0_121 = arith.constant 0 : index
    %c0_122 = arith.constant 0 : index
    %109 = vector.load %arg3[%c0_120, %c0_121, %c0_122] : memref<1x32x64xbf16, #tpu.memory_space<vmem>>, vector<1x32x64xbf16>
    %110 = vector.shape_cast %109 : vector<1x32x64xbf16> to vector<32x64xbf16>
    %111 = vector.shape_cast %108 : vector<32x64xbf16> to vector<1x32x64xbf16>
    tpu.vector_store %arg3[%c0_120, %c0_121, %c0_122], %111 {strides = array<i32>} : memref<1x32x64xbf16, #tpu.memory_space<vmem>>, vector<1x32x64xbf16>,
    return
  }
  func.func @transform_0(%arg0: i32) -> (i32, i32, i32, i32) {
    %c0_i32 = arith.constant 0 : i32
    %c0_i32_0 = arith.constant 0 : i32
    %c0_i32_1 = arith.constant 0 : i32
    %c0_i32_2 = arith.constant 0 : i32
    return %arg0, %c0_i32, %c0_i32_0, %c0_i32_1 : i32, i32, i32, i32
  }
  func.func @transform_1(%arg0: i32) -> (i32, i32, i32) {
    %c0_i32 = arith.constant 0 : i32
    %c0_i32_0 = arith.constant 0 : i32
    %c0_i32_1 = arith.constant 0 : i32
    %c0_i32_2 = arith.constant 0 : i32
    return %c0_i32, %c0_i32_0, %c0_i32_1 : i32, i32, i32
  }
  func.func @transform_2(%arg0: i32) -> (i32, i32, i32) {
    %c0_i32 = arith.constant 0 : i32
    %c0_i32_0 = arith.constant 0 : i32
    %c0_i32_1 = arith.constant 0 : i32
    return %arg0, %c0_i32, %c0_i32_0 : i32, i32, i32
  }
  func.func @transform_3(%arg0: i32) -> (i32, i32, i32) {
    %c0_i32 = arith.constant 0 : i32
    %c0_i32_0 = arith.constant 0 : i32
    %c0_i32_1 = arith.constant 0 : i32
    return %arg0, %c0_i32, %c0_i32_0 : i32, i32, i32
  }
  func.func @transform_4(%arg0: i32) -> (i32, i32, i32) {
    %c0_i32 = arith.constant 0 : i32
    %c0_i32_0 = arith.constant 0 : i32
    %c0_i32_1 = arith.constant 0 : i32
    return %arg0, %c0_i32, %c0_i32_0 : i32, i32, i32
  }
}

module attributes {stable_mosaic.version = 11 : i64} {
  func.func @_conv_s2d_kernel(%arg0: i32, %arg1: memref<1x8x32x20xbf16, #tpu.memory_space<vmem>>, %arg2: memref<16x64x32xbf16, #tpu.memory_space<vmem>>, %arg3: memref<1x64x16xbf16, #tpu.memory_space<vmem>>, %arg4: memref<1x64x1xf32, #tpu.memory_space<vmem>>, %arg5: memref<1x64x1xf32, #tpu.memory_space<vmem>>) attributes {dimension_semantics = [#tpu.dimension_semantics<parallel>], iteration_bounds = array<i64: 2>, scalar_prefetch = 0 : i64, scratch_operands = 0 : i64, tpu.core_type = #tpu.core_type<tc>, window_params = [{transform_indices = @transform_0, window_bounds = array<i64: 1, 8, 32, 20>}, {pipeline_mode = #tpu.pipeline_mode<synchronous>, transform_indices = @transform_1, window_bounds = array<i64: 16, 64, 32>}, {transform_indices = @transform_2, window_bounds = array<i64: 1, 64, 16>}, {transform_indices = @transform_3, window_bounds = array<i64: 1, 64, 1>}, {transform_indices = @transform_4, window_bounds = array<i64: 1, 64, 1>}]} {
    %cst = arith.constant 0.000000e+00 : f32
    %0 = vector.broadcast %cst : f32 to vector<64x16xf32>
    %c0 = arith.constant 0 : index
    %c0_0 = arith.constant 0 : index
    %c0_1 = arith.constant 0 : index
    %c0_2 = arith.constant 0 : index
    %1 = vector.load %arg1[%c0, %c0_0, %c0_1, %c0_2] : memref<1x8x32x20xbf16, #tpu.memory_space<vmem>>, vector<1x1x32x16xbf16>
    %2 = vector.shape_cast %1 : vector<1x1x32x16xbf16> to vector<32x16xbf16>
    %c0_3 = arith.constant 0 : index
    %c0_4 = arith.constant 0 : index
    %c0_5 = arith.constant 0 : index
    %3 = vector.load %arg2[%c0_3, %c0_4, %c0_5] : memref<16x64x32xbf16, #tpu.memory_space<vmem>>, vector<1x64x32xbf16>
    %4 = vector.shape_cast %3 : vector<1x64x32xbf16> to vector<64x32xbf16>
    %cst_6 = arith.constant dense<0.000000e+00> : vector<64x16xf32>
    %5 = tpu.matmul %4, %2, %cst_6 {dimension_numbers = #tpu.dot_dimension_numbers<[1], [0], [0], [1], [0, 0, 1, 1], [], []>} : vector<64x32xbf16>, vector<32x16xbf16>, vector<64x16xf32> -> vector<64x16xf32>
    %6 = arith.addf %0, %5 : vector<64x16xf32>
    %c0_7 = arith.constant 0 : index
    %c0_8 = arith.constant 0 : index
    %c0_9 = arith.constant 0 : index
    %c4 = arith.constant 4 : index
    %7 = vector.load %arg1[%c0_7, %c0_8, %c0_9, %c4] : memref<1x8x32x20xbf16, #tpu.memory_space<vmem>>, vector<1x1x32x16xbf16>
    %8 = vector.shape_cast %7 : vector<1x1x32x16xbf16> to vector<32x16xbf16>
    %c8 = arith.constant 8 : index
    %c0_10 = arith.constant 0 : index
    %c0_11 = arith.constant 0 : index
    %9 = vector.load %arg2[%c8, %c0_10, %c0_11] : memref<16x64x32xbf16, #tpu.memory_space<vmem>>, vector<1x64x32xbf16>
    %10 = vector.shape_cast %9 : vector<1x64x32xbf16> to vector<64x32xbf16>
    %cst_12 = arith.constant dense<0.000000e+00> : vector<64x16xf32>
    %11 = tpu.matmul %10, %8, %cst_12 {dimension_numbers = #tpu.dot_dimension_numbers<[1], [0], [0], [1], [0, 0, 1, 1], [], []>} : vector<64x32xbf16>, vector<32x16xbf16>, vector<64x16xf32> -> vector<64x16xf32>
    %12 = arith.addf %6, %11 : vector<64x16xf32>
    %c0_13 = arith.constant 0 : index
    %c1 = arith.constant 1 : index
    %c0_14 = arith.constant 0 : index
    %c0_15 = arith.constant 0 : index
    %13 = vector.load %arg1[%c0_13, %c1, %c0_14, %c0_15] : memref<1x8x32x20xbf16, #tpu.memory_space<vmem>>, vector<1x1x32x16xbf16>
    %14 = vector.shape_cast %13 : vector<1x1x32x16xbf16> to vector<32x16xbf16>
    %c2 = arith.constant 2 : index
    %c0_16 = arith.constant 0 : index
    %c0_17 = arith.constant 0 : index
    %15 = vector.load %arg2[%c2, %c0_16, %c0_17] : memref<16x64x32xbf16, #tpu.memory_space<vmem>>, vector<1x64x32xbf16>
    %16 = vector.shape_cast %15 : vector<1x64x32xbf16> to vector<64x32xbf16>
    %cst_18 = arith.constant dense<0.000000e+00> : vector<64x16xf32>
    %17 = tpu.matmul %16, %14, %cst_18 {dimension_numbers = #tpu.dot_dimension_numbers<[1], [0], [0], [1], [0, 0, 1, 1], [], []>} : vector<64x32xbf16>, vector<32x16xbf16>, vector<64x16xf32> -> vector<64x16xf32>
    %18 = arith.addf %12, %17 : vector<64x16xf32>
    %c0_19 = arith.constant 0 : index
    %c1_20 = arith.constant 1 : index
    %c0_21 = arith.constant 0 : index
    %c4_22 = arith.constant 4 : index
    %19 = vector.load %arg1[%c0_19, %c1_20, %c0_21, %c4_22] : memref<1x8x32x20xbf16, #tpu.memory_space<vmem>>, vector<1x1x32x16xbf16>
    %20 = vector.shape_cast %19 : vector<1x1x32x16xbf16> to vector<32x16xbf16>
    %c10 = arith.constant 10 : index
    %c0_23 = arith.constant 0 : index
    %c0_24 = arith.constant 0 : index
    %21 = vector.load %arg2[%c10, %c0_23, %c0_24] : memref<16x64x32xbf16, #tpu.memory_space<vmem>>, vector<1x64x32xbf16>
    %22 = vector.shape_cast %21 : vector<1x64x32xbf16> to vector<64x32xbf16>
    %cst_25 = arith.constant dense<0.000000e+00> : vector<64x16xf32>
    %23 = tpu.matmul %22, %20, %cst_25 {dimension_numbers = #tpu.dot_dimension_numbers<[1], [0], [0], [1], [0, 0, 1, 1], [], []>} : vector<64x32xbf16>, vector<32x16xbf16>, vector<64x16xf32> -> vector<64x16xf32>
    %24 = arith.addf %18, %23 : vector<64x16xf32>
    %c0_26 = arith.constant 0 : index
    %c2_27 = arith.constant 2 : index
    %c0_28 = arith.constant 0 : index
    %c0_29 = arith.constant 0 : index
    %25 = vector.load %arg1[%c0_26, %c2_27, %c0_28, %c0_29] : memref<1x8x32x20xbf16, #tpu.memory_space<vmem>>, vector<1x1x32x16xbf16>
    %26 = vector.shape_cast %25 : vector<1x1x32x16xbf16> to vector<32x16xbf16>
    %c1_30 = arith.constant 1 : index
    %c0_31 = arith.constant 0 : index
    %c0_32 = arith.constant 0 : index
    %27 = vector.load %arg2[%c1_30, %c0_31, %c0_32] : memref<16x64x32xbf16, #tpu.memory_space<vmem>>, vector<1x64x32xbf16>
    %28 = vector.shape_cast %27 : vector<1x64x32xbf16> to vector<64x32xbf16>
    %cst_33 = arith.constant dense<0.000000e+00> : vector<64x16xf32>
    %29 = tpu.matmul %28, %26, %cst_33 {dimension_numbers = #tpu.dot_dimension_numbers<[1], [0], [0], [1], [0, 0, 1, 1], [], []>} : vector<64x32xbf16>, vector<32x16xbf16>, vector<64x16xf32> -> vector<64x16xf32>
    %30 = arith.addf %24, %29 : vector<64x16xf32>
    %c0_34 = arith.constant 0 : index
    %c2_35 = arith.constant 2 : index
    %c0_36 = arith.constant 0 : index
    %c4_37 = arith.constant 4 : index
    %31 = vector.load %arg1[%c0_34, %c2_35, %c0_36, %c4_37] : memref<1x8x32x20xbf16, #tpu.memory_space<vmem>>, vector<1x1x32x16xbf16>
    %32 = vector.shape_cast %31 : vector<1x1x32x16xbf16> to vector<32x16xbf16>
    %c9 = arith.constant 9 : index
    %c0_38 = arith.constant 0 : index
    %c0_39 = arith.constant 0 : index
    %33 = vector.load %arg2[%c9, %c0_38, %c0_39] : memref<16x64x32xbf16, #tpu.memory_space<vmem>>, vector<1x64x32xbf16>
    %34 = vector.shape_cast %33 : vector<1x64x32xbf16> to vector<64x32xbf16>
    %cst_40 = arith.constant dense<0.000000e+00> : vector<64x16xf32>
    %35 = tpu.matmul %34, %32, %cst_40 {dimension_numbers = #tpu.dot_dimension_numbers<[1], [0], [0], [1], [0, 0, 1, 1], [], []>} : vector<64x32xbf16>, vector<32x16xbf16>, vector<64x16xf32> -> vector<64x16xf32>
    %36 = arith.addf %30, %35 : vector<64x16xf32>
    %c0_41 = arith.constant 0 : index
    %c3 = arith.constant 3 : index
    %c0_42 = arith.constant 0 : index
    %c0_43 = arith.constant 0 : index
    %37 = vector.load %arg1[%c0_41, %c3, %c0_42, %c0_43] : memref<1x8x32x20xbf16, #tpu.memory_space<vmem>>, vector<1x1x32x16xbf16>
    %38 = vector.shape_cast %37 : vector<1x1x32x16xbf16> to vector<32x16xbf16>
    %c3_44 = arith.constant 3 : index
    %c0_45 = arith.constant 0 : index
    %c0_46 = arith.constant 0 : index
    %39 = vector.load %arg2[%c3_44, %c0_45, %c0_46] : memref<16x64x32xbf16, #tpu.memory_space<vmem>>, vector<1x64x32xbf16>
    %40 = vector.shape_cast %39 : vector<1x64x32xbf16> to vector<64x32xbf16>
    %cst_47 = arith.constant dense<0.000000e+00> : vector<64x16xf32>
    %41 = tpu.matmul %40, %38, %cst_47 {dimension_numbers = #tpu.dot_dimension_numbers<[1], [0], [0], [1], [0, 0, 1, 1], [], []>} : vector<64x32xbf16>, vector<32x16xbf16>, vector<64x16xf32> -> vector<64x16xf32>
    %42 = arith.addf %36, %41 : vector<64x16xf32>
    %c0_48 = arith.constant 0 : index
    %c3_49 = arith.constant 3 : index
    %c0_50 = arith.constant 0 : index
    %c4_51 = arith.constant 4 : index
    %43 = vector.load %arg1[%c0_48, %c3_49, %c0_50, %c4_51] : memref<1x8x32x20xbf16, #tpu.memory_space<vmem>>, vector<1x1x32x16xbf16>
    %44 = vector.shape_cast %43 : vector<1x1x32x16xbf16> to vector<32x16xbf16>
    %c11 = arith.constant 11 : index
    %c0_52 = arith.constant 0 : index
    %c0_53 = arith.constant 0 : index
    %45 = vector.load %arg2[%c11, %c0_52, %c0_53] : memref<16x64x32xbf16, #tpu.memory_space<vmem>>, vector<1x64x32xbf16>
    %46 = vector.shape_cast %45 : vector<1x64x32xbf16> to vector<64x32xbf16>
    %cst_54 = arith.constant dense<0.000000e+00> : vector<64x16xf32>
    %47 = tpu.matmul %46, %44, %cst_54 {dimension_numbers = #tpu.dot_dimension_numbers<[1], [0], [0], [1], [0, 0, 1, 1], [], []>} : vector<64x32xbf16>, vector<32x16xbf16>, vector<64x16xf32> -> vector<64x16xf32>
    %48 = arith.addf %42, %47 : vector<64x16xf32>
    %c0_55 = arith.constant 0 : index
    %c4_56 = arith.constant 4 : index
    %c0_57 = arith.constant 0 : index
    %c0_58 = arith.constant 0 : index
    %49 = vector.load %arg1[%c0_55, %c4_56, %c0_57, %c0_58] : memref<1x8x32x20xbf16, #tpu.memory_space<vmem>>, vector<1x1x32x16xbf16>
    %50 = vector.shape_cast %49 : vector<1x1x32x16xbf16> to vector<32x16xbf16>
    %c4_59 = arith.constant 4 : index
    %c0_60 = arith.constant 0 : index
    %c0_61 = arith.constant 0 : index
    %51 = vector.load %arg2[%c4_59, %c0_60, %c0_61] : memref<16x64x32xbf16, #tpu.memory_space<vmem>>, vector<1x64x32xbf16>
    %52 = vector.shape_cast %51 : vector<1x64x32xbf16> to vector<64x32xbf16>
    %cst_62 = arith.constant dense<0.000000e+00> : vector<64x16xf32>
    %53 = tpu.matmul %52, %50, %cst_62 {dimension_numbers = #tpu.dot_dimension_numbers<[1], [0], [0], [1], [0, 0, 1, 1], [], []>} : vector<64x32xbf16>, vector<32x16xbf16>, vector<64x16xf32> -> vector<64x16xf32>
    %54 = arith.addf %48, %53 : vector<64x16xf32>
    %c0_63 = arith.constant 0 : index
    %c4_64 = arith.constant 4 : index
    %c0_65 = arith.constant 0 : index
    %c4_66 = arith.constant 4 : index
    %55 = vector.load %arg1[%c0_63, %c4_64, %c0_65, %c4_66] : memref<1x8x32x20xbf16, #tpu.memory_space<vmem>>, vector<1x1x32x16xbf16>
    %56 = vector.shape_cast %55 : vector<1x1x32x16xbf16> to vector<32x16xbf16>
    %c12 = arith.constant 12 : index
    %c0_67 = arith.constant 0 : index
    %c0_68 = arith.constant 0 : index
    %57 = vector.load %arg2[%c12, %c0_67, %c0_68] : memref<16x64x32xbf16, #tpu.memory_space<vmem>>, vector<1x64x32xbf16>
    %58 = vector.shape_cast %57 : vector<1x64x32xbf16> to vector<64x32xbf16>
    %cst_69 = arith.constant dense<0.000000e+00> : vector<64x16xf32>
    %59 = tpu.matmul %58, %56, %cst_69 {dimension_numbers = #tpu.dot_dimension_numbers<[1], [0], [0], [1], [0, 0, 1, 1], [], []>} : vector<64x32xbf16>, vector<32x16xbf16>, vector<64x16xf32> -> vector<64x16xf32>
    %60 = arith.addf %54, %59 : vector<64x16xf32>
    %c0_70 = arith.constant 0 : index
    %c5 = arith.constant 5 : index
    %c0_71 = arith.constant 0 : index
    %c0_72 = arith.constant 0 : index
    %61 = vector.load %arg1[%c0_70, %c5, %c0_71, %c0_72] : memref<1x8x32x20xbf16, #tpu.memory_space<vmem>>, vector<1x1x32x16xbf16>
    %62 = vector.shape_cast %61 : vector<1x1x32x16xbf16> to vector<32x16xbf16>
    %c6 = arith.constant 6 : index
    %c0_73 = arith.constant 0 : index
    %c0_74 = arith.constant 0 : index
    %63 = vector.load %arg2[%c6, %c0_73, %c0_74] : memref<16x64x32xbf16, #tpu.memory_space<vmem>>, vector<1x64x32xbf16>
    %64 = vector.shape_cast %63 : vector<1x64x32xbf16> to vector<64x32xbf16>
    %cst_75 = arith.constant dense<0.000000e+00> : vector<64x16xf32>
    %65 = tpu.matmul %64, %62, %cst_75 {dimension_numbers = #tpu.dot_dimension_numbers<[1], [0], [0], [1], [0, 0, 1, 1], [], []>} : vector<64x32xbf16>, vector<32x16xbf16>, vector<64x16xf32> -> vector<64x16xf32>
    %66 = arith.addf %60, %65 : vector<64x16xf32>
    %c0_76 = arith.constant 0 : index
    %c5_77 = arith.constant 5 : index
    %c0_78 = arith.constant 0 : index
    %c4_79 = arith.constant 4 : index
    %67 = vector.load %arg1[%c0_76, %c5_77, %c0_78, %c4_79] : memref<1x8x32x20xbf16, #tpu.memory_space<vmem>>, vector<1x1x32x16xbf16>
    %68 = vector.shape_cast %67 : vector<1x1x32x16xbf16> to vector<32x16xbf16>
    %c14 = arith.constant 14 : index
    %c0_80 = arith.constant 0 : index
    %c0_81 = arith.constant 0 : index
    %69 = vector.load %arg2[%c14, %c0_80, %c0_81] : memref<16x64x32xbf16, #tpu.memory_space<vmem>>, vector<1x64x32xbf16>
    %70 = vector.shape_cast %69 : vector<1x64x32xbf16> to vector<64x32xbf16>
    %cst_82 = arith.constant dense<0.000000e+00> : vector<64x16xf32>
    %71 = tpu.matmul %70, %68, %cst_82 {dimension_numbers = #tpu.dot_dimension_numbers<[1], [0], [0], [1], [0, 0, 1, 1], [], []>} : vector<64x32xbf16>, vector<32x16xbf16>, vector<64x16xf32> -> vector<64x16xf32>
    %72 = arith.addf %66, %71 : vector<64x16xf32>
    %c0_83 = arith.constant 0 : index
    %c6_84 = arith.constant 6 : index
    %c0_85 = arith.constant 0 : index
    %c0_86 = arith.constant 0 : index
    %73 = vector.load %arg1[%c0_83, %c6_84, %c0_85, %c0_86] : memref<1x8x32x20xbf16, #tpu.memory_space<vmem>>, vector<1x1x32x16xbf16>
    %74 = vector.shape_cast %73 : vector<1x1x32x16xbf16> to vector<32x16xbf16>
    %c5_87 = arith.constant 5 : index
    %c0_88 = arith.constant 0 : index
    %c0_89 = arith.constant 0 : index
    %75 = vector.load %arg2[%c5_87, %c0_88, %c0_89] : memref<16x64x32xbf16, #tpu.memory_space<vmem>>, vector<1x64x32xbf16>
    %76 = vector.shape_cast %75 : vector<1x64x32xbf16> to vector<64x32xbf16>
    %cst_90 = arith.constant dense<0.000000e+00> : vector<64x16xf32>
    %77 = tpu.matmul %76, %74, %cst_90 {dimension_numbers = #tpu.dot_dimension_numbers<[1], [0], [0], [1], [0, 0, 1, 1], [], []>} : vector<64x32xbf16>, vector<32x16xbf16>, vector<64x16xf32> -> vector<64x16xf32>
    %78 = arith.addf %72, %77 : vector<64x16xf32>
    %c0_91 = arith.constant 0 : index
    %c6_92 = arith.constant 6 : index
    %c0_93 = arith.constant 0 : index
    %c4_94 = arith.constant 4 : index
    %79 = vector.load %arg1[%c0_91, %c6_92, %c0_93, %c4_94] : memref<1x8x32x20xbf16, #tpu.memory_space<vmem>>, vector<1x1x32x16xbf16>
    %80 = vector.shape_cast %79 : vector<1x1x32x16xbf16> to vector<32x16xbf16>
    %c13 = arith.constant 13 : index
    %c0_95 = arith.constant 0 : index
    %c0_96 = arith.constant 0 : index
    %81 = vector.load %arg2[%c13, %c0_95, %c0_96] : memref<16x64x32xbf16, #tpu.memory_space<vmem>>, vector<1x64x32xbf16>
    %82 = vector.shape_cast %81 : vector<1x64x32xbf16> to vector<64x32xbf16>
    %cst_97 = arith.constant dense<0.000000e+00> : vector<64x16xf32>
    %83 = tpu.matmul %82, %80, %cst_97 {dimension_numbers = #tpu.dot_dimension_numbers<[1], [0], [0], [1], [0, 0, 1, 1], [], []>} : vector<64x32xbf16>, vector<32x16xbf16>, vector<64x16xf32> -> vector<64x16xf32>
    %84 = arith.addf %78, %83 : vector<64x16xf32>
    %c0_98 = arith.constant 0 : index
    %c7 = arith.constant 7 : index
    %c0_99 = arith.constant 0 : index
    %c0_100 = arith.constant 0 : index
    %85 = vector.load %arg1[%c0_98, %c7, %c0_99, %c0_100] : memref<1x8x32x20xbf16, #tpu.memory_space<vmem>>, vector<1x1x32x16xbf16>
    %86 = vector.shape_cast %85 : vector<1x1x32x16xbf16> to vector<32x16xbf16>
    %c7_101 = arith.constant 7 : index
    %c0_102 = arith.constant 0 : index
    %c0_103 = arith.constant 0 : index
    %87 = vector.load %arg2[%c7_101, %c0_102, %c0_103] : memref<16x64x32xbf16, #tpu.memory_space<vmem>>, vector<1x64x32xbf16>
    %88 = vector.shape_cast %87 : vector<1x64x32xbf16> to vector<64x32xbf16>
    %cst_104 = arith.constant dense<0.000000e+00> : vector<64x16xf32>
    %89 = tpu.matmul %88, %86, %cst_104 {dimension_numbers = #tpu.dot_dimension_numbers<[1], [0], [0], [1], [0, 0, 1, 1], [], []>} : vector<64x32xbf16>, vector<32x16xbf16>, vector<64x16xf32> -> vector<64x16xf32>
    %90 = arith.addf %84, %89 : vector<64x16xf32>
    %c0_105 = arith.constant 0 : index
    %c7_106 = arith.constant 7 : index
    %c0_107 = arith.constant 0 : index
    %c4_108 = arith.constant 4 : index
    %91 = vector.load %arg1[%c0_105, %c7_106, %c0_107, %c4_108] : memref<1x8x32x20xbf16, #tpu.memory_space<vmem>>, vector<1x1x32x16xbf16>
    %92 = vector.shape_cast %91 : vector<1x1x32x16xbf16> to vector<32x16xbf16>
    %c15 = arith.constant 15 : index
    %c0_109 = arith.constant 0 : index
    %c0_110 = arith.constant 0 : index
    %93 = vector.load %arg2[%c15, %c0_109, %c0_110] : memref<16x64x32xbf16, #tpu.memory_space<vmem>>, vector<1x64x32xbf16>
    %94 = vector.shape_cast %93 : vector<1x64x32xbf16> to vector<64x32xbf16>
    %cst_111 = arith.constant dense<0.000000e+00> : vector<64x16xf32>
    %95 = tpu.matmul %94, %92, %cst_111 {dimension_numbers = #tpu.dot_dimension_numbers<[1], [0], [0], [1], [0, 0, 1, 1], [], []>} : vector<64x32xbf16>, vector<32x16xbf16>, vector<64x16xf32> -> vector<64x16xf32>
    %96 = arith.addf %90, %95 : vector<64x16xf32>
    %cst_112 = arith.constant dense<0.000000e+00> : vector<64xf32>
    %97 = vector.multi_reduction <add>, %96, %cst_112 [1] : vector<64x16xf32> to vector<64xf32>
    %98 = vector.shape_cast %97 : vector<64xf32> to vector<64x1xf32>
    %c0_113 = arith.constant 0 : index
    %c0_114 = arith.constant 0 : index
    %c0_115 = arith.constant 0 : index
    %99 = vector.load %arg4[%c0_113, %c0_114, %c0_115] : memref<1x64x1xf32, #tpu.memory_space<vmem>>, vector<1x64x1xf32>
    %100 = vector.shape_cast %99 : vector<1x64x1xf32> to vector<64x1xf32>
    %101 = vector.shape_cast %98 : vector<64x1xf32> to vector<1x64x1xf32>
    tpu.vector_store %arg4[%c0_113, %c0_114, %c0_115], %101 {strides = array<i32>} : memref<1x64x1xf32, #tpu.memory_space<vmem>>, vector<1x64x1xf32>,
    %102 = arith.mulf %96, %96 : vector<64x16xf32>
    %cst_116 = arith.constant dense<0.000000e+00> : vector<64xf32>
    %103 = vector.multi_reduction <add>, %102, %cst_116 [1] : vector<64x16xf32> to vector<64xf32>
    %104 = vector.shape_cast %103 : vector<64xf32> to vector<64x1xf32>
    %c0_117 = arith.constant 0 : index
    %c0_118 = arith.constant 0 : index
    %c0_119 = arith.constant 0 : index
    %105 = vector.load %arg5[%c0_117, %c0_118, %c0_119] : memref<1x64x1xf32, #tpu.memory_space<vmem>>, vector<1x64x1xf32>
    %106 = vector.shape_cast %105 : vector<1x64x1xf32> to vector<64x1xf32>
    %107 = vector.shape_cast %104 : vector<64x1xf32> to vector<1x64x1xf32>
    tpu.vector_store %arg5[%c0_117, %c0_118, %c0_119], %107 {strides = array<i32>} : memref<1x64x1xf32, #tpu.memory_space<vmem>>, vector<1x64x1xf32>,
    %108 = arith.truncf %96 : vector<64x16xf32> to vector<64x16xbf16>
    %c0_120 = arith.constant 0 : index
    %c0_121 = arith.constant 0 : index
    %c0_122 = arith.constant 0 : index
    %109 = vector.load %arg3[%c0_120, %c0_121, %c0_122] : memref<1x64x16xbf16, #tpu.memory_space<vmem>>, vector<1x64x16xbf16>
    %110 = vector.shape_cast %109 : vector<1x64x16xbf16> to vector<64x16xbf16>
    %111 = vector.shape_cast %108 : vector<64x16xbf16> to vector<1x64x16xbf16>
    tpu.vector_store %arg3[%c0_120, %c0_121, %c0_122], %111 {strides = array<i32>} : memref<1x64x16xbf16, #tpu.memory_space<vmem>>, vector<1x64x16xbf16>,
    return
  }
  func.func @transform_0(%arg0: i32) -> (i32, i32, i32, i32) {
    %c0_i32 = arith.constant 0 : i32
    %c0_i32_0 = arith.constant 0 : i32
    %c0_i32_1 = arith.constant 0 : i32
    %c0_i32_2 = arith.constant 0 : i32
    return %arg0, %c0_i32, %c0_i32_0, %c0_i32_1 : i32, i32, i32, i32
  }
  func.func @transform_1(%arg0: i32) -> (i32, i32, i32) {
    %c0_i32 = arith.constant 0 : i32
    %c0_i32_0 = arith.constant 0 : i32
    %c0_i32_1 = arith.constant 0 : i32
    %c0_i32_2 = arith.constant 0 : i32
    return %c0_i32, %c0_i32_0, %c0_i32_1 : i32, i32, i32
  }
  func.func @transform_2(%arg0: i32) -> (i32, i32, i32) {
    %c0_i32 = arith.constant 0 : i32
    %c0_i32_0 = arith.constant 0 : i32
    %c0_i32_1 = arith.constant 0 : i32
    return %arg0, %c0_i32, %c0_i32_0 : i32, i32, i32
  }
  func.func @transform_3(%arg0: i32) -> (i32, i32, i32) {
    %c0_i32 = arith.constant 0 : i32
    %c0_i32_0 = arith.constant 0 : i32
    %c0_i32_1 = arith.constant 0 : i32
    return %arg0, %c0_i32, %c0_i32_0 : i32, i32, i32
  }
  func.func @transform_4(%arg0: i32) -> (i32, i32, i32) {
    %c0_i32 = arith.constant 0 : i32
    %c0_i32_0 = arith.constant 0 : i32
    %c0_i32_1 = arith.constant 0 : i32
    return %arg0, %c0_i32, %c0_i32_0 : i32, i32, i32
  }
}

module attributes {stable_mosaic.version = 11 : i64} {
  func.func @_dense_sigmoid_kernel(%arg0: memref<8x1024xbf16, #tpu.memory_space<vmem>>, %arg1: memref<1024x2xbf16, #tpu.memory_space<vmem>>, %arg2: memref<8x2xf32, #tpu.memory_space<vmem>>) attributes {dimension_semantics = [], scalar_prefetch = 0 : i64, scratch_operands = 0 : i64, tpu.core_type = #tpu.core_type<tc>} {
    %c0 = arith.constant 0 : index
    %c0_0 = arith.constant 0 : index
    %0 = vector.load %arg0[%c0, %c0_0] : memref<8x1024xbf16, #tpu.memory_space<vmem>>, vector<8x1024xbf16>
    %c0_1 = arith.constant 0 : index
    %c0_2 = arith.constant 0 : index
    %1 = vector.load %arg1[%c0_1, %c0_2] : memref<1024x2xbf16, #tpu.memory_space<vmem>>, vector<1024x2xbf16>
    %cst = arith.constant dense<0.000000e+00> : vector<8x2xf32>
    %2 = tpu.matmul %0, %1, %cst {dimension_numbers = #tpu.dot_dimension_numbers<[1], [0], [0], [1], [0, 0, 1, 1], [], []>} : vector<8x1024xbf16>, vector<1024x2xbf16>, vector<8x2xf32> -> vector<8x2xf32>
    %cst_3 = arith.constant 0.000000e+00 : f32
    %3 = vector.broadcast %cst_3 : f32 to vector<8x2xf32>
    %4 = arith.subf %3, %2 : vector<8x2xf32>
    %5 = math.exp %4 : vector<8x2xf32>
    %cst_4 = arith.constant 1.000000e+00 : f32
    %6 = vector.broadcast %cst_4 : f32 to vector<8x2xf32>
    %7 = arith.addf %6, %5 : vector<8x2xf32>
    %cst_5 = arith.constant 1.000000e+00 : f32
    %8 = vector.broadcast %cst_5 : f32 to vector<8x2xf32>
    %9 = arith.divf %8, %7 : vector<8x2xf32>
    %c0_6 = arith.constant 0 : index
    %c0_7 = arith.constant 0 : index
    %10 = vector.load %arg2[%c0_6, %c0_7] : memref<8x2xf32, #tpu.memory_space<vmem>>, vector<8x2xf32>
    tpu.vector_store %arg2[%c0_6, %c0_7], %9 {strides = array<i32>} : memref<8x2xf32, #tpu.memory_space<vmem>>, vector<8x2xf32>,
    return
  }
}

</mosaic_0001>

<llo_original>
// kernel: discriminator_forward.5
$region0: #{discriminator_forward.5}
  #allocation0 [shape = 'u32[]', space=smem, size = 0x4, offset = 0x4, fixed_abs, tag = 'smem constant byte address 0x4 - core index']
  #allocation1 [shape = 'u32[144,128]{1,0:T(1,128)}', space=vmem, size = 0x12000, scoped, tag = 'internal scratch']
  %s0 = inlined_call_operand.vmem [shape: bf16[2,8,8,1056], index: 0, kind: input, shape index: {}]
  %s1 = inlined_call_operand.vmem [shape: bf16[16,8,8], index: 1, kind: input, shape index: {}]
  %s2 = inlined_call_operand.vmem [shape: bf16[2,8,1024], index: 2, kind: output, shape index: {}]
  %s3 = sld [smem:[#allocation0]]
  $region41: #{discriminator_forward.5} parent=0
    _
  %s5 = ssub.s32 1, %s3
  %s6 = scalar_select 0, %s5, %s3
  loop: start=0, step=1, limit=4
  $region2: #{discriminator_forward.5} parent=0 // loop_pre_header
    _
  $region3: #{discriminator_forward.5} parent=0 // loop_header
    %s8 = sphi 0, %s12
    %p9 = scmp.ge.s32.totalorder %s8, 4
    %s18 = sphi 0, %s20
    %s21 = sphi 0, %s18
    %s22 = sphi 0, %s21
    %s38 = sphi 0, %s22
    %s42 = sphi 0, %s42
    %s44 = sphi 0, %s42
    %s45 = sphi 0, %s44
    %s59 = sphi 0, %s45
    %s65 = sphi 0, %s67
    %s68 = sphi 0, %s65
    %s69 = sphi 0, %s68
    %s85 = sphi 0, %s69
  $region4: #{discriminator_forward.5} parent=0 // loop_header_branch
    %11 = sbr.rel (%p9) target = $region8
  $region5: #{discriminator_forward.5} parent=0 // loop_body
    %s13 = ssub.s32 %s8, 1
    %s14 = ssub.s32 %s8, 2
    %s15 = sadd.s32 %s8, 1
    %s16 = ssub.s32 %s8, %s15
    %p17 = scmp.eq.s32.totalorder %s16, 0
    %s19 = sadd.s32 %s18, 1
    %s20 = scalar_select %p17, %s18, %s19
    %p23 = pneg %p17
    %p24 = scmp.eq.s32.totalorder %s8, 1
    %p25 = por %p23, %p24
    %p26 = scmp.ne.s32.totalorder %s18, %s21
    %p27 = scmp.eq.s32.totalorder %s8, 0
    %p28 = por %p26, %p27
    %p29 = scmp.ne.s32.totalorder %s18, %s21
    %p30 = scmp.eq.s32.totalorder %s13, 1
    %p31 = por %p29, %p30
    %p32 = scmp.ne.s32.totalorder %s21, %s22
    %p33 = scmp.eq.s32.totalorder %s13, 0
    %p34 = por %p32, %p33
    %p35 = scmp.ne.s32.totalorder %s21, %s22
    %p36 = scmp.eq.s32.totalorder %s14, 1
    %p37 = por %p35, %p36
    %p39 = scmp.ne.s32.totalorder %s22, %s38
    %p40 = scmp.eq.s32.totalorder %s14, 0
    %p41 = por %p39, %p40
    %s43 = sadd.s32 %s42, 1
    %p46 = scmp.eq.s32.totalorder %s8, 1
    %p47 = scmp.ne.s32.totalorder %s42, %s44
    %p48 = scmp.eq.s32.totalorder %s8, 0
    %p49 = por %p47, %p48
    %p50 = scmp.ne.s32.totalorder %s42, %s44
    %p51 = scmp.eq.s32.totalorder %s13, 1
    %p52 = por %p50, %p51
    %p53 = scmp.ne.s32.totalorder %s44, %s45
    %p54 = scmp.eq.s32.totalorder %s13, 0
    %p55 = por %p53, %p54
    %p56 = scmp.ne.s32.totalorder %s44, %s45
    %p57 = scmp.eq.s32.totalorder %s14, 1
    %p58 = por %p56, %p57
    %p60 = scmp.ne.s32.totalorder %s45, %s59
    %p61 = scmp.eq.s32.totalorder %s14, 0
    %p62 = por %p60, %p61
    %s63 = ssub.s32 %s8, %s15
    %p64 = scmp.eq.s32.totalorder %s63, 0
    %s66 = sadd.s32 %s65, 1
    %s67 = scalar_select %p64, %s65, %s66
    %p70 = pneg %p64
    %p71 = scmp.eq.s32.totalorder %s8, 1
    %p72 = por %p70, %p71
    %p73 = scmp.ne.s32.totalorder %s65, %s68
    %p74 = scmp.eq.s32.totalorder %s8, 0
    %p75 = por %p73, %p74
    %p76 = scmp.ne.s32.totalorder %s65, %s68
    %p77 = scmp.eq.s32.totalorder %s13, 1
    %p78 = por %p76, %p77
    %p79 = scmp.ne.s32.totalorder %s68, %s69
    %p80 = scmp.eq.s32.totalorder %s13, 0
    %p81 = por %p79, %p80
    %p82 = scmp.ne.s32.totalorder %s68, %s69
    %p83 = scmp.eq.s32.totalorder %s14, 1
    %p84 = por %p82, %p83
    %p86 = scmp.ne.s32.totalorder %s69, %s85
    %p87 = scmp.eq.s32.totalorder %s14, 0
    %p88 = por %p86, %p87
    %p89 = scmp.le.s32.totalorder 1, %s8
    %p90 = scmp.lt.s32.totalorder %s8, 3
    %p91 = pnand %p89, %p90
    %p92 = pneg %p91
    // Predicated region
    $region9: #{discriminator_forward.5} parent=5 // pred_check
      _
    $region10: #{discriminator_forward.5} parent=5 // pred_check_branch
      %94 = sbr.rel (%p91) target = $region12
    $region11: #{discriminator_forward.5} parent=5 // pred_region
      %s95 = ssub.s32 %s8, 1
      // Predicated region
      $region13: #{discriminator_forward.5} parent=11 // pred_check
        %p96 = pneg %p55
      $region14: #{discriminator_forward.5} parent=11 // pred_check_branch
        %98 = sbr.rel (%p96) target = $region16
      $region15: #{discriminator_forward.5} parent=11 // pred_region
        _
      $region16: #{discriminator_forward.5} parent=11 // pred_fallthru
        _
    $region12: #{discriminator_forward.5} parent=5 // pred_fallthru
      _
    %p99 = scmp.lt.s32.totalorder %s8, 2
    // Predicated region
    $region17: #{discriminator_forward.5} parent=5 // pred_check
      %p100 = pneg %p99
    $region18: #{discriminator_forward.5} parent=5 // pred_check_branch
      %102 = sbr.rel (%p100) target = $region20
    $region19: #{discriminator_forward.5} parent=5 // pred_region
      // Predicated region
      $region21: #{discriminator_forward.5} parent=19 // pred_check
        %p103 = pneg %p28
      $region22: #{discriminator_forward.5} parent=19 // pred_check_branch
        %105 = sbr.rel (%p103) target = $region24
      $region23: #{discriminator_forward.5} parent=19 // pred_region
        %p106 = scmp.lt.s32.totalorder %s8, 1
        %s107 = scalar_select %p106, %s8, 1
        %s108 = smul.addr %s107, 72
        %s109 = smul.addr %s108, 4
        %s110 = scalar_lea.vmem %s0, %s109
      $region24: #{discriminator_forward.5} parent=19 // pred_fallthru
        _
    $region20: #{discriminator_forward.5} parent=5 // pred_fallthru
      _
    %p111 = scmp.le.s32.totalorder 1, %s8
    %p112 = scmp.lt.s32.totalorder %s8, 3
    %p113 = pnand %p111, %p112
    %p114 = pneg %p113
    // Predicated region
    $region25: #{discriminator_forward.5} parent=5 // pred_check
      _
    $region26: #{discriminator_forward.5} parent=5 // pred_check_branch
      %116 = sbr.rel (%p113) target = $region28
    $region27: #{discriminator_forward.5} parent=5 // pred_region
      %s117 = ssub.s32 %s8, 1
      %p118 = scmp.lt.s32.totalorder %s13, 1
      %s119 = scalar_select %p118, %s13, 1
      %s120 = smul.addr %s119, 72
      %s121 = smul.addr %s120, 4
      %s122 = scalar_lea.vmem %s0, %s121
      %p123 = pneg %p34
      %p124 = pneg %p31
      %p125 = pneg %p55
      %p126 = pneg %p52
      %p127 = pneg %p81
      %p128 = pneg %p78
      %p129 = scmp.lt.s32.totalorder %s13, 1
      %s130 = scalar_select %p129, %s13, 1
      %s131 = smul.addr %s130, 8
      %s132 = smul.addr %s131, 4
      %s133 = scalar_lea.vmem %s2, %s132
      %p134 = scmp.lt.s32.totalorder %s13, 1
      %s135 = scalar_select %p134, %s13, 1
      %s136 = smul.addr %s135, 72
      %s137 = smul.addr %s136, 4
      %s138 = scalar_lea.vmem %s0, %s137
      %p139 = scmp.lt.s32.totalorder %s13, 1
      %s140 = scalar_select %p139, %s13, 1
      %s141 = smul.addr %s140, 8
      %s142 = smul.addr %s141, 4
      %s143 = scalar_lea.vmem %s2, %s142
      %v145 = vld [vmem:[%s138] sm:$0xff]
      %v146 = vld [vmem:[%s138 + $0x8] sm:$0xff]
      %v147 = vld [vmem:[%s138 + $0x10] sm:$0xff]
      %v148 = vld [vmem:[%s138 + $0x18] sm:$0xff]
      %v149 = vld [vmem:[%s1] sm:$0xf]
      %v150 = vld [vmem:[%s138 + $0x20] sm:$0xf]
      %s151 = scalar_lea.vmem %s1, 32
      %v152 = vld [vmem:[%s151] sm:$0xf]
      %v158 = vunpack.c.l.b16 %v145
      %v159 = vunpack.c.h.b16 %v145
      %v160 = vunpack.c.l.b16 %v146
      %v161 = vunpack.c.h.b16 %v146
      %v162 = vunpack.c.l.b16 %v147
      %v163 = vunpack.c.h.b16 %v147
      %v164 = vunpack.c.l.b16 %v148
      %v165 = vunpack.c.h.b16 %v148
      %v166 = vunpack.c.l.b16 %v150
      %v167 = vpack.c.b16 %v158, %v158
      %v168 = vpack.c.b16 %v159, %v159
      %v169 = vpack.c.b16 %v160, %v160
      %v170 = vpack.c.b16 %v161, %v161
      %v171 = vpack.c.b16 %v162, %v162
      %v172 = vpack.c.b16 %v163, %v163
      %v173 = vpack.c.b16 %v164, %v164
      %v174 = vpack.c.b16 %v165, %v165
      %v175 = vpack.c.b16 %v166, %v166
      %176 = vrot.lane.b32.xlu0 %v167, 96
      %v177 = vpop.permute.xlu0 %176
      %178 = vrot.lane.b32.xlu0 %v168, 96
      %v179 = vpop.permute.xlu0 %178
      %180 = vrot.lane.b32.xlu0 %v169, 96
      %v181 = vpop.permute.xlu0 %180
      %182 = vrot.lane.b32.xlu0 %v170, 96
      %v183 = vpop.permute.xlu0 %182
      %184 = vrot.lane.b32.xlu0 %v171, 96
      %v185 = vpop.permute.xlu0 %184
      %186 = vrot.lane.b32.xlu0 %v172, 96
      %v187 = vpop.permute.xlu0 %186
      %188 = vrot.lane.b32.xlu0 %v173, 96
      %v189 = vpop.permute.xlu0 %188
      %190 = vrot.lane.b32.xlu0 %v174, 96
      %v191 = vpop.permute.xlu0 %190
      %192 = vrot.lane.b32.xlu0 %v175, 96
      %v193 = vpop.permute.xlu0 %192
      %vm194 = vcmask 785408
      %v195 = vsel %vm194, %v177, %v179
      %v196 = vsel %vm194, %v179, %v181
      %v197 = vsel %vm194, %v181, %v183
      %v198 = vsel %vm194, %v183, %v185
      %v199 = vsel %vm194, %v185, %v187
      %v200 = vsel %vm194, %v187, %v189
      %v201 = vsel %vm194, %v189, %v191
      %v202 = vsel %vm194, %v191, %v193
      %vm203 = vcmask 64512
      %v205 = vsel %vm203, %v152, 0
      %vm207 = vcmask 1043456
      %v209 = vsel %vm207, %v195, 0
      %v212 = vsel %vm207, %v196, 0
      %v215 = vsel %vm207, %v197, 0
      %v218 = vsel %vm207, %v198, 0
      %v221 = vsel %vm207, %v199, 0
      %v224 = vsel %vm207, %v200, 0
      %v227 = vsel %vm207, %v201, 0
      %v230 = vsel %vm207, %v202, 0
      %232 = vmatprep.subr.bf16.mxu0 0
      %233 = vmatpush1.bf16.msra.mxu0 0
      %234 = vmatprep.subr.bf16.mxu0 0
      %235 = vmatpush1.bf16.msra.mxu0 0
      %236 = vmatprep.subr.bf16.mxu0 0
      %237 = vmatpush1.bf16.msra.mxu0 0
      %238 = vmatprep.subr.bf16.mxu0 0
      %239 = vmatpush1.bf16.msra.mxu0 0
      %240 = vmatprep.subr.bf16.mxu0 0
      %241 = vmatpush1.bf16.msra.mxu0 0
      %242 = vmatprep.subr.bf16.mxu0 0
      %243 = vmatpush1.bf16.msra.mxu0 0
      %244 = vmatprep.subr.bf16.mxu0 0
      %245 = vmatpush1.bf16.msra.mxu0 0
      %246 = vmatprep.subr.bf16.mxu0 %v212
      %247 = vmatpush1.bf16.msra.mxu0 %v209
      %248 = vmatprep.subr.bf16.mxu0 0
      %249 = vmatpush2.bf16.msra.mxu0 0
      %250 = vmatprep.subr.bf16.mxu0 0
      %251 = vmatpush2.bf16.msra.mxu0 0
      %252 = vmatprep.subr.bf16.mxu0 0
      %253 = vmatpush2.bf16.msra.mxu0 0
      %254 = vmatprep.subr.bf16.mxu0 0
      %255 = vmatpush2.bf16.msra.mxu0 0
      %256 = vmatprep.subr.bf16.mxu0 0
      %257 = vmatpush2.bf16.msra.mxu0 0
      %258 = vmatprep.subr.bf16.mxu0 0
      %259 = vmatpush2.bf16.msra.mxu0 0
      %260 = vmatprep.subr.bf16.mxu0 0
      %261 = vmatpush2.bf16.msra.mxu0 0
      %262 = vmatprep.subr.bf16.mxu0 0
      %263 = vmatpush2.bf16.msra.mxu0 0
      %264 = vmatprep.mubr.bf16.mxu0 0
      %265 = vmatmul.mubr.bf16.gmra.mxu0 %v205
      %v266 = vpop.f32.mrf.mxu0
      %v267 = vadd.f32 0.0, %v266
      %v268 = vpop.f32.mrf.mxu0
      %v269 = vadd.f32 0.0, %v268
      %v270 = vpop.f32.mrf.mxu0
      %v271 = vpop.f32.mrf.mxu0
      %272 = vdwg.mxu0
      %273 = vmatprep.subr.bf16.mxu0 0
      %274 = vmatpush1.bf16.msra.mxu0 0
      %275 = vmatprep.subr.bf16.mxu0 0
      %276 = vmatpush1.bf16.msra.mxu0 0
      %277 = vmatprep.subr.bf16.mxu0 0
      %278 = vmatpush1.bf16.msra.mxu0 0
      %279 = vmatprep.subr.bf16.mxu0 0
      %280 = vmatpush1.bf16.msra.mxu0 0
      %281 = vmatprep.subr.bf16.mxu0 0
      %282 = vmatpush1.bf16.msra.mxu0 0
      %283 = vmatprep.subr.bf16.mxu0 0
      %284 = vmatpush1.bf16.msra.mxu0 0
      %285 = vmatprep.subr.bf16.mxu0 0
      %286 = vmatpush1.bf16.msra.mxu0 0
      %287 = vmatprep.subr.bf16.mxu0 %v218
      %288 = vmatpush1.bf16.msra.mxu0 %v215
      %289 = vmatprep.subr.bf16.mxu0 0
      %290 = vmatpush2.bf16.msra.mxu0 0
      %291 = vmatprep.subr.bf16.mxu0 0
      %292 = vmatpush2.bf16.msra.mxu0 0
      %293 = vmatprep.subr.bf16.mxu0 0
      %294 = vmatpush2.bf16.msra.mxu0 0
      %295 = vmatprep.subr.bf16.mxu0 0
      %296 = vmatpush2.bf16.msra.mxu0 0
      %297 = vmatprep.subr.bf16.mxu0 0
      %298 = vmatpush2.bf16.msra.mxu0 0
      %299 = vmatprep.subr.bf16.mxu0 0
      %300 = vmatpush2.bf16.msra.mxu0 0
      %301 = vmatprep.subr.bf16.mxu0 0
      %302 = vmatpush2.bf16.msra.mxu0 0
      %303 = vmatprep.subr.bf16.mxu0 0
      %304 = vmatpush2.bf16.msra.mxu0 0
      %305 = vmatprep.mubr.bf16.mxu0 0
      %306 = vmatmul.mubr.bf16.gmra.mxu0 %v205
      %v307 = vpop.f32.mrf.mxu0
      %v308 = vadd.f32 0.0, %v307
      %v309 = vpop.f32.mrf.mxu0
      %v310 = vadd.f32 0.0, %v309
      %v311 = vpop.f32.mrf.mxu0
      %v312 = vpop.f32.mrf.mxu0
      %313 = vdwg.mxu0
      %314 = vmatprep.subr.bf16.mxu0 0
      %315 = vmatpush1.bf16.msra.mxu0 0
      %316 = vmatprep.subr.bf16.mxu0 0
      %317 = vmatpush1.bf16.msra.mxu0 0
      %318 = vmatprep.subr.bf16.mxu0 0
      %319 = vmatpush1.bf16.msra.mxu0 0
      %320 = vmatprep.subr.bf16.mxu0 0
      %321 = vmatpush1.bf16.msra.mxu0 0
      %322 = vmatprep.subr.bf16.mxu0 0
      %323 = vmatpush1.bf16.msra.mxu0 0
      %324 = vmatprep.subr.bf16.mxu0 0
      %325 = vmatpush1.bf16.msra.mxu0 0
      %326 = vmatprep.subr.bf16.mxu0 0
      %327 = vmatpush1.bf16.msra.mxu0 0
      %328 = vmatprep.subr.bf16.mxu0 %v224
      %329 = vmatpush1.bf16.msra.mxu0 %v221
      %330 = vmatprep.subr.bf16.mxu0 0
      %331 = vmatpush2.bf16.msra.mxu0 0
      %332 = vmatprep.subr.bf16.mxu0 0
      %333 = vmatpush2.bf16.msra.mxu0 0
      %334 = vmatprep.subr.bf16.mxu0 0
      %335 = vmatpush2.bf16.msra.mxu0 0
      %336 = vmatprep.subr.bf16.mxu0 0
      %337 = vmatpush2.bf16.msra.mxu0 0
      %338 = vmatprep.subr.bf16.mxu0 0
      %339 = vmatpush2.bf16.msra.mxu0 0
      %340 = vmatprep.subr.bf16.mxu0 0
      %341 = vmatpush2.bf16.msra.mxu0 0
      %342 = vmatprep.subr.bf16.mxu0 0
      %343 = vmatpush2.bf16.msra.mxu0 0
      %344 = vmatprep.subr.bf16.mxu0 0
      %345 = vmatpush2.bf16.msra.mxu0 0
      %346 = vmatprep.mubr.bf16.mxu0 0
      %347 = vmatmul.mubr.bf16.gmra.mxu0 %v205
      %v348 = vpop.f32.mrf.mxu0
      %v349 = vadd.f32 0.0, %v348
      %v350 = vpop.f32.mrf.mxu0
      %v351 = vadd.f32 0.0, %v350
      %v352 = vpop.f32.mrf.mxu0
      %v353 = vpop.f32.mrf.mxu0
      %354 = vdwg.mxu0
      %355 = vmatprep.subr.bf16.mxu0 0
      %356 = vmatpush1.bf16.msra.mxu0 0
      %357 = vmatprep.subr.bf16.mxu0 0
      %358 = vmatpush1.bf16.msra.mxu0 0
      %359 = vmatprep.subr.bf16.mxu0 0
      %360 = vmatpush1.bf16.msra.mxu0 0
      %361 = vmatprep.subr.bf16.mxu0 0
      %362 = vmatpush1.bf16.msra.mxu0 0
      %363 = vmatprep.subr.bf16.mxu0 0
      %364 = vmatpush1.bf16.msra.mxu0 0
      %365 = vmatprep.subr.bf16.mxu0 0
      %366 = vmatpush1.bf16.msra.mxu0 0
      %367 = vmatprep.subr.bf16.mxu0 0
      %368 = vmatpush1.bf16.msra.mxu0 0
      %369 = vmatprep.subr.bf16.mxu0 %v230
      %370 = vmatpush1.bf16.msra.mxu0 %v227
      %371 = vmatprep.subr.bf16.mxu0 0
      %372 = vmatpush2.bf16.msra.mxu0 0
      %373 = vmatprep.subr.bf16.mxu0 0
      %374 = vmatpush2.bf16.msra.mxu0 0
      %375 = vmatprep.subr.bf16.mxu0 0
      %376 = vmatpush2.bf16.msra.mxu0 0
      %377 = vmatprep.subr.bf16.mxu0 0
      %378 = vmatpush2.bf16.msra.mxu0 0
      %379 = vmatprep.subr.bf16.mxu0 0
      %380 = vmatpush2.bf16.msra.mxu0 0
      %381 = vmatprep.subr.bf16.mxu0 0
      %382 = vmatpush2.bf16.msra.mxu0 0
      %383 = vmatprep.subr.bf16.mxu0 0
      %384 = vmatpush2.bf16.msra.mxu0 0
      %385 = vmatprep.subr.bf16.mxu0 0
      %386 = vmatpush2.bf16.msra.mxu0 0
      %387 = vmatprep.mubr.bf16.mxu0 0
      %388 = vmatmul.mubr.bf16.gmra.mxu0 %v205
      %v389 = vpop.f32.mrf.mxu0
      %v390 = vadd.f32 0.0, %v389
      %v391 = vpop.f32.mrf.mxu0
      %v392 = vadd.f32 0.0, %v391
      %v393 = vpop.f32.mrf.mxu0
      %v394 = vpop.f32.mrf.mxu0
      %395 = vdwg.mxu0
      %v397 = vsel %vm203, %v149, 0
      %v400 = vsel %vm207, %v167, 0
      %v403 = vsel %vm207, %v168, 0
      %v406 = vsel %vm207, %v169, 0
      %v409 = vsel %vm207, %v170, 0
      %v412 = vsel %vm207, %v171, 0
      %v415 = vsel %vm207, %v172, 0
      %v418 = vsel %vm207, %v173, 0
      %v421 = vsel %vm207, %v174, 0
      %423 = vmatprep.subr.bf16.mxu0 0
      %424 = vmatpush1.bf16.msra.mxu0 0
      %425 = vmatprep.subr.bf16.mxu0 0
      %426 = vmatpush1.bf16.msra.mxu0 0
      %427 = vmatprep.subr.bf16.mxu0 0
      %428 = vmatpush1.bf16.msra.mxu0 0
      %429 = vmatprep.subr.bf16.mxu0 0
      %430 = vmatpush1.bf16.msra.mxu0 0
      %431 = vmatprep.subr.bf16.mxu0 0
      %432 = vmatpush1.bf16.msra.mxu0 0
      %433 = vmatprep.subr.bf16.mxu0 0
      %434 = vmatpush1.bf16.msra.mxu0 0
      %435 = vmatprep.subr.bf16.mxu0 0
      %436 = vmatpush1.bf16.msra.mxu0 0
      %437 = vmatprep.subr.bf16.mxu0 %v403
      %438 = vmatpush1.bf16.msra.mxu0 %v400
      %439 = vmatprep.subr.bf16.mxu0 0
      %440 = vmatpush2.bf16.msra.mxu0 0
      %441 = vmatprep.subr.bf16.mxu0 0
      %442 = vmatpush2.bf16.msra.mxu0 0
      %443 = vmatprep.subr.bf16.mxu0 0
      %444 = vmatpush2.bf16.msra.mxu0 0
      %445 = vmatprep.subr.bf16.mxu0 0
      %446 = vmatpush2.bf16.msra.mxu0 0
      %447 = vmatprep.subr.bf16.mxu0 0
      %448 = vmatpush2.bf16.msra.mxu0 0
      %449 = vmatprep.subr.bf16.mxu0 0
      %450 = vmatpush2.bf16.msra.mxu0 0
      %451 = vmatprep.subr.bf16.mxu0 0
      %452 = vmatpush2.bf16.msra.mxu0 0
      %453 = vmatprep.subr.bf16.mxu0 0
      %454 = vmatpush2.bf16.msra.mxu0 0
      %455 = vmatprep.mubr.bf16.mxu0 0
      %456 = vmatmul.mubr.bf16.gmra.mxu0 %v397
      %v457 = vpop.f32.mrf.mxu0
      %v458 = vadd.f32 %v267, %v457
      %v459 = vpop.f32.mrf.mxu0
      %v460 = vadd.f32 %v269, %v459
      %v461 = vpop.f32.mrf.mxu0
      %v462 = vpop.f32.mrf.mxu0
      %463 = vdwg.mxu0
      %464 = vmatprep.subr.bf16.mxu0 0
      %465 = vmatpush1.bf16.msra.mxu0 0
      %466 = vmatprep.subr.bf16.mxu0 0
      %467 = vmatpush1.bf16.msra.mxu0 0
      %468 = vmatprep.subr.bf16.mxu0 0
      %469 = vmatpush1.bf16.msra.mxu0 0
      %470 = vmatprep.subr.bf16.mxu0 0
      %471 = vmatpush1.bf16.msra.mxu0 0
      %472 = vmatprep.subr.bf16.mxu0 0
      %473 = vmatpush1.bf16.msra.mxu0 0
      %474 = vmatprep.subr.bf16.mxu0 0
      %475 = vmatpush1.bf16.msra.mxu0 0
      %476 = vmatprep.subr.bf16.mxu0 0
      %477 = vmatpush1.bf16.msra.mxu0 0
      %478 = vmatprep.subr.bf16.mxu0 %v409
      %479 = vmatpush1.bf16.msra.mxu0 %v406
      %480 = vmatprep.subr.bf16.mxu0 0
      %481 = vmatpush2.bf16.msra.mxu0 0
      %482 = vmatprep.subr.bf16.mxu0 0
      %483 = vmatpush2.bf16.msra.mxu0 0
      %484 = vmatprep.subr.bf16.mxu0 0
      %485 = vmatpush2.bf16.msra.mxu0 0
      %486 = vmatprep.subr.bf16.mxu0 0
      %487 = vmatpush2.bf16.msra.mxu0 0
      %488 = vmatprep.subr.bf16.mxu0 0
      %489 = vmatpush2.bf16.msra.mxu0 0
      %490 = vmatprep.subr.bf16.mxu0 0
      %491 = vmatpush2.bf16.msra.mxu0 0
      %492 = vmatprep.subr.bf16.mxu0 0
      %493 = vmatpush2.bf16.msra.mxu0 0
      %494 = vmatprep.subr.bf16.mxu0 0
      %495 = vmatpush2.bf16.msra.mxu0 0
      %496 = vmatprep.mubr.bf16.mxu0 0
      %497 = vmatmul.mubr.bf16.gmra.mxu0 %v397
      %v498 = vpop.f32.mrf.mxu0
      %v499 = vadd.f32 %v308, %v498
      %v500 = vpop.f32.mrf.mxu0
      %v501 = vadd.f32 %v310, %v500
      %v502 = vpop.f32.mrf.mxu0
      %v503 = vpop.f32.mrf.mxu0
      %504 = vdwg.mxu0
      %505 = vmatprep.subr.bf16.mxu0 0
      %506 = vmatpush1.bf16.msra.mxu0 0
      %507 = vmatprep.subr.bf16.mxu0 0
      %508 = vmatpush1.bf16.msra.mxu0 0
      %509 = vmatprep.subr.bf16.mxu0 0
      %510 = vmatpush1.bf16.msra.mxu0 0
      %511 = vmatprep.subr.bf16.mxu0 0
      %512 = vmatpush1.bf16.msra.mxu0 0
      %513 = vmatprep.subr.bf16.mxu0 0
      %514 = vmatpush1.bf16.msra.mxu0 0
      %515 = vmatprep.subr.bf16.mxu0 0
      %516 = vmatpush1.bf16.msra.mxu0 0
      %517 = vmatprep.subr.bf16.mxu0 0
      %518 = vmatpush1.bf16.msra.mxu0 0
      %519 = vmatprep.subr.bf16.mxu0 %v415
      %520 = vmatpush1.bf16.msra.mxu0 %v412
      %521 = vmatprep.subr.bf16.mxu0 0
      %522 = vmatpush2.bf16.msra.mxu0 0
      %523 = vmatprep.subr.bf16.mxu0 0
      %524 = vmatpush2.bf16.msra.mxu0 0
      %525 = vmatprep.subr.bf16.mxu0 0
      %526 = vmatpush2.bf16.msra.mxu0 0
      %527 = vmatprep.subr.bf16.mxu0 0
      %528 = vmatpush2.bf16.msra.mxu0 0
      %529 = vmatprep.subr.bf16.mxu0 0
      %530 = vmatpush2.bf16.msra.mxu0 0
      %531 = vmatprep.subr.bf16.mxu0 0
      %532 = vmatpush2.bf16.msra.mxu0 0
      %533 = vmatprep.subr.bf16.mxu0 0
      %534 = vmatpush2.bf16.msra.mxu0 0
      %535 = vmatprep.subr.bf16.mxu0 0
      %536 = vmatpush2.bf16.msra.mxu0 0
      %537 = vmatprep.mubr.bf16.mxu0 0
      %538 = vmatmul.mubr.bf16.gmra.mxu0 %v397
      %v539 = vpop.f32.mrf.mxu0
      %v540 = vadd.f32 %v349, %v539
      %v541 = vpop.f32.mrf.mxu0
      %v542 = vadd.f32 %v351, %v541
      %v543 = vpop.f32.mrf.mxu0
      %v544 = vpop.f32.mrf.mxu0
      %545 = vdwg.mxu0
      %546 = vmatprep.subr.bf16.mxu0 0
      %547 = vmatpush1.bf16.msra.mxu0 0
      %548 = vmatprep.subr.bf16.mxu0 0
      %549 = vmatpush1.bf16.msra.mxu0 0
      %550 = vmatprep.subr.bf16.mxu0 0
      %551 = vmatpush1.bf16.msra.mxu0 0
      %552 = vmatprep.subr.bf16.mxu0 0
      %553 = vmatpush1.bf16.msra.mxu0 0
      %554 = vmatprep.subr.bf16.mxu0 0
      %555 = vmatpush1.bf16.msra.mxu0 0
      %556 = vmatprep.subr.bf16.mxu0 0
      %557 = vmatpush1.bf16.msra.mxu0 0
      %558 = vmatprep.subr.bf16.mxu0 0
      %559 = vmatpush1.bf16.msra.mxu0 0
      %560 = vmatprep.subr.bf16.mxu0 %v421
      %561 = vmatpush1.bf16.msra.mxu0 %v418
      %562 = vmatprep.subr.bf16.mxu0 0
      %563 = vmatpush2.bf16.msra.mxu0 0
      %564 = vmatprep.subr.bf16.mxu0 0
      %565 = vmatpush2.bf16.msra.mxu0 0
      %566 = vmatprep.subr.bf16.mxu0 0
      %567 = vmatpush2.bf16.msra.mxu0 0
      %568 = vmatprep.subr.bf16.mxu0 0
      %569 = vmatpush2.bf16.msra.mxu0 0
      %570 = vmatprep.subr.bf16.mxu0 0
      %571 = vmatpush2.bf16.msra.mxu0 0
      %572 = vmatprep.subr.bf16.mxu0 0
      %573 = vmatpush2.bf16.msra.mxu0 0
      %574 = vmatprep.subr.bf16.mxu0 0
      %575 = vmatpush2.bf16.msra.mxu0 0
      %576 = vmatprep.subr.bf16.mxu0 0
      %577 = vmatpush2.bf16.msra.mxu0 0
      %578 = vmatprep.mubr.bf16.mxu0 0
      %579 = vmatmul.mubr.bf16.gmra.mxu0 %v397
      %v580 = vpop.f32.mrf.mxu0
      %v581 = vadd.f32 %v390, %v580
      %v582 = vpop.f32.mrf.mxu0
      %v583 = vadd.f32 %v392, %v582
      %v584 = vpop.f32.mrf.mxu0
      %v585 = vpop.f32.mrf.mxu0
      %586 = vdwg.mxu0
      %s587 = scalar_lea.vmem %s138, 36
      %v588 = vld [vmem:[%s587] sm:$0xff]
      %v589 = vld [vmem:[%s587 + $0x8] sm:$0xff]
      %v590 = vld [vmem:[%s587 + $0x10] sm:$0xff]
      %v591 = vld [vmem:[%s587 + $0x18] sm:$0xff]
      %s592 = scalar_lea.vmem %s1, 8
      %v593 = vld [vmem:[%s592] sm:$0xf]
      %v598 = vunpack.c.l.b16 %v588
      %v599 = vunpack.c.h.b16 %v588
      %v600 = vunpack.c.l.b16 %v589
      %v601 = vunpack.c.h.b16 %v589
      %v602 = vunpack.c.l.b16 %v590
      %v603 = vunpack.c.h.b16 %v590
      %v604 = vunpack.c.l.b16 %v591
      %v605 = vunpack.c.h.b16 %v591
      %v606 = vpack.c.b16 %v598, %v598
      %v607 = vpack.c.b16 %v599, %v599
      %v608 = vpack.c.b16 %v600, %v600
      %v609 = vpack.c.b16 %v601, %v601
      %v610 = vpack.c.b16 %v602, %v602
      %v611 = vpack.c.b16 %v603, %v603
      %v612 = vpack.c.b16 %v604, %v604
      %v613 = vpack.c.b16 %v605, %v605
      %v615 = vsel %vm203, %v593, 0
      %v618 = vsel %vm207, %v606, 0
      %v621 = vsel %vm207, %v607, 0
      %v624 = vsel %vm207, %v608, 0
      %v627 = vsel %vm207, %v609, 0
      %v630 = vsel %vm207, %v610, 0
      %v633 = vsel %vm207, %v611, 0
      %v636 = vsel %vm207, %v612, 0
      %v639 = vsel %vm207, %v613, 0
      %641 = vmatprep.subr.bf16.mxu0 0
      %642 = vmatpush1.bf16.msra.mxu0 0
      %643 = vmatprep.subr.bf16.mxu0 0
      %644 = vmatpush1.bf16.msra.mxu0 0
      %645 = vmatprep.subr.bf16.mxu0 0
      %646 = vmatpush1.bf16.msra.mxu0 0
      %647 = vmatprep.subr.bf16.mxu0 0
      %648 = vmatpush1.bf16.msra.mxu0 0
      %649 = vmatprep.subr.bf16.mxu0 0
      %650 = vmatpush1.bf16.msra.mxu0 0
      %651 = vmatprep.subr.bf16.mxu0 0
      %652 = vmatpush1.bf16.msra.mxu0 0
      %653 = vmatprep.subr.bf16.mxu0 0
      %654 = vmatpush1.bf16.msra.mxu0 0
      %655 = vmatprep.subr.bf16.mxu0 %v621
      %656 = vmatpush1.bf16.msra.mxu0 %v618
      %657 = vmatprep.subr.bf16.mxu0 0
      %658 = vmatpush2.bf16.msra.mxu0 0
      %659 = vmatprep.subr.bf16.mxu0 0
      %660 = vmatpush2.bf16.msra.mxu0 0
      %661 = vmatprep.subr.bf16.mxu0 0
      %662 = vmatpush2.bf16.msra.mxu0 0
      %663 = vmatprep.subr.bf16.mxu0 0
      %664 = vmatpush2.bf16.msra.mxu0 0
      %665 = vmatprep.subr.bf16.mxu0 0
      %666 = vmatpush2.bf16.msra.mxu0 0
      %667 = vmatprep.subr.bf16.mxu0 0
      %668 = vmatpush2.bf16.msra.mxu0 0
      %669 = vmatprep.subr.bf16.mxu0 0
      %670 = vmatpush2.bf16.msra.mxu0 0
      %671 = vmatprep.subr.bf16.mxu0 0
      %672 = vmatpush2.bf16.msra.mxu0 0
      %673 = vmatprep.mubr.bf16.mxu0 0
      %674 = vmatmul.mubr.bf16.gmra.mxu0 %v615
      %v675 = vpop.f32.mrf.mxu0
      %v676 = vadd.f32 0.0, %v675
      %v677 = vpop.f32.mrf.mxu0
      %v678 = vadd.f32 0.0, %v677
      %v679 = vpop.f32.mrf.mxu0
      %v680 = vpop.f32.mrf.mxu0
      %681 = vdwg.mxu0
      %682 = vmatprep.subr.bf16.mxu0 0
      %683 = vmatpush1.bf16.msra.mxu0 0
      %684 = vmatprep.subr.bf16.mxu0 0
      %685 = vmatpush1.bf16.msra.mxu0 0
      %686 = vmatprep.subr.bf16.mxu0 0
      %687 = vmatpush1.bf16.msra.mxu0 0
      %688 = vmatprep.subr.bf16.mxu0 0
      %689 = vmatpush1.bf16.msra.mxu0 0
      %690 = vmatprep.subr.bf16.mxu0 0
      %691 = vmatpush1.bf16.msra.mxu0 0
      %692 = vmatprep.subr.bf16.mxu0 0
      %693 = vmatpush1.bf16.msra.mxu0 0
      %694 = vmatprep.subr.bf16.mxu0 0
      %695 = vmatpush1.bf16.msra.mxu0 0
      %696 = vmatprep.subr.bf16.mxu0 %v627
      %697 = vmatpush1.bf16.msra.mxu0 %v624
      %698 = vmatprep.subr.bf16.mxu0 0
      %699 = vmatpush2.bf16.msra.mxu0 0
      %700 = vmatprep.subr.bf16.mxu0 0
      %701 = vmatpush2.bf16.msra.mxu0 0
      %702 = vmatprep.subr.bf16.mxu0 0
      %703 = vmatpush2.bf16.msra.mxu0 0
      %704 = vmatprep.subr.bf16.mxu0 0
      %705 = vmatpush2.bf16.msra.mxu0 0
      %706 = vmatprep.subr.bf16.mxu0 0
      %707 = vmatpush2.bf16.msra.mxu0 0
      %708 = vmatprep.subr.bf16.mxu0 0
      %709 = vmatpush2.bf16.msra.mxu0 0
      %710 = vmatprep.subr.bf16.mxu0 0
      %711 = vmatpush2.bf16.msra.mxu0 0
      %712 = vmatprep.subr.bf16.mxu0 0
      %713 = vmatpush2.bf16.msra.mxu0 0
      %714 = vmatprep.mubr.bf16.mxu0 0
      %715 = vmatmul.mubr.bf16.gmra.mxu0 %v615
      %v716 = vpop.f32.mrf.mxu0
      %v717 = vadd.f32 0.0, %v716
      %v718 = vpop.f32.mrf.mxu0
      %v719 = vadd.f32 0.0, %v718
      %v720 = vpop.f32.mrf.mxu0
      %v721 = vpop.f32.mrf.mxu0
      %722 = vdwg.mxu0
      %723 = vmatprep.subr.bf16.mxu0 0
      %724 = vmatpush1.bf16.msra.mxu0 0
      %725 = vmatprep.subr.bf16.mxu0 0
      %726 = vmatpush1.bf16.msra.mxu0 0
      %727 = vmatprep.subr.bf16.mxu0 0
      %728 = vmatpush1.bf16.msra.mxu0 0
      %729 = vmatprep.subr.bf16.mxu0 0
      %730 = vmatpush1.bf16.msra.mxu0 0
      %731 = vmatprep.subr.bf16.mxu0 0
      %732 = vmatpush1.bf16.msra.mxu0 0
      %733 = vmatprep.subr.bf16.mxu0 0
      %734 = vmatpush1.bf16.msra.mxu0 0
      %735 = vmatprep.subr.bf16.mxu0 0
      %736 = vmatpush1.bf16.msra.mxu0 0
      %737 = vmatprep.subr.bf16.mxu0 %v633
      %738 = vmatpush1.bf16.msra.mxu0 %v630
      %739 = vmatprep.subr.bf16.mxu0 0
      %740 = vmatpush2.bf16.msra.mxu0 0
      %741 = vmatprep.subr.bf16.mxu0 0
      %742 = vmatpush2.bf16.msra.mxu0 0
      %743 = vmatprep.subr.bf16.mxu0 0
      %744 = vmatpush2.bf16.msra.mxu0 0
      %745 = vmatprep.subr.bf16.mxu0 0
      %746 = vmatpush2.bf16.msra.mxu0 0
      %747 = vmatprep.subr.bf16.mxu0 0
      %748 = vmatpush2.bf16.msra.mxu0 0
      %749 = vmatprep.subr.bf16.mxu0 0
      %750 = vmatpush2.bf16.msra.mxu0 0
      %751 = vmatprep.subr.bf16.mxu0 0
      %752 = vmatpush2.bf16.msra.mxu0 0
      %753 = vmatprep.subr.bf16.mxu0 0
      %754 = vmatpush2.bf16.msra.mxu0 0
      %755 = vmatprep.mubr.bf16.mxu0 0
      %756 = vmatmul.mubr.bf16.gmra.mxu0 %v615
      %v757 = vpop.f32.mrf.mxu0
      %v758 = vadd.f32 0.0, %v757
      %v759 = vpop.f32.mrf.mxu0
      %v760 = vadd.f32 0.0, %v759
      %v761 = vpop.f32.mrf.mxu0
      %v762 = vpop.f32.mrf.mxu0
      %763 = vdwg.mxu0
      %764 = vmatprep.subr.bf16.mxu0 0
      %765 = vmatpush1.bf16.msra.mxu0 0
      %766 = vmatprep.subr.bf16.mxu0 0
      %767 = vmatpush1.bf16.msra.mxu0 0
      %768 = vmatprep.subr.bf16.mxu0 0
      %769 = vmatpush1.bf16.msra.mxu0 0
      %770 = vmatprep.subr.bf16.mxu0 0
      %771 = vmatpush1.bf16.msra.mxu0 0
      %772 = vmatprep.subr.bf16.mxu0 0
      %773 = vmatpush1.bf16.msra.mxu0 0
      %774 = vmatprep.subr.bf16.mxu0 0
      %775 = vmatpush1.bf16.msra.mxu0 0
      %776 = vmatprep.subr.bf16.mxu0 0
      %777 = vmatpush1.bf16.msra.mxu0 0
      %778 = vmatprep.subr.bf16.mxu0 %v639
      %779 = vmatpush1.bf16.msra.mxu0 %v636
      %780 = vmatprep.subr.bf16.mxu0 0
      %781 = vmatpush2.bf16.msra.mxu0 0
      %782 = vmatprep.subr.bf16.mxu0 0
      %783 = vmatpush2.bf16.msra.mxu0 0
      %784 = vmatprep.subr.bf16.mxu0 0
      %785 = vmatpush2.bf16.msra.mxu0 0
      %786 = vmatprep.subr.bf16.mxu0 0
      %787 = vmatpush2.bf16.msra.mxu0 0
      %788 = vmatprep.subr.bf16.mxu0 0
      %789 = vmatpush2.bf16.msra.mxu0 0
      %790 = vmatprep.subr.bf16.mxu0 0
      %791 = vmatpush2.bf16.msra.mxu0 0
      %792 = vmatprep.subr.bf16.mxu0 0
      %793 = vmatpush2.bf16.msra.mxu0 0
      %794 = vmatprep.subr.bf16.mxu0 0
      %795 = vmatpush2.bf16.msra.mxu0 0
      %796 = vmatprep.mubr.bf16.mxu0 0
      %797 = vmatmul.mubr.bf16.gmra.mxu0 %v615
      %v798 = vpop.f32.mrf.mxu0
      %v799 = vadd.f32 0.0, %v798
      %v800 = vpop.f32.mrf.mxu0
      %v801 = vadd.f32 0.0, %v800
      %v802 = vpop.f32.mrf.mxu0
      %v803 = vpop.f32.mrf.mxu0
      %804 = vdwg.mxu0
      %v805 = vadd.f32 %v458, %v676
      %v806 = vadd.f32 %v460, %v678
      %v807 = vadd.f32 %v499, %v717
      %v808 = vadd.f32 %v501, %v719
      %v809 = vadd.f32 %v540, %v758
      %v810 = vadd.f32 %v542, %v760
      %v811 = vadd.f32 %v581, %v799
      %v812 = vadd.f32 %v583, %v801
      %v813 = vld [vmem:[%s587] sm:$0xff]
      %v814 = vld [vmem:[%s587 + $0x8] sm:$0xff]
      %v815 = vld [vmem:[%s587 + $0x10] sm:$0xff]
      %v816 = vld [vmem:[%s587 + $0x18] sm:$0xff]
      %v817 = vld [vmem:[%s587 + $0x20] sm:$0xf]
      %s818 = scalar_lea.vmem %s1, 40
      %v819 = vld [vmem:[%s818] sm:$0xf]
      %v825 = vunpack.c.l.b16 %v813
      %v826 = vunpack.c.h.b16 %v813
      %v827 = vunpack.c.l.b16 %v814
      %v828 = vunpack.c.h.b16 %v814
      %v829 = vunpack.c.l.b16 %v815
      %v830 = vunpack.c.h.b16 %v815
      %v831 = vunpack.c.l.b16 %v816
      %v832 = vunpack.c.h.b16 %v816
      %v833 = vunpack.c.l.b16 %v817
      %v834 = vpack.c.b16 %v825, %v825
      %v835 = vpack.c.b16 %v826, %v826
      %v836 = vpack.c.b16 %v827, %v827
      %v837 = vpack.c.b16 %v828, %v828
      %v838 = vpack.c.b16 %v829, %v829
      %v839 = vpack.c.b16 %v830, %v830
      %v840 = vpack.c.b16 %v831, %v831
      %v841 = vpack.c.b16 %v832, %v832
      %v842 = vpack.c.b16 %v833, %v833
      %843 = vrot.lane.b32.xlu0 %v834, 96
      %v844 = vpop.permute.xlu0 %843
      %845 = vrot.lane.b32.xlu0 %v835, 96
      %v846 = vpop.permute.xlu0 %845
      %847 = vrot.lane.b32.xlu0 %v836, 96
      %v848 = vpop.permute.xlu0 %847
      %849 = vrot.lane.b32.xlu0 %v837, 96
      %v850 = vpop.permute.xlu0 %849
      %851 = vrot.lane.b32.xlu0 %v838, 96
      %v852 = vpop.permute.xlu0 %851
      %853 = vrot.lane.b32.xlu0 %v839, 96
      %v854 = vpop.permute.xlu0 %853
      %855 = vrot.lane.b32.xlu0 %v840, 96
      %v856 = vpop.permute.xlu0 %855
      %857 = vrot.lane.b32.xlu0 %v841, 96
      %v858 = vpop.permute.xlu0 %857
      %859 = vrot.lane.b32.xlu0 %v842, 96
      %v860 = vpop.permute.xlu0 %859
      %v861 = vsel %vm194, %v844, %v846
      %v862 = vsel %vm194, %v846, %v848
      %v863 = vsel %vm194, %v848, %v850
      %v864 = vsel %vm194, %v850, %v852
      %v865 = vsel %vm194, %v852, %v854
      %v866 = vsel %vm194, %v854, %v856
      %v867 = vsel %vm194, %v856, %v858
      %v868 = vsel %vm194, %v858, %v860
      %v870 = vsel %vm203, %v819, 0
      %v873 = vsel %vm207, %v861, 0
      %v876 = vsel %vm207, %v862, 0
      %v879 = vsel %vm207, %v863, 0
      %v882 = vsel %vm207, %v864, 0
      %v885 = vsel %vm207, %v865, 0
      %v888 = vsel %vm207, %v866, 0
      %v891 = vsel %vm207, %v867, 0
      %v894 = vsel %vm207, %v868, 0
      %896 = vmatprep.subr.bf16.mxu0 0
      %897 = vmatpush1.bf16.msra.mxu0 0
      %898 = vmatprep.subr.bf16.mxu0 0
      %899 = vmatpush1.bf16.msra.mxu0 0
      %900 = vmatprep.subr.bf16.mxu0 0
      %901 = vmatpush1.bf16.msra.mxu0 0
      %902 = vmatprep.subr.bf16.mxu0 0
      %903 = vmatpush1.bf16.msra.mxu0 0
      %904 = vmatprep.subr.bf16.mxu0 0
      %905 = vmatpush1.bf16.msra.mxu0 0
      %906 = vmatprep.subr.bf16.mxu0 0
      %907 = vmatpush1.bf16.msra.mxu0 0
      %908 = vmatprep.subr.bf16.mxu0 0
      %909 = vmatpush1.bf16.msra.mxu0 0
      %910 = vmatprep.subr.bf16.mxu0 %v876
      %911 = vmatpush1.bf16.msra.mxu0 %v873
      %912 = vmatprep.subr.bf16.mxu0 0
      %913 = vmatpush2.bf16.msra.mxu0 0
      %914 = vmatprep.subr.bf16.mxu0 0
      %915 = vmatpush2.bf16.msra.mxu0 0
      %916 = vmatprep.subr.bf16.mxu0 0
      %917 = vmatpush2.bf16.msra.mxu0 0
      %918 = vmatprep.subr.bf16.mxu0 0
      %919 = vmatpush2.bf16.msra.mxu0 0
      %920 = vmatprep.subr.bf16.mxu0 0
      %921 = vmatpush2.bf16.msra.mxu0 0
      %922 = vmatprep.subr.bf16.mxu0 0
      %923 = vmatpush2.bf16.msra.mxu0 0
      %924 = vmatprep.subr.bf16.mxu0 0
      %925 = vmatpush2.bf16.msra.mxu0 0
      %926 = vmatprep.subr.bf16.mxu0 0
      %927 = vmatpush2.bf16.msra.mxu0 0
      %928 = vmatprep.mubr.bf16.mxu0 0
      %929 = vmatmul.mubr.bf16.gmra.mxu0 %v870
      %v930 = vpop.f32.mrf.mxu0
      %v931 = vadd.f32 0.0, %v930
      %v932 = vpop.f32.mrf.mxu0
      %v933 = vadd.f32 0.0, %v932
      %v934 = vpop.f32.mrf.mxu0
      %v935 = vpop.f32.mrf.mxu0
      %936 = vdwg.mxu0
      %937 = vmatprep.subr.bf16.mxu0 0
      %938 = vmatpush1.bf16.msra.mxu0 0
      %939 = vmatprep.subr.bf16.mxu0 0
      %940 = vmatpush1.bf16.msra.mxu0 0
      %941 = vmatprep.subr.bf16.mxu0 0
      %942 = vmatpush1.bf16.msra.mxu0 0
      %943 = vmatprep.subr.bf16.mxu0 0
      %944 = vmatpush1.bf16.msra.mxu0 0
      %945 = vmatprep.subr.bf16.mxu0 0
      %946 = vmatpush1.bf16.msra.mxu0 0
      %947 = vmatprep.subr.bf16.mxu0 0
      %948 = vmatpush1.bf16.msra.mxu0 0
      %949 = vmatprep.subr.bf16.mxu0 0
      %950 = vmatpush1.bf16.msra.mxu0 0
      %951 = vmatprep.subr.bf16.mxu0 %v882
      %952 = vmatpush1.bf16.msra.mxu0 %v879
      %953 = vmatprep.subr.bf16.mxu0 0
      %954 = vmatpush2.bf16.msra.mxu0 0
      %955 = vmatprep.subr.bf16.mxu0 0
      %956 = vmatpush2.bf16.msra.mxu0 0
      %957 = vmatprep.subr.bf16.mxu0 0
      %958 = vmatpush2.bf16.msra.mxu0 0
      %959 = vmatprep.subr.bf16.mxu0 0
      %960 = vmatpush2.bf16.msra.mxu0 0
      %961 = vmatprep.subr.bf16.mxu0 0
      %962 = vmatpush2.bf16.msra.mxu0 0
      %963 = vmatprep.subr.bf16.mxu0 0
      %964 = vmatpush2.bf16.msra.mxu0 0
      %965 = vmatprep.subr.bf16.mxu0 0
      %966 = vmatpush2.bf16.msra.mxu0 0
      %967 = vmatprep.subr.bf16.mxu0 0
      %968 = vmatpush2.bf16.msra.mxu0 0
      %969 = vmatprep.mubr.bf16.mxu0 0
      %970 = vmatmul.mubr.bf16.gmra.mxu0 %v870
      %v971 = vpop.f32.mrf.mxu0
      %v972 = vadd.f32 0.0, %v971
      %v973 = vpop.f32.mrf.mxu0
      %v974 = vadd.f32 0.0, %v973
      %v975 = vpop.f32.mrf.mxu0
      %v976 = vpop.f32.mrf.mxu0
      %977 = vdwg.mxu0
      %978 = vmatprep.subr.bf16.mxu0 0
      %979 = vmatpush1.bf16.msra.mxu0 0
      %980 = vmatprep.subr.bf16.mxu0 0
      %981 = vmatpush1.bf16.msra.mxu0 0
      %982 = vmatprep.subr.bf16.mxu0 0
      %983 = vmatpush1.bf16.msra.mxu0 0
      %984 = vmatprep.subr.bf16.mxu0 0
      %985 = vmatpush1.bf16.msra.mxu0 0
      %986 = vmatprep.subr.bf16.mxu0 0
      %987 = vmatpush1.bf16.msra.mxu0 0
      %988 = vmatprep.subr.bf16.mxu0 0
      %989 = vmatpush1.bf16.msra.mxu0 0
      %990 = vmatprep.subr.bf16.mxu0 0
      %991 = vmatpush1.bf16.msra.mxu0 0
      %992 = vmatprep.subr.bf16.mxu0 %v888
      %993 = vmatpush1.bf16.msra.mxu0 %v885
      %994 = vmatprep.subr.bf16.mxu0 0
      %995 = vmatpush2.bf16.msra.mxu0 0
      %996 = vmatprep.subr.bf16.mxu0 0
      %997 = vmatpush2.bf16.msra.mxu0 0
      %998 = vmatprep.subr.bf16.mxu0 0
      %999 = vmatpush2.bf16.msra.mxu0 0
      %1000 = vmatprep.subr.bf16.mxu0 0
      %1001 = vmatpush2.bf16.msra.mxu0 0
      %1002 = vmatprep.subr.bf16.mxu0 0
      %1003 = vmatpush2.bf16.msra.mxu0 0
      %1004 = vmatprep.subr.bf16.mxu0 0
      %1005 = vmatpush2.bf16.msra.mxu0 0
      %1006 = vmatprep.subr.bf16.mxu0 0
      %1007 = vmatpush2.bf16.msra.mxu0 0
      %1008 = vmatprep.subr.bf16.mxu0 0
      %1009 = vmatpush2.bf16.msra.mxu0 0
      %1010 = vmatprep.mubr.bf16.mxu0 0
      %1011 = vmatmul.mubr.bf16.gmra.mxu0 %v870
      %v1012 = vpop.f32.mrf.mxu0
      %v1013 = vadd.f32 0.0, %v1012
      %v1014 = vpop.f32.mrf.mxu0
      %v1015 = vadd.f32 0.0, %v1014
      %v1016 = vpop.f32.mrf.mxu0
      %v1017 = vpop.f32.mrf.mxu0
      %1018 = vdwg.mxu0
      %1019 = vmatprep.subr.bf16.mxu0 0
      %1020 = vmatpush1.bf16.msra.mxu0 0
      %1021 = vmatprep.subr.bf16.mxu0 0
      %1022 = vmatpush1.bf16.msra.mxu0 0
      %1023 = vmatprep.subr.bf16.mxu0 0
      %1024 = vmatpush1.bf16.msra.mxu0 0
      %1025 = vmatprep.subr.bf16.mxu0 0
      %1026 = vmatpush1.bf16.msra.mxu0 0
      %1027 = vmatprep.subr.bf16.mxu0 0
      %1028 = vmatpush1.bf16.msra.mxu0 0
      %1029 = vmatprep.subr.bf16.mxu0 0
      %1030 = vmatpush1.bf16.msra.mxu0 0
      %1031 = vmatprep.subr.bf16.mxu0 0
      %1032 = vmatpush1.bf16.msra.mxu0 0
      %1033 = vmatprep.subr.bf16.mxu0 %v894
      %1034 = vmatpush1.bf16.msra.mxu0 %v891
      %1035 = vmatprep.subr.bf16.mxu0 0
      %1036 = vmatpush2.bf16.msra.mxu0 0
      %1037 = vmatprep.subr.bf16.mxu0 0
      %1038 = vmatpush2.bf16.msra.mxu0 0
      %1039 = vmatprep.subr.bf16.mxu0 0
      %1040 = vmatpush2.bf16.msra.mxu0 0
      %1041 = vmatprep.subr.bf16.mxu0 0
      %1042 = vmatpush2.bf16.msra.mxu0 0
      %1043 = vmatprep.subr.bf16.mxu0 0
      %1044 = vmatpush2.bf16.msra.mxu0 0
      %1045 = vmatprep.subr.bf16.mxu0 0
      %1046 = vmatpush2.bf16.msra.mxu0 0
      %1047 = vmatprep.subr.bf16.mxu0 0
      %1048 = vmatpush2.bf16.msra.mxu0 0
      %1049 = vmatprep.subr.bf16.mxu0 0
      %1050 = vmatpush2.bf16.msra.mxu0 0
      %1051 = vmatprep.mubr.bf16.mxu0 0
      %1052 = vmatmul.mubr.bf16.gmra.mxu0 %v870
      %v1053 = vpop.f32.mrf.mxu0
      %v1054 = vadd.f32 0.0, %v1053
      %v1055 = vpop.f32.mrf.mxu0
      %v1056 = vadd.f32 0.0, %v1055
      %v1057 = vpop.f32.mrf.mxu0
      %v1058 = vpop.f32.mrf.mxu0
      %1059 = vdwg.mxu0
      %v1060 = vadd.f32 %v805, %v931
      %v1061 = vadd.f32 %v806, %v933
      %v1062 = vadd.f32 %v807, %v972
      %v1063 = vadd.f32 %v808, %v974
      %v1064 = vadd.f32 %v809, %v1013
      %v1065 = vadd.f32 %v810, %v1015
      %v1066 = vadd.f32 %v811, %v1054
      %v1067 = vadd.f32 %v812, %v1056
      %s1068 = scalar_lea.vmem %s138, 72
      %v1069 = vld [vmem:[%s1068] sm:$0xff]
      %v1070 = vld [vmem:[%s1068 + $0x8] sm:$0xff]
      %v1071 = vld [vmem:[%s1068 + $0x10] sm:$0xff]
      %v1072 = vld [vmem:[%s1068 + $0x18] sm:$0xff]
      %s1073 = scalar_lea.vmem %s1, 4
      %v1074 = vld [vmem:[%s1073] sm:$0xf]
      %v1079 = vunpack.c.l.b16 %v1069
      %v1080 = vunpack.c.h.b16 %v1069
      %v1081 = vunpack.c.l.b16 %v1070
      %v1082 = vunpack.c.h.b16 %v1070
      %v1083 = vunpack.c.l.b16 %v1071
      %v1084 = vunpack.c.h.b16 %v1071
      %v1085 = vunpack.c.l.b16 %v1072
      %v1086 = vunpack.c.h.b16 %v1072
      %v1087 = vpack.c.b16 %v1079, %v1079
      %v1088 = vpack.c.b16 %v1080, %v1080
      %v1089 = vpack.c.b16 %v1081, %v1081
      %v1090 = vpack.c.b16 %v1082, %v1082
      %v1091 = vpack.c.b16 %v1083, %v1083
      %v1092 = vpack.c.b16 %v1084, %v1084
      %v1093 = vpack.c.b16 %v1085, %v1085
      %v1094 = vpack.c.b16 %v1086, %v1086
      %v1096 = vsel %vm203, %v1074, 0
      %v1099 = vsel %vm207, %v1087, 0
      %v1102 = vsel %vm207, %v1088, 0
      %v1105 = vsel %vm207, %v1089, 0
      %v1108 = vsel %vm207, %v1090, 0
      %v1111 = vsel %vm207, %v1091, 0
      %v1114 = vsel %vm207, %v1092, 0
      %v1117 = vsel %vm207, %v1093, 0
      %v1120 = vsel %vm207, %v1094, 0
      %1122 = vmatprep.subr.bf16.mxu0 0
      %1123 = vmatpush1.bf16.msra.mxu0 0
      %1124 = vmatprep.subr.bf16.mxu0 0
      %1125 = vmatpush1.bf16.msra.mxu0 0
      %1126 = vmatprep.subr.bf16.mxu0 0
      %1127 = vmatpush1.bf16.msra.mxu0 0
      %1128 = vmatprep.subr.bf16.mxu0 0
      %1129 = vmatpush1.bf16.msra.mxu0 0
      %1130 = vmatprep.subr.bf16.mxu0 0
      %1131 = vmatpush1.bf16.msra.mxu0 0
      %1132 = vmatprep.subr.bf16.mxu0 0
      %1133 = vmatpush1.bf16.msra.mxu0 0
      %1134 = vmatprep.subr.bf16.mxu0 0
      %1135 = vmatpush1.bf16.msra.mxu0 0
      %1136 = vmatprep.subr.bf16.mxu0 %v1102
      %1137 = vmatpush1.bf16.msra.mxu0 %v1099
      %1138 = vmatprep.subr.bf16.mxu0 0
      %1139 = vmatpush2.bf16.msra.mxu0 0
      %1140 = vmatprep.subr.bf16.mxu0 0
      %1141 = vmatpush2.bf16.msra.mxu0 0
      %1142 = vmatprep.subr.bf16.mxu0 0
      %1143 = vmatpush2.bf16.msra.mxu0 0
      %1144 = vmatprep.subr.bf16.mxu0 0
      %1145 = vmatpush2.bf16.msra.mxu0 0
      %1146 = vmatprep.subr.bf16.mxu0 0
      %1147 = vmatpush2.bf16.msra.mxu0 0
      %1148 = vmatprep.subr.bf16.mxu0 0
      %1149 = vmatpush2.bf16.msra.mxu0 0
      %1150 = vmatprep.subr.bf16.mxu0 0
      %1151 = vmatpush2.bf16.msra.mxu0 0
      %1152 = vmatprep.subr.bf16.mxu0 0
      %1153 = vmatpush2.bf16.msra.mxu0 0
      %1154 = vmatprep.mubr.bf16.mxu0 0
      %1155 = vmatmul.mubr.bf16.gmra.mxu0 %v1096
      %v1156 = vpop.f32.mrf.mxu0
      %v1157 = vadd.f32 0.0, %v1156
      %v1158 = vpop.f32.mrf.mxu0
      %v1159 = vadd.f32 0.0, %v1158
      %v1160 = vpop.f32.mrf.mxu0
      %v1161 = vpop.f32.mrf.mxu0
      %1162 = vdwg.mxu0
      %1163 = vmatprep.subr.bf16.mxu0 0
      %1164 = vmatpush1.bf16.msra.mxu0 0
      %1165 = vmatprep.subr.bf16.mxu0 0
      %1166 = vmatpush1.bf16.msra.mxu0 0
      %1167 = vmatprep.subr.bf16.mxu0 0
      %1168 = vmatpush1.bf16.msra.mxu0 0
      %1169 = vmatprep.subr.bf16.mxu0 0
      %1170 = vmatpush1.bf16.msra.mxu0 0
      %1171 = vmatprep.subr.bf16.mxu0 0
      %1172 = vmatpush1.bf16.msra.mxu0 0
      %1173 = vmatprep.subr.bf16.mxu0 0
      %1174 = vmatpush1.bf16.msra.mxu0 0
      %1175 = vmatprep.subr.bf16.mxu0 0
      %1176 = vmatpush1.bf16.msra.mxu0 0
      %1177 = vmatprep.subr.bf16.mxu0 %v1108
      %1178 = vmatpush1.bf16.msra.mxu0 %v1105
      %1179 = vmatprep.subr.bf16.mxu0 0
      %1180 = vmatpush2.bf16.msra.mxu0 0
      %1181 = vmatprep.subr.bf16.mxu0 0
      %1182 = vmatpush2.bf16.msra.mxu0 0
      %1183 = vmatprep.subr.bf16.mxu0 0
      %1184 = vmatpush2.bf16.msra.mxu0 0
      %1185 = vmatprep.subr.bf16.mxu0 0
      %1186 = vmatpush2.bf16.msra.mxu0 0
      %1187 = vmatprep.subr.bf16.mxu0 0
      %1188 = vmatpush2.bf16.msra.mxu0 0
      %1189 = vmatprep.subr.bf16.mxu0 0
      %1190 = vmatpush2.bf16.msra.mxu0 0
      %1191 = vmatprep.subr.bf16.mxu0 0
      %1192 = vmatpush2.bf16.msra.mxu0 0
      %1193 = vmatprep.subr.bf16.mxu0 0
      %1194 = vmatpush2.bf16.msra.mxu0 0
      %1195 = vmatprep.mubr.bf16.mxu0 0
      %1196 = vmatmul.mubr.bf16.gmra.mxu0 %v1096
      %v1197 = vpop.f32.mrf.mxu0
      %v1198 = vadd.f32 0.0, %v1197
      %v1199 = vpop.f32.mrf.mxu0
      %v1200 = vadd.f32 0.0, %v1199
      %v1201 = vpop.f32.mrf.mxu0
      %v1202 = vpop.f32.mrf.mxu0
      %1203 = vdwg.mxu0
      %1204 = vmatprep.subr.bf16.mxu0 0
      %1205 = vmatpush1.bf16.msra.mxu0 0
      %1206 = vmatprep.subr.bf16.mxu0 0
      %1207 = vmatpush1.bf16.msra.mxu0 0
      %1208 = vmatprep.subr.bf16.mxu0 0
      %1209 = vmatpush1.bf16.msra.mxu0 0
      %1210 = vmatprep.subr.bf16.mxu0 0
      %1211 = vmatpush1.bf16.msra.mxu0 0
      %1212 = vmatprep.subr.bf16.mxu0 0
      %1213 = vmatpush1.bf16.msra.mxu0 0
      %1214 = vmatprep.subr.bf16.mxu0 0
      %1215 = vmatpush1.bf16.msra.mxu0 0
      %1216 = vmatprep.subr.bf16.mxu0 0
      %1217 = vmatpush1.bf16.msra.mxu0 0
      %1218 = vmatprep.subr.bf16.mxu0 %v1114
      %1219 = vmatpush1.bf16.msra.mxu0 %v1111
      %1220 = vmatprep.subr.bf16.mxu0 0
      %1221 = vmatpush2.bf16.msra.mxu0 0
      %1222 = vmatprep.subr.bf16.mxu0 0
      %1223 = vmatpush2.bf16.msra.mxu0 0
      %1224 = vmatprep.subr.bf16.mxu0 0
      %1225 = vmatpush2.bf16.msra.mxu0 0
      %1226 = vmatprep.subr.bf16.mxu0 0
      %1227 = vmatpush2.bf16.msra.mxu0 0
      %1228 = vmatprep.subr.bf16.mxu0 0
      %1229 = vmatpush2.bf16.msra.mxu0 0
      %1230 = vmatprep.subr.bf16.mxu0 0
      %1231 = vmatpush2.bf16.msra.mxu0 0
      %1232 = vmatprep.subr.bf16.mxu0 0
      %1233 = vmatpush2.bf16.msra.mxu0 0
      %1234 = vmatprep.subr.bf16.mxu0 0
      %1235 = vmatpush2.bf16.msra.mxu0 0
      %1236 = vmatprep.mubr.bf16.mxu0 0
      %1237 = vmatmul.mubr.bf16.gmra.mxu0 %v1096
      %v1238 = vpop.f32.mrf.mxu0
      %v1239 = vadd.f32 0.0, %v1238
      %v1240 = vpop.f32.mrf.mxu0
      %v1241 = vadd.f32 0.0, %v1240
      %v1242 = vpop.f32.mrf.mxu0
      %v1243 = vpop.f32.mrf.mxu0
      %1244 = vdwg.mxu0
      %1245 = vmatprep.subr.bf16.mxu0 0
      %1246 = vmatpush1.bf16.msra.mxu0 0
      %1247 = vmatprep.subr.bf16.mxu0 0
      %1248 = vmatpush1.bf16.msra.mxu0 0
      %1249 = vmatprep.subr.bf16.mxu0 0
      %1250 = vmatpush1.bf16.msra.mxu0 0
      %1251 = vmatprep.subr.bf16.mxu0 0
      %1252 = vmatpush1.bf16.msra.mxu0 0
      %1253 = vmatprep.subr.bf16.mxu0 0
      %1254 = vmatpush1.bf16.msra.mxu0 0
      %1255 = vmatprep.subr.bf16.mxu0 0
      %1256 = vmatpush1.bf16.msra.mxu0 0
      %1257 = vmatprep.subr.bf16.mxu0 0
      %1258 = vmatpush1.bf16.msra.mxu0 0
      %1259 = vmatprep.subr.bf16.mxu0 %v1120
      %1260 = vmatpush1.bf16.msra.mxu0 %v1117
      %1261 = vmatprep.subr.bf16.mxu0 0
      %1262 = vmatpush2.bf16.msra.mxu0 0
      %1263 = vmatprep.subr.bf16.mxu0 0
      %1264 = vmatpush2.bf16.msra.mxu0 0
      %1265 = vmatprep.subr.bf16.mxu0 0
      %1266 = vmatpush2.bf16.msra.mxu0 0
      %1267 = vmatprep.subr.bf16.mxu0 0
      %1268 = vmatpush2.bf16.msra.mxu0 0
      %1269 = vmatprep.subr.bf16.mxu0 0
      %1270 = vmatpush2.bf16.msra.mxu0 0
      %1271 = vmatprep.subr.bf16.mxu0 0
      %1272 = vmatpush2.bf16.msra.mxu0 0
      %1273 = vmatprep.subr.bf16.mxu0 0
      %1274 = vmatpush2.bf16.msra.mxu0 0
      %1275 = vmatprep.subr.bf16.mxu0 0
      %1276 = vmatpush2.bf16.msra.mxu0 0
      %1277 = vmatprep.mubr.bf16.mxu0 0
      %1278 = vmatmul.mubr.bf16.gmra.mxu0 %v1096
      %v1279 = vpop.f32.mrf.mxu0
      %v1280 = vadd.f32 0.0, %v1279
      %v1281 = vpop.f32.mrf.mxu0
      %v1282 = vadd.f32 0.0, %v1281
      %v1283 = vpop.f32.mrf.mxu0
      %v1284 = vpop.f32.mrf.mxu0
      %1285 = vdwg.mxu0
      %v1286 = vadd.f32 %v1060, %v1157
      %v1287 = vadd.f32 %v1061, %v1159
      %v1288 = vadd.f32 %v1062, %v1198
      %v1289 = vadd.f32 %v1063, %v1200
      %v1290 = vadd.f32 %v1064, %v1239
      %v1291 = vadd.f32 %v1065, %v1241
      %v1292 = vadd.f32 %v1066, %v1280
      %v1293 = vadd.f32 %v1067, %v1282
      %v1294 = vld [vmem:[%s1068] sm:$0xff]
      %v1295 = vld [vmem:[%s1068 + $0x8] sm:$0xff]
      %v1296 = vld [vmem:[%s1068 + $0x10] sm:$0xff]
      %v1297 = vld [vmem:[%s1068 + $0x18] sm:$0xff]
      %v1298 = vld [vmem:[%s1068 + $0x20] sm:$0xf]
      %s1299 = scalar_lea.vmem %s1, 36
      %v1300 = vld [vmem:[%s1299] sm:$0xf]
      %v1306 = vunpack.c.l.b16 %v1294
      %v1307 = vunpack.c.h.b16 %v1294
      %v1308 = vunpack.c.l.b16 %v1295
      %v1309 = vunpack.c.h.b16 %v1295
      %v1310 = vunpack.c.l.b16 %v1296
      %v1311 = vunpack.c.h.b16 %v1296
      %v1312 = vunpack.c.l.b16 %v1297
      %v1313 = vunpack.c.h.b16 %v1297
      %v1314 = vunpack.c.l.b16 %v1298
      %v1315 = vpack.c.b16 %v1306, %v1306
      %v1316 = vpack.c.b16 %v1307, %v1307
      %v1317 = vpack.c.b16 %v1308, %v1308
      %v1318 = vpack.c.b16 %v1309, %v1309
      %v1319 = vpack.c.b16 %v1310, %v1310
      %v1320 = vpack.c.b16 %v1311, %v1311
      %v1321 = vpack.c.b16 %v1312, %v1312
      %v1322 = vpack.c.b16 %v1313, %v1313
      %v1323 = vpack.c.b16 %v1314, %v1314
      %1324 = vrot.lane.b32.xlu0 %v1315, 96
      %v1325 = vpop.permute.xlu0 %1324
      %1326 = vrot.lane.b32.xlu0 %v1316, 96
      %v1327 = vpop.permute.xlu0 %1326
      %1328 = vrot.lane.b32.xlu0 %v1317, 96
      %v1329 = vpop.permute.xlu0 %1328
      %1330 = vrot.lane.b32.xlu0 %v1318, 96
      %v1331 = vpop.permute.xlu0 %1330
      %1332 = vrot.lane.b32.xlu0 %v1319, 96
      %v1333 = vpop.permute.xlu0 %1332
      %1334 = vrot.lane.b32.xlu0 %v1320, 96
      %v1335 = vpop.permute.xlu0 %1334
      %1336 = vrot.lane.b32.xlu0 %v1321, 96
      %v1337 = vpop.permute.xlu0 %1336
      %1338 = vrot.lane.b32.xlu0 %v1322, 96
      %v1339 = vpop.permute.xlu0 %1338
      %1340 = vrot.lane.b32.xlu0 %v1323, 96
      %v1341 = vpop.permute.xlu0 %1340
      %v1342 = vsel %vm194, %v1325, %v1327
      %v1343 = vsel %vm194, %v1327, %v1329
      %v1344 = vsel %vm194, %v1329, %v1331
      %v1345 = vsel %vm194, %v1331, %v1333
      %v1346 = vsel %vm194, %v1333, %v1335
      %v1347 = vsel %vm194, %v1335, %v1337
      %v1348 = vsel %vm194, %v1337, %v1339
      %v1349 = vsel %vm194, %v1339, %v1341
      %v1351 = vsel %vm203, %v1300, 0
      %v1354 = vsel %vm207, %v1342, 0
      %v1357 = vsel %vm207, %v1343, 0
      %v1360 = vsel %vm207, %v1344, 0
      %v1363 = vsel %vm207, %v1345, 0
      %v1366 = vsel %vm207, %v1346, 0
      %v1369 = vsel %vm207, %v1347, 0
      %v1372 = vsel %vm207, %v1348, 0
      %v1375 = vsel %vm207, %v1349, 0
      %1377 = vmatprep.subr.bf16.mxu0 0
      %1378 = vmatpush1.bf16.msra.mxu0 0
      %1379 = vmatprep.subr.bf16.mxu0 0
      %1380 = vmatpush1.bf16.msra.mxu0 0
      %1381 = vmatprep.subr.bf16.mxu0 0
      %1382 = vmatpush1.bf16.msra.mxu0 0
      %1383 = vmatprep.subr.bf16.mxu0 0
      %1384 = vmatpush1.bf16.msra.mxu0 0
      %1385 = vmatprep.subr.bf16.mxu0 0
      %1386 = vmatpush1.bf16.msra.mxu0 0
      %1387 = vmatprep.subr.bf16.mxu0 0
      %1388 = vmatpush1.bf16.msra.mxu0 0
      %1389 = vmatprep.subr.bf16.mxu0 0
      %1390 = vmatpush1.bf16.msra.mxu0 0
      %1391 = vmatprep.subr.bf16.mxu0 %v1357
      %1392 = vmatpush1.bf16.msra.mxu0 %v1354
      %1393 = vmatprep.subr.bf16.mxu0 0
      %1394 = vmatpush2.bf16.msra.mxu0 0
      %1395 = vmatprep.subr.bf16.mxu0 0
      %1396 = vmatpush2.bf16.msra.mxu0 0
      %1397 = vmatprep.subr.bf16.mxu0 0
      %1398 = vmatpush2.bf16.msra.mxu0 0
      %1399 = vmatprep.subr.bf16.mxu0 0
      %1400 = vmatpush2.bf16.msra.mxu0 0
      %1401 = vmatprep.subr.bf16.mxu0 0
      %1402 = vmatpush2.bf16.msra.mxu0 0
      %1403 = vmatprep.subr.bf16.mxu0 0
      %1404 = vmatpush2.bf16.msra.mxu0 0
      %1405 = vmatprep.subr.bf16.mxu0 0
      %1406 = vmatpush2.bf16.msra.mxu0 0
      %1407 = vmatprep.subr.bf16.mxu0 0
      %1408 = vmatpush2.bf16.msra.mxu0 0
      %1409 = vmatprep.mubr.bf16.mxu0 0
      %1410 = vmatmul.mubr.bf16.gmra.mxu0 %v1351
      %v1411 = vpop.f32.mrf.mxu0
      %v1412 = vadd.f32 0.0, %v1411
      %v1413 = vpop.f32.mrf.mxu0
      %v1414 = vadd.f32 0.0, %v1413
      %v1415 = vpop.f32.mrf.mxu0
      %v1416 = vpop.f32.mrf.mxu0
      %1417 = vdwg.mxu0
      %1418 = vmatprep.subr.bf16.mxu0 0
      %1419 = vmatpush1.bf16.msra.mxu0 0
      %1420 = vmatprep.subr.bf16.mxu0 0
      %1421 = vmatpush1.bf16.msra.mxu0 0
      %1422 = vmatprep.subr.bf16.mxu0 0
      %1423 = vmatpush1.bf16.msra.mxu0 0
      %1424 = vmatprep.subr.bf16.mxu0 0
      %1425 = vmatpush1.bf16.msra.mxu0 0
      %1426 = vmatprep.subr.bf16.mxu0 0
      %1427 = vmatpush1.bf16.msra.mxu0 0
      %1428 = vmatprep.subr.bf16.mxu0 0
      %1429 = vmatpush1.bf16.msra.mxu0 0
      %1430 = vmatprep.subr.bf16.mxu0 0
      %1431 = vmatpush1.bf16.msra.mxu0 0
      %1432 = vmatprep.subr.bf16.mxu0 %v1363
      %1433 = vmatpush1.bf16.msra.mxu0 %v1360
      %1434 = vmatprep.subr.bf16.mxu0 0
      %1435 = vmatpush2.bf16.msra.mxu0 0
      %1436 = vmatprep.subr.bf16.mxu0 0
      %1437 = vmatpush2.bf16.msra.mxu0 0
      %1438 = vmatprep.subr.bf16.mxu0 0
      %1439 = vmatpush2.bf16.msra.mxu0 0
      %1440 = vmatprep.subr.bf16.mxu0 0
      %1441 = vmatpush2.bf16.msra.mxu0 0
      %1442 = vmatprep.subr.bf16.mxu0 0
      %1443 = vmatpush2.bf16.msra.mxu0 0
      %1444 = vmatprep.subr.bf16.mxu0 0
      %1445 = vmatpush2.bf16.msra.mxu0 0
      %1446 = vmatprep.subr.bf16.mxu0 0
      %1447 = vmatpush2.bf16.msra.mxu0 0
      %1448 = vmatprep.subr.bf16.mxu0 0
      %1449 = vmatpush2.bf16.msra.mxu0 0
      %1450 = vmatprep.mubr.bf16.mxu0 0
      %1451 = vmatmul.mubr.bf16.gmra.mxu0 %v1351
      %v1452 = vpop.f32.mrf.mxu0
      %v1453 = vadd.f32 0.0, %v1452
      %v1454 = vpop.f32.mrf.mxu0
      %v1455 = vadd.f32 0.0, %v1454
      %v1456 = vpop.f32.mrf.mxu0
      %v1457 = vpop.f32.mrf.mxu0
      %1458 = vdwg.mxu0
      %1459 = vmatprep.subr.bf16.mxu0 0
      %1460 = vmatpush1.bf16.msra.mxu0 0
      %1461 = vmatprep.subr.bf16.mxu0 0
      %1462 = vmatpush1.bf16.msra.mxu0 0
      %1463 = vmatprep.subr.bf16.mxu0 0
      %1464 = vmatpush1.bf16.msra.mxu0 0
      %1465 = vmatprep.subr.bf16.mxu0 0
      %1466 = vmatpush1.bf16.msra.mxu0 0
      %1467 = vmatprep.subr.bf16.mxu0 0
      %1468 = vmatpush1.bf16.msra.mxu0 0
      %1469 = vmatprep.subr.bf16.mxu0 0
      %1470 = vmatpush1.bf16.msra.mxu0 0
      %1471 = vmatprep.subr.bf16.mxu0 0
      %1472 = vmatpush1.bf16.msra.mxu0 0
      %1473 = vmatprep.subr.bf16.mxu0 %v1369
      %1474 = vmatpush1.bf16.msra.mxu0 %v1366
      %1475 = vmatprep.subr.bf16.mxu0 0
      %1476 = vmatpush2.bf16.msra.mxu0 0
      %1477 = vmatprep.subr.bf16.mxu0 0
      %1478 = vmatpush2.bf16.msra.mxu0 0
      %1479 = vmatprep.subr.bf16.mxu0 0
      %1480 = vmatpush2.bf16.msra.mxu0 0
      %1481 = vmatprep.subr.bf16.mxu0 0
      %1482 = vmatpush2.bf16.msra.mxu0 0
      %1483 = vmatprep.subr.bf16.mxu0 0
      %1484 = vmatpush2.bf16.msra.mxu0 0
      %1485 = vmatprep.subr.bf16.mxu0 0
      %1486 = vmatpush2.bf16.msra.mxu0 0
      %1487 = vmatprep.subr.bf16.mxu0 0
      %1488 = vmatpush2.bf16.msra.mxu0 0
      %1489 = vmatprep.subr.bf16.mxu0 0
      %1490 = vmatpush2.bf16.msra.mxu0 0
      %1491 = vmatprep.mubr.bf16.mxu0 0
      %1492 = vmatmul.mubr.bf16.gmra.mxu0 %v1351
      %v1493 = vpop.f32.mrf.mxu0
      %v1494 = vadd.f32 0.0, %v1493
      %v1495 = vpop.f32.mrf.mxu0
      %v1496 = vadd.f32 0.0, %v1495
      %v1497 = vpop.f32.mrf.mxu0
      %v1498 = vpop.f32.mrf.mxu0
      %1499 = vdwg.mxu0
      %1500 = vmatprep.subr.bf16.mxu0 0
      %1501 = vmatpush1.bf16.msra.mxu0 0
      %1502 = vmatprep.subr.bf16.mxu0 0
      %1503 = vmatpush1.bf16.msra.mxu0 0
      %1504 = vmatprep.subr.bf16.mxu0 0
      %1505 = vmatpush1.bf16.msra.mxu0 0
      %1506 = vmatprep.subr.bf16.mxu0 0
      %1507 = vmatpush1.bf16.msra.mxu0 0
      %1508 = vmatprep.subr.bf16.mxu0 0
      %1509 = vmatpush1.bf16.msra.mxu0 0
      %1510 = vmatprep.subr.bf16.mxu0 0
      %1511 = vmatpush1.bf16.msra.mxu0 0
      %1512 = vmatprep.subr.bf16.mxu0 0
      %1513 = vmatpush1.bf16.msra.mxu0 0
      %1514 = vmatprep.subr.bf16.mxu0 %v1375
      %1515 = vmatpush1.bf16.msra.mxu0 %v1372
      %1516 = vmatprep.subr.bf16.mxu0 0
      %1517 = vmatpush2.bf16.msra.mxu0 0
      %1518 = vmatprep.subr.bf16.mxu0 0
      %1519 = vmatpush2.bf16.msra.mxu0 0
      %1520 = vmatprep.subr.bf16.mxu0 0
      %1521 = vmatpush2.bf16.msra.mxu0 0
      %1522 = vmatprep.subr.bf16.mxu0 0
      %1523 = vmatpush2.bf16.msra.mxu0 0
      %1524 = vmatprep.subr.bf16.mxu0 0
      %1525 = vmatpush2.bf16.msra.mxu0 0
      %1526 = vmatprep.subr.bf16.mxu0 0
      %1527 = vmatpush2.bf16.msra.mxu0 0
      %1528 = vmatprep.subr.bf16.mxu0 0
      %1529 = vmatpush2.bf16.msra.mxu0 0
      %1530 = vmatprep.subr.bf16.mxu0 0
      %1531 = vmatpush2.bf16.msra.mxu0 0
      %1532 = vmatprep.mubr.bf16.mxu0 0
      %1533 = vmatmul.mubr.bf16.gmra.mxu0 %v1351
      %v1534 = vpop.f32.mrf.mxu0
      %v1535 = vadd.f32 0.0, %v1534
      %v1536 = vpop.f32.mrf.mxu0
      %v1537 = vadd.f32 0.0, %v1536
      %v1538 = vpop.f32.mrf.mxu0
      %v1539 = vpop.f32.mrf.mxu0
      %1540 = vdwg.mxu0
      %v1541 = vadd.f32 %v1286, %v1412
      %v1542 = vadd.f32 %v1287, %v1414
      %v1543 = vadd.f32 %v1288, %v1453
      %v1544 = vadd.f32 %v1289, %v1455
      %v1545 = vadd.f32 %v1290, %v1494
      %v1546 = vadd.f32 %v1291, %v1496
      %v1547 = vadd.f32 %v1292, %v1535
      %v1548 = vadd.f32 %v1293, %v1537
      %s1549 = scalar_lea.vmem %s138, 108
      %v1550 = vld [vmem:[%s1549] sm:$0xff]
      %v1551 = vld [vmem:[%s1549 + $0x8] sm:$0xff]
      %v1552 = vld [vmem:[%s1549 + $0x10] sm:$0xff]
      %v1553 = vld [vmem:[%s1549 + $0x18] sm:$0xff]
      %s1554 = scalar_lea.vmem %s1, 12
      %v1555 = vld [vmem:[%s1554] sm:$0xf]
      %v1560 = vunpack.c.l.b16 %v1550
      %v1561 = vunpack.c.h.b16 %v1550
      %v1562 = vunpack.c.l.b16 %v1551
      %v1563 = vunpack.c.h.b16 %v1551
      %v1564 = vunpack.c.l.b16 %v1552
      %v1565 = vunpack.c.h.b16 %v1552
      %v1566 = vunpack.c.l.b16 %v1553
      %v1567 = vunpack.c.h.b16 %v1553
      %v1568 = vpack.c.b16 %v1560, %v1560
      %v1569 = vpack.c.b16 %v1561, %v1561
      %v1570 = vpack.c.b16 %v1562, %v1562
      %v1571 = vpack.c.b16 %v1563, %v1563
      %v1572 = vpack.c.b16 %v1564, %v1564
      %v1573 = vpack.c.b16 %v1565, %v1565
      %v1574 = vpack.c.b16 %v1566, %v1566
      %v1575 = vpack.c.b16 %v1567, %v1567
      %v1577 = vsel %vm203, %v1555, 0
      %v1580 = vsel %vm207, %v1568, 0
      %v1583 = vsel %vm207, %v1569, 0
      %v1586 = vsel %vm207, %v1570, 0
      %v1589 = vsel %vm207, %v1571, 0
      %v1592 = vsel %vm207, %v1572, 0
      %v1595 = vsel %vm207, %v1573, 0
      %v1598 = vsel %vm207, %v1574, 0
      %v1601 = vsel %vm207, %v1575, 0
      %1603 = vmatprep.subr.bf16.mxu0 0
      %1604 = vmatpush1.bf16.msra.mxu0 0
      %1605 = vmatprep.subr.bf16.mxu0 0
      %1606 = vmatpush1.bf16.msra.mxu0 0
      %1607 = vmatprep.subr.bf16.mxu0 0
      %1608 = vmatpush1.bf16.msra.mxu0 0
      %1609 = vmatprep.subr.bf16.mxu0 0
      %1610 = vmatpush1.bf16.msra.mxu0 0
      %1611 = vmatprep.subr.bf16.mxu0 0
      %1612 = vmatpush1.bf16.msra.mxu0 0
      %1613 = vmatprep.subr.bf16.mxu0 0
      %1614 = vmatpush1.bf16.msra.mxu0 0
      %1615 = vmatprep.subr.bf16.mxu0 0
      %1616 = vmatpush1.bf16.msra.mxu0 0
      %1617 = vmatprep.subr.bf16.mxu0 %v1583
      %1618 = vmatpush1.bf16.msra.mxu0 %v1580
      %1619 = vmatprep.subr.bf16.mxu0 0
      %1620 = vmatpush2.bf16.msra.mxu0 0
      %1621 = vmatprep.subr.bf16.mxu0 0
      %1622 = vmatpush2.bf16.msra.mxu0 0
      %1623 = vmatprep.subr.bf16.mxu0 0
      %1624 = vmatpush2.bf16.msra.mxu0 0
      %1625 = vmatprep.subr.bf16.mxu0 0
      %1626 = vmatpush2.bf16.msra.mxu0 0
      %1627 = vmatprep.subr.bf16.mxu0 0
      %1628 = vmatpush2.bf16.msra.mxu0 0
      %1629 = vmatprep.subr.bf16.mxu0 0
      %1630 = vmatpush2.bf16.msra.mxu0 0
      %1631 = vmatprep.subr.bf16.mxu0 0
      %1632 = vmatpush2.bf16.msra.mxu0 0
      %1633 = vmatprep.subr.bf16.mxu0 0
      %1634 = vmatpush2.bf16.msra.mxu0 0
      %1635 = vmatprep.mubr.bf16.mxu0 0
      %1636 = vmatmul.mubr.bf16.gmra.mxu0 %v1577
      %v1637 = vpop.f32.mrf.mxu0
      %v1638 = vadd.f32 0.0, %v1637
      %v1639 = vpop.f32.mrf.mxu0
      %v1640 = vadd.f32 0.0, %v1639
      %v1641 = vpop.f32.mrf.mxu0
      %v1642 = vpop.f32.mrf.mxu0
      %1643 = vdwg.mxu0
      %1644 = vmatprep.subr.bf16.mxu0 0
      %1645 = vmatpush1.bf16.msra.mxu0 0
      %1646 = vmatprep.subr.bf16.mxu0 0
      %1647 = vmatpush1.bf16.msra.mxu0 0
      %1648 = vmatprep.subr.bf16.mxu0 0
      %1649 = vmatpush1.bf16.msra.mxu0 0
      %1650 = vmatprep.subr.bf16.mxu0 0
      %1651 = vmatpush1.bf16.msra.mxu0 0
      %1652 = vmatprep.subr.bf16.mxu0 0
      %1653 = vmatpush1.bf16.msra.mxu0 0
      %1654 = vmatprep.subr.bf16.mxu0 0
      %1655 = vmatpush1.bf16.msra.mxu0 0
      %1656 = vmatprep.subr.bf16.mxu0 0
      %1657 = vmatpush1.bf16.msra.mxu0 0
      %1658 = vmatprep.subr.bf16.mxu0 %v1589
      %1659 = vmatpush1.bf16.msra.mxu0 %v1586
      %1660 = vmatprep.subr.bf16.mxu0 0
      %1661 = vmatpush2.bf16.msra.mxu0 0
      %1662 = vmatprep.subr.bf16.mxu0 0
      %1663 = vmatpush2.bf16.msra.mxu0 0
      %1664 = vmatprep.subr.bf16.mxu0 0
      %1665 = vmatpush2.bf16.msra.mxu0 0
      %1666 = vmatprep.subr.bf16.mxu0 0
      %1667 = vmatpush2.bf16.msra.mxu0 0
      %1668 = vmatprep.subr.bf16.mxu0 0
      %1669 = vmatpush2.bf16.msra.mxu0 0
      %1670 = vmatprep.subr.bf16.mxu0 0
      %1671 = vmatpush2.bf16.msra.mxu0 0
      %1672 = vmatprep.subr.bf16.mxu0 0
      %1673 = vmatpush2.bf16.msra.mxu0 0
      %1674 = vmatprep.subr.bf16.mxu0 0
      %1675 = vmatpush2.bf16.msra.mxu0 0
      %1676 = vmatprep.mubr.bf16.mxu0 0
      %1677 = vmatmul.mubr.bf16.gmra.mxu0 %v1577
      %v1678 = vpop.f32.mrf.mxu0
      %v1679 = vadd.f32 0.0, %v1678
      %v1680 = vpop.f32.mrf.mxu0
      %v1681 = vadd.f32 0.0, %v1680
      %v1682 = vpop.f32.mrf.mxu0
      %v1683 = vpop.f32.mrf.mxu0
      %1684 = vdwg.mxu0
      %1685 = vmatprep.subr.bf16.mxu0 0
      %1686 = vmatpush1.bf16.msra.mxu0 0
      %1687 = vmatprep.subr.bf16.mxu0 0
      %1688 = vmatpush1.bf16.msra.mxu0 0
      %1689 = vmatprep.subr.bf16.mxu0 0
      %1690 = vmatpush1.bf16.msra.mxu0 0
      %1691 = vmatprep.subr.bf16.mxu0 0
      %1692 = vmatpush1.bf16.msra.mxu0 0
      %1693 = vmatprep.subr.bf16.mxu0 0
      %1694 = vmatpush1.bf16.msra.mxu0 0
      %1695 = vmatprep.subr.bf16.mxu0 0
      %1696 = vmatpush1.bf16.msra.mxu0 0
      %1697 = vmatprep.subr.bf16.mxu0 0
      %1698 = vmatpush1.bf16.msra.mxu0 0
      %1699 = vmatprep.subr.bf16.mxu0 %v1595
      %1700 = vmatpush1.bf16.msra.mxu0 %v1592
      %1701 = vmatprep.subr.bf16.mxu0 0
      %1702 = vmatpush2.bf16.msra.mxu0 0
      %1703 = vmatprep.subr.bf16.mxu0 0
      %1704 = vmatpush2.bf16.msra.mxu0 0
      %1705 = vmatprep.subr.bf16.mxu0 0
      %1706 = vmatpush2.bf16.msra.mxu0 0
      %1707 = vmatprep.subr.bf16.mxu0 0
      %1708 = vmatpush2.bf16.msra.mxu0 0
      %1709 = vmatprep.subr.bf16.mxu0 0
      %1710 = vmatpush2.bf16.msra.mxu0 0
      %1711 = vmatprep.subr.bf16.mxu0 0
      %1712 = vmatpush2.bf16.msra.mxu0 0
      %1713 = vmatprep.subr.bf16.mxu0 0
      %1714 = vmatpush2.bf16.msra.mxu0 0
      %1715 = vmatprep.subr.bf16.mxu0 0
      %1716 = vmatpush2.bf16.msra.mxu0 0
      %1717 = vmatprep.mubr.bf16.mxu0 0
      %1718 = vmatmul.mubr.bf16.gmra.mxu0 %v1577
      %v1719 = vpop.f32.mrf.mxu0
      %v1720 = vadd.f32 0.0, %v1719
      %v1721 = vpop.f32.mrf.mxu0
      %v1722 = vadd.f32 0.0, %v1721
      %v1723 = vpop.f32.mrf.mxu0
      %v1724 = vpop.f32.mrf.mxu0
      %1725 = vdwg.mxu0
      %1726 = vmatprep.subr.bf16.mxu0 0
      %1727 = vmatpush1.bf16.msra.mxu0 0
      %1728 = vmatprep.subr.bf16.mxu0 0
      %1729 = vmatpush1.bf16.msra.mxu0 0
      %1730 = vmatprep.subr.bf16.mxu0 0
      %1731 = vmatpush1.bf16.msra.mxu0 0
      %1732 = vmatprep.subr.bf16.mxu0 0
      %1733 = vmatpush1.bf16.msra.mxu0 0
      %1734 = vmatprep.subr.bf16.mxu0 0
      %1735 = vmatpush1.bf16.msra.mxu0 0
      %1736 = vmatprep.subr.bf16.mxu0 0
      %1737 = vmatpush1.bf16.msra.mxu0 0
      %1738 = vmatprep.subr.bf16.mxu0 0
      %1739 = vmatpush1.bf16.msra.mxu0 0
      %1740 = vmatprep.subr.bf16.mxu0 %v1601
      %1741 = vmatpush1.bf16.msra.mxu0 %v1598
      %1742 = vmatprep.subr.bf16.mxu0 0
      %1743 = vmatpush2.bf16.msra.mxu0 0
      %1744 = vmatprep.subr.bf16.mxu0 0
      %1745 = vmatpush2.bf16.msra.mxu0 0
      %1746 = vmatprep.subr.bf16.mxu0 0
      %1747 = vmatpush2.bf16.msra.mxu0 0
      %1748 = vmatprep.subr.bf16.mxu0 0
      %1749 = vmatpush2.bf16.msra.mxu0 0
      %1750 = vmatprep.subr.bf16.mxu0 0
      %1751 = vmatpush2.bf16.msra.mxu0 0
      %1752 = vmatprep.subr.bf16.mxu0 0
      %1753 = vmatpush2.bf16.msra.mxu0 0
      %1754 = vmatprep.subr.bf16.mxu0 0
      %1755 = vmatpush2.bf16.msra.mxu0 0
      %1756 = vmatprep.subr.bf16.mxu0 0
      %1757 = vmatpush2.bf16.msra.mxu0 0
      %1758 = vmatprep.mubr.bf16.mxu0 0
      %1759 = vmatmul.mubr.bf16.gmra.mxu0 %v1577
      %v1760 = vpop.f32.mrf.mxu0
      %v1761 = vadd.f32 0.0, %v1760
      %v1762 = vpop.f32.mrf.mxu0
      %v1763 = vadd.f32 0.0, %v1762
      %v1764 = vpop.f32.mrf.mxu0
      %v1765 = vpop.f32.mrf.mxu0
      %1766 = vdwg.mxu0
      %v1767 = vadd.f32 %v1541, %v1638
      %v1768 = vadd.f32 %v1542, %v1640
      %v1769 = vadd.f32 %v1543, %v1679
      %v1770 = vadd.f32 %v1544, %v1681
      %v1771 = vadd.f32 %v1545, %v1720
      %v1772 = vadd.f32 %v1546, %v1722
      %v1773 = vadd.f32 %v1547, %v1761
      %v1774 = vadd.f32 %v1548, %v1763
      %v1775 = vld [vmem:[%s1549] sm:$0xff]
      %v1776 = vld [vmem:[%s1549 + $0x8] sm:$0xff]
      %v1777 = vld [vmem:[%s1549 + $0x10] sm:$0xff]
      %v1778 = vld [vmem:[%s1549 + $0x18] sm:$0xff]
      %v1779 = vld [vmem:[%s1549 + $0x20] sm:$0xf]
      %s1780 = scalar_lea.vmem %s1, 44
      %v1781 = vld [vmem:[%s1780] sm:$0xf]
      %v1787 = vunpack.c.l.b16 %v1775
      %v1788 = vunpack.c.h.b16 %v1775
      %v1789 = vunpack.c.l.b16 %v1776
      %v1790 = vunpack.c.h.b16 %v1776
      %v1791 = vunpack.c.l.b16 %v1777
      %v1792 = vunpack.c.h.b16 %v1777
      %v1793 = vunpack.c.l.b16 %v1778
      %v1794 = vunpack.c.h.b16 %v1778
      %v1795 = vunpack.c.l.b16 %v1779
      %v1796 = vpack.c.b16 %v1787, %v1787
      %v1797 = vpack.c.b16 %v1788, %v1788
      %v1798 = vpack.c.b16 %v1789, %v1789
      %v1799 = vpack.c.b16 %v1790, %v1790
      %v1800 = vpack.c.b16 %v1791, %v1791
      %v1801 = vpack.c.b16 %v1792, %v1792
      %v1802 = vpack.c.b16 %v1793, %v1793
      %v1803 = vpack.c.b16 %v1794, %v1794
      %v1804 = vpack.c.b16 %v1795, %v1795
      %1805 = vrot.lane.b32.xlu0 %v1796, 96
      %v1806 = vpop.permute.xlu0 %1805
      %1807 = vrot.lane.b32.xlu0 %v1797, 96
      %v1808 = vpop.permute.xlu0 %1807
      %1809 = vrot.lane.b32.xlu0 %v1798, 96
      %v1810 = vpop.permute.xlu0 %1809
      %1811 = vrot.lane.b32.xlu0 %v1799, 96
      %v1812 = vpop.permute.xlu0 %1811
      %1813 = vrot.lane.b32.xlu0 %v1800, 96
      %v1814 = vpop.permute.xlu0 %1813
      %1815 = vrot.lane.b32.xlu0 %v1801, 96
      %v1816 = vpop.permute.xlu0 %1815
      %1817 = vrot.lane.b32.xlu0 %v1802, 96
      %v1818 = vpop.permute.xlu0 %1817
      %1819 = vrot.lane.b32.xlu0 %v1803, 96
      %v1820 = vpop.permute.xlu0 %1819
      %1821 = vrot.lane.b32.xlu0 %v1804, 96
      %v1822 = vpop.permute.xlu0 %1821
      %v1823 = vsel %vm194, %v1806, %v1808
      %v1824 = vsel %vm194, %v1808, %v1810
      %v1825 = vsel %vm194, %v1810, %v1812
      %v1826 = vsel %vm194, %v1812, %v1814
      %v1827 = vsel %vm194, %v1814, %v1816
      %v1828 = vsel %vm194, %v1816, %v1818
      %v1829 = vsel %vm194, %v1818, %v1820
      %v1830 = vsel %vm194, %v1820, %v1822
      %v1832 = vsel %vm203, %v1781, 0
      %v1835 = vsel %vm207, %v1823, 0
      %v1838 = vsel %vm207, %v1824, 0
      %v1841 = vsel %vm207, %v1825, 0
      %v1844 = vsel %vm207, %v1826, 0
      %v1847 = vsel %vm207, %v1827, 0
      %v1850 = vsel %vm207, %v1828, 0
      %v1853 = vsel %vm207, %v1829, 0
      %v1856 = vsel %vm207, %v1830, 0
      %1858 = vmatprep.subr.bf16.mxu0 0
      %1859 = vmatpush1.bf16.msra.mxu0 0
      %1860 = vmatprep.subr.bf16.mxu0 0
      %1861 = vmatpush1.bf16.msra.mxu0 0
      %1862 = vmatprep.subr.bf16.mxu0 0
      %1863 = vmatpush1.bf16.msra.mxu0 0
      %1864 = vmatprep.subr.bf16.mxu0 0
      %1865 = vmatpush1.bf16.msra.mxu0 0
      %1866 = vmatprep.subr.bf16.mxu0 0
      %1867 = vmatpush1.bf16.msra.mxu0 0
      %1868 = vmatprep.subr.bf16.mxu0 0
      %1869 = vmatpush1.bf16.msra.mxu0 0
      %1870 = vmatprep.subr.bf16.mxu0 0
      %1871 = vmatpush1.bf16.msra.mxu0 0
      %1872 = vmatprep.subr.bf16.mxu0 %v1838
      %1873 = vmatpush1.bf16.msra.mxu0 %v1835
      %1874 = vmatprep.subr.bf16.mxu0 0
      %1875 = vmatpush2.bf16.msra.mxu0 0
      %1876 = vmatprep.subr.bf16.mxu0 0
      %1877 = vmatpush2.bf16.msra.mxu0 0
      %1878 = vmatprep.subr.bf16.mxu0 0
      %1879 = vmatpush2.bf16.msra.mxu0 0
      %1880 = vmatprep.subr.bf16.mxu0 0
      %1881 = vmatpush2.bf16.msra.mxu0 0
      %1882 = vmatprep.subr.bf16.mxu0 0
      %1883 = vmatpush2.bf16.msra.mxu0 0
      %1884 = vmatprep.subr.bf16.mxu0 0
      %1885 = vmatpush2.bf16.msra.mxu0 0
      %1886 = vmatprep.subr.bf16.mxu0 0
      %1887 = vmatpush2.bf16.msra.mxu0 0
      %1888 = vmatprep.subr.bf16.mxu0 0
      %1889 = vmatpush2.bf16.msra.mxu0 0
      %1890 = vmatprep.mubr.bf16.mxu0 0
      %1891 = vmatmul.mubr.bf16.gmra.mxu0 %v1832
      %v1892 = vpop.f32.mrf.mxu0
      %v1893 = vadd.f32 0.0, %v1892
      %v1894 = vpop.f32.mrf.mxu0
      %v1895 = vadd.f32 0.0, %v1894
      %v1896 = vpop.f32.mrf.mxu0
      %v1897 = vpop.f32.mrf.mxu0
      %1898 = vdwg.mxu0
      %1899 = vmatprep.subr.bf16.mxu0 0
      %1900 = vmatpush1.bf16.msra.mxu0 0
      %1901 = vmatprep.subr.bf16.mxu0 0
      %1902 = vmatpush1.bf16.msra.mxu0 0
      %1903 = vmatprep.subr.bf16.mxu0 0
      %1904 = vmatpush1.bf16.msra.mxu0 0
      %1905 = vmatprep.subr.bf16.mxu0 0
      %1906 = vmatpush1.bf16.msra.mxu0 0
      %1907 = vmatprep.subr.bf16.mxu0 0
      %1908 = vmatpush1.bf16.msra.mxu0 0
      %1909 = vmatprep.subr.bf16.mxu0 0
      %1910 = vmatpush1.bf16.msra.mxu0 0
      %1911 = vmatprep.subr.bf16.mxu0 0
      %1912 = vmatpush1.bf16.msra.mxu0 0
      %1913 = vmatprep.subr.bf16.mxu0 %v1844
      %1914 = vmatpush1.bf16.msra.mxu0 %v1841
      %1915 = vmatprep.subr.bf16.mxu0 0
      %1916 = vmatpush2.bf16.msra.mxu0 0
      %1917 = vmatprep.subr.bf16.mxu0 0
      %1918 = vmatpush2.bf16.msra.mxu0 0
      %1919 = vmatprep.subr.bf16.mxu0 0
      %1920 = vmatpush2.bf16.msra.mxu0 0
      %1921 = vmatprep.subr.bf16.mxu0 0
      %1922 = vmatpush2.bf16.msra.mxu0 0
      %1923 = vmatprep.subr.bf16.mxu0 0
      %1924 = vmatpush2.bf16.msra.mxu0 0
      %1925 = vmatprep.subr.bf16.mxu0 0
      %1926 = vmatpush2.bf16.msra.mxu0 0
      %1927 = vmatprep.subr.bf16.mxu0 0
      %1928 = vmatpush2.bf16.msra.mxu0 0
      %1929 = vmatprep.subr.bf16.mxu0 0
      %1930 = vmatpush2.bf16.msra.mxu0 0
      %1931 = vmatprep.mubr.bf16.mxu0 0
      %1932 = vmatmul.mubr.bf16.gmra.mxu0 %v1832
      %v1933 = vpop.f32.mrf.mxu0
      %v1934 = vadd.f32 0.0, %v1933
      %v1935 = vpop.f32.mrf.mxu0
      %v1936 = vadd.f32 0.0, %v1935
      %v1937 = vpop.f32.mrf.mxu0
      %v1938 = vpop.f32.mrf.mxu0
      %1939 = vdwg.mxu0
      %1940 = vmatprep.subr.bf16.mxu0 0
      %1941 = vmatpush1.bf16.msra.mxu0 0
      %1942 = vmatprep.subr.bf16.mxu0 0
      %1943 = vmatpush1.bf16.msra.mxu0 0
      %1944 = vmatprep.subr.bf16.mxu0 0
      %1945 = vmatpush1.bf16.msra.mxu0 0
      %1946 = vmatprep.subr.bf16.mxu0 0
      %1947 = vmatpush1.bf16.msra.mxu0 0
      %1948 = vmatprep.subr.bf16.mxu0 0
      %1949 = vmatpush1.bf16.msra.mxu0 0
      %1950 = vmatprep.subr.bf16.mxu0 0
      %1951 = vmatpush1.bf16.msra.mxu0 0
      %1952 = vmatprep.subr.bf16.mxu0 0
      %1953 = vmatpush1.bf16.msra.mxu0 0
      %1954 = vmatprep.subr.bf16.mxu0 %v1850
      %1955 = vmatpush1.bf16.msra.mxu0 %v1847
      %1956 = vmatprep.subr.bf16.mxu0 0
      %1957 = vmatpush2.bf16.msra.mxu0 0
      %1958 = vmatprep.subr.bf16.mxu0 0
      %1959 = vmatpush2.bf16.msra.mxu0 0
      %1960 = vmatprep.subr.bf16.mxu0 0
      %1961 = vmatpush2.bf16.msra.mxu0 0
      %1962 = vmatprep.subr.bf16.mxu0 0
      %1963 = vmatpush2.bf16.msra.mxu0 0
      %1964 = vmatprep.subr.bf16.mxu0 0
      %1965 = vmatpush2.bf16.msra.mxu0 0
      %1966 = vmatprep.subr.bf16.mxu0 0
      %1967 = vmatpush2.bf16.msra.mxu0 0
      %1968 = vmatprep.subr.bf16.mxu0 0
      %1969 = vmatpush2.bf16.msra.mxu0 0
      %1970 = vmatprep.subr.bf16.mxu0 0
      %1971 = vmatpush2.bf16.msra.mxu0 0
      %1972 = vmatprep.mubr.bf16.mxu0 0
      %1973 = vmatmul.mubr.bf16.gmra.mxu0 %v1832
      %v1974 = vpop.f32.mrf.mxu0
      %v1975 = vadd.f32 0.0, %v1974
      %v1976 = vpop.f32.mrf.mxu0
      %v1977 = vadd.f32 0.0, %v1976
      %v1978 = vpop.f32.mrf.mxu0
      %v1979 = vpop.f32.mrf.mxu0
      %1980 = vdwg.mxu0
      %1981 = vmatprep.subr.bf16.mxu0 0
      %1982 = vmatpush1.bf16.msra.mxu0 0
      %1983 = vmatprep.subr.bf16.mxu0 0
      %1984 = vmatpush1.bf16.msra.mxu0 0
      %1985 = vmatprep.subr.bf16.mxu0 0
      %1986 = vmatpush1.bf16.msra.mxu0 0
      %1987 = vmatprep.subr.bf16.mxu0 0
      %1988 = vmatpush1.bf16.msra.mxu0 0
      %1989 = vmatprep.subr.bf16.mxu0 0
      %1990 = vmatpush1.bf16.msra.mxu0 0
      %1991 = vmatprep.subr.bf16.mxu0 0
      %1992 = vmatpush1.bf16.msra.mxu0 0
      %1993 = vmatprep.subr.bf16.mxu0 0
      %1994 = vmatpush1.bf16.msra.mxu0 0
      %1995 = vmatprep.subr.bf16.mxu0 %v1856
      %1996 = vmatpush1.bf16.msra.mxu0 %v1853
      %1997 = vmatprep.subr.bf16.mxu0 0
      %1998 = vmatpush2.bf16.msra.mxu0 0
      %1999 = vmatprep.subr.bf16.mxu0 0
      %2000 = vmatpush2.bf16.msra.mxu0 0
      %2001 = vmatprep.subr.bf16.mxu0 0
      %2002 = vmatpush2.bf16.msra.mxu0 0
      %2003 = vmatprep.subr.bf16.mxu0 0
      %2004 = vmatpush2.bf16.msra.mxu0 0
      %2005 = vmatprep.subr.bf16.mxu0 0
      %2006 = vmatpush2.bf16.msra.mxu0 0
      %2007 = vmatprep.subr.bf16.mxu0 0
      %2008 = vmatpush2.bf16.msra.mxu0 0
      %2009 = vmatprep.subr.bf16.mxu0 0
      %2010 = vmatpush2.bf16.msra.mxu0 0
      %2011 = vmatprep.subr.bf16.mxu0 0
      %2012 = vmatpush2.bf16.msra.mxu0 0
      %2013 = vmatprep.mubr.bf16.mxu0 0
      %2014 = vmatmul.mubr.bf16.gmra.mxu0 %v1832
      %v2015 = vpop.f32.mrf.mxu0
      %v2016 = vadd.f32 0.0, %v2015
      %v2017 = vpop.f32.mrf.mxu0
      %v2018 = vadd.f32 0.0, %v2017
      %v2019 = vpop.f32.mrf.mxu0
      %v2020 = vpop.f32.mrf.mxu0
      %2021 = vdwg.mxu0
      %v2022 = vadd.f32 %v1767, %v1893
      %v2023 = vadd.f32 %v1768, %v1895
      %v2024 = vadd.f32 %v1769, %v1934
      %v2025 = vadd.f32 %v1770, %v1936
      %v2026 = vadd.f32 %v1771, %v1975
      %v2027 = vadd.f32 %v1772, %v1977
      %v2028 = vadd.f32 %v1773, %v2016
      %v2029 = vadd.f32 %v1774, %v2018
      %s2030 = scalar_lea.vmem %s138, 144
      %v2031 = vld [vmem:[%s2030] sm:$0xff]
      %v2032 = vld [vmem:[%s2030 + $0x8] sm:$0xff]
      %v2033 = vld [vmem:[%s2030 + $0x10] sm:$0xff]
      %v2034 = vld [vmem:[%s2030 + $0x18] sm:$0xff]
      %s2035 = scalar_lea.vmem %s1, 16
      %v2036 = vld [vmem:[%s2035] sm:$0xf]
      %v2041 = vunpack.c.l.b16 %v2031
      %v2042 = vunpack.c.h.b16 %v2031
      %v2043 = vunpack.c.l.b16 %v2032
      %v2044 = vunpack.c.h.b16 %v2032
      %v2045 = vunpack.c.l.b16 %v2033
      %v2046 = vunpack.c.h.b16 %v2033
      %v2047 = vunpack.c.l.b16 %v2034
      %v2048 = vunpack.c.h.b16 %v2034
      %v2049 = vpack.c.b16 %v2041, %v2041
      %v2050 = vpack.c.b16 %v2042, %v2042
      %v2051 = vpack.c.b16 %v2043, %v2043
      %v2052 = vpack.c.b16 %v2044, %v2044
      %v2053 = vpack.c.b16 %v2045, %v2045
      %v2054 = vpack.c.b16 %v2046, %v2046
      %v2055 = vpack.c.b16 %v2047, %v2047
      %v2056 = vpack.c.b16 %v2048, %v2048
      %v2058 = vsel %vm203, %v2036, 0
      %v2061 = vsel %vm207, %v2049, 0
      %v2064 = vsel %vm207, %v2050, 0
      %v2067 = vsel %vm207, %v2051, 0
      %v2070 = vsel %vm207, %v2052, 0
      %v2073 = vsel %vm207, %v2053, 0
      %v2076 = vsel %vm207, %v2054, 0
      %v2079 = vsel %vm207, %v2055, 0
      %v2082 = vsel %vm207, %v2056, 0
      %2084 = vmatprep.subr.bf16.mxu0 0
      %2085 = vmatpush1.bf16.msra.mxu0 0
      %2086 = vmatprep.subr.bf16.mxu0 0
      %2087 = vmatpush1.bf16.msra.mxu0 0
      %2088 = vmatprep.subr.bf16.mxu0 0
      %2089 = vmatpush1.bf16.msra.mxu0 0
      %2090 = vmatprep.subr.bf16.mxu0 0
      %2091 = vmatpush1.bf16.msra.mxu0 0
      %2092 = vmatprep.subr.bf16.mxu0 0
      %2093 = vmatpush1.bf16.msra.mxu0 0
      %2094 = vmatprep.subr.bf16.mxu0 0
      %2095 = vmatpush1.bf16.msra.mxu0 0
      %2096 = vmatprep.subr.bf16.mxu0 0
      %2097 = vmatpush1.bf16.msra.mxu0 0
      %2098 = vmatprep.subr.bf16.mxu0 %v2064
      %2099 = vmatpush1.bf16.msra.mxu0 %v2061
      %2100 = vmatprep.subr.bf16.mxu0 0
      %2101 = vmatpush2.bf16.msra.mxu0 0
      %2102 = vmatprep.subr.bf16.mxu0 0
      %2103 = vmatpush2.bf16.msra.mxu0 0
      %2104 = vmatprep.subr.bf16.mxu0 0
      %2105 = vmatpush2.bf16.msra.mxu0 0
      %2106 = vmatprep.subr.bf16.mxu0 0
      %2107 = vmatpush2.bf16.msra.mxu0 0
      %2108 = vmatprep.subr.bf16.mxu0 0
      %2109 = vmatpush2.bf16.msra.mxu0 0
      %2110 = vmatprep.subr.bf16.mxu0 0
      %2111 = vmatpush2.bf16.msra.mxu0 0
      %2112 = vmatprep.subr.bf16.mxu0 0
      %2113 = vmatpush2.bf16.msra.mxu0 0
      %2114 = vmatprep.subr.bf16.mxu0 0
      %2115 = vmatpush2.bf16.msra.mxu0 0
      %2116 = vmatprep.mubr.bf16.mxu0 0
      %2117 = vmatmul.mubr.bf16.gmra.mxu0 %v2058
      %v2118 = vpop.f32.mrf.mxu0
      %v2119 = vadd.f32 0.0, %v2118
      %v2120 = vpop.f32.mrf.mxu0
      %v2121 = vadd.f32 0.0, %v2120
      %v2122 = vpop.f32.mrf.mxu0
      %v2123 = vpop.f32.mrf.mxu0
      %2124 = vdwg.mxu0
      %2125 = vmatprep.subr.bf16.mxu0 0
      %2126 = vmatpush1.bf16.msra.mxu0 0
      %2127 = vmatprep.subr.bf16.mxu0 0
      %2128 = vmatpush1.bf16.msra.mxu0 0
      %2129 = vmatprep.subr.bf16.mxu0 0
      %2130 = vmatpush1.bf16.msra.mxu0 0
      %2131 = vmatprep.subr.bf16.mxu0 0
      %2132 = vmatpush1.bf16.msra.mxu0 0
      %2133 = vmatprep.subr.bf16.mxu0 0
      %2134 = vmatpush1.bf16.msra.mxu0 0
      %2135 = vmatprep.subr.bf16.mxu0 0
      %2136 = vmatpush1.bf16.msra.mxu0 0
      %2137 = vmatprep.subr.bf16.mxu0 0
      %2138 = vmatpush1.bf16.msra.mxu0 0
      %2139 = vmatprep.subr.bf16.mxu0 %v2070
      %2140 = vmatpush1.bf16.msra.mxu0 %v2067
      %2141 = vmatprep.subr.bf16.mxu0 0
      %2142 = vmatpush2.bf16.msra.mxu0 0
      %2143 = vmatprep.subr.bf16.mxu0 0
      %2144 = vmatpush2.bf16.msra.mxu0 0
      %2145 = vmatprep.subr.bf16.mxu0 0
      %2146 = vmatpush2.bf16.msra.mxu0 0
      %2147 = vmatprep.subr.bf16.mxu0 0
      %2148 = vmatpush2.bf16.msra.mxu0 0
      %2149 = vmatprep.subr.bf16.mxu0 0
      %2150 = vmatpush2.bf16.msra.mxu0 0
      %2151 = vmatprep.subr.bf16.mxu0 0
      %2152 = vmatpush2.bf16.msra.mxu0 0
      %2153 = vmatprep.subr.bf16.mxu0 0
      %2154 = vmatpush2.bf16.msra.mxu0 0
      %2155 = vmatprep.subr.bf16.mxu0 0
      %2156 = vmatpush2.bf16.msra.mxu0 0
      %2157 = vmatprep.mubr.bf16.mxu0 0
      %2158 = vmatmul.mubr.bf16.gmra.mxu0 %v2058
      %v2159 = vpop.f32.mrf.mxu0
      %v2160 = vadd.f32 0.0, %v2159
      %v2161 = vpop.f32.mrf.mxu0
      %v2162 = vadd.f32 0.0, %v2161
      %v2163 = vpop.f32.mrf.mxu0
      %v2164 = vpop.f32.mrf.mxu0
      %2165 = vdwg.mxu0
      %2166 = vmatprep.subr.bf16.mxu0 0
      %2167 = vmatpush1.bf16.msra.mxu0 0
      %2168 = vmatprep.subr.bf16.mxu0 0
      %2169 = vmatpush1.bf16.msra.mxu0 0
      %2170 = vmatprep.subr.bf16.mxu0 0
      %2171 = vmatpush1.bf16.msra.mxu0 0
      %2172 = vmatprep.subr.bf16.mxu0 0
      %2173 = vmatpush1.bf16.msra.mxu0 0
      %2174 = vmatprep.subr.bf16.mxu0 0
      %2175 = vmatpush1.bf16.msra.mxu0 0
      %2176 = vmatprep.subr.bf16.mxu0 0
      %2177 = vmatpush1.bf16.msra.mxu0 0
      %2178 = vmatprep.subr.bf16.mxu0 0
      %2179 = vmatpush1.bf16.msra.mxu0 0
      %2180 = vmatprep.subr.bf16.mxu0 %v2076
      %2181 = vmatpush1.bf16.msra.mxu0 %v2073
      %2182 = vmatprep.subr.bf16.mxu0 0
      %2183 = vmatpush2.bf16.msra.mxu0 0
      %2184 = vmatprep.subr.bf16.mxu0 0
      %2185 = vmatpush2.bf16.msra.mxu0 0
      %2186 = vmatprep.subr.bf16.mxu0 0
      %2187 = vmatpush2.bf16.msra.mxu0 0
      %2188 = vmatprep.subr.bf16.mxu0 0
      %2189 = vmatpush2.bf16.msra.mxu0 0
      %2190 = vmatprep.subr.bf16.mxu0 0
      %2191 = vmatpush2.bf16.msra.mxu0 0
      %2192 = vmatprep.subr.bf16.mxu0 0
      %2193 = vmatpush2.bf16.msra.mxu0 0
      %2194 = vmatprep.subr.bf16.mxu0 0
      %2195 = vmatpush2.bf16.msra.mxu0 0
      %2196 = vmatprep.subr.bf16.mxu0 0
      %2197 = vmatpush2.bf16.msra.mxu0 0
      %2198 = vmatprep.mubr.bf16.mxu0 0
      %2199 = vmatmul.mubr.bf16.gmra.mxu0 %v2058
      %v2200 = vpop.f32.mrf.mxu0
      %v2201 = vadd.f32 0.0, %v2200
      %v2202 = vpop.f32.mrf.mxu0
      %v2203 = vadd.f32 0.0, %v2202
      %v2204 = vpop.f32.mrf.mxu0
      %v2205 = vpop.f32.mrf.mxu0
      %2206 = vdwg.mxu0
      %2207 = vmatprep.subr.bf16.mxu0 0
      %2208 = vmatpush1.bf16.msra.mxu0 0
      %2209 = vmatprep.subr.bf16.mxu0 0
      %2210 = vmatpush1.bf16.msra.mxu0 0
      %2211 = vmatprep.subr.bf16.mxu0 0
      %2212 = vmatpush1.bf16.msra.mxu0 0
      %2213 = vmatprep.subr.bf16.mxu0 0
      %2214 = vmatpush1.bf16.msra.mxu0 0
      %2215 = vmatprep.subr.bf16.mxu0 0
      %2216 = vmatpush1.bf16.msra.mxu0 0
      %2217 = vmatprep.subr.bf16.mxu0 0
      %2218 = vmatpush1.bf16.msra.mxu0 0
      %2219 = vmatprep.subr.bf16.mxu0 0
      %2220 = vmatpush1.bf16.msra.mxu0 0
      %2221 = vmatprep.subr.bf16.mxu0 %v2082
      %2222 = vmatpush1.bf16.msra.mxu0 %v2079
      %2223 = vmatprep.subr.bf16.mxu0 0
      %2224 = vmatpush2.bf16.msra.mxu0 0
      %2225 = vmatprep.subr.bf16.mxu0 0
      %2226 = vmatpush2.bf16.msra.mxu0 0
      %2227 = vmatprep.subr.bf16.mxu0 0
      %2228 = vmatpush2.bf16.msra.mxu0 0
      %2229 = vmatprep.subr.bf16.mxu0 0
      %2230 = vmatpush2.bf16.msra.mxu0 0
      %2231 = vmatprep.subr.bf16.mxu0 0
      %2232 = vmatpush2.bf16.msra.mxu0 0
      %2233 = vmatprep.subr.bf16.mxu0 0
      %2234 = vmatpush2.bf16.msra.mxu0 0
      %2235 = vmatprep.subr.bf16.mxu0 0
      %2236 = vmatpush2.bf16.msra.mxu0 0
      %2237 = vmatprep.subr.bf16.mxu0 0
      %2238 = vmatpush2.bf16.msra.mxu0 0
      %2239 = vmatprep.mubr.bf16.mxu0 0
      %2240 = vmatmul.mubr.bf16.gmra.mxu0 %v2058
      %v2241 = vpop.f32.mrf.mxu0
      %v2242 = vadd.f32 0.0, %v2241
      %v2243 = vpop.f32.mrf.mxu0
      %v2244 = vadd.f32 0.0, %v2243
      %v2245 = vpop.f32.mrf.mxu0
      %v2246 = vpop.f32.mrf.mxu0
      %2247 = vdwg.mxu0
      %v2248 = vadd.f32 %v2022, %v2119
      %v2249 = vadd.f32 %v2023, %v2121
      %v2250 = vadd.f32 %v2024, %v2160
      %v2251 = vadd.f32 %v2025, %v2162
      %v2252 = vadd.f32 %v2026, %v2201
      %v2253 = vadd.f32 %v2027, %v2203
      %v2254 = vadd.f32 %v2028, %v2242
      %v2255 = vadd.f32 %v2029, %v2244
      %v2256 = vld [vmem:[%s2030] sm:$0xff]
      %v2257 = vld [vmem:[%s2030 + $0x8] sm:$0xff]
      %v2258 = vld [vmem:[%s2030 + $0x10] sm:$0xff]
      %v2259 = vld [vmem:[%s2030 + $0x18] sm:$0xff]
      %v2260 = vld [vmem:[%s2030 + $0x20] sm:$0xf]
      %s2261 = scalar_lea.vmem %s1, 48
      %v2262 = vld [vmem:[%s2261] sm:$0xf]
      %v2268 = vunpack.c.l.b16 %v2256
      %v2269 = vunpack.c.h.b16 %v2256
      %v2270 = vunpack.c.l.b16 %v2257
      %v2271 = vunpack.c.h.b16 %v2257
      %v2272 = vunpack.c.l.b16 %v2258
      %v2273 = vunpack.c.h.b16 %v2258
      %v2274 = vunpack.c.l.b16 %v2259
      %v2275 = vunpack.c.h.b16 %v2259
      %v2276 = vunpack.c.l.b16 %v2260
      %v2277 = vpack.c.b16 %v2268, %v2268
      %v2278 = vpack.c.b16 %v2269, %v2269
      %v2279 = vpack.c.b16 %v2270, %v2270
      %v2280 = vpack.c.b16 %v2271, %v2271
      %v2281 = vpack.c.b16 %v2272, %v2272
      %v2282 = vpack.c.b16 %v2273, %v2273
      %v2283 = vpack.c.b16 %v2274, %v2274
      %v2284 = vpack.c.b16 %v2275, %v2275
      %v2285 = vpack.c.b16 %v2276, %v2276
      %2286 = vrot.lane.b32.xlu0 %v2277, 96
      %v2287 = vpop.permute.xlu0 %2286
      %2288 = vrot.lane.b32.xlu0 %v2278, 96
      %v2289 = vpop.permute.xlu0 %2288
      %2290 = vrot.lane.b32.xlu0 %v2279, 96
      %v2291 = vpop.permute.xlu0 %2290
      %2292 = vrot.lane.b32.xlu0 %v2280, 96
      %v2293 = vpop.permute.xlu0 %2292
      %2294 = vrot.lane.b32.xlu0 %v2281, 96
      %v2295 = vpop.permute.xlu0 %2294
      %2296 = vrot.lane.b32.xlu0 %v2282, 96
      %v2297 = vpop.permute.xlu0 %2296
      %2298 = vrot.lane.b32.xlu0 %v2283, 96
      %v2299 = vpop.permute.xlu0 %2298
      %2300 = vrot.lane.b32.xlu0 %v2284, 96
      %v2301 = vpop.permute.xlu0 %2300
      %2302 = vrot.lane.b32.xlu0 %v2285, 96
      %v2303 = vpop.permute.xlu0 %2302
      %v2304 = vsel %vm194, %v2287, %v2289
      %v2305 = vsel %vm194, %v2289, %v2291
      %v2306 = vsel %vm194, %v2291, %v2293
      %v2307 = vsel %vm194, %v2293, %v2295
      %v2308 = vsel %vm194, %v2295, %v2297
      %v2309 = vsel %vm194, %v2297, %v2299
      %v2310 = vsel %vm194, %v2299, %v2301
      %v2311 = vsel %vm194, %v2301, %v2303
      %v2313 = vsel %vm203, %v2262, 0
      %v2316 = vsel %vm207, %v2304, 0
      %v2319 = vsel %vm207, %v2305, 0
      %v2322 = vsel %vm207, %v2306, 0
      %v2325 = vsel %vm207, %v2307, 0
      %v2328 = vsel %vm207, %v2308, 0
      %v2331 = vsel %vm207, %v2309, 0
      %v2334 = vsel %vm207, %v2310, 0
      %v2337 = vsel %vm207, %v2311, 0
      %2339 = vmatprep.subr.bf16.mxu0 0
      %2340 = vmatpush1.bf16.msra.mxu0 0
      %2341 = vmatprep.subr.bf16.mxu0 0
      %2342 = vmatpush1.bf16.msra.mxu0 0
      %2343 = vmatprep.subr.bf16.mxu0 0
      %2344 = vmatpush1.bf16.msra.mxu0 0
      %2345 = vmatprep.subr.bf16.mxu0 0
      %2346 = vmatpush1.bf16.msra.mxu0 0
      %2347 = vmatprep.subr.bf16.mxu0 0
      %2348 = vmatpush1.bf16.msra.mxu0 0
      %2349 = vmatprep.subr.bf16.mxu0 0
      %2350 = vmatpush1.bf16.msra.mxu0 0
      %2351 = vmatprep.subr.bf16.mxu0 0
      %2352 = vmatpush1.bf16.msra.mxu0 0
      %2353 = vmatprep.subr.bf16.mxu0 %v2319
      %2354 = vmatpush1.bf16.msra.mxu0 %v2316
      %2355 = vmatprep.subr.bf16.mxu0 0
      %2356 = vmatpush2.bf16.msra.mxu0 0
      %2357 = vmatprep.subr.bf16.mxu0 0
      %2358 = vmatpush2.bf16.msra.mxu0 0
      %2359 = vmatprep.subr.bf16.mxu0 0
      %2360 = vmatpush2.bf16.msra.mxu0 0
      %2361 = vmatprep.subr.bf16.mxu0 0
      %2362 = vmatpush2.bf16.msra.mxu0 0
      %2363 = vmatprep.subr.bf16.mxu0 0
      %2364 = vmatpush2.bf16.msra.mxu0 0
      %2365 = vmatprep.subr.bf16.mxu0 0
      %2366 = vmatpush2.bf16.msra.mxu0 0
      %2367 = vmatprep.subr.bf16.mxu0 0
      %2368 = vmatpush2.bf16.msra.mxu0 0
      %2369 = vmatprep.subr.bf16.mxu0 0
      %2370 = vmatpush2.bf16.msra.mxu0 0
      %2371 = vmatprep.mubr.bf16.mxu0 0
      %2372 = vmatmul.mubr.bf16.gmra.mxu0 %v2313
      %v2373 = vpop.f32.mrf.mxu0
      %v2374 = vadd.f32 0.0, %v2373
      %v2375 = vpop.f32.mrf.mxu0
      %v2376 = vadd.f32 0.0, %v2375
      %v2377 = vpop.f32.mrf.mxu0
      %v2378 = vpop.f32.mrf.mxu0
      %2379 = vdwg.mxu0
      %2380 = vmatprep.subr.bf16.mxu0 0
      %2381 = vmatpush1.bf16.msra.mxu0 0
      %2382 = vmatprep.subr.bf16.mxu0 0
      %2383 = vmatpush1.bf16.msra.mxu0 0
      %2384 = vmatprep.subr.bf16.mxu0 0
      %2385 = vmatpush1.bf16.msra.mxu0 0
      %2386 = vmatprep.subr.bf16.mxu0 0
      %2387 = vmatpush1.bf16.msra.mxu0 0
      %2388 = vmatprep.subr.bf16.mxu0 0
      %2389 = vmatpush1.bf16.msra.mxu0 0
      %2390 = vmatprep.subr.bf16.mxu0 0
      %2391 = vmatpush1.bf16.msra.mxu0 0
      %2392 = vmatprep.subr.bf16.mxu0 0
      %2393 = vmatpush1.bf16.msra.mxu0 0
      %2394 = vmatprep.subr.bf16.mxu0 %v2325
      %2395 = vmatpush1.bf16.msra.mxu0 %v2322
      %2396 = vmatprep.subr.bf16.mxu0 0
      %2397 = vmatpush2.bf16.msra.mxu0 0
      %2398 = vmatprep.subr.bf16.mxu0 0
      %2399 = vmatpush2.bf16.msra.mxu0 0
      %2400 = vmatprep.subr.bf16.mxu0 0
      %2401 = vmatpush2.bf16.msra.mxu0 0
      %2402 = vmatprep.subr.bf16.mxu0 0
      %2403 = vmatpush2.bf16.msra.mxu0 0
      %2404 = vmatprep.subr.bf16.mxu0 0
      %2405 = vmatpush2.bf16.msra.mxu0 0
      %2406 = vmatprep.subr.bf16.mxu0 0
      %2407 = vmatpush2.bf16.msra.mxu0 0
      %2408 = vmatprep.subr.bf16.mxu0 0
      %2409 = vmatpush2.bf16.msra.mxu0 0
      %2410 = vmatprep.subr.bf16.mxu0 0
      %2411 = vmatpush2.bf16.msra.mxu0 0
      %2412 = vmatprep.mubr.bf16.mxu0 0
      %2413 = vmatmul.mubr.bf16.gmra.mxu0 %v2313
      %v2414 = vpop.f32.mrf.mxu0
      %v2415 = vadd.f32 0.0, %v2414
      %v2416 = vpop.f32.mrf.mxu0
      %v2417 = vadd.f32 0.0, %v2416
      %v2418 = vpop.f32.mrf.mxu0
      %v2419 = vpop.f32.mrf.mxu0
      %2420 = vdwg.mxu0
      %2421 = vmatprep.subr.bf16.mxu0 0
      %2422 = vmatpush1.bf16.msra.mxu0 0
      %2423 = vmatprep.subr.bf16.mxu0 0
      %2424 = vmatpush1.bf16.msra.mxu0 0
      %2425 = vmatprep.subr.bf16.mxu0 0
      %2426 = vmatpush1.bf16.msra.mxu0 0
      %2427 = vmatprep.subr.bf16.mxu0 0
      %2428 = vmatpush1.bf16.msra.mxu0 0
      %2429 = vmatprep.subr.bf16.mxu0 0
      %2430 = vmatpush1.bf16.msra.mxu0 0
      %2431 = vmatprep.subr.bf16.mxu0 0
      %2432 = vmatpush1.bf16.msra.mxu0 0
      %2433 = vmatprep.subr.bf16.mxu0 0
      %2434 = vmatpush1.bf16.msra.mxu0 0
      %2435 = vmatprep.subr.bf16.mxu0 %v2331
      %2436 = vmatpush1.bf16.msra.mxu0 %v2328
      %2437 = vmatprep.subr.bf16.mxu0 0
      %2438 = vmatpush2.bf16.msra.mxu0 0
      %2439 = vmatprep.subr.bf16.mxu0 0
      %2440 = vmatpush2.bf16.msra.mxu0 0
      %2441 = vmatprep.subr.bf16.mxu0 0
      %2442 = vmatpush2.bf16.msra.mxu0 0
      %2443 = vmatprep.subr.bf16.mxu0 0
      %2444 = vmatpush2.bf16.msra.mxu0 0
      %2445 = vmatprep.subr.bf16.mxu0 0
      %2446 = vmatpush2.bf16.msra.mxu0 0
      %2447 = vmatprep.subr.bf16.mxu0 0
      %2448 = vmatpush2.bf16.msra.mxu0 0
      %2449 = vmatprep.subr.bf16.mxu0 0
      %2450 = vmatpush2.bf16.msra.mxu0 0
      %2451 = vmatprep.subr.bf16.mxu0 0
      %2452 = vmatpush2.bf16.msra.mxu0 0
      %2453 = vmatprep.mubr.bf16.mxu0 0
      %2454 = vmatmul.mubr.bf16.gmra.mxu0 %v2313
      %v2455 = vpop.f32.mrf.mxu0
      %v2456 = vadd.f32 0.0, %v2455
      %v2457 = vpop.f32.mrf.mxu0
      %v2458 = vadd.f32 0.0, %v2457
      %v2459 = vpop.f32.mrf.mxu0
      %v2460 = vpop.f32.mrf.mxu0
      %2461 = vdwg.mxu0
      %2462 = vmatprep.subr.bf16.mxu0 0
      %2463 = vmatpush1.bf16.msra.mxu0 0
      %2464 = vmatprep.subr.bf16.mxu0 0
      %2465 = vmatpush1.bf16.msra.mxu0 0
      %2466 = vmatprep.subr.bf16.mxu0 0
      %2467 = vmatpush1.bf16.msra.mxu0 0
      %2468 = vmatprep.subr.bf16.mxu0 0
      %2469 = vmatpush1.bf16.msra.mxu0 0
      %2470 = vmatprep.subr.bf16.mxu0 0
      %2471 = vmatpush1.bf16.msra.mxu0 0
      %2472 = vmatprep.subr.bf16.mxu0 0
      %2473 = vmatpush1.bf16.msra.mxu0 0
      %2474 = vmatprep.subr.bf16.mxu0 0
      %2475 = vmatpush1.bf16.msra.mxu0 0
      %2476 = vmatprep.subr.bf16.mxu0 %v2337
      %2477 = vmatpush1.bf16.msra.mxu0 %v2334
      %2478 = vmatprep.subr.bf16.mxu0 0
      %2479 = vmatpush2.bf16.msra.mxu0 0
      %2480 = vmatprep.subr.bf16.mxu0 0
      %2481 = vmatpush2.bf16.msra.mxu0 0
      %2482 = vmatprep.subr.bf16.mxu0 0
      %2483 = vmatpush2.bf16.msra.mxu0 0
      %2484 = vmatprep.subr.bf16.mxu0 0
      %2485 = vmatpush2.bf16.msra.mxu0 0
      %2486 = vmatprep.subr.bf16.mxu0 0
      %2487 = vmatpush2.bf16.msra.mxu0 0
      %2488 = vmatprep.subr.bf16.mxu0 0
      %2489 = vmatpush2.bf16.msra.mxu0 0
      %2490 = vmatprep.subr.bf16.mxu0 0
      %2491 = vmatpush2.bf16.msra.mxu0 0
      %2492 = vmatprep.subr.bf16.mxu0 0
      %2493 = vmatpush2.bf16.msra.mxu0 0
      %2494 = vmatprep.mubr.bf16.mxu0 0
      %2495 = vmatmul.mubr.bf16.gmra.mxu0 %v2313
      %v2496 = vpop.f32.mrf.mxu0
      %v2497 = vadd.f32 0.0, %v2496
      %v2498 = vpop.f32.mrf.mxu0
      %v2499 = vadd.f32 0.0, %v2498
      %v2500 = vpop.f32.mrf.mxu0
      %v2501 = vpop.f32.mrf.mxu0
      %2502 = vdwg.mxu0
      %v2503 = vadd.f32 %v2248, %v2374
      %v2504 = vadd.f32 %v2249, %v2376
      %v2505 = vadd.f32 %v2250, %v2415
      %v2506 = vadd.f32 %v2251, %v2417
      %v2507 = vadd.f32 %v2252, %v2456
      %v2508 = vadd.f32 %v2253, %v2458
      %v2509 = vadd.f32 %v2254, %v2497
      %v2510 = vadd.f32 %v2255, %v2499
      %s2511 = scalar_lea.vmem %s138, 180
      %v2512 = vld [vmem:[%s2511] sm:$0xff]
      %v2513 = vld [vmem:[%s2511 + $0x8] sm:$0xff]
      %v2514 = vld [vmem:[%s2511 + $0x10] sm:$0xff]
      %v2515 = vld [vmem:[%s2511 + $0x18] sm:$0xff]
      %s2516 = scalar_lea.vmem %s1, 24
      %v2517 = vld [vmem:[%s2516] sm:$0xf]
      %v2522 = vunpack.c.l.b16 %v2512
      %v2523 = vunpack.c.h.b16 %v2512
      %v2524 = vunpack.c.l.b16 %v2513
      %v2525 = vunpack.c.h.b16 %v2513
      %v2526 = vunpack.c.l.b16 %v2514
      %v2527 = vunpack.c.h.b16 %v2514
      %v2528 = vunpack.c.l.b16 %v2515
      %v2529 = vunpack.c.h.b16 %v2515
      %v2530 = vpack.c.b16 %v2522, %v2522
      %v2531 = vpack.c.b16 %v2523, %v2523
      %v2532 = vpack.c.b16 %v2524, %v2524
      %v2533 = vpack.c.b16 %v2525, %v2525
      %v2534 = vpack.c.b16 %v2526, %v2526
      %v2535 = vpack.c.b16 %v2527, %v2527
      %v2536 = vpack.c.b16 %v2528, %v2528
      %v2537 = vpack.c.b16 %v2529, %v2529
      %v2539 = vsel %vm203, %v2517, 0
      %v2542 = vsel %vm207, %v2530, 0
      %v2545 = vsel %vm207, %v2531, 0
      %v2548 = vsel %vm207, %v2532, 0
      %v2551 = vsel %vm207, %v2533, 0
      %v2554 = vsel %vm207, %v2534, 0
      %v2557 = vsel %vm207, %v2535, 0
      %v2560 = vsel %vm207, %v2536, 0
      %v2563 = vsel %vm207, %v2537, 0
      %2565 = vmatprep.subr.bf16.mxu0 0
      %2566 = vmatpush1.bf16.msra.mxu0 0
      %2567 = vmatprep.subr.bf16.mxu0 0
      %2568 = vmatpush1.bf16.msra.mxu0 0
      %2569 = vmatprep.subr.bf16.mxu0 0
      %2570 = vmatpush1.bf16.msra.mxu0 0
      %2571 = vmatprep.subr.bf16.mxu0 0
      %2572 = vmatpush1.bf16.msra.mxu0 0
      %2573 = vmatprep.subr.bf16.mxu0 0
      %2574 = vmatpush1.bf16.msra.mxu0 0
      %2575 = vmatprep.subr.bf16.mxu0 0
      %2576 = vmatpush1.bf16.msra.mxu0 0
      %2577 = vmatprep.subr.bf16.mxu0 0
      %2578 = vmatpush1.bf16.msra.mxu0 0
      %2579 = vmatprep.subr.bf16.mxu0 %v2545
      %2580 = vmatpush1.bf16.msra.mxu0 %v2542
      %2581 = vmatprep.subr.bf16.mxu0 0
      %2582 = vmatpush2.bf16.msra.mxu0 0
      %2583 = vmatprep.subr.bf16.mxu0 0
      %2584 = vmatpush2.bf16.msra.mxu0 0
      %2585 = vmatprep.subr.bf16.mxu0 0
      %2586 = vmatpush2.bf16.msra.mxu0 0
      %2587 = vmatprep.subr.bf16.mxu0 0
      %2588 = vmatpush2.bf16.msra.mxu0 0
      %2589 = vmatprep.subr.bf16.mxu0 0
      %2590 = vmatpush2.bf16.msra.mxu0 0
      %2591 = vmatprep.subr.bf16.mxu0 0
      %2592 = vmatpush2.bf16.msra.mxu0 0
      %2593 = vmatprep.subr.bf16.mxu0 0
      %2594 = vmatpush2.bf16.msra.mxu0 0
      %2595 = vmatprep.subr.bf16.mxu0 0
      %2596 = vmatpush2.bf16.msra.mxu0 0
      %2597 = vmatprep.mubr.bf16.mxu0 0
      %2598 = vmatmul.mubr.bf16.gmra.mxu0 %v2539
      %v2599 = vpop.f32.mrf.mxu0
      %v2600 = vadd.f32 0.0, %v2599
      %v2601 = vpop.f32.mrf.mxu0
      %v2602 = vadd.f32 0.0, %v2601
      %v2603 = vpop.f32.mrf.mxu0
      %v2604 = vpop.f32.mrf.mxu0
      %2605 = vdwg.mxu0
      %2606 = vmatprep.subr.bf16.mxu0 0
      %2607 = vmatpush1.bf16.msra.mxu0 0
      %2608 = vmatprep.subr.bf16.mxu0 0
      %2609 = vmatpush1.bf16.msra.mxu0 0
      %2610 = vmatprep.subr.bf16.mxu0 0
      %2611 = vmatpush1.bf16.msra.mxu0 0
      %2612 = vmatprep.subr.bf16.mxu0 0
      %2613 = vmatpush1.bf16.msra.mxu0 0
      %2614 = vmatprep.subr.bf16.mxu0 0
      %2615 = vmatpush1.bf16.msra.mxu0 0
      %2616 = vmatprep.subr.bf16.mxu0 0
      %2617 = vmatpush1.bf16.msra.mxu0 0
      %2618 = vmatprep.subr.bf16.mxu0 0
      %2619 = vmatpush1.bf16.msra.mxu0 0
      %2620 = vmatprep.subr.bf16.mxu0 %v2551
      %2621 = vmatpush1.bf16.msra.mxu0 %v2548
      %2622 = vmatprep.subr.bf16.mxu0 0
      %2623 = vmatpush2.bf16.msra.mxu0 0
      %2624 = vmatprep.subr.bf16.mxu0 0
      %2625 = vmatpush2.bf16.msra.mxu0 0
      %2626 = vmatprep.subr.bf16.mxu0 0
      %2627 = vmatpush2.bf16.msra.mxu0 0
      %2628 = vmatprep.subr.bf16.mxu0 0
      %2629 = vmatpush2.bf16.msra.mxu0 0
      %2630 = vmatprep.subr.bf16.mxu0 0
      %2631 = vmatpush2.bf16.msra.mxu0 0
      %2632 = vmatprep.subr.bf16.mxu0 0
      %2633 = vmatpush2.bf16.msra.mxu0 0
      %2634 = vmatprep.subr.bf16.mxu0 0
      %2635 = vmatpush2.bf16.msra.mxu0 0
      %2636 = vmatprep.subr.bf16.mxu0 0
      %2637 = vmatpush2.bf16.msra.mxu0 0
      %2638 = vmatprep.mubr.bf16.mxu0 0
      %2639 = vmatmul.mubr.bf16.gmra.mxu0 %v2539
      %v2640 = vpop.f32.mrf.mxu0
      %v2641 = vadd.f32 0.0, %v2640
      %v2642 = vpop.f32.mrf.mxu0
      %v2643 = vadd.f32 0.0, %v2642
      %v2644 = vpop.f32.mrf.mxu0
      %v2645 = vpop.f32.mrf.mxu0
      %2646 = vdwg.mxu0
      %2647 = vmatprep.subr.bf16.mxu0 0
      %2648 = vmatpush1.bf16.msra.mxu0 0
      %2649 = vmatprep.subr.bf16.mxu0 0
      %2650 = vmatpush1.bf16.msra.mxu0 0
      %2651 = vmatprep.subr.bf16.mxu0 0
      %2652 = vmatpush1.bf16.msra.mxu0 0
      %2653 = vmatprep.subr.bf16.mxu0 0
      %2654 = vmatpush1.bf16.msra.mxu0 0
      %2655 = vmatprep.subr.bf16.mxu0 0
      %2656 = vmatpush1.bf16.msra.mxu0 0
      %2657 = vmatprep.subr.bf16.mxu0 0
      %2658 = vmatpush1.bf16.msra.mxu0 0
      %2659 = vmatprep.subr.bf16.mxu0 0
      %2660 = vmatpush1.bf16.msra.mxu0 0
      %2661 = vmatprep.subr.bf16.mxu0 %v2557
      %2662 = vmatpush1.bf16.msra.mxu0 %v2554
      %2663 = vmatprep.subr.bf16.mxu0 0
      %2664 = vmatpush2.bf16.msra.mxu0 0
      %2665 = vmatprep.subr.bf16.mxu0 0
      %2666 = vmatpush2.bf16.msra.mxu0 0
      %2667 = vmatprep.subr.bf16.mxu0 0
      %2668 = vmatpush2.bf16.msra.mxu0 0
      %2669 = vmatprep.subr.bf16.mxu0 0
      %2670 = vmatpush2.bf16.msra.mxu0 0
      %2671 = vmatprep.subr.bf16.mxu0 0
      %2672 = vmatpush2.bf16.msra.mxu0 0
      %2673 = vmatprep.subr.bf16.mxu0 0
      %2674 = vmatpush2.bf16.msra.mxu0 0
      %2675 = vmatprep.subr.bf16.mxu0 0
      %2676 = vmatpush2.bf16.msra.mxu0 0
      %2677 = vmatprep.subr.bf16.mxu0 0
      %2678 = vmatpush2.bf16.msra.mxu0 0
      %2679 = vmatprep.mubr.bf16.mxu0 0
      %2680 = vmatmul.mubr.bf16.gmra.mxu0 %v2539
      %v2681 = vpop.f32.mrf.mxu0
      %v2682 = vadd.f32 0.0, %v2681
      %v2683 = vpop.f32.mrf.mxu0
      %v2684 = vadd.f32 0.0, %v2683
      %v2685 = vpop.f32.mrf.mxu0
      %v2686 = vpop.f32.mrf.mxu0
      %2687 = vdwg.mxu0
      %2688 = vmatprep.subr.bf16.mxu0 0
      %2689 = vmatpush1.bf16.msra.mxu0 0
      %2690 = vmatprep.subr.bf16.mxu0 0
      %2691 = vmatpush1.bf16.msra.mxu0 0
      %2692 = vmatprep.subr.bf16.mxu0 0
      %2693 = vmatpush1.bf16.msra.mxu0 0
      %2694 = vmatprep.subr.bf16.mxu0 0
      %2695 = vmatpush1.bf16.msra.mxu0 0
      %2696 = vmatprep.subr.bf16.mxu0 0
      %2697 = vmatpush1.bf16.msra.mxu0 0
      %2698 = vmatprep.subr.bf16.mxu0 0
      %2699 = vmatpush1.bf16.msra.mxu0 0
      %2700 = vmatprep.subr.bf16.mxu0 0
      %2701 = vmatpush1.bf16.msra.mxu0 0
      %2702 = vmatprep.subr.bf16.mxu0 %v2563
      %2703 = vmatpush1.bf16.msra.mxu0 %v2560
      %2704 = vmatprep.subr.bf16.mxu0 0
      %2705 = vmatpush2.bf16.msra.mxu0 0
      %2706 = vmatprep.subr.bf16.mxu0 0
      %2707 = vmatpush2.bf16.msra.mxu0 0
      %2708 = vmatprep.subr.bf16.mxu0 0
      %2709 = vmatpush2.bf16.msra.mxu0 0
      %2710 = vmatprep.subr.bf16.mxu0 0
      %2711 = vmatpush2.bf16.msra.mxu0 0
      %2712 = vmatprep.subr.bf16.mxu0 0
      %2713 = vmatpush2.bf16.msra.mxu0 0
      %2714 = vmatprep.subr.bf16.mxu0 0
      %2715 = vmatpush2.bf16.msra.mxu0 0
      %2716 = vmatprep.subr.bf16.mxu0 0
      %2717 = vmatpush2.bf16.msra.mxu0 0
      %2718 = vmatprep.subr.bf16.mxu0 0
      %2719 = vmatpush2.bf16.msra.mxu0 0
      %2720 = vmatprep.mubr.bf16.mxu0 0
      %2721 = vmatmul.mubr.bf16.gmra.mxu0 %v2539
      %v2722 = vpop.f32.mrf.mxu0
      %v2723 = vadd.f32 0.0, %v2722
      %v2724 = vpop.f32.mrf.mxu0
      %v2725 = vadd.f32 0.0, %v2724
      %v2726 = vpop.f32.mrf.mxu0
      %v2727 = vpop.f32.mrf.mxu0
      %2728 = vdwg.mxu0
      %v2729 = vadd.f32 %v2503, %v2600
      %v2730 = vadd.f32 %v2504, %v2602
      %v2731 = vadd.f32 %v2505, %v2641
      %v2732 = vadd.f32 %v2506, %v2643
      %v2733 = vadd.f32 %v2507, %v2682
      %v2734 = vadd.f32 %v2508, %v2684
      %v2735 = vadd.f32 %v2509, %v2723
      %v2736 = vadd.f32 %v2510, %v2725
      %v2737 = vld [vmem:[%s2511] sm:$0xff]
      %v2738 = vld [vmem:[%s2511 + $0x8] sm:$0xff]
      %v2739 = vld [vmem:[%s2511 + $0x10] sm:$0xff]
      %v2740 = vld [vmem:[%s2511 + $0x18] sm:$0xff]
      %v2741 = vld [vmem:[%s2511 + $0x20] sm:$0xf]
      %s2742 = scalar_lea.vmem %s1, 56
      %v2743 = vld [vmem:[%s2742] sm:$0xf]
      %v2749 = vunpack.c.l.b16 %v2737
      %v2750 = vunpack.c.h.b16 %v2737
      %v2751 = vunpack.c.l.b16 %v2738
      %v2752 = vunpack.c.h.b16 %v2738
      %v2753 = vunpack.c.l.b16 %v2739
      %v2754 = vunpack.c.h.b16 %v2739
      %v2755 = vunpack.c.l.b16 %v2740
      %v2756 = vunpack.c.h.b16 %v2740
      %v2757 = vunpack.c.l.b16 %v2741
      %v2758 = vpack.c.b16 %v2749, %v2749
      %v2759 = vpack.c.b16 %v2750, %v2750
      %v2760 = vpack.c.b16 %v2751, %v2751
      %v2761 = vpack.c.b16 %v2752, %v2752
      %v2762 = vpack.c.b16 %v2753, %v2753
      %v2763 = vpack.c.b16 %v2754, %v2754
      %v2764 = vpack.c.b16 %v2755, %v2755
      %v2765 = vpack.c.b16 %v2756, %v2756
      %v2766 = vpack.c.b16 %v2757, %v2757
      %2767 = vrot.lane.b32.xlu0 %v2758, 96
      %v2768 = vpop.permute.xlu0 %2767
      %2769 = vrot.lane.b32.xlu0 %v2759, 96
      %v2770 = vpop.permute.xlu0 %2769
      %2771 = vrot.lane.b32.xlu0 %v2760, 96
      %v2772 = vpop.permute.xlu0 %2771
      %2773 = vrot.lane.b32.xlu0 %v2761, 96
      %v2774 = vpop.permute.xlu0 %2773
      %2775 = vrot.lane.b32.xlu0 %v2762, 96
      %v2776 = vpop.permute.xlu0 %2775
      %2777 = vrot.lane.b32.xlu0 %v2763, 96
      %v2778 = vpop.permute.xlu0 %2777
      %2779 = vrot.lane.b32.xlu0 %v2764, 96
      %v2780 = vpop.permute.xlu0 %2779
      %2781 = vrot.lane.b32.xlu0 %v2765, 96
      %v2782 = vpop.permute.xlu0 %2781
      %2783 = vrot.lane.b32.xlu0 %v2766, 96
      %v2784 = vpop.permute.xlu0 %2783
      %v2785 = vsel %vm194, %v2768, %v2770
      %v2786 = vsel %vm194, %v2770, %v2772
      %v2787 = vsel %vm194, %v2772, %v2774
      %v2788 = vsel %vm194, %v2774, %v2776
      %v2789 = vsel %vm194, %v2776, %v2778
      %v2790 = vsel %vm194, %v2778, %v2780
      %v2791 = vsel %vm194, %v2780, %v2782
      %v2792 = vsel %vm194, %v2782, %v2784
      %v2794 = vsel %vm203, %v2743, 0
      %v2797 = vsel %vm207, %v2785, 0
      %v2800 = vsel %vm207, %v2786, 0
      %v2803 = vsel %vm207, %v2787, 0
      %v2806 = vsel %vm207, %v2788, 0
      %v2809 = vsel %vm207, %v2789, 0
      %v2812 = vsel %vm207, %v2790, 0
      %v2815 = vsel %vm207, %v2791, 0
      %v2818 = vsel %vm207, %v2792, 0
      %2820 = vmatprep.subr.bf16.mxu0 0
      %2821 = vmatpush1.bf16.msra.mxu0 0
      %2822 = vmatprep.subr.bf16.mxu0 0
      %2823 = vmatpush1.bf16.msra.mxu0 0
      %2824 = vmatprep.subr.bf16.mxu0 0
      %2825 = vmatpush1.bf16.msra.mxu0 0
      %2826 = vmatprep.subr.bf16.mxu0 0
      %2827 = vmatpush1.bf16.msra.mxu0 0
      %2828 = vmatprep.subr.bf16.mxu0 0
      %2829 = vmatpush1.bf16.msra.mxu0 0
      %2830 = vmatprep.subr.bf16.mxu0 0
      %2831 = vmatpush1.bf16.msra.mxu0 0
      %2832 = vmatprep.subr.bf16.mxu0 0
      %2833 = vmatpush1.bf16.msra.mxu0 0
      %2834 = vmatprep.subr.bf16.mxu0 %v2800
      %2835 = vmatpush1.bf16.msra.mxu0 %v2797
      %2836 = vmatprep.subr.bf16.mxu0 0
      %2837 = vmatpush2.bf16.msra.mxu0 0
      %2838 = vmatprep.subr.bf16.mxu0 0
      %2839 = vmatpush2.bf16.msra.mxu0 0
      %2840 = vmatprep.subr.bf16.mxu0 0
      %2841 = vmatpush2.bf16.msra.mxu0 0
      %2842 = vmatprep.subr.bf16.mxu0 0
      %2843 = vmatpush2.bf16.msra.mxu0 0
      %2844 = vmatprep.subr.bf16.mxu0 0
      %2845 = vmatpush2.bf16.msra.mxu0 0
      %2846 = vmatprep.subr.bf16.mxu0 0
      %2847 = vmatpush2.bf16.msra.mxu0 0
      %2848 = vmatprep.subr.bf16.mxu0 0
      %2849 = vmatpush2.bf16.msra.mxu0 0
      %2850 = vmatprep.subr.bf16.mxu0 0
      %2851 = vmatpush2.bf16.msra.mxu0 0
      %2852 = vmatprep.mubr.bf16.mxu0 0
      %2853 = vmatmul.mubr.bf16.gmra.mxu0 %v2794
      %v2854 = vpop.f32.mrf.mxu0
      %v2855 = vadd.f32 0.0, %v2854
      %v2856 = vpop.f32.mrf.mxu0
      %v2857 = vadd.f32 0.0, %v2856
      %v2858 = vpop.f32.mrf.mxu0
      %v2859 = vpop.f32.mrf.mxu0
      %2860 = vdwg.mxu0
      %2861 = vmatprep.subr.bf16.mxu0 0
      %2862 = vmatpush1.bf16.msra.mxu0 0
      %2863 = vmatprep.subr.bf16.mxu0 0
      %2864 = vmatpush1.bf16.msra.mxu0 0
      %2865 = vmatprep.subr.bf16.mxu0 0
      %2866 = vmatpush1.bf16.msra.mxu0 0
      %2867 = vmatprep.subr.bf16.mxu0 0
      %2868 = vmatpush1.bf16.msra.mxu0 0
      %2869 = vmatprep.subr.bf16.mxu0 0
      %2870 = vmatpush1.bf16.msra.mxu0 0
      %2871 = vmatprep.subr.bf16.mxu0 0
      %2872 = vmatpush1.bf16.msra.mxu0 0
      %2873 = vmatprep.subr.bf16.mxu0 0
      %2874 = vmatpush1.bf16.msra.mxu0 0
      %2875 = vmatprep.subr.bf16.mxu0 %v2806
      %2876 = vmatpush1.bf16.msra.mxu0 %v2803
      %2877 = vmatprep.subr.bf16.mxu0 0
      %2878 = vmatpush2.bf16.msra.mxu0 0
      %2879 = vmatprep.subr.bf16.mxu0 0
      %2880 = vmatpush2.bf16.msra.mxu0 0
      %2881 = vmatprep.subr.bf16.mxu0 0
      %2882 = vmatpush2.bf16.msra.mxu0 0
      %2883 = vmatprep.subr.bf16.mxu0 0
      %2884 = vmatpush2.bf16.msra.mxu0 0
      %2885 = vmatprep.subr.bf16.mxu0 0
      %2886 = vmatpush2.bf16.msra.mxu0 0
      %2887 = vmatprep.subr.bf16.mxu0 0
      %2888 = vmatpush2.bf16.msra.mxu0 0
      %2889 = vmatprep.subr.bf16.mxu0 0
      %2890 = vmatpush2.bf16.msra.mxu0 0
      %2891 = vmatprep.subr.bf16.mxu0 0
      %2892 = vmatpush2.bf16.msra.mxu0 0
      %2893 = vmatprep.mubr.bf16.mxu0 0
      %2894 = vmatmul.mubr.bf16.gmra.mxu0 %v2794
      %v2895 = vpop.f32.mrf.mxu0
      %v2896 = vadd.f32 0.0, %v2895
      %v2897 = vpop.f32.mrf.mxu0
      %v2898 = vadd.f32 0.0, %v2897
      %v2899 = vpop.f32.mrf.mxu0
      %v2900 = vpop.f32.mrf.mxu0
      %2901 = vdwg.mxu0
      %2902 = vmatprep.subr.bf16.mxu0 0
      %2903 = vmatpush1.bf16.msra.mxu0 0
      %2904 = vmatprep.subr.bf16.mxu0 0
      %2905 = vmatpush1.bf16.msra.mxu0 0
      %2906 = vmatprep.subr.bf16.mxu0 0
      %2907 = vmatpush1.bf16.msra.mxu0 0
      %2908 = vmatprep.subr.bf16.mxu0 0
      %2909 = vmatpush1.bf16.msra.mxu0 0
      %2910 = vmatprep.subr.bf16.mxu0 0
      %2911 = vmatpush1.bf16.msra.mxu0 0
      %2912 = vmatprep.subr.bf16.mxu0 0
      %2913 = vmatpush1.bf16.msra.mxu0 0
      %2914 = vmatprep.subr.bf16.mxu0 0
      %2915 = vmatpush1.bf16.msra.mxu0 0
      %2916 = vmatprep.subr.bf16.mxu0 %v2812
      %2917 = vmatpush1.bf16.msra.mxu0 %v2809
      %2918 = vmatprep.subr.bf16.mxu0 0
      %2919 = vmatpush2.bf16.msra.mxu0 0
      %2920 = vmatprep.subr.bf16.mxu0 0
      %2921 = vmatpush2.bf16.msra.mxu0 0
      %2922 = vmatprep.subr.bf16.mxu0 0
      %2923 = vmatpush2.bf16.msra.mxu0 0
      %2924 = vmatprep.subr.bf16.mxu0 0
      %2925 = vmatpush2.bf16.msra.mxu0 0
      %2926 = vmatprep.subr.bf16.mxu0 0
      %2927 = vmatpush2.bf16.msra.mxu0 0
      %2928 = vmatprep.subr.bf16.mxu0 0
      %2929 = vmatpush2.bf16.msra.mxu0 0
      %2930 = vmatprep.subr.bf16.mxu0 0
      %2931 = vmatpush2.bf16.msra.mxu0 0
      %2932 = vmatprep.subr.bf16.mxu0 0
      %2933 = vmatpush2.bf16.msra.mxu0 0
      %2934 = vmatprep.mubr.bf16.mxu0 0
      %2935 = vmatmul.mubr.bf16.gmra.mxu0 %v2794
      %v2936 = vpop.f32.mrf.mxu0
      %v2937 = vadd.f32 0.0, %v2936
      %v2938 = vpop.f32.mrf.mxu0
      %v2939 = vadd.f32 0.0, %v2938
      %v2940 = vpop.f32.mrf.mxu0
      %v2941 = vpop.f32.mrf.mxu0
      %2942 = vdwg.mxu0
      %2943 = vmatprep.subr.bf16.mxu0 0
      %2944 = vmatpush1.bf16.msra.mxu0 0
      %2945 = vmatprep.subr.bf16.mxu0 0
      %2946 = vmatpush1.bf16.msra.mxu0 0
      %2947 = vmatprep.subr.bf16.mxu0 0
      %2948 = vmatpush1.bf16.msra.mxu0 0
      %2949 = vmatprep.subr.bf16.mxu0 0
      %2950 = vmatpush1.bf16.msra.mxu0 0
      %2951 = vmatprep.subr.bf16.mxu0 0
      %2952 = vmatpush1.bf16.msra.mxu0 0
      %2953 = vmatprep.subr.bf16.mxu0 0
      %2954 = vmatpush1.bf16.msra.mxu0 0
      %2955 = vmatprep.subr.bf16.mxu0 0
      %2956 = vmatpush1.bf16.msra.mxu0 0
      %2957 = vmatprep.subr.bf16.mxu0 %v2818
      %2958 = vmatpush1.bf16.msra.mxu0 %v2815
      %2959 = vmatprep.subr.bf16.mxu0 0
      %2960 = vmatpush2.bf16.msra.mxu0 0
      %2961 = vmatprep.subr.bf16.mxu0 0
      %2962 = vmatpush2.bf16.msra.mxu0 0
      %2963 = vmatprep.subr.bf16.mxu0 0
      %2964 = vmatpush2.bf16.msra.mxu0 0
      %2965 = vmatprep.subr.bf16.mxu0 0
      %2966 = vmatpush2.bf16.msra.mxu0 0
      %2967 = vmatprep.subr.bf16.mxu0 0
      %2968 = vmatpush2.bf16.msra.mxu0 0
      %2969 = vmatprep.subr.bf16.mxu0 0
      %2970 = vmatpush2.bf16.msra.mxu0 0
      %2971 = vmatprep.subr.bf16.mxu0 0
      %2972 = vmatpush2.bf16.msra.mxu0 0
      %2973 = vmatprep.subr.bf16.mxu0 0
      %2974 = vmatpush2.bf16.msra.mxu0 0
      %2975 = vmatprep.mubr.bf16.mxu0 0
      %2976 = vmatmul.mubr.bf16.gmra.mxu0 %v2794
      %v2977 = vpop.f32.mrf.mxu0
      %v2978 = vadd.f32 0.0, %v2977
      %v2979 = vpop.f32.mrf.mxu0
      %v2980 = vadd.f32 0.0, %v2979
      %v2981 = vpop.f32.mrf.mxu0
      %v2982 = vpop.f32.mrf.mxu0
      %2983 = vdwg.mxu0
      %v2984 = vadd.f32 %v2729, %v2855
      %v2985 = vadd.f32 %v2730, %v2857
      %v2986 = vadd.f32 %v2731, %v2896
      %v2987 = vadd.f32 %v2732, %v2898
      %v2988 = vadd.f32 %v2733, %v2937
      %v2989 = vadd.f32 %v2734, %v2939
      %v2990 = vadd.f32 %v2735, %v2978
      %v2991 = vadd.f32 %v2736, %v2980
      %s2992 = scalar_lea.vmem %s138, 216
      %v2993 = vld [vmem:[%s2992] sm:$0xff]
      %v2994 = vld [vmem:[%s2992 + $0x8] sm:$0xff]
      %v2995 = vld [vmem:[%s2992 + $0x10] sm:$0xff]
      %v2996 = vld [vmem:[%s2992 + $0x18] sm:$0xff]
      %s2997 = scalar_lea.vmem %s1, 20
      %v2998 = vld [vmem:[%s2997] sm:$0xf]
      %v3003 = vunpack.c.l.b16 %v2993
      %v3004 = vunpack.c.h.b16 %v2993
      %v3005 = vunpack.c.l.b16 %v2994
      %v3006 = vunpack.c.h.b16 %v2994
      %v3007 = vunpack.c.l.b16 %v2995
      %v3008 = vunpack.c.h.b16 %v2995
      %v3009 = vunpack.c.l.b16 %v2996
      %v3010 = vunpack.c.h.b16 %v2996
      %v3011 = vpack.c.b16 %v3003, %v3003
      %v3012 = vpack.c.b16 %v3004, %v3004
      %v3013 = vpack.c.b16 %v3005, %v3005
      %v3014 = vpack.c.b16 %v3006, %v3006
      %v3015 = vpack.c.b16 %v3007, %v3007
      %v3016 = vpack.c.b16 %v3008, %v3008
      %v3017 = vpack.c.b16 %v3009, %v3009
      %v3018 = vpack.c.b16 %v3010, %v3010
      %v3020 = vsel %vm203, %v2998, 0
      %v3023 = vsel %vm207, %v3011, 0
      %v3026 = vsel %vm207, %v3012, 0
      %v3029 = vsel %vm207, %v3013, 0
      %v3032 = vsel %vm207, %v3014, 0
      %v3035 = vsel %vm207, %v3015, 0
      %v3038 = vsel %vm207, %v3016, 0
      %v3041 = vsel %vm207, %v3017, 0
      %v3044 = vsel %vm207, %v3018, 0
      %3046 = vmatprep.subr.bf16.mxu0 0
      %3047 = vmatpush1.bf16.msra.mxu0 0
      %3048 = vmatprep.subr.bf16.mxu0 0
      %3049 = vmatpush1.bf16.msra.mxu0 0
      %3050 = vmatprep.subr.bf16.mxu0 0
      %3051 = vmatpush1.bf16.msra.mxu0 0
      %3052 = vmatprep.subr.bf16.mxu0 0
      %3053 = vmatpush1.bf16.msra.mxu0 0
      %3054 = vmatprep.subr.bf16.mxu0 0
      %3055 = vmatpush1.bf16.msra.mxu0 0
      %3056 = vmatprep.subr.bf16.mxu0 0
      %3057 = vmatpush1.bf16.msra.mxu0 0
      %3058 = vmatprep.subr.bf16.mxu0 0
      %3059 = vmatpush1.bf16.msra.mxu0 0
      %3060 = vmatprep.subr.bf16.mxu0 %v3026
      %3061 = vmatpush1.bf16.msra.mxu0 %v3023
      %3062 = vmatprep.subr.bf16.mxu0 0
      %3063 = vmatpush2.bf16.msra.mxu0 0
      %3064 = vmatprep.subr.bf16.mxu0 0
      %3065 = vmatpush2.bf16.msra.mxu0 0
      %3066 = vmatprep.subr.bf16.mxu0 0
      %3067 = vmatpush2.bf16.msra.mxu0 0
      %3068 = vmatprep.subr.bf16.mxu0 0
      %3069 = vmatpush2.bf16.msra.mxu0 0
      %3070 = vmatprep.subr.bf16.mxu0 0
      %3071 = vmatpush2.bf16.msra.mxu0 0
      %3072 = vmatprep.subr.bf16.mxu0 0
      %3073 = vmatpush2.bf16.msra.mxu0 0
      %3074 = vmatprep.subr.bf16.mxu0 0
      %3075 = vmatpush2.bf16.msra.mxu0 0
      %3076 = vmatprep.subr.bf16.mxu0 0
      %3077 = vmatpush2.bf16.msra.mxu0 0
      %3078 = vmatprep.mubr.bf16.mxu0 0
      %3079 = vmatmul.mubr.bf16.gmra.mxu0 %v3020
      %v3080 = vpop.f32.mrf.mxu0
      %v3081 = vadd.f32 0.0, %v3080
      %v3082 = vpop.f32.mrf.mxu0
      %v3083 = vadd.f32 0.0, %v3082
      %v3084 = vpop.f32.mrf.mxu0
      %v3085 = vpop.f32.mrf.mxu0
      %3086 = vdwg.mxu0
      %3087 = vmatprep.subr.bf16.mxu0 0
      %3088 = vmatpush1.bf16.msra.mxu0 0
      %3089 = vmatprep.subr.bf16.mxu0 0
      %3090 = vmatpush1.bf16.msra.mxu0 0
      %3091 = vmatprep.subr.bf16.mxu0 0
      %3092 = vmatpush1.bf16.msra.mxu0 0
      %3093 = vmatprep.subr.bf16.mxu0 0
      %3094 = vmatpush1.bf16.msra.mxu0 0
      %3095 = vmatprep.subr.bf16.mxu0 0
      %3096 = vmatpush1.bf16.msra.mxu0 0
      %3097 = vmatprep.subr.bf16.mxu0 0
      %3098 = vmatpush1.bf16.msra.mxu0 0
      %3099 = vmatprep.subr.bf16.mxu0 0
      %3100 = vmatpush1.bf16.msra.mxu0 0
      %3101 = vmatprep.subr.bf16.mxu0 %v3032
      %3102 = vmatpush1.bf16.msra.mxu0 %v3029
      %3103 = vmatprep.subr.bf16.mxu0 0
      %3104 = vmatpush2.bf16.msra.mxu0 0
      %3105 = vmatprep.subr.bf16.mxu0 0
      %3106 = vmatpush2.bf16.msra.mxu0 0
      %3107 = vmatprep.subr.bf16.mxu0 0
      %3108 = vmatpush2.bf16.msra.mxu0 0
      %3109 = vmatprep.subr.bf16.mxu0 0
      %3110 = vmatpush2.bf16.msra.mxu0 0
      %3111 = vmatprep.subr.bf16.mxu0 0
      %3112 = vmatpush2.bf16.msra.mxu0 0
      %3113 = vmatprep.subr.bf16.mxu0 0
      %3114 = vmatpush2.bf16.msra.mxu0 0
      %3115 = vmatprep.subr.bf16.mxu0 0
      %3116 = vmatpush2.bf16.msra.mxu0 0
      %3117 = vmatprep.subr.bf16.mxu0 0
      %3118 = vmatpush2.bf16.msra.mxu0 0
      %3119 = vmatprep.mubr.bf16.mxu0 0
      %3120 = vmatmul.mubr.bf16.gmra.mxu0 %v3020
      %v3121 = vpop.f32.mrf.mxu0
      %v3122 = vadd.f32 0.0, %v3121
      %v3123 = vpop.f32.mrf.mxu0
      %v3124 = vadd.f32 0.0, %v3123
      %v3125 = vpop.f32.mrf.mxu0
      %v3126 = vpop.f32.mrf.mxu0
      %3127 = vdwg.mxu0
      %3128 = vmatprep.subr.bf16.mxu0 0
      %3129 = vmatpush1.bf16.msra.mxu0 0
      %3130 = vmatprep.subr.bf16.mxu0 0
      %3131 = vmatpush1.bf16.msra.mxu0 0
      %3132 = vmatprep.subr.bf16.mxu0 0
      %3133 = vmatpush1.bf16.msra.mxu0 0
      %3134 = vmatprep.subr.bf16.mxu0 0
      %3135 = vmatpush1.bf16.msra.mxu0 0
      %3136 = vmatprep.subr.bf16.mxu0 0
      %3137 = vmatpush1.bf16.msra.mxu0 0
      %3138 = vmatprep.subr.bf16.mxu0 0
      %3139 = vmatpush1.bf16.msra.mxu0 0
      %3140 = vmatprep.subr.bf16.mxu0 0
      %3141 = vmatpush1.bf16.msra.mxu0 0
      %3142 = vmatprep.subr.bf16.mxu0 %v3038
      %3143 = vmatpush1.bf16.msra.mxu0 %v3035
      %3144 = vmatprep.subr.bf16.mxu0 0
      %3145 = vmatpush2.bf16.msra.mxu0 0
      %3146 = vmatprep.subr.bf16.mxu0 0
      %3147 = vmatpush2.bf16.msra.mxu0 0
      %3148 = vmatprep.subr.bf16.mxu0 0
      %3149 = vmatpush2.bf16.msra.mxu0 0
      %3150 = vmatprep.subr.bf16.mxu0 0
      %3151 = vmatpush2.bf16.msra.mxu0 0
      %3152 = vmatprep.subr.bf16.mxu0 0
      %3153 = vmatpush2.bf16.msra.mxu0 0
      %3154 = vmatprep.subr.bf16.mxu0 0
      %3155 = vmatpush2.bf16.msra.mxu0 0
      %3156 = vmatprep.subr.bf16.mxu0 0
      %3157 = vmatpush2.bf16.msra.mxu0 0
      %3158 = vmatprep.subr.bf16.mxu0 0
      %3159 = vmatpush2.bf16.msra.mxu0 0
      %3160 = vmatprep.mubr.bf16.mxu0 0
      %3161 = vmatmul.mubr.bf16.gmra.mxu0 %v3020
      %v3162 = vpop.f32.mrf.mxu0
      %v3163 = vadd.f32 0.0, %v3162
      %v3164 = vpop.f32.mrf.mxu0
      %v3165 = vadd.f32 0.0, %v3164
      %v3166 = vpop.f32.mrf.mxu0
      %v3167 = vpop.f32.mrf.mxu0
      %3168 = vdwg.mxu0
      %3169 = vmatprep.subr.bf16.mxu0 0
      %3170 = vmatpush1.bf16.msra.mxu0 0
      %3171 = vmatprep.subr.bf16.mxu0 0
      %3172 = vmatpush1.bf16.msra.mxu0 0
      %3173 = vmatprep.subr.bf16.mxu0 0
      %3174 = vmatpush1.bf16.msra.mxu0 0
      %3175 = vmatprep.subr.bf16.mxu0 0
      %3176 = vmatpush1.bf16.msra.mxu0 0
      %3177 = vmatprep.subr.bf16.mxu0 0
      %3178 = vmatpush1.bf16.msra.mxu0 0
      %3179 = vmatprep.subr.bf16.mxu0 0
      %3180 = vmatpush1.bf16.msra.mxu0 0
      %3181 = vmatprep.subr.bf16.mxu0 0
      %3182 = vmatpush1.bf16.msra.mxu0 0
      %3183 = vmatprep.subr.bf16.mxu0 %v3044
      %3184 = vmatpush1.bf16.msra.mxu0 %v3041
      %3185 = vmatprep.subr.bf16.mxu0 0
      %3186 = vmatpush2.bf16.msra.mxu0 0
      %3187 = vmatprep.subr.bf16.mxu0 0
      %3188 = vmatpush2.bf16.msra.mxu0 0
      %3189 = vmatprep.subr.bf16.mxu0 0
      %3190 = vmatpush2.bf16.msra.mxu0 0
      %3191 = vmatprep.subr.bf16.mxu0 0
      %3192 = vmatpush2.bf16.msra.mxu0 0
      %3193 = vmatprep.subr.bf16.mxu0 0
      %3194 = vmatpush2.bf16.msra.mxu0 0
      %3195 = vmatprep.subr.bf16.mxu0 0
      %3196 = vmatpush2.bf16.msra.mxu0 0
      %3197 = vmatprep.subr.bf16.mxu0 0
      %3198 = vmatpush2.bf16.msra.mxu0 0
      %3199 = vmatprep.subr.bf16.mxu0 0
      %3200 = vmatpush2.bf16.msra.mxu0 0
      %3201 = vmatprep.mubr.bf16.mxu0 0
      %3202 = vmatmul.mubr.bf16.gmra.mxu0 %v3020
      %v3203 = vpop.f32.mrf.mxu0
      %v3204 = vadd.f32 0.0, %v3203
      %v3205 = vpop.f32.mrf.mxu0
      %v3206 = vadd.f32 0.0, %v3205
      %v3207 = vpop.f32.mrf.mxu0
      %v3208 = vpop.f32.mrf.mxu0
      %3209 = vdwg.mxu0
      %v3210 = vadd.f32 %v2984, %v3081
      %v3211 = vadd.f32 %v2985, %v3083
      %v3212 = vadd.f32 %v2986, %v3122
      %v3213 = vadd.f32 %v2987, %v3124
      %v3214 = vadd.f32 %v2988, %v3163
      %v3215 = vadd.f32 %v2989, %v3165
      %v3216 = vadd.f32 %v2990, %v3204
      %v3217 = vadd.f32 %v2991, %v3206
      %v3218 = vld [vmem:[%s2992] sm:$0xff]
      %v3219 = vld [vmem:[%s2992 + $0x8] sm:$0xff]
      %v3220 = vld [vmem:[%s2992 + $0x10] sm:$0xff]
      %v3221 = vld [vmem:[%s2992 + $0x18] sm:$0xff]
      %v3222 = vld [vmem:[%s2992 + $0x20] sm:$0xf]
      %s3223 = scalar_lea.vmem %s1, 52
      %v3224 = vld [vmem:[%s3223] sm:$0xf]
      %v3230 = vunpack.c.l.b16 %v3218
      %v3231 = vunpack.c.h.b16 %v3218
      %v3232 = vunpack.c.l.b16 %v3219
      %v3233 = vunpack.c.h.b16 %v3219
      %v3234 = vunpack.c.l.b16 %v3220
      %v3235 = vunpack.c.h.b16 %v3220
      %v3236 = vunpack.c.l.b16 %v3221
      %v3237 = vunpack.c.h.b16 %v3221
      %v3238 = vunpack.c.l.b16 %v3222
      %v3239 = vpack.c.b16 %v3230, %v3230
      %v3240 = vpack.c.b16 %v3231, %v3231
      %v3241 = vpack.c.b16 %v3232, %v3232
      %v3242 = vpack.c.b16 %v3233, %v3233
      %v3243 = vpack.c.b16 %v3234, %v3234
      %v3244 = vpack.c.b16 %v3235, %v3235
      %v3245 = vpack.c.b16 %v3236, %v3236
      %v3246 = vpack.c.b16 %v3237, %v3237
      %v3247 = vpack.c.b16 %v3238, %v3238
      %3248 = vrot.lane.b32.xlu0 %v3239, 96
      %v3249 = vpop.permute.xlu0 %3248
      %3250 = vrot.lane.b32.xlu0 %v3240, 96
      %v3251 = vpop.permute.xlu0 %3250
      %3252 = vrot.lane.b32.xlu0 %v3241, 96
      %v3253 = vpop.permute.xlu0 %3252
      %3254 = vrot.lane.b32.xlu0 %v3242, 96
      %v3255 = vpop.permute.xlu0 %3254
      %3256 = vrot.lane.b32.xlu0 %v3243, 96
      %v3257 = vpop.permute.xlu0 %3256
      %3258 = vrot.lane.b32.xlu0 %v3244, 96
      %v3259 = vpop.permute.xlu0 %3258
      %3260 = vrot.lane.b32.xlu0 %v3245, 96
      %v3261 = vpop.permute.xlu0 %3260
      %3262 = vrot.lane.b32.xlu0 %v3246, 96
      %v3263 = vpop.permute.xlu0 %3262
      %3264 = vrot.lane.b32.xlu0 %v3247, 96
      %v3265 = vpop.permute.xlu0 %3264
      %v3266 = vsel %vm194, %v3249, %v3251
      %v3267 = vsel %vm194, %v3251, %v3253
      %v3268 = vsel %vm194, %v3253, %v3255
      %v3269 = vsel %vm194, %v3255, %v3257
      %v3270 = vsel %vm194, %v3257, %v3259
      %v3271 = vsel %vm194, %v3259, %v3261
      %v3272 = vsel %vm194, %v3261, %v3263
      %v3273 = vsel %vm194, %v3263, %v3265
      %v3275 = vsel %vm203, %v3224, 0
      %v3278 = vsel %vm207, %v3266, 0
      %v3281 = vsel %vm207, %v3267, 0
      %v3284 = vsel %vm207, %v3268, 0
      %v3287 = vsel %vm207, %v3269, 0
      %v3290 = vsel %vm207, %v3270, 0
      %v3293 = vsel %vm207, %v3271, 0
      %v3296 = vsel %vm207, %v3272, 0
      %v3299 = vsel %vm207, %v3273, 0
      %3301 = vmatprep.subr.bf16.mxu0 0
      %3302 = vmatpush1.bf16.msra.mxu0 0
      %3303 = vmatprep.subr.bf16.mxu0 0
      %3304 = vmatpush1.bf16.msra.mxu0 0
      %3305 = vmatprep.subr.bf16.mxu0 0
      %3306 = vmatpush1.bf16.msra.mxu0 0
      %3307 = vmatprep.subr.bf16.mxu0 0
      %3308 = vmatpush1.bf16.msra.mxu0 0
      %3309 = vmatprep.subr.bf16.mxu0 0
      %3310 = vmatpush1.bf16.msra.mxu0 0
      %3311 = vmatprep.subr.bf16.mxu0 0
      %3312 = vmatpush1.bf16.msra.mxu0 0
      %3313 = vmatprep.subr.bf16.mxu0 0
      %3314 = vmatpush1.bf16.msra.mxu0 0
      %3315 = vmatprep.subr.bf16.mxu0 %v3281
      %3316 = vmatpush1.bf16.msra.mxu0 %v3278
      %3317 = vmatprep.subr.bf16.mxu0 0
      %3318 = vmatpush2.bf16.msra.mxu0 0
      %3319 = vmatprep.subr.bf16.mxu0 0
      %3320 = vmatpush2.bf16.msra.mxu0 0
      %3321 = vmatprep.subr.bf16.mxu0 0
      %3322 = vmatpush2.bf16.msra.mxu0 0
      %3323 = vmatprep.subr.bf16.mxu0 0
      %3324 = vmatpush2.bf16.msra.mxu0 0
      %3325 = vmatprep.subr.bf16.mxu0 0
      %3326 = vmatpush2.bf16.msra.mxu0 0
      %3327 = vmatprep.subr.bf16.mxu0 0
      %3328 = vmatpush2.bf16.msra.mxu0 0
      %3329 = vmatprep.subr.bf16.mxu0 0
      %3330 = vmatpush2.bf16.msra.mxu0 0
      %3331 = vmatprep.subr.bf16.mxu0 0
      %3332 = vmatpush2.bf16.msra.mxu0 0
      %3333 = vmatprep.mubr.bf16.mxu0 0
      %3334 = vmatmul.mubr.bf16.gmra.mxu0 %v3275
      %v3335 = vpop.f32.mrf.mxu0
      %v3336 = vadd.f32 0.0, %v3335
      %v3337 = vpop.f32.mrf.mxu0
      %v3338 = vadd.f32 0.0, %v3337
      %v3339 = vpop.f32.mrf.mxu0
      %v3340 = vpop.f32.mrf.mxu0
      %3341 = vdwg.mxu0
      %3342 = vmatprep.subr.bf16.mxu0 0
      %3343 = vmatpush1.bf16.msra.mxu0 0
      %3344 = vmatprep.subr.bf16.mxu0 0
      %3345 = vmatpush1.bf16.msra.mxu0 0
      %3346 = vmatprep.subr.bf16.mxu0 0
      %3347 = vmatpush1.bf16.msra.mxu0 0
      %3348 = vmatprep.subr.bf16.mxu0 0
      %3349 = vmatpush1.bf16.msra.mxu0 0
      %3350 = vmatprep.subr.bf16.mxu0 0
      %3351 = vmatpush1.bf16.msra.mxu0 0
      %3352 = vmatprep.subr.bf16.mxu0 0
      %3353 = vmatpush1.bf16.msra.mxu0 0
      %3354 = vmatprep.subr.bf16.mxu0 0
      %3355 = vmatpush1.bf16.msra.mxu0 0
      %3356 = vmatprep.subr.bf16.mxu0 %v3287
      %3357 = vmatpush1.bf16.msra.mxu0 %v3284
      %3358 = vmatprep.subr.bf16.mxu0 0
      %3359 = vmatpush2.bf16.msra.mxu0 0
      %3360 = vmatprep.subr.bf16.mxu0 0
      %3361 = vmatpush2.bf16.msra.mxu0 0
      %3362 = vmatprep.subr.bf16.mxu0 0
      %3363 = vmatpush2.bf16.msra.mxu0 0
      %3364 = vmatprep.subr.bf16.mxu0 0
      %3365 = vmatpush2.bf16.msra.mxu0 0
      %3366 = vmatprep.subr.bf16.mxu0 0
      %3367 = vmatpush2.bf16.msra.mxu0 0
      %3368 = vmatprep.subr.bf16.mxu0 0
      %3369 = vmatpush2.bf16.msra.mxu0 0
      %3370 = vmatprep.subr.bf16.mxu0 0
      %3371 = vmatpush2.bf16.msra.mxu0 0
      %3372 = vmatprep.subr.bf16.mxu0 0
      %3373 = vmatpush2.bf16.msra.mxu0 0
      %3374 = vmatprep.mubr.bf16.mxu0 0
      %3375 = vmatmul.mubr.bf16.gmra.mxu0 %v3275
      %v3376 = vpop.f32.mrf.mxu0
      %v3377 = vadd.f32 0.0, %v3376
      %v3378 = vpop.f32.mrf.mxu0
      %v3379 = vadd.f32 0.0, %v3378
      %v3380 = vpop.f32.mrf.mxu0
      %v3381 = vpop.f32.mrf.mxu0
      %3382 = vdwg.mxu0
      %3383 = vmatprep.subr.bf16.mxu0 0
      %3384 = vmatpush1.bf16.msra.mxu0 0
      %3385 = vmatprep.subr.bf16.mxu0 0
      %3386 = vmatpush1.bf16.msra.mxu0 0
      %3387 = vmatprep.subr.bf16.mxu0 0
      %3388 = vmatpush1.bf16.msra.mxu0 0
      %3389 = vmatprep.subr.bf16.mxu0 0
      %3390 = vmatpush1.bf16.msra.mxu0 0
      %3391 = vmatprep.subr.bf16.mxu0 0
      %3392 = vmatpush1.bf16.msra.mxu0 0
      %3393 = vmatprep.subr.bf16.mxu0 0
      %3394 = vmatpush1.bf16.msra.mxu0 0
      %3395 = vmatprep.subr.bf16.mxu0 0
      %3396 = vmatpush1.bf16.msra.mxu0 0
      %3397 = vmatprep.subr.bf16.mxu0 %v3293
      %3398 = vmatpush1.bf16.msra.mxu0 %v3290
      %3399 = vmatprep.subr.bf16.mxu0 0
      %3400 = vmatpush2.bf16.msra.mxu0 0
      %3401 = vmatprep.subr.bf16.mxu0 0
      %3402 = vmatpush2.bf16.msra.mxu0 0
      %3403 = vmatprep.subr.bf16.mxu0 0
      %3404 = vmatpush2.bf16.msra.mxu0 0
      %3405 = vmatprep.subr.bf16.mxu0 0
      %3406 = vmatpush2.bf16.msra.mxu0 0
      %3407 = vmatprep.subr.bf16.mxu0 0
      %3408 = vmatpush2.bf16.msra.mxu0 0
      %3409 = vmatprep.subr.bf16.mxu0 0
      %3410 = vmatpush2.bf16.msra.mxu0 0
      %3411 = vmatprep.subr.bf16.mxu0 0
      %3412 = vmatpush2.bf16.msra.mxu0 0
      %3413 = vmatprep.subr.bf16.mxu0 0
      %3414 = vmatpush2.bf16.msra.mxu0 0
      %3415 = vmatprep.mubr.bf16.mxu0 0
      %3416 = vmatmul.mubr.bf16.gmra.mxu0 %v3275
      %v3417 = vpop.f32.mrf.mxu0
      %v3418 = vadd.f32 0.0, %v3417
      %v3419 = vpop.f32.mrf.mxu0
      %v3420 = vadd.f32 0.0, %v3419
      %v3421 = vpop.f32.mrf.mxu0
      %v3422 = vpop.f32.mrf.mxu0
      %3423 = vdwg.mxu0
      %3424 = vmatprep.subr.bf16.mxu0 0
      %3425 = vmatpush1.bf16.msra.mxu0 0
      %3426 = vmatprep.subr.bf16.mxu0 0
      %3427 = vmatpush1.bf16.msra.mxu0 0
      %3428 = vmatprep.subr.bf16.mxu0 0
      %3429 = vmatpush1.bf16.msra.mxu0 0
      %3430 = vmatprep.subr.bf16.mxu0 0
      %3431 = vmatpush1.bf16.msra.mxu0 0
      %3432 = vmatprep.subr.bf16.mxu0 0
      %3433 = vmatpush1.bf16.msra.mxu0 0
      %3434 = vmatprep.subr.bf16.mxu0 0
      %3435 = vmatpush1.bf16.msra.mxu0 0
      %3436 = vmatprep.subr.bf16.mxu0 0
      %3437 = vmatpush1.bf16.msra.mxu0 0
      %3438 = vmatprep.subr.bf16.mxu0 %v3299
      %3439 = vmatpush1.bf16.msra.mxu0 %v3296
      %3440 = vmatprep.subr.bf16.mxu0 0
      %3441 = vmatpush2.bf16.msra.mxu0 0
      %3442 = vmatprep.subr.bf16.mxu0 0
      %3443 = vmatpush2.bf16.msra.mxu0 0
      %3444 = vmatprep.subr.bf16.mxu0 0
      %3445 = vmatpush2.bf16.msra.mxu0 0
      %3446 = vmatprep.subr.bf16.mxu0 0
      %3447 = vmatpush2.bf16.msra.mxu0 0
      %3448 = vmatprep.subr.bf16.mxu0 0
      %3449 = vmatpush2.bf16.msra.mxu0 0
      %3450 = vmatprep.subr.bf16.mxu0 0
      %3451 = vmatpush2.bf16.msra.mxu0 0
      %3452 = vmatprep.subr.bf16.mxu0 0
      %3453 = vmatpush2.bf16.msra.mxu0 0
      %3454 = vmatprep.subr.bf16.mxu0 0
      %3455 = vmatpush2.bf16.msra.mxu0 0
      %3456 = vmatprep.mubr.bf16.mxu0 0
      %3457 = vmatmul.mubr.bf16.gmra.mxu0 %v3275
      %v3458 = vpop.f32.mrf.mxu0
      %v3459 = vadd.f32 0.0, %v3458
      %v3460 = vpop.f32.mrf.mxu0
      %v3461 = vadd.f32 0.0, %v3460
      %v3462 = vpop.f32.mrf.mxu0
      %v3463 = vpop.f32.mrf.mxu0
      %3464 = vdwg.mxu0
      %v3465 = vadd.f32 %v3210, %v3336
      %v3466 = vadd.f32 %v3211, %v3338
      %v3467 = vadd.f32 %v3212, %v3377
      %v3468 = vadd.f32 %v3213, %v3379
      %v3469 = vadd.f32 %v3214, %v3418
      %v3470 = vadd.f32 %v3215, %v3420
      %v3471 = vadd.f32 %v3216, %v3459
      %v3472 = vadd.f32 %v3217, %v3461
      %s3473 = scalar_lea.vmem %s138, 252
      %v3474 = vld [vmem:[%s3473] sm:$0xff]
      %v3475 = vld [vmem:[%s3473 + $0x8] sm:$0xff]
      %v3476 = vld [vmem:[%s3473 + $0x10] sm:$0xff]
      %v3477 = vld [vmem:[%s3473 + $0x18] sm:$0xff]
      %s3478 = scalar_lea.vmem %s1, 28
      %v3479 = vld [vmem:[%s3478] sm:$0xf]
      %v3484 = vunpack.c.l.b16 %v3474
      %v3485 = vunpack.c.h.b16 %v3474
      %v3486 = vunpack.c.l.b16 %v3475
      %v3487 = vunpack.c.h.b16 %v3475
      %v3488 = vunpack.c.l.b16 %v3476
      %v3489 = vunpack.c.h.b16 %v3476
      %v3490 = vunpack.c.l.b16 %v3477
      %v3491 = vunpack.c.h.b16 %v3477
      %v3492 = vpack.c.b16 %v3484, %v3484
      %v3493 = vpack.c.b16 %v3485, %v3485
      %v3494 = vpack.c.b16 %v3486, %v3486
      %v3495 = vpack.c.b16 %v3487, %v3487
      %v3496 = vpack.c.b16 %v3488, %v3488
      %v3497 = vpack.c.b16 %v3489, %v3489
      %v3498 = vpack.c.b16 %v3490, %v3490
      %v3499 = vpack.c.b16 %v3491, %v3491
      %v3501 = vsel %vm203, %v3479, 0
      %v3504 = vsel %vm207, %v3492, 0
      %v3507 = vsel %vm207, %v3493, 0
      %v3510 = vsel %vm207, %v3494, 0
      %v3513 = vsel %vm207, %v3495, 0
      %v3516 = vsel %vm207, %v3496, 0
      %v3519 = vsel %vm207, %v3497, 0
      %v3522 = vsel %vm207, %v3498, 0
      %v3525 = vsel %vm207, %v3499, 0
      %3527 = vmatprep.subr.bf16.mxu0 0
      %3528 = vmatpush1.bf16.msra.mxu0 0
      %3529 = vmatprep.subr.bf16.mxu0 0
      %3530 = vmatpush1.bf16.msra.mxu0 0
      %3531 = vmatprep.subr.bf16.mxu0 0
      %3532 = vmatpush1.bf16.msra.mxu0 0
      %3533 = vmatprep.subr.bf16.mxu0 0
      %3534 = vmatpush1.bf16.msra.mxu0 0
      %3535 = vmatprep.subr.bf16.mxu0 0
      %3536 = vmatpush1.bf16.msra.mxu0 0
      %3537 = vmatprep.subr.bf16.mxu0 0
      %3538 = vmatpush1.bf16.msra.mxu0 0
      %3539 = vmatprep.subr.bf16.mxu0 0
      %3540 = vmatpush1.bf16.msra.mxu0 0
      %3541 = vmatprep.subr.bf16.mxu0 %v3507
      %3542 = vmatpush1.bf16.msra.mxu0 %v3504
      %3543 = vmatprep.subr.bf16.mxu0 0
      %3544 = vmatpush2.bf16.msra.mxu0 0
      %3545 = vmatprep.subr.bf16.mxu0 0
      %3546 = vmatpush2.bf16.msra.mxu0 0
      %3547 = vmatprep.subr.bf16.mxu0 0
      %3548 = vmatpush2.bf16.msra.mxu0 0
      %3549 = vmatprep.subr.bf16.mxu0 0
      %3550 = vmatpush2.bf16.msra.mxu0 0
      %3551 = vmatprep.subr.bf16.mxu0 0
      %3552 = vmatpush2.bf16.msra.mxu0 0
      %3553 = vmatprep.subr.bf16.mxu0 0
      %3554 = vmatpush2.bf16.msra.mxu0 0
      %3555 = vmatprep.subr.bf16.mxu0 0
      %3556 = vmatpush2.bf16.msra.mxu0 0
      %3557 = vmatprep.subr.bf16.mxu0 0
      %3558 = vmatpush2.bf16.msra.mxu0 0
      %3559 = vmatprep.mubr.bf16.mxu0 0
      %3560 = vmatmul.mubr.bf16.gmra.mxu0 %v3501
      %v3561 = vpop.f32.mrf.mxu0
      %v3562 = vadd.f32 0.0, %v3561
      %v3563 = vpop.f32.mrf.mxu0
      %v3564 = vadd.f32 0.0, %v3563
      %v3565 = vpop.f32.mrf.mxu0
      %v3566 = vpop.f32.mrf.mxu0
      %3567 = vdwg.mxu0
      %3568 = vmatprep.subr.bf16.mxu0 0
      %3569 = vmatpush1.bf16.msra.mxu0 0
      %3570 = vmatprep.subr.bf16.mxu0 0
      %3571 = vmatpush1.bf16.msra.mxu0 0
      %3572 = vmatprep.subr.bf16.mxu0 0
      %3573 = vmatpush1.bf16.msra.mxu0 0
      %3574 = vmatprep.subr.bf16.mxu0 0
      %3575 = vmatpush1.bf16.msra.mxu0 0
      %3576 = vmatprep.subr.bf16.mxu0 0
      %3577 = vmatpush1.bf16.msra.mxu0 0
      %3578 = vmatprep.subr.bf16.mxu0 0
      %3579 = vmatpush1.bf16.msra.mxu0 0
      %3580 = vmatprep.subr.bf16.mxu0 0
      %3581 = vmatpush1.bf16.msra.mxu0 0
      %3582 = vmatprep.subr.bf16.mxu0 %v3513
      %3583 = vmatpush1.bf16.msra.mxu0 %v3510
      %3584 = vmatprep.subr.bf16.mxu0 0
      %3585 = vmatpush2.bf16.msra.mxu0 0
      %3586 = vmatprep.subr.bf16.mxu0 0
      %3587 = vmatpush2.bf16.msra.mxu0 0
      %3588 = vmatprep.subr.bf16.mxu0 0
      %3589 = vmatpush2.bf16.msra.mxu0 0
      %3590 = vmatprep.subr.bf16.mxu0 0
      %3591 = vmatpush2.bf16.msra.mxu0 0
      %3592 = vmatprep.subr.bf16.mxu0 0
      %3593 = vmatpush2.bf16.msra.mxu0 0
      %3594 = vmatprep.subr.bf16.mxu0 0
      %3595 = vmatpush2.bf16.msra.mxu0 0
      %3596 = vmatprep.subr.bf16.mxu0 0
      %3597 = vmatpush2.bf16.msra.mxu0 0
      %3598 = vmatprep.subr.bf16.mxu0 0
      %3599 = vmatpush2.bf16.msra.mxu0 0
      %3600 = vmatprep.mubr.bf16.mxu0 0
      %3601 = vmatmul.mubr.bf16.gmra.mxu0 %v3501
      %v3602 = vpop.f32.mrf.mxu0
      %v3603 = vadd.f32 0.0, %v3602
      %v3604 = vpop.f32.mrf.mxu0
      %v3605 = vadd.f32 0.0, %v3604
      %v3606 = vpop.f32.mrf.mxu0
      %v3607 = vpop.f32.mrf.mxu0
      %3608 = vdwg.mxu0
      %3609 = vmatprep.subr.bf16.mxu0 0
      %3610 = vmatpush1.bf16.msra.mxu0 0
      %3611 = vmatprep.subr.bf16.mxu0 0
      %3612 = vmatpush1.bf16.msra.mxu0 0
      %3613 = vmatprep.subr.bf16.mxu0 0
      %3614 = vmatpush1.bf16.msra.mxu0 0
      %3615 = vmatprep.subr.bf16.mxu0 0
      %3616 = vmatpush1.bf16.msra.mxu0 0
      %3617 = vmatprep.subr.bf16.mxu0 0
      %3618 = vmatpush1.bf16.msra.mxu0 0
      %3619 = vmatprep.subr.bf16.mxu0 0
      %3620 = vmatpush1.bf16.msra.mxu0 0
      %3621 = vmatprep.subr.bf16.mxu0 0
      %3622 = vmatpush1.bf16.msra.mxu0 0
      %3623 = vmatprep.subr.bf16.mxu0 %v3519
      %3624 = vmatpush1.bf16.msra.mxu0 %v3516
      %3625 = vmatprep.subr.bf16.mxu0 0
      %3626 = vmatpush2.bf16.msra.mxu0 0
      %3627 = vmatprep.subr.bf16.mxu0 0
      %3628 = vmatpush2.bf16.msra.mxu0 0
      %3629 = vmatprep.subr.bf16.mxu0 0
      %3630 = vmatpush2.bf16.msra.mxu0 0
      %3631 = vmatprep.subr.bf16.mxu0 0
      %3632 = vmatpush2.bf16.msra.mxu0 0
      %3633 = vmatprep.subr.bf16.mxu0 0
      %3634 = vmatpush2.bf16.msra.mxu0 0
      %3635 = vmatprep.subr.bf16.mxu0 0
      %3636 = vmatpush2.bf16.msra.mxu0 0
      %3637 = vmatprep.subr.bf16.mxu0 0
      %3638 = vmatpush2.bf16.msra.mxu0 0
      %3639 = vmatprep.subr.bf16.mxu0 0
      %3640 = vmatpush2.bf16.msra.mxu0 0
      %3641 = vmatprep.mubr.bf16.mxu0 0
      %3642 = vmatmul.mubr.bf16.gmra.mxu0 %v3501
      %v3643 = vpop.f32.mrf.mxu0
      %v3644 = vadd.f32 0.0, %v3643
      %v3645 = vpop.f32.mrf.mxu0
      %v3646 = vadd.f32 0.0, %v3645
      %v3647 = vpop.f32.mrf.mxu0
      %v3648 = vpop.f32.mrf.mxu0
      %3649 = vdwg.mxu0
      %3650 = vmatprep.subr.bf16.mxu0 0
      %3651 = vmatpush1.bf16.msra.mxu0 0
      %3652 = vmatprep.subr.bf16.mxu0 0
      %3653 = vmatpush1.bf16.msra.mxu0 0
      %3654 = vmatprep.subr.bf16.mxu0 0
      %3655 = vmatpush1.bf16.msra.mxu0 0
      %3656 = vmatprep.subr.bf16.mxu0 0
      %3657 = vmatpush1.bf16.msra.mxu0 0
      %3658 = vmatprep.subr.bf16.mxu0 0
      %3659 = vmatpush1.bf16.msra.mxu0 0
      %3660 = vmatprep.subr.bf16.mxu0 0
      %3661 = vmatpush1.bf16.msra.mxu0 0
      %3662 = vmatprep.subr.bf16.mxu0 0
      %3663 = vmatpush1.bf16.msra.mxu0 0
      %3664 = vmatprep.subr.bf16.mxu0 %v3525
      %3665 = vmatpush1.bf16.msra.mxu0 %v3522
      %3666 = vmatprep.subr.bf16.mxu0 0
      %3667 = vmatpush2.bf16.msra.mxu0 0
      %3668 = vmatprep.subr.bf16.mxu0 0
      %3669 = vmatpush2.bf16.msra.mxu0 0
      %3670 = vmatprep.subr.bf16.mxu0 0
      %3671 = vmatpush2.bf16.msra.mxu0 0
      %3672 = vmatprep.subr.bf16.mxu0 0
      %3673 = vmatpush2.bf16.msra.mxu0 0
      %3674 = vmatprep.subr.bf16.mxu0 0
      %3675 = vmatpush2.bf16.msra.mxu0 0
      %3676 = vmatprep.subr.bf16.mxu0 0
      %3677 = vmatpush2.bf16.msra.mxu0 0
      %3678 = vmatprep.subr.bf16.mxu0 0
      %3679 = vmatpush2.bf16.msra.mxu0 0
      %3680 = vmatprep.subr.bf16.mxu0 0
      %3681 = vmatpush2.bf16.msra.mxu0 0
      %3682 = vmatprep.mubr.bf16.mxu0 0
      %3683 = vmatmul.mubr.bf16.gmra.mxu0 %v3501
      %v3684 = vpop.f32.mrf.mxu0
      %v3685 = vadd.f32 0.0, %v3684
      %v3686 = vpop.f32.mrf.mxu0
      %v3687 = vadd.f32 0.0, %v3686
      %v3688 = vpop.f32.mrf.mxu0
      %v3689 = vpop.f32.mrf.mxu0
      %3690 = vdwg.mxu0
      %v3691 = vadd.f32 %v3465, %v3562
      %v3692 = vadd.f32 %v3466, %v3564
      %v3693 = vadd.f32 %v3467, %v3603
      %v3694 = vadd.f32 %v3468, %v3605
      %v3695 = vadd.f32 %v3469, %v3644
      %v3696 = vadd.f32 %v3470, %v3646
      %v3697 = vadd.f32 %v3471, %v3685
      %v3698 = vadd.f32 %v3472, %v3687
      %v3699 = vld [vmem:[%s3473] sm:$0xff]
      %v3700 = vld [vmem:[%s3473 + $0x8] sm:$0xff]
      %v3701 = vld [vmem:[%s3473 + $0x10] sm:$0xff]
      %v3702 = vld [vmem:[%s3473 + $0x18] sm:$0xff]
      %v3703 = vld [vmem:[%s3473 + $0x20] sm:$0xf]
      %s3704 = scalar_lea.vmem %s1, 60
      %v3705 = vld [vmem:[%s3704] sm:$0xf]
      %v3711 = vunpack.c.l.b16 %v3699
      %v3712 = vunpack.c.h.b16 %v3699
      %v3713 = vunpack.c.l.b16 %v3700
      %v3714 = vunpack.c.h.b16 %v3700
      %v3715 = vunpack.c.l.b16 %v3701
      %v3716 = vunpack.c.h.b16 %v3701
      %v3717 = vunpack.c.l.b16 %v3702
      %v3718 = vunpack.c.h.b16 %v3702
      %v3719 = vunpack.c.l.b16 %v3703
      %v3720 = vpack.c.b16 %v3711, %v3711
      %v3721 = vpack.c.b16 %v3712, %v3712
      %v3722 = vpack.c.b16 %v3713, %v3713
      %v3723 = vpack.c.b16 %v3714, %v3714
      %v3724 = vpack.c.b16 %v3715, %v3715
      %v3725 = vpack.c.b16 %v3716, %v3716
      %v3726 = vpack.c.b16 %v3717, %v3717
      %v3727 = vpack.c.b16 %v3718, %v3718
      %v3728 = vpack.c.b16 %v3719, %v3719
      %3729 = vrot.lane.b32.xlu0 %v3720, 96
      %v3730 = vpop.permute.xlu0 %3729
      %3731 = vrot.lane.b32.xlu0 %v3721, 96
      %v3732 = vpop.permute.xlu0 %3731
      %3733 = vrot.lane.b32.xlu0 %v3722, 96
      %v3734 = vpop.permute.xlu0 %3733
      %3735 = vrot.lane.b32.xlu0 %v3723, 96
      %v3736 = vpop.permute.xlu0 %3735
      %3737 = vrot.lane.b32.xlu0 %v3724, 96
      %v3738 = vpop.permute.xlu0 %3737
      %3739 = vrot.lane.b32.xlu0 %v3725, 96
      %v3740 = vpop.permute.xlu0 %3739
      %3741 = vrot.lane.b32.xlu0 %v3726, 96
      %v3742 = vpop.permute.xlu0 %3741
      %3743 = vrot.lane.b32.xlu0 %v3727, 96
      %v3744 = vpop.permute.xlu0 %3743
      %3745 = vrot.lane.b32.xlu0 %v3728, 96
      %v3746 = vpop.permute.xlu0 %3745
      %v3747 = vsel %vm194, %v3730, %v3732
      %v3748 = vsel %vm194, %v3732, %v3734
      %v3749 = vsel %vm194, %v3734, %v3736
      %v3750 = vsel %vm194, %v3736, %v3738
      %v3751 = vsel %vm194, %v3738, %v3740
      %v3752 = vsel %vm194, %v3740, %v3742
      %v3753 = vsel %vm194, %v3742, %v3744
      %v3754 = vsel %vm194, %v3744, %v3746
      %v3756 = vsel %vm203, %v3705, 0
      %v3759 = vsel %vm207, %v3747, 0
      %v3762 = vsel %vm207, %v3748, 0
      %v3765 = vsel %vm207, %v3749, 0
      %v3768 = vsel %vm207, %v3750, 0
      %v3771 = vsel %vm207, %v3751, 0
      %v3774 = vsel %vm207, %v3752, 0
      %v3777 = vsel %vm207, %v3753, 0
      %v3780 = vsel %vm207, %v3754, 0
      %3782 = vmatprep.subr.bf16.mxu0 0
      %3783 = vmatpush1.bf16.msra.mxu0 0
      %3784 = vmatprep.subr.bf16.mxu0 0
      %3785 = vmatpush1.bf16.msra.mxu0 0
      %3786 = vmatprep.subr.bf16.mxu0 0
      %3787 = vmatpush1.bf16.msra.mxu0 0
      %3788 = vmatprep.subr.bf16.mxu0 0
      %3789 = vmatpush1.bf16.msra.mxu0 0
      %3790 = vmatprep.subr.bf16.mxu0 0
      %3791 = vmatpush1.bf16.msra.mxu0 0
      %3792 = vmatprep.subr.bf16.mxu0 0
      %3793 = vmatpush1.bf16.msra.mxu0 0
      %3794 = vmatprep.subr.bf16.mxu0 0
      %3795 = vmatpush1.bf16.msra.mxu0 0
      %3796 = vmatprep.subr.bf16.mxu0 %v3762
      %3797 = vmatpush1.bf16.msra.mxu0 %v3759
      %3798 = vmatprep.subr.bf16.mxu0 0
      %3799 = vmatpush2.bf16.msra.mxu0 0
      %3800 = vmatprep.subr.bf16.mxu0 0
      %3801 = vmatpush2.bf16.msra.mxu0 0
      %3802 = vmatprep.subr.bf16.mxu0 0
      %3803 = vmatpush2.bf16.msra.mxu0 0
      %3804 = vmatprep.subr.bf16.mxu0 0
      %3805 = vmatpush2.bf16.msra.mxu0 0
      %3806 = vmatprep.subr.bf16.mxu0 0
      %3807 = vmatpush2.bf16.msra.mxu0 0
      %3808 = vmatprep.subr.bf16.mxu0 0
      %3809 = vmatpush2.bf16.msra.mxu0 0
      %3810 = vmatprep.subr.bf16.mxu0 0
      %3811 = vmatpush2.bf16.msra.mxu0 0
      %3812 = vmatprep.subr.bf16.mxu0 0
      %3813 = vmatpush2.bf16.msra.mxu0 0
      %3814 = vmatprep.mubr.bf16.mxu0 0
      %3815 = vmatmul.mubr.bf16.gmra.mxu0 %v3756
      %v3816 = vpop.f32.mrf.mxu0
      %v3817 = vadd.f32 0.0, %v3816
      %v3818 = vpop.f32.mrf.mxu0
      %v3819 = vadd.f32 0.0, %v3818
      %v3820 = vpop.f32.mrf.mxu0
      %v3821 = vpop.f32.mrf.mxu0
      %3822 = vdwg.mxu0
      %3823 = vmatprep.subr.bf16.mxu0 0
      %3824 = vmatpush1.bf16.msra.mxu0 0
      %3825 = vmatprep.subr.bf16.mxu0 0
      %3826 = vmatpush1.bf16.msra.mxu0 0
      %3827 = vmatprep.subr.bf16.mxu0 0
      %3828 = vmatpush1.bf16.msra.mxu0 0
      %3829 = vmatprep.subr.bf16.mxu0 0
      %3830 = vmatpush1.bf16.msra.mxu0 0
      %3831 = vmatprep.subr.bf16.mxu0 0
      %3832 = vmatpush1.bf16.msra.mxu0 0
      %3833 = vmatprep.subr.bf16.mxu0 0
      %3834 = vmatpush1.bf16.msra.mxu0 0
      %3835 = vmatprep.subr.bf16.mxu0 0
      %3836 = vmatpush1.bf16.msra.mxu0 0
      %3837 = vmatprep.subr.bf16.mxu0 %v3768
      %3838 = vmatpush1.bf16.msra.mxu0 %v3765
      %3839 = vmatprep.subr.bf16.mxu0 0
      %3840 = vmatpush2.bf16.msra.mxu0 0
      %3841 = vmatprep.subr.bf16.mxu0 0
      %3842 = vmatpush2.bf16.msra.mxu0 0
      %3843 = vmatprep.subr.bf16.mxu0 0
      %3844 = vmatpush2.bf16.msra.mxu0 0
      %3845 = vmatprep.subr.bf16.mxu0 0
      %3846 = vmatpush2.bf16.msra.mxu0 0
      %3847 = vmatprep.subr.bf16.mxu0 0
      %3848 = vmatpush2.bf16.msra.mxu0 0
      %3849 = vmatprep.subr.bf16.mxu0 0
      %3850 = vmatpush2.bf16.msra.mxu0 0
      %3851 = vmatprep.subr.bf16.mxu0 0
      %3852 = vmatpush2.bf16.msra.mxu0 0
      %3853 = vmatprep.subr.bf16.mxu0 0
      %3854 = vmatpush2.bf16.msra.mxu0 0
      %3855 = vmatprep.mubr.bf16.mxu0 0
      %3856 = vmatmul.mubr.bf16.gmra.mxu0 %v3756
      %v3857 = vpop.f32.mrf.mxu0
      %v3858 = vadd.f32 0.0, %v3857
      %v3859 = vpop.f32.mrf.mxu0
      %v3860 = vadd.f32 0.0, %v3859
      %v3861 = vpop.f32.mrf.mxu0
      %v3862 = vpop.f32.mrf.mxu0
      %3863 = vdwg.mxu0
      %3864 = vmatprep.subr.bf16.mxu0 0
      %3865 = vmatpush1.bf16.msra.mxu0 0
      %3866 = vmatprep.subr.bf16.mxu0 0
      %3867 = vmatpush1.bf16.msra.mxu0 0
      %3868 = vmatprep.subr.bf16.mxu0 0
      %3869 = vmatpush1.bf16.msra.mxu0 0
      %3870 = vmatprep.subr.bf16.mxu0 0
      %3871 = vmatpush1.bf16.msra.mxu0 0
      %3872 = vmatprep.subr.bf16.mxu0 0
      %3873 = vmatpush1.bf16.msra.mxu0 0
      %3874 = vmatprep.subr.bf16.mxu0 0
      %3875 = vmatpush1.bf16.msra.mxu0 0
      %3876 = vmatprep.subr.bf16.mxu0 0
      %3877 = vmatpush1.bf16.msra.mxu0 0
      %3878 = vmatprep.subr.bf16.mxu0 %v3774
      %3879 = vmatpush1.bf16.msra.mxu0 %v3771
      %3880 = vmatprep.subr.bf16.mxu0 0
      %3881 = vmatpush2.bf16.msra.mxu0 0
      %3882 = vmatprep.subr.bf16.mxu0 0
      %3883 = vmatpush2.bf16.msra.mxu0 0
      %3884 = vmatprep.subr.bf16.mxu0 0
      %3885 = vmatpush2.bf16.msra.mxu0 0
      %3886 = vmatprep.subr.bf16.mxu0 0
      %3887 = vmatpush2.bf16.msra.mxu0 0
      %3888 = vmatprep.subr.bf16.mxu0 0
      %3889 = vmatpush2.bf16.msra.mxu0 0
      %3890 = vmatprep.subr.bf16.mxu0 0
      %3891 = vmatpush2.bf16.msra.mxu0 0
      %3892 = vmatprep.subr.bf16.mxu0 0
      %3893 = vmatpush2.bf16.msra.mxu0 0
      %3894 = vmatprep.subr.bf16.mxu0 0
      %3895 = vmatpush2.bf16.msra.mxu0 0
      %3896 = vmatprep.mubr.bf16.mxu0 0
      %3897 = vmatmul.mubr.bf16.gmra.mxu0 %v3756
      %v3898 = vpop.f32.mrf.mxu0
      %v3899 = vadd.f32 0.0, %v3898
      %v3900 = vpop.f32.mrf.mxu0
      %v3901 = vadd.f32 0.0, %v3900
      %v3902 = vpop.f32.mrf.mxu0
      %v3903 = vpop.f32.mrf.mxu0
      %3904 = vdwg.mxu0
      %3905 = vmatprep.subr.bf16.mxu0 0
      %3906 = vmatpush1.bf16.msra.mxu0 0
      %3907 = vmatprep.subr.bf16.mxu0 0
      %3908 = vmatpush1.bf16.msra.mxu0 0
      %3909 = vmatprep.subr.bf16.mxu0 0
      %3910 = vmatpush1.bf16.msra.mxu0 0
      %3911 = vmatprep.subr.bf16.mxu0 0
      %3912 = vmatpush1.bf16.msra.mxu0 0
      %3913 = vmatprep.subr.bf16.mxu0 0
      %3914 = vmatpush1.bf16.msra.mxu0 0
      %3915 = vmatprep.subr.bf16.mxu0 0
      %3916 = vmatpush1.bf16.msra.mxu0 0
      %3917 = vmatprep.subr.bf16.mxu0 0
      %3918 = vmatpush1.bf16.msra.mxu0 0
      %3919 = vmatprep.subr.bf16.mxu0 %v3780
      %3920 = vmatpush1.bf16.msra.mxu0 %v3777
      %3921 = vmatprep.subr.bf16.mxu0 0
      %3922 = vmatpush2.bf16.msra.mxu0 0
      %3923 = vmatprep.subr.bf16.mxu0 0
      %3924 = vmatpush2.bf16.msra.mxu0 0
      %3925 = vmatprep.subr.bf16.mxu0 0
      %3926 = vmatpush2.bf16.msra.mxu0 0
      %3927 = vmatprep.subr.bf16.mxu0 0
      %3928 = vmatpush2.bf16.msra.mxu0 0
      %3929 = vmatprep.subr.bf16.mxu0 0
      %3930 = vmatpush2.bf16.msra.mxu0 0
      %3931 = vmatprep.subr.bf16.mxu0 0
      %3932 = vmatpush2.bf16.msra.mxu0 0
      %3933 = vmatprep.subr.bf16.mxu0 0
      %3934 = vmatpush2.bf16.msra.mxu0 0
      %3935 = vmatprep.subr.bf16.mxu0 0
      %3936 = vmatpush2.bf16.msra.mxu0 0
      %3937 = vmatprep.mubr.bf16.mxu0 0
      %3938 = vmatmul.mubr.bf16.gmra.mxu0 %v3756
      %v3939 = vpop.f32.mrf.mxu0
      %v3940 = vadd.f32 0.0, %v3939
      %v3941 = vpop.f32.mrf.mxu0
      %v3942 = vadd.f32 0.0, %v3941
      %v3943 = vpop.f32.mrf.mxu0
      %v3944 = vpop.f32.mrf.mxu0
      %3945 = vdwg.mxu0
      %v3946 = vadd.f32 %v3691, %v3817
      %v3947 = vadd.f32 %v3692, %v3819
      %v3948 = vadd.f32 %v3693, %v3858
      %v3949 = vadd.f32 %v3694, %v3860
      %v3950 = vadd.f32 %v3695, %v3899
      %v3951 = vadd.f32 %v3696, %v3901
      %v3952 = vadd.f32 %v3697, %v3940
      %v3953 = vadd.f32 %v3698, %v3942
      %vm3954 = vcmp.gt.f32.partialorder %v3946, 0.0
      %vm3955 = vcmp.gt.f32.partialorder %v3947, 0.0
      %vm3956 = vcmp.gt.f32.partialorder %v3948, 0.0
      %vm3957 = vcmp.gt.f32.partialorder %v3949, 0.0
      %vm3958 = vcmp.gt.f32.partialorder %v3950, 0.0
      %vm3959 = vcmp.gt.f32.partialorder %v3951, 0.0
      %vm3960 = vcmp.gt.f32.partialorder %v3952, 0.0
      %vm3961 = vcmp.gt.f32.partialorder %v3953, 0.0
      %v3962 = vmul.f32 %v3946, 0.2
      %v3963 = vmul.f32 %v3947, 0.2
      %v3964 = vmul.f32 %v3948, 0.2
      %v3965 = vmul.f32 %v3949, 0.2
      %v3966 = vmul.f32 %v3950, 0.2
      %v3967 = vmul.f32 %v3951, 0.2
      %v3968 = vmul.f32 %v3952, 0.2
      %v3969 = vmul.f32 %v3953, 0.2
      %v3970 = vsel %vm3954, %v3946, %v3962
      %v3971 = vsel %vm3955, %v3947, %v3963
      %v3972 = vsel %vm3956, %v3948, %v3964
      %v3973 = vsel %vm3957, %v3949, %v3965
      %v3974 = vsel %vm3958, %v3950, %v3966
      %v3975 = vsel %vm3959, %v3951, %v3967
      %v3976 = vsel %vm3960, %v3952, %v3968
      %v3977 = vsel %vm3961, %v3953, %v3969
      %v3978 = vpack.c.bf16 %v3970, %v3970
      %v3979 = vpack.c.bf16 %v3971, %v3971
      %v3980 = vpack.c.bf16 %v3972, %v3972
      %v3981 = vpack.c.bf16 %v3973, %v3973
      %v3982 = vpack.c.bf16 %v3974, %v3974
      %v3983 = vpack.c.bf16 %v3975, %v3975
      %v3984 = vpack.c.bf16 %v3976, %v3976
      %v3985 = vpack.c.bf16 %v3977, %v3977
      %v3994 = vunpack.c.l.b16 %v3978
      %v3995 = vunpack.c.l.b16 %v3979
      %v3996 = vunpack.c.l.b16 %v3980
      %v3997 = vunpack.c.l.b16 %v3981
      %v3998 = vunpack.c.l.b16 %v3982
      %v3999 = vunpack.c.l.b16 %v3983
      %v4000 = vunpack.c.l.b16 %v3984
      %v4001 = vunpack.c.l.b16 %v3985
      %v4002 = vpack.c.b16 %v3995, %v3994
      %v4003 = vpack.c.b16 %v3997, %v3996
      %v4004 = vpack.c.b16 %v3999, %v3998
      %v4005 = vpack.c.b16 %v4001, %v4000
      %4010 = vst [vmem:[%s143] sm:$0xff] %v4002
      %4011 = vst [vmem:[%s143 + $0x8] sm:$0xff] %v4003
      %4012 = vst [vmem:[%s143 + $0x10] sm:$0xff] %v4004
      %4013 = vst [vmem:[%s143 + $0x18] sm:$0xff] %v4005
      %p4014 = scmp.lt.s32.totalorder %s13, 1
      %s4015 = scalar_select %p4014, %s13, 1
      %s4016 = smul.addr %s4015, 8
      %s4017 = smul.addr %s4016, 4
      %s4018 = scalar_lea.vmem %s2, %s4017
      // Predicated region
      $region29: #{discriminator_forward.5} parent=27 // pred_check
        %p4019 = pneg %p78
      $region30: #{discriminator_forward.5} parent=27 // pred_check_branch
        %4021 = sbr.rel (%p4019) target = $region32
      $region31: #{discriminator_forward.5} parent=27 // pred_region
        _
      $region32: #{discriminator_forward.5} parent=27 // pred_fallthru
        _
    $region28: #{discriminator_forward.5} parent=5 // pred_fallthru
      _
    %p4022 = scmp.le.s32.totalorder 2, %s8
    // Predicated region
    $region33: #{discriminator_forward.5} parent=5 // pred_check
      %p4023 = pneg %p4022
    $region34: #{discriminator_forward.5} parent=5 // pred_check_branch
      %4025 = sbr.rel (%p4023) target = $region36
    $region35: #{discriminator_forward.5} parent=5 // pred_region
      %s4026 = ssub.s32 %s8, 2
      // Predicated region
      $region37: #{discriminator_forward.5} parent=35 // pred_check
        %p4027 = pneg %p84
      $region38: #{discriminator_forward.5} parent=35 // pred_check_branch
        %4029 = sbr.rel (%p4027) target = $region40
      $region39: #{discriminator_forward.5} parent=35 // pred_region
        %p4030 = scmp.lt.s32.totalorder %s14, 1
        %s4031 = scalar_select %p4030, %s14, 1
        %s4032 = smul.addr %s4031, 8
        %s4033 = smul.addr %s4032, 4
        %s4034 = scalar_lea.vmem %s2, %s4033
      $region40: #{discriminator_forward.5} parent=35 // pred_fallthru
        _
    $region36: #{discriminator_forward.5} parent=5 // pred_fallthru
      _
  $region6: #{discriminator_forward.5} parent=0 // loop_footer
    %s12 = sadd.s32 1, %s8
  $region7: #{discriminator_forward.5} parent=0 // loop_footer_branch
    %7 = sbr.rel target = $region3
  $region8: #{discriminator_forward.5} parent=0 // loop_exit
    _

// kernel: discriminator_forward.6
$region0: #{discriminator_forward.6}
  #allocation0 [shape = 'u32[]', space=smem, size = 0x4, offset = 0x4, fixed_abs, tag = 'smem constant byte address 0x4 - core index']
  #allocation1 [shape = 'u32[144,128]{1,0:T(1,128)}', space=vmem, size = 0x12000, scoped, tag = 'internal scratch']
  %s0 = inlined_call_operand.vmem [shape: bf16[2,8,8,272], index: 0, kind: input, shape index: {}]
  %s1 = inlined_call_operand.vmem [shape: bf16[16,16,8], index: 1, kind: input, shape index: {}]
  %s2 = inlined_call_operand.vmem [shape: bf16[2,16,256], index: 2, kind: output, shape index: {0}]
  %s3 = inlined_call_operand.vmem [shape: f32[2,16,1], index: 3, kind: output, shape index: {1}]
  %s4 = inlined_call_operand.vmem [shape: f32[2,16,1], index: 4, kind: output, shape index: {2}]
  %5 = xla_tuple %s2, %s3, %s4
  %s6 = sld [smem:[#allocation0]]
  $region57: #{discriminator_forward.6} parent=0
    _
  %s8 = ssub.s32 1, %s6
  %s9 = scalar_select 0, %s8, %s6
  loop: start=0, step=1, limit=4
  $region2: #{discriminator_forward.6} parent=0 // loop_pre_header
    _
  $region3: #{discriminator_forward.6} parent=0 // loop_header
    %s11 = sphi 0, %s15
    %p12 = scmp.ge.s32.totalorder %s11, 4
    %s21 = sphi 0, %s23
    %s24 = sphi 0, %s21
    %s25 = sphi 0, %s24
    %s41 = sphi 0, %s25
    %s45 = sphi 0, %s45
    %s47 = sphi 0, %s45
    %s48 = sphi 0, %s47
    %s62 = sphi 0, %s48
    %s68 = sphi 0, %s70
    %s71 = sphi 0, %s68
    %s72 = sphi 0, %s71
    %s88 = sphi 0, %s72
    %s94 = sphi 0, %s96
    %s97 = sphi 0, %s94
    %s98 = sphi 0, %s97
    %s114 = sphi 0, %s98
    %s120 = sphi 0, %s122
    %s123 = sphi 0, %s120
    %s124 = sphi 0, %s123
    %s140 = sphi 0, %s124
  $region4: #{discriminator_forward.6} parent=0 // loop_header_branch
    %14 = sbr.rel (%p12) target = $region8
  $region5: #{discriminator_forward.6} parent=0 // loop_body
    %s16 = ssub.s32 %s11, 1
    %s17 = ssub.s32 %s11, 2
    %s18 = sadd.s32 %s11, 1
    %s19 = ssub.s32 %s11, %s18
    %p20 = scmp.eq.s32.totalorder %s19, 0
    %s22 = sadd.s32 %s21, 1
    %s23 = scalar_select %p20, %s21, %s22
    %p26 = pneg %p20
    %p27 = scmp.eq.s32.totalorder %s11, 1
    %p28 = por %p26, %p27
    %p29 = scmp.ne.s32.totalorder %s21, %s24
    %p30 = scmp.eq.s32.totalorder %s11, 0
    %p31 = por %p29, %p30
    %p32 = scmp.ne.s32.totalorder %s21, %s24
    %p33 = scmp.eq.s32.totalorder %s16, 1
    %p34 = por %p32, %p33
    %p35 = scmp.ne.s32.totalorder %s24, %s25
    %p36 = scmp.eq.s32.totalorder %s16, 0
    %p37 = por %p35, %p36
    %p38 = scmp.ne.s32.totalorder %s24, %s25
    %p39 = scmp.eq.s32.totalorder %s17, 1
    %p40 = por %p38, %p39
    %p42 = scmp.ne.s32.totalorder %s25, %s41
    %p43 = scmp.eq.s32.totalorder %s17, 0
    %p44 = por %p42, %p43
    %s46 = sadd.s32 %s45, 1
    %p49 = scmp.eq.s32.totalorder %s11, 1
    %p50 = scmp.ne.s32.totalorder %s45, %s47
    %p51 = scmp.eq.s32.totalorder %s11, 0
    %p52 = por %p50, %p51
    %p53 = scmp.ne.s32.totalorder %s45, %s47
    %p54 = scmp.eq.s32.totalorder %s16, 1
    %p55 = por %p53, %p54
    %p56 = scmp.ne.s32.totalorder %s47, %s48
    %p57 = scmp.eq.s32.totalorder %s16, 0
    %p58 = por %p56, %p57
    %p59 = scmp.ne.s32.totalorder %s47, %s48
    %p60 = scmp.eq.s32.totalorder %s17, 1
    %p61 = por %p59, %p60
    %p63 = scmp.ne.s32.totalorder %s48, %s62
    %p64 = scmp.eq.s32.totalorder %s17, 0
    %p65 = por %p63, %p64
    %s66 = ssub.s32 %s11, %s18
    %p67 = scmp.eq.s32.totalorder %s66, 0
    %s69 = sadd.s32 %s68, 1
    %s70 = scalar_select %p67, %s68, %s69
    %p73 = pneg %p67
    %p74 = scmp.eq.s32.totalorder %s11, 1
    %p75 = por %p73, %p74
    %p76 = scmp.ne.s32.totalorder %s68, %s71
    %p77 = scmp.eq.s32.totalorder %s11, 0
    %p78 = por %p76, %p77
    %p79 = scmp.ne.s32.totalorder %s68, %s71
    %p80 = scmp.eq.s32.totalorder %s16, 1
    %p81 = por %p79, %p80
    %p82 = scmp.ne.s32.totalorder %s71, %s72
    %p83 = scmp.eq.s32.totalorder %s16, 0
    %p84 = por %p82, %p83
    %p85 = scmp.ne.s32.totalorder %s71, %s72
    %p86 = scmp.eq.s32.totalorder %s17, 1
    %p87 = por %p85, %p86
    %p89 = scmp.ne.s32.totalorder %s72, %s88
    %p90 = scmp.eq.s32.totalorder %s17, 0
    %p91 = por %p89, %p90
    %s92 = ssub.s32 %s11, %s18
    %p93 = scmp.eq.s32.totalorder %s92, 0
    %s95 = sadd.s32 %s94, 1
    %s96 = scalar_select %p93, %s94, %s95
    %p99 = pneg %p93
    %p100 = scmp.eq.s32.totalorder %s11, 1
    %p101 = por %p99, %p100
    %p102 = scmp.ne.s32.totalorder %s94, %s97
    %p103 = scmp.eq.s32.totalorder %s11, 0
    %p104 = por %p102, %p103
    %p105 = scmp.ne.s32.totalorder %s94, %s97
    %p106 = scmp.eq.s32.totalorder %s16, 1
    %p107 = por %p105, %p106
    %p108 = scmp.ne.s32.totalorder %s97, %s98
    %p109 = scmp.eq.s32.totalorder %s16, 0
    %p110 = por %p108, %p109
    %p111 = scmp.ne.s32.totalorder %s97, %s98
    %p112 = scmp.eq.s32.totalorder %s17, 1
    %p113 = por %p111, %p112
    %p115 = scmp.ne.s32.totalorder %s98, %s114
    %p116 = scmp.eq.s32.totalorder %s17, 0
    %p117 = por %p115, %p116
    %s118 = ssub.s32 %s11, %s18
    %p119 = scmp.eq.s32.totalorder %s118, 0
    %s121 = sadd.s32 %s120, 1
    %s122 = scalar_select %p119, %s120, %s121
    %p125 = pneg %p119
    %p126 = scmp.eq.s32.totalorder %s11, 1
    %p127 = por %p125, %p126
    %p128 = scmp.ne.s32.totalorder %s120, %s123
    %p129 = scmp.eq.s32.totalorder %s11, 0
    %p130 = por %p128, %p129
    %p131 = scmp.ne.s32.totalorder %s120, %s123
    %p132 = scmp.eq.s32.totalorder %s16, 1
    %p133 = por %p131, %p132
    %p134 = scmp.ne.s32.totalorder %s123, %s124
    %p135 = scmp.eq.s32.totalorder %s16, 0
    %p136 = por %p134, %p135
    %p137 = scmp.ne.s32.totalorder %s123, %s124
    %p138 = scmp.eq.s32.totalorder %s17, 1
    %p139 = por %p137, %p138
    %p141 = scmp.ne.s32.totalorder %s124, %s140
    %p142 = scmp.eq.s32.totalorder %s17, 0
    %p143 = por %p141, %p142
    %p144 = scmp.le.s32.totalorder 1, %s11
    %p145 = scmp.lt.s32.totalorder %s11, 3
    %p146 = pnand %p144, %p145
    %p147 = pneg %p146
    // Predicated region
    $region9: #{discriminator_forward.6} parent=5 // pred_check
      _
    $region10: #{discriminator_forward.6} parent=5 // pred_check_branch
      %149 = sbr.rel (%p146) target = $region12
    $region11: #{discriminator_forward.6} parent=5 // pred_region
      %s150 = ssub.s32 %s11, 1
      // Predicated region
      $region13: #{discriminator_forward.6} parent=11 // pred_check
        %p151 = pneg %p58
      $region14: #{discriminator_forward.6} parent=11 // pred_check_branch
        %153 = sbr.rel (%p151) target = $region16
      $region15: #{discriminator_forward.6} parent=11 // pred_region
        _
      $region16: #{discriminator_forward.6} parent=11 // pred_fallthru
        _
    $region12: #{discriminator_forward.6} parent=5 // pred_fallthru
      _
    %p154 = scmp.lt.s32.totalorder %s11, 2
    // Predicated region
    $region17: #{discriminator_forward.6} parent=5 // pred_check
      %p155 = pneg %p154
    $region18: #{discriminator_forward.6} parent=5 // pred_check_branch
      %157 = sbr.rel (%p155) target = $region20
    $region19: #{discriminator_forward.6} parent=5 // pred_region
      // Predicated region
      $region21: #{discriminator_forward.6} parent=19 // pred_check
        %p158 = pneg %p31
      $region22: #{discriminator_forward.6} parent=19 // pred_check_branch
        %160 = sbr.rel (%p158) target = $region24
      $region23: #{discriminator_forward.6} parent=19 // pred_region
        %p161 = scmp.lt.s32.totalorder %s11, 1
        %s162 = scalar_select %p161, %s11, 1
        %s163 = smul.addr %s162, 24
        %s164 = smul.addr %s163, 4
        %s165 = scalar_lea.vmem %s0, %s164
      $region24: #{discriminator_forward.6} parent=19 // pred_fallthru
        _
    $region20: #{discriminator_forward.6} parent=5 // pred_fallthru
      _
    %p166 = scmp.le.s32.totalorder 1, %s11
    %p167 = scmp.lt.s32.totalorder %s11, 3
    %p168 = pnand %p166, %p167
    %p169 = pneg %p168
    // Predicated region
    $region25: #{discriminator_forward.6} parent=5 // pred_check
      _
    $region26: #{discriminator_forward.6} parent=5 // pred_check_branch
      %171 = sbr.rel (%p168) target = $region28
    $region27: #{discriminator_forward.6} parent=5 // pred_region
      %s172 = ssub.s32 %s11, 1
      %p173 = scmp.lt.s32.totalorder %s16, 1
      %s174 = scalar_select %p173, %s16, 1
      %s175 = smul.addr %s174, 24
      %s176 = smul.addr %s175, 4
      %s177 = scalar_lea.vmem %s0, %s176
      %p178 = pneg %p37
      %p179 = pneg %p34
      %p180 = pneg %p58
      %p181 = pneg %p55
      %p182 = pneg %p84
      %p183 = pneg %p81
      %p184 = scmp.lt.s32.totalorder %s16, 1
      %s185 = scalar_select %p184, %s16, 1
      %s186 = smul.addr %s185, 4
      %s187 = smul.addr %s186, 4
      %s188 = scalar_lea.vmem %s2, %s187
      %p189 = pneg %p110
      %p190 = pneg %p107
      %p191 = scmp.lt.s32.totalorder %s16, 1
      %s192 = scalar_select %p191, %s16, 1
      %s193 = smul.addr %s192, 2
      %s194 = smul.addr %s193, 8
      %s195 = scalar_lea.vmem %s3, %s194
      %p196 = pneg %p136
      %p197 = pneg %p133
      %p198 = scmp.lt.s32.totalorder %s16, 1
      %s199 = scalar_select %p198, %s16, 1
      %s200 = smul.addr %s199, 2
      %s201 = smul.addr %s200, 8
      %s202 = scalar_lea.vmem %s4, %s201
      %p203 = scmp.lt.s32.totalorder %s16, 1
      %s204 = scalar_select %p203, %s16, 1
      %s205 = smul.addr %s204, 24
      %s206 = smul.addr %s205, 4
      %s207 = scalar_lea.vmem %s0, %s206
      %p208 = scmp.lt.s32.totalorder %s16, 1
      %s209 = scalar_select %p208, %s16, 1
      %s210 = smul.addr %s209, 4
      %s211 = smul.addr %s210, 4
      %s212 = scalar_lea.vmem %s2, %s211
      %p213 = scmp.lt.s32.totalorder %s16, 1
      %s214 = scalar_select %p213, %s16, 1
      %s215 = smul.addr %s214, 2
      %s216 = smul.addr %s215, 8
      %s217 = scalar_lea.vmem %s3, %s216
      %p218 = scmp.lt.s32.totalorder %s16, 1
      %s219 = scalar_select %p218, %s16, 1
      %s220 = smul.addr %s219, 2
      %s221 = smul.addr %s220, 8
      %s222 = scalar_lea.vmem %s4, %s221
      %v224 = vld [vmem:[%s207] sm:$0xff]
      %v225 = vld [vmem:[%s1] sm:$0xf]
      %v226 = vld [vmem:[%s1 + $0x4] sm:$0xf]
      %v227 = vld [vmem:[%s207 + $0x8] sm:$0xf]
      %s228 = scalar_lea.vmem %s1, 64
      %v229 = vld [vmem:[%s228] sm:$0xf]
      %v230 = vld [vmem:[%s228 + $0x4] sm:$0xf]
      %v233 = vunpack.c.l.b16 %v229
      %v234 = vunpack.c.l.b16 %v230
      %v235 = vpack.c.b16 %v234, %v233
      %v238 = vunpack.c.l.b16 %v224
      %v239 = vunpack.c.h.b16 %v224
      %v240 = vunpack.c.l.b16 %v227
      %v241 = vpack.c.b16 %v238, %v238
      %v242 = vpack.c.b16 %v239, %v239
      %v243 = vpack.c.b16 %v240, %v240
      %244 = vrot.lane.b32.xlu0 %v241, 112
      %v245 = vpop.permute.xlu0 %244
      %246 = vrot.lane.b32.xlu0 %v242, 112
      %v247 = vpop.permute.xlu0 %246
      %248 = vrot.lane.b32.xlu0 %v243, 112
      %v249 = vpop.permute.xlu0 %248
      %vm250 = vcmask 916480
      %v251 = vsel %vm250, %v245, %v247
      %v252 = vsel %vm250, %v247, %v249
      %vm253 = vcmask 64512
      %v255 = vsel %vm253, %v235, 0
      %vm257 = vcmask 1043456
      %v259 = vsel %vm257, %v251, 0
      %v262 = vsel %vm257, %v252, 0
      %264 = vmatprep.subr.bf16.mxu0 0
      %265 = vmatpush1.bf16.msra.mxu0 0
      %266 = vmatprep.subr.bf16.mxu0 0
      %267 = vmatpush1.bf16.msra.mxu0 0
      %268 = vmatprep.subr.bf16.mxu0 0
      %269 = vmatpush1.bf16.msra.mxu0 0
      %270 = vmatprep.subr.bf16.mxu0 0
      %271 = vmatpush1.bf16.msra.mxu0 0
      %272 = vmatprep.subr.bf16.mxu0 0
      %273 = vmatpush1.bf16.msra.mxu0 0
      %274 = vmatprep.subr.bf16.mxu0 0
      %275 = vmatpush1.bf16.msra.mxu0 0
      %276 = vmatprep.subr.bf16.mxu0 0
      %277 = vmatpush1.bf16.msra.mxu0 0
      %278 = vmatprep.subr.bf16.mxu0 %v262
      %279 = vmatpush1.bf16.msra.mxu0 %v259
      %280 = vmatprep.subr.bf16.mxu0 0
      %281 = vmatpush2.bf16.msra.mxu0 0
      %282 = vmatprep.subr.bf16.mxu0 0
      %283 = vmatpush2.bf16.msra.mxu0 0
      %284 = vmatprep.subr.bf16.mxu0 0
      %285 = vmatpush2.bf16.msra.mxu0 0
      %286 = vmatprep.subr.bf16.mxu0 0
      %287 = vmatpush2.bf16.msra.mxu0 0
      %288 = vmatprep.subr.bf16.mxu0 0
      %289 = vmatpush2.bf16.msra.mxu0 0
      %290 = vmatprep.subr.bf16.mxu0 0
      %291 = vmatpush2.bf16.msra.mxu0 0
      %292 = vmatprep.subr.bf16.mxu0 0
      %293 = vmatpush2.bf16.msra.mxu0 0
      %294 = vmatprep.subr.bf16.mxu0 0
      %295 = vmatpush2.bf16.msra.mxu0 0
      %296 = vmatprep.mubr.bf16.mxu0 0
      %297 = vmatmul.mubr.bf16.gmra.mxu0 %v255
      %v298 = vpop.f32.mrf.mxu0
      %v299 = vadd.f32 0.0, %v298
      %v300 = vpop.f32.mrf.mxu0
      %v301 = vadd.f32 0.0, %v300
      %v302 = vpop.f32.mrf.mxu0
      %v303 = vadd.f32 0.0, %v302
      %v304 = vpop.f32.mrf.mxu0
      %v305 = vadd.f32 0.0, %v304
      %306 = vdwg.mxu0
      %v309 = vunpack.c.l.b16 %v225
      %v310 = vunpack.c.l.b16 %v226
      %v311 = vpack.c.b16 %v310, %v309
      %v313 = vsel %vm253, %v311, 0
      %v316 = vsel %vm257, %v241, 0
      %v319 = vsel %vm257, %v242, 0
      %321 = vmatprep.subr.bf16.mxu0 0
      %322 = vmatpush1.bf16.msra.mxu0 0
      %323 = vmatprep.subr.bf16.mxu0 0
      %324 = vmatpush1.bf16.msra.mxu0 0
      %325 = vmatprep.subr.bf16.mxu0 0
      %326 = vmatpush1.bf16.msra.mxu0 0
      %327 = vmatprep.subr.bf16.mxu0 0
      %328 = vmatpush1.bf16.msra.mxu0 0
      %329 = vmatprep.subr.bf16.mxu0 0
      %330 = vmatpush1.bf16.msra.mxu0 0
      %331 = vmatprep.subr.bf16.mxu0 0
      %332 = vmatpush1.bf16.msra.mxu0 0
      %333 = vmatprep.subr.bf16.mxu0 0
      %334 = vmatpush1.bf16.msra.mxu0 0
      %335 = vmatprep.subr.bf16.mxu0 %v319
      %336 = vmatpush1.bf16.msra.mxu0 %v316
      %337 = vmatprep.subr.bf16.mxu0 0
      %338 = vmatpush2.bf16.msra.mxu0 0
      %339 = vmatprep.subr.bf16.mxu0 0
      %340 = vmatpush2.bf16.msra.mxu0 0
      %341 = vmatprep.subr.bf16.mxu0 0
      %342 = vmatpush2.bf16.msra.mxu0 0
      %343 = vmatprep.subr.bf16.mxu0 0
      %344 = vmatpush2.bf16.msra.mxu0 0
      %345 = vmatprep.subr.bf16.mxu0 0
      %346 = vmatpush2.bf16.msra.mxu0 0
      %347 = vmatprep.subr.bf16.mxu0 0
      %348 = vmatpush2.bf16.msra.mxu0 0
      %349 = vmatprep.subr.bf16.mxu0 0
      %350 = vmatpush2.bf16.msra.mxu0 0
      %351 = vmatprep.subr.bf16.mxu0 0
      %352 = vmatpush2.bf16.msra.mxu0 0
      %353 = vmatprep.mubr.bf16.mxu0 0
      %354 = vmatmul.mubr.bf16.gmra.mxu0 %v313
      %v355 = vpop.f32.mrf.mxu0
      %v356 = vadd.f32 %v299, %v355
      %v357 = vpop.f32.mrf.mxu0
      %v358 = vadd.f32 %v301, %v357
      %v359 = vpop.f32.mrf.mxu0
      %v360 = vadd.f32 %v303, %v359
      %v361 = vpop.f32.mrf.mxu0
      %v362 = vadd.f32 %v305, %v361
      %363 = vdwg.mxu0
      %s364 = scalar_lea.vmem %s207, 12
      %v365 = vld [vmem:[%s364] sm:$0xff]
      %s366 = scalar_lea.vmem %s1, 16
      %v367 = vld [vmem:[%s366] sm:$0xf]
      %v368 = vld [vmem:[%s366 + $0x4] sm:$0xf]
      %v371 = vunpack.c.l.b16 %v367
      %v372 = vunpack.c.l.b16 %v368
      %v373 = vpack.c.b16 %v372, %v371
      %v375 = vunpack.c.l.b16 %v365
      %v376 = vunpack.c.h.b16 %v365
      %v377 = vpack.c.b16 %v375, %v375
      %v378 = vpack.c.b16 %v376, %v376
      %v380 = vsel %vm253, %v373, 0
      %v383 = vsel %vm257, %v377, 0
      %v386 = vsel %vm257, %v378, 0
      %388 = vmatprep.subr.bf16.mxu0 0
      %389 = vmatpush1.bf16.msra.mxu0 0
      %390 = vmatprep.subr.bf16.mxu0 0
      %391 = vmatpush1.bf16.msra.mxu0 0
      %392 = vmatprep.subr.bf16.mxu0 0
      %393 = vmatpush1.bf16.msra.mxu0 0
      %394 = vmatprep.subr.bf16.mxu0 0
      %395 = vmatpush1.bf16.msra.mxu0 0
      %396 = vmatprep.subr.bf16.mxu0 0
      %397 = vmatpush1.bf16.msra.mxu0 0
      %398 = vmatprep.subr.bf16.mxu0 0
      %399 = vmatpush1.bf16.msra.mxu0 0
      %400 = vmatprep.subr.bf16.mxu0 0
      %401 = vmatpush1.bf16.msra.mxu0 0
      %402 = vmatprep.subr.bf16.mxu0 %v386
      %403 = vmatpush1.bf16.msra.mxu0 %v383
      %404 = vmatprep.subr.bf16.mxu0 0
      %405 = vmatpush2.bf16.msra.mxu0 0
      %406 = vmatprep.subr.bf16.mxu0 0
      %407 = vmatpush2.bf16.msra.mxu0 0
      %408 = vmatprep.subr.bf16.mxu0 0
      %409 = vmatpush2.bf16.msra.mxu0 0
      %410 = vmatprep.subr.bf16.mxu0 0
      %411 = vmatpush2.bf16.msra.mxu0 0
      %412 = vmatprep.subr.bf16.mxu0 0
      %413 = vmatpush2.bf16.msra.mxu0 0
      %414 = vmatprep.subr.bf16.mxu0 0
      %415 = vmatpush2.bf16.msra.mxu0 0
      %416 = vmatprep.subr.bf16.mxu0 0
      %417 = vmatpush2.bf16.msra.mxu0 0
      %418 = vmatprep.subr.bf16.mxu0 0
      %419 = vmatpush2.bf16.msra.mxu0 0
      %420 = vmatprep.mubr.bf16.mxu0 0
      %421 = vmatmul.mubr.bf16.gmra.mxu0 %v380
      %v422 = vpop.f32.mrf.mxu0
      %v423 = vadd.f32 0.0, %v422
      %v424 = vpop.f32.mrf.mxu0
      %v425 = vadd.f32 0.0, %v424
      %v426 = vpop.f32.mrf.mxu0
      %v427 = vadd.f32 0.0, %v426
      %v428 = vpop.f32.mrf.mxu0
      %v429 = vadd.f32 0.0, %v428
      %430 = vdwg.mxu0
      %v431 = vadd.f32 %v356, %v423
      %v432 = vadd.f32 %v358, %v425
      %v433 = vadd.f32 %v360, %v427
      %v434 = vadd.f32 %v362, %v429
      %v435 = vld [vmem:[%s364] sm:$0xff]
      %v436 = vld [vmem:[%s364 + $0x8] sm:$0xf]
      %s437 = scalar_lea.vmem %s1, 80
      %v438 = vld [vmem:[%s437] sm:$0xf]
      %v439 = vld [vmem:[%s437 + $0x4] sm:$0xf]
      %v442 = vunpack.c.l.b16 %v438
      %v443 = vunpack.c.l.b16 %v439
      %v444 = vpack.c.b16 %v443, %v442
      %v447 = vunpack.c.l.b16 %v435
      %v448 = vunpack.c.h.b16 %v435
      %v449 = vunpack.c.l.b16 %v436
      %v450 = vpack.c.b16 %v447, %v447
      %v451 = vpack.c.b16 %v448, %v448
      %v452 = vpack.c.b16 %v449, %v449
      %453 = vrot.lane.b32.xlu0 %v450, 112
      %v454 = vpop.permute.xlu0 %453
      %455 = vrot.lane.b32.xlu0 %v451, 112
      %v456 = vpop.permute.xlu0 %455
      %457 = vrot.lane.b32.xlu0 %v452, 112
      %v458 = vpop.permute.xlu0 %457
      %v459 = vsel %vm250, %v454, %v456
      %v460 = vsel %vm250, %v456, %v458
      %v462 = vsel %vm253, %v444, 0
      %v465 = vsel %vm257, %v459, 0
      %v468 = vsel %vm257, %v460, 0
      %470 = vmatprep.subr.bf16.mxu0 0
      %471 = vmatpush1.bf16.msra.mxu0 0
      %472 = vmatprep.subr.bf16.mxu0 0
      %473 = vmatpush1.bf16.msra.mxu0 0
      %474 = vmatprep.subr.bf16.mxu0 0
      %475 = vmatpush1.bf16.msra.mxu0 0
      %476 = vmatprep.subr.bf16.mxu0 0
      %477 = vmatpush1.bf16.msra.mxu0 0
      %478 = vmatprep.subr.bf16.mxu0 0
      %479 = vmatpush1.bf16.msra.mxu0 0
      %480 = vmatprep.subr.bf16.mxu0 0
      %481 = vmatpush1.bf16.msra.mxu0 0
      %482 = vmatprep.subr.bf16.mxu0 0
      %483 = vmatpush1.bf16.msra.mxu0 0
      %484 = vmatprep.subr.bf16.mxu0 %v468
      %485 = vmatpush1.bf16.msra.mxu0 %v465
      %486 = vmatprep.subr.bf16.mxu0 0
      %487 = vmatpush2.bf16.msra.mxu0 0
      %488 = vmatprep.subr.bf16.mxu0 0
      %489 = vmatpush2.bf16.msra.mxu0 0
      %490 = vmatprep.subr.bf16.mxu0 0
      %491 = vmatpush2.bf16.msra.mxu0 0
      %492 = vmatprep.subr.bf16.mxu0 0
      %493 = vmatpush2.bf16.msra.mxu0 0
      %494 = vmatprep.subr.bf16.mxu0 0
      %495 = vmatpush2.bf16.msra.mxu0 0
      %496 = vmatprep.subr.bf16.mxu0 0
      %497 = vmatpush2.bf16.msra.mxu0 0
      %498 = vmatprep.subr.bf16.mxu0 0
      %499 = vmatpush2.bf16.msra.mxu0 0
      %500 = vmatprep.subr.bf16.mxu0 0
      %501 = vmatpush2.bf16.msra.mxu0 0
      %502 = vmatprep.mubr.bf16.mxu0 0
      %503 = vmatmul.mubr.bf16.gmra.mxu0 %v462
      %v504 = vpop.f32.mrf.mxu0
      %v505 = vadd.f32 0.0, %v504
      %v506 = vpop.f32.mrf.mxu0
      %v507 = vadd.f32 0.0, %v506
      %v508 = vpop.f32.mrf.mxu0
      %v509 = vadd.f32 0.0, %v508
      %v510 = vpop.f32.mrf.mxu0
      %v511 = vadd.f32 0.0, %v510
      %512 = vdwg.mxu0
      %v513 = vadd.f32 %v431, %v505
      %v514 = vadd.f32 %v432, %v507
      %v515 = vadd.f32 %v433, %v509
      %v516 = vadd.f32 %v434, %v511
      %s517 = scalar_lea.vmem %s207, 24
      %v518 = vld [vmem:[%s517] sm:$0xff]
      %s519 = scalar_lea.vmem %s1, 8
      %v520 = vld [vmem:[%s519] sm:$0xf]
      %v521 = vld [vmem:[%s519 + $0x4] sm:$0xf]
      %v524 = vunpack.c.l.b16 %v520
      %v525 = vunpack.c.l.b16 %v521
      %v526 = vpack.c.b16 %v525, %v524
      %v528 = vunpack.c.l.b16 %v518
      %v529 = vunpack.c.h.b16 %v518
      %v530 = vpack.c.b16 %v528, %v528
      %v531 = vpack.c.b16 %v529, %v529
      %v533 = vsel %vm253, %v526, 0
      %v536 = vsel %vm257, %v530, 0
      %v539 = vsel %vm257, %v531, 0
      %541 = vmatprep.subr.bf16.mxu0 0
      %542 = vmatpush1.bf16.msra.mxu0 0
      %543 = vmatprep.subr.bf16.mxu0 0
      %544 = vmatpush1.bf16.msra.mxu0 0
      %545 = vmatprep.subr.bf16.mxu0 0
      %546 = vmatpush1.bf16.msra.mxu0 0
      %547 = vmatprep.subr.bf16.mxu0 0
      %548 = vmatpush1.bf16.msra.mxu0 0
      %549 = vmatprep.subr.bf16.mxu0 0
      %550 = vmatpush1.bf16.msra.mxu0 0
      %551 = vmatprep.subr.bf16.mxu0 0
      %552 = vmatpush1.bf16.msra.mxu0 0
      %553 = vmatprep.subr.bf16.mxu0 0
      %554 = vmatpush1.bf16.msra.mxu0 0
      %555 = vmatprep.subr.bf16.mxu0 %v539
      %556 = vmatpush1.bf16.msra.mxu0 %v536
      %557 = vmatprep.subr.bf16.mxu0 0
      %558 = vmatpush2.bf16.msra.mxu0 0
      %559 = vmatprep.subr.bf16.mxu0 0
      %560 = vmatpush2.bf16.msra.mxu0 0
      %561 = vmatprep.subr.bf16.mxu0 0
      %562 = vmatpush2.bf16.msra.mxu0 0
      %563 = vmatprep.subr.bf16.mxu0 0
      %564 = vmatpush2.bf16.msra.mxu0 0
      %565 = vmatprep.subr.bf16.mxu0 0
      %566 = vmatpush2.bf16.msra.mxu0 0
      %567 = vmatprep.subr.bf16.mxu0 0
      %568 = vmatpush2.bf16.msra.mxu0 0
      %569 = vmatprep.subr.bf16.mxu0 0
      %570 = vmatpush2.bf16.msra.mxu0 0
      %571 = vmatprep.subr.bf16.mxu0 0
      %572 = vmatpush2.bf16.msra.mxu0 0
      %573 = vmatprep.mubr.bf16.mxu0 0
      %574 = vmatmul.mubr.bf16.gmra.mxu0 %v533
      %v575 = vpop.f32.mrf.mxu0
      %v576 = vadd.f32 0.0, %v575
      %v577 = vpop.f32.mrf.mxu0
      %v578 = vadd.f32 0.0, %v577
      %v579 = vpop.f32.mrf.mxu0
      %v580 = vadd.f32 0.0, %v579
      %v581 = vpop.f32.mrf.mxu0
      %v582 = vadd.f32 0.0, %v581
      %583 = vdwg.mxu0
      %v584 = vadd.f32 %v513, %v576
      %v585 = vadd.f32 %v514, %v578
      %v586 = vadd.f32 %v515, %v580
      %v587 = vadd.f32 %v516, %v582
      %v588 = vld [vmem:[%s517] sm:$0xff]
      %v589 = vld [vmem:[%s517 + $0x8] sm:$0xf]
      %s590 = scalar_lea.vmem %s1, 72
      %v591 = vld [vmem:[%s590] sm:$0xf]
      %v592 = vld [vmem:[%s590 + $0x4] sm:$0xf]
      %v595 = vunpack.c.l.b16 %v591
      %v596 = vunpack.c.l.b16 %v592
      %v597 = vpack.c.b16 %v596, %v595
      %v600 = vunpack.c.l.b16 %v588
      %v601 = vunpack.c.h.b16 %v588
      %v602 = vunpack.c.l.b16 %v589
      %v603 = vpack.c.b16 %v600, %v600
      %v604 = vpack.c.b16 %v601, %v601
      %v605 = vpack.c.b16 %v602, %v602
      %606 = vrot.lane.b32.xlu0 %v603, 112
      %v607 = vpop.permute.xlu0 %606
      %608 = vrot.lane.b32.xlu0 %v604, 112
      %v609 = vpop.permute.xlu0 %608
      %610 = vrot.lane.b32.xlu0 %v605, 112
      %v611 = vpop.permute.xlu0 %610
      %v612 = vsel %vm250, %v607, %v609
      %v613 = vsel %vm250, %v609, %v611
      %v615 = vsel %vm253, %v597, 0
      %v618 = vsel %vm257, %v612, 0
      %v621 = vsel %vm257, %v613, 0
      %623 = vmatprep.subr.bf16.mxu0 0
      %624 = vmatpush1.bf16.msra.mxu0 0
      %625 = vmatprep.subr.bf16.mxu0 0
      %626 = vmatpush1.bf16.msra.mxu0 0
      %627 = vmatprep.subr.bf16.mxu0 0
      %628 = vmatpush1.bf16.msra.mxu0 0
      %629 = vmatprep.subr.bf16.mxu0 0
      %630 = vmatpush1.bf16.msra.mxu0 0
      %631 = vmatprep.subr.bf16.mxu0 0
      %632 = vmatpush1.bf16.msra.mxu0 0
      %633 = vmatprep.subr.bf16.mxu0 0
      %634 = vmatpush1.bf16.msra.mxu0 0
      %635 = vmatprep.subr.bf16.mxu0 0
      %636 = vmatpush1.bf16.msra.mxu0 0
      %637 = vmatprep.subr.bf16.mxu0 %v621
      %638 = vmatpush1.bf16.msra.mxu0 %v618
      %639 = vmatprep.subr.bf16.mxu0 0
      %640 = vmatpush2.bf16.msra.mxu0 0
      %641 = vmatprep.subr.bf16.mxu0 0
      %642 = vmatpush2.bf16.msra.mxu0 0
      %643 = vmatprep.subr.bf16.mxu0 0
      %644 = vmatpush2.bf16.msra.mxu0 0
      %645 = vmatprep.subr.bf16.mxu0 0
      %646 = vmatpush2.bf16.msra.mxu0 0
      %647 = vmatprep.subr.bf16.mxu0 0
      %648 = vmatpush2.bf16.msra.mxu0 0
      %649 = vmatprep.subr.bf16.mxu0 0
      %650 = vmatpush2.bf16.msra.mxu0 0
      %651 = vmatprep.subr.bf16.mxu0 0
      %652 = vmatpush2.bf16.msra.mxu0 0
      %653 = vmatprep.subr.bf16.mxu0 0
      %654 = vmatpush2.bf16.msra.mxu0 0
      %655 = vmatprep.mubr.bf16.mxu0 0
      %656 = vmatmul.mubr.bf16.gmra.mxu0 %v615
      %v657 = vpop.f32.mrf.mxu0
      %v658 = vadd.f32 0.0, %v657
      %v659 = vpop.f32.mrf.mxu0
      %v660 = vadd.f32 0.0, %v659
      %v661 = vpop.f32.mrf.mxu0
      %v662 = vadd.f32 0.0, %v661
      %v663 = vpop.f32.mrf.mxu0
      %v664 = vadd.f32 0.0, %v663
      %665 = vdwg.mxu0
      %v666 = vadd.f32 %v584, %v658
      %v667 = vadd.f32 %v585, %v660
      %v668 = vadd.f32 %v586, %v662
      %v669 = vadd.f32 %v587, %v664
      %s670 = scalar_lea.vmem %s207, 36
      %v671 = vld [vmem:[%s670] sm:$0xff]
      %s672 = scalar_lea.vmem %s1, 24
      %v673 = vld [vmem:[%s672] sm:$0xf]
      %v674 = vld [vmem:[%s672 + $0x4] sm:$0xf]
      %v677 = vunpack.c.l.b16 %v673
      %v678 = vunpack.c.l.b16 %v674
      %v679 = vpack.c.b16 %v678, %v677
      %v681 = vunpack.c.l.b16 %v671
      %v682 = vunpack.c.h.b16 %v671
      %v683 = vpack.c.b16 %v681, %v681
      %v684 = vpack.c.b16 %v682, %v682
      %v686 = vsel %vm253, %v679, 0
      %v689 = vsel %vm257, %v683, 0
      %v692 = vsel %vm257, %v684, 0
      %694 = vmatprep.subr.bf16.mxu0 0
      %695 = vmatpush1.bf16.msra.mxu0 0
      %696 = vmatprep.subr.bf16.mxu0 0
      %697 = vmatpush1.bf16.msra.mxu0 0
      %698 = vmatprep.subr.bf16.mxu0 0
      %699 = vmatpush1.bf16.msra.mxu0 0
      %700 = vmatprep.subr.bf16.mxu0 0
      %701 = vmatpush1.bf16.msra.mxu0 0
      %702 = vmatprep.subr.bf16.mxu0 0
      %703 = vmatpush1.bf16.msra.mxu0 0
      %704 = vmatprep.subr.bf16.mxu0 0
      %705 = vmatpush1.bf16.msra.mxu0 0
      %706 = vmatprep.subr.bf16.mxu0 0
      %707 = vmatpush1.bf16.msra.mxu0 0
      %708 = vmatprep.subr.bf16.mxu0 %v692
      %709 = vmatpush1.bf16.msra.mxu0 %v689
      %710 = vmatprep.subr.bf16.mxu0 0
      %711 = vmatpush2.bf16.msra.mxu0 0
      %712 = vmatprep.subr.bf16.mxu0 0
      %713 = vmatpush2.bf16.msra.mxu0 0
      %714 = vmatprep.subr.bf16.mxu0 0
      %715 = vmatpush2.bf16.msra.mxu0 0
      %716 = vmatprep.subr.bf16.mxu0 0
      %717 = vmatpush2.bf16.msra.mxu0 0
      %718 = vmatprep.subr.bf16.mxu0 0
      %719 = vmatpush2.bf16.msra.mxu0 0
      %720 = vmatprep.subr.bf16.mxu0 0
      %721 = vmatpush2.bf16.msra.mxu0 0
      %722 = vmatprep.subr.bf16.mxu0 0
      %723 = vmatpush2.bf16.msra.mxu0 0
      %724 = vmatprep.subr.bf16.mxu0 0
      %725 = vmatpush2.bf16.msra.mxu0 0
      %726 = vmatprep.mubr.bf16.mxu0 0
      %727 = vmatmul.mubr.bf16.gmra.mxu0 %v686
      %v728 = vpop.f32.mrf.mxu0
      %v729 = vadd.f32 0.0, %v728
      %v730 = vpop.f32.mrf.mxu0
      %v731 = vadd.f32 0.0, %v730
      %v732 = vpop.f32.mrf.mxu0
      %v733 = vadd.f32 0.0, %v732
      %v734 = vpop.f32.mrf.mxu0
      %v735 = vadd.f32 0.0, %v734
      %736 = vdwg.mxu0
      %v737 = vadd.f32 %v666, %v729
      %v738 = vadd.f32 %v667, %v731
      %v739 = vadd.f32 %v668, %v733
      %v740 = vadd.f32 %v669, %v735
      %v741 = vld [vmem:[%s670] sm:$0xff]
      %v742 = vld [vmem:[%s670 + $0x8] sm:$0xf]
      %s743 = scalar_lea.vmem %s1, 88
      %v744 = vld [vmem:[%s743] sm:$0xf]
      %v745 = vld [vmem:[%s743 + $0x4] sm:$0xf]
      %v748 = vunpack.c.l.b16 %v744
      %v749 = vunpack.c.l.b16 %v745
      %v750 = vpack.c.b16 %v749, %v748
      %v753 = vunpack.c.l.b16 %v741
      %v754 = vunpack.c.h.b16 %v741
      %v755 = vunpack.c.l.b16 %v742
      %v756 = vpack.c.b16 %v753, %v753
      %v757 = vpack.c.b16 %v754, %v754
      %v758 = vpack.c.b16 %v755, %v755
      %759 = vrot.lane.b32.xlu0 %v756, 112
      %v760 = vpop.permute.xlu0 %759
      %761 = vrot.lane.b32.xlu0 %v757, 112
      %v762 = vpop.permute.xlu0 %761
      %763 = vrot.lane.b32.xlu0 %v758, 112
      %v764 = vpop.permute.xlu0 %763
      %v765 = vsel %vm250, %v760, %v762
      %v766 = vsel %vm250, %v762, %v764
      %v768 = vsel %vm253, %v750, 0
      %v771 = vsel %vm257, %v765, 0
      %v774 = vsel %vm257, %v766, 0
      %776 = vmatprep.subr.bf16.mxu0 0
      %777 = vmatpush1.bf16.msra.mxu0 0
      %778 = vmatprep.subr.bf16.mxu0 0
      %779 = vmatpush1.bf16.msra.mxu0 0
      %780 = vmatprep.subr.bf16.mxu0 0
      %781 = vmatpush1.bf16.msra.mxu0 0
      %782 = vmatprep.subr.bf16.mxu0 0
      %783 = vmatpush1.bf16.msra.mxu0 0
      %784 = vmatprep.subr.bf16.mxu0 0
      %785 = vmatpush1.bf16.msra.mxu0 0
      %786 = vmatprep.subr.bf16.mxu0 0
      %787 = vmatpush1.bf16.msra.mxu0 0
      %788 = vmatprep.subr.bf16.mxu0 0
      %789 = vmatpush1.bf16.msra.mxu0 0
      %790 = vmatprep.subr.bf16.mxu0 %v774
      %791 = vmatpush1.bf16.msra.mxu0 %v771
      %792 = vmatprep.subr.bf16.mxu0 0
      %793 = vmatpush2.bf16.msra.mxu0 0
      %794 = vmatprep.subr.bf16.mxu0 0
      %795 = vmatpush2.bf16.msra.mxu0 0
      %796 = vmatprep.subr.bf16.mxu0 0
      %797 = vmatpush2.bf16.msra.mxu0 0
      %798 = vmatprep.subr.bf16.mxu0 0
      %799 = vmatpush2.bf16.msra.mxu0 0
      %800 = vmatprep.subr.bf16.mxu0 0
      %801 = vmatpush2.bf16.msra.mxu0 0
      %802 = vmatprep.subr.bf16.mxu0 0
      %803 = vmatpush2.bf16.msra.mxu0 0
      %804 = vmatprep.subr.bf16.mxu0 0
      %805 = vmatpush2.bf16.msra.mxu0 0
      %806 = vmatprep.subr.bf16.mxu0 0
      %807 = vmatpush2.bf16.msra.mxu0 0
      %808 = vmatprep.mubr.bf16.mxu0 0
      %809 = vmatmul.mubr.bf16.gmra.mxu0 %v768
      %v810 = vpop.f32.mrf.mxu0
      %v811 = vadd.f32 0.0, %v810
      %v812 = vpop.f32.mrf.mxu0
      %v813 = vadd.f32 0.0, %v812
      %v814 = vpop.f32.mrf.mxu0
      %v815 = vadd.f32 0.0, %v814
      %v816 = vpop.f32.mrf.mxu0
      %v817 = vadd.f32 0.0, %v816
      %818 = vdwg.mxu0
      %v819 = vadd.f32 %v737, %v811
      %v820 = vadd.f32 %v738, %v813
      %v821 = vadd.f32 %v739, %v815
      %v822 = vadd.f32 %v740, %v817
      %s823 = scalar_lea.vmem %s207, 48
      %v824 = vld [vmem:[%s823] sm:$0xff]
      %s825 = scalar_lea.vmem %s1, 32
      %v826 = vld [vmem:[%s825] sm:$0xf]
      %v827 = vld [vmem:[%s825 + $0x4] sm:$0xf]
      %v830 = vunpack.c.l.b16 %v826
      %v831 = vunpack.c.l.b16 %v827
      %v832 = vpack.c.b16 %v831, %v830
      %v834 = vunpack.c.l.b16 %v824
      %v835 = vunpack.c.h.b16 %v824
      %v836 = vpack.c.b16 %v834, %v834
      %v837 = vpack.c.b16 %v835, %v835
      %v839 = vsel %vm253, %v832, 0
      %v842 = vsel %vm257, %v836, 0
      %v845 = vsel %vm257, %v837, 0
      %847 = vmatprep.subr.bf16.mxu0 0
      %848 = vmatpush1.bf16.msra.mxu0 0
      %849 = vmatprep.subr.bf16.mxu0 0
      %850 = vmatpush1.bf16.msra.mxu0 0
      %851 = vmatprep.subr.bf16.mxu0 0
      %852 = vmatpush1.bf16.msra.mxu0 0
      %853 = vmatprep.subr.bf16.mxu0 0
      %854 = vmatpush1.bf16.msra.mxu0 0
      %855 = vmatprep.subr.bf16.mxu0 0
      %856 = vmatpush1.bf16.msra.mxu0 0
      %857 = vmatprep.subr.bf16.mxu0 0
      %858 = vmatpush1.bf16.msra.mxu0 0
      %859 = vmatprep.subr.bf16.mxu0 0
      %860 = vmatpush1.bf16.msra.mxu0 0
      %861 = vmatprep.subr.bf16.mxu0 %v845
      %862 = vmatpush1.bf16.msra.mxu0 %v842
      %863 = vmatprep.subr.bf16.mxu0 0
      %864 = vmatpush2.bf16.msra.mxu0 0
      %865 = vmatprep.subr.bf16.mxu0 0
      %866 = vmatpush2.bf16.msra.mxu0 0
      %867 = vmatprep.subr.bf16.mxu0 0
      %868 = vmatpush2.bf16.msra.mxu0 0
      %869 = vmatprep.subr.bf16.mxu0 0
      %870 = vmatpush2.bf16.msra.mxu0 0
      %871 = vmatprep.subr.bf16.mxu0 0
      %872 = vmatpush2.bf16.msra.mxu0 0
      %873 = vmatprep.subr.bf16.mxu0 0
      %874 = vmatpush2.bf16.msra.mxu0 0
      %875 = vmatprep.subr.bf16.mxu0 0
      %876 = vmatpush2.bf16.msra.mxu0 0
      %877 = vmatprep.subr.bf16.mxu0 0
      %878 = vmatpush2.bf16.msra.mxu0 0
      %879 = vmatprep.mubr.bf16.mxu0 0
      %880 = vmatmul.mubr.bf16.gmra.mxu0 %v839
      %v881 = vpop.f32.mrf.mxu0
      %v882 = vadd.f32 0.0, %v881
      %v883 = vpop.f32.mrf.mxu0
      %v884 = vadd.f32 0.0, %v883
      %v885 = vpop.f32.mrf.mxu0
      %v886 = vadd.f32 0.0, %v885
      %v887 = vpop.f32.mrf.mxu0
      %v888 = vadd.f32 0.0, %v887
      %889 = vdwg.mxu0
      %v890 = vadd.f32 %v819, %v882
      %v891 = vadd.f32 %v820, %v884
      %v892 = vadd.f32 %v821, %v886
      %v893 = vadd.f32 %v822, %v888
      %v894 = vld [vmem:[%s823] sm:$0xff]
      %v895 = vld [vmem:[%s823 + $0x8] sm:$0xf]
      %s896 = scalar_lea.vmem %s1, 96
      %v897 = vld [vmem:[%s896] sm:$0xf]
      %v898 = vld [vmem:[%s896 + $0x4] sm:$0xf]
      %v901 = vunpack.c.l.b16 %v897
      %v902 = vunpack.c.l.b16 %v898
      %v903 = vpack.c.b16 %v902, %v901
      %v906 = vunpack.c.l.b16 %v894
      %v907 = vunpack.c.h.b16 %v894
      %v908 = vunpack.c.l.b16 %v895
      %v909 = vpack.c.b16 %v906, %v906
      %v910 = vpack.c.b16 %v907, %v907
      %v911 = vpack.c.b16 %v908, %v908
      %912 = vrot.lane.b32.xlu0 %v909, 112
      %v913 = vpop.permute.xlu0 %912
      %914 = vrot.lane.b32.xlu0 %v910, 112
      %v915 = vpop.permute.xlu0 %914
      %916 = vrot.lane.b32.xlu0 %v911, 112
      %v917 = vpop.permute.xlu0 %916
      %v918 = vsel %vm250, %v913, %v915
      %v919 = vsel %vm250, %v915, %v917
      %v921 = vsel %vm253, %v903, 0
      %v924 = vsel %vm257, %v918, 0
      %v927 = vsel %vm257, %v919, 0
      %929 = vmatprep.subr.bf16.mxu0 0
      %930 = vmatpush1.bf16.msra.mxu0 0
      %931 = vmatprep.subr.bf16.mxu0 0
      %932 = vmatpush1.bf16.msra.mxu0 0
      %933 = vmatprep.subr.bf16.mxu0 0
      %934 = vmatpush1.bf16.msra.mxu0 0
      %935 = vmatprep.subr.bf16.mxu0 0
      %936 = vmatpush1.bf16.msra.mxu0 0
      %937 = vmatprep.subr.bf16.mxu0 0
      %938 = vmatpush1.bf16.msra.mxu0 0
      %939 = vmatprep.subr.bf16.mxu0 0
      %940 = vmatpush1.bf16.msra.mxu0 0
      %941 = vmatprep.subr.bf16.mxu0 0
      %942 = vmatpush1.bf16.msra.mxu0 0
      %943 = vmatprep.subr.bf16.mxu0 %v927
      %944 = vmatpush1.bf16.msra.mxu0 %v924
      %945 = vmatprep.subr.bf16.mxu0 0
      %946 = vmatpush2.bf16.msra.mxu0 0
      %947 = vmatprep.subr.bf16.mxu0 0
      %948 = vmatpush2.bf16.msra.mxu0 0
      %949 = vmatprep.subr.bf16.mxu0 0
      %950 = vmatpush2.bf16.msra.mxu0 0
      %951 = vmatprep.subr.bf16.mxu0 0
      %952 = vmatpush2.bf16.msra.mxu0 0
      %953 = vmatprep.subr.bf16.mxu0 0
      %954 = vmatpush2.bf16.msra.mxu0 0
      %955 = vmatprep.subr.bf16.mxu0 0
      %956 = vmatpush2.bf16.msra.mxu0 0
      %957 = vmatprep.subr.bf16.mxu0 0
      %958 = vmatpush2.bf16.msra.mxu0 0
      %959 = vmatprep.subr.bf16.mxu0 0
      %960 = vmatpush2.bf16.msra.mxu0 0
      %961 = vmatprep.mubr.bf16.mxu0 0
      %962 = vmatmul.mubr.bf16.gmra.mxu0 %v921
      %v963 = vpop.f32.mrf.mxu0
      %v964 = vadd.f32 0.0, %v963
      %v965 = vpop.f32.mrf.mxu0
      %v966 = vadd.f32 0.0, %v965
      %v967 = vpop.f32.mrf.mxu0
      %v968 = vadd.f32 0.0, %v967
      %v969 = vpop.f32.mrf.mxu0
      %v970 = vadd.f32 0.0, %v969
      %971 = vdwg.mxu0
      %v972 = vadd.f32 %v890, %v964
      %v973 = vadd.f32 %v891, %v966
      %v974 = vadd.f32 %v892, %v968
      %v975 = vadd.f32 %v893, %v970
      %s976 = scalar_lea.vmem %s207, 60
      %v977 = vld [vmem:[%s976] sm:$0xff]
      %s978 = scalar_lea.vmem %s1, 48
      %v979 = vld [vmem:[%s978] sm:$0xf]
      %v980 = vld [vmem:[%s978 + $0x4] sm:$0xf]
      %v983 = vunpack.c.l.b16 %v979
      %v984 = vunpack.c.l.b16 %v980
      %v985 = vpack.c.b16 %v984, %v983
      %v987 = vunpack.c.l.b16 %v977
      %v988 = vunpack.c.h.b16 %v977
      %v989 = vpack.c.b16 %v987, %v987
      %v990 = vpack.c.b16 %v988, %v988
      %v992 = vsel %vm253, %v985, 0
      %v995 = vsel %vm257, %v989, 0
      %v998 = vsel %vm257, %v990, 0
      %1000 = vmatprep.subr.bf16.mxu0 0
      %1001 = vmatpush1.bf16.msra.mxu0 0
      %1002 = vmatprep.subr.bf16.mxu0 0
      %1003 = vmatpush1.bf16.msra.mxu0 0
      %1004 = vmatprep.subr.bf16.mxu0 0
      %1005 = vmatpush1.bf16.msra.mxu0 0
      %1006 = vmatprep.subr.bf16.mxu0 0
      %1007 = vmatpush1.bf16.msra.mxu0 0
      %1008 = vmatprep.subr.bf16.mxu0 0
      %1009 = vmatpush1.bf16.msra.mxu0 0
      %1010 = vmatprep.subr.bf16.mxu0 0
      %1011 = vmatpush1.bf16.msra.mxu0 0
      %1012 = vmatprep.subr.bf16.mxu0 0
      %1013 = vmatpush1.bf16.msra.mxu0 0
      %1014 = vmatprep.subr.bf16.mxu0 %v998
      %1015 = vmatpush1.bf16.msra.mxu0 %v995
      %1016 = vmatprep.subr.bf16.mxu0 0
      %1017 = vmatpush2.bf16.msra.mxu0 0
      %1018 = vmatprep.subr.bf16.mxu0 0
      %1019 = vmatpush2.bf16.msra.mxu0 0
      %1020 = vmatprep.subr.bf16.mxu0 0
      %1021 = vmatpush2.bf16.msra.mxu0 0
      %1022 = vmatprep.subr.bf16.mxu0 0
      %1023 = vmatpush2.bf16.msra.mxu0 0
      %1024 = vmatprep.subr.bf16.mxu0 0
      %1025 = vmatpush2.bf16.msra.mxu0 0
      %1026 = vmatprep.subr.bf16.mxu0 0
      %1027 = vmatpush2.bf16.msra.mxu0 0
      %1028 = vmatprep.subr.bf16.mxu0 0
      %1029 = vmatpush2.bf16.msra.mxu0 0
      %1030 = vmatprep.subr.bf16.mxu0 0
      %1031 = vmatpush2.bf16.msra.mxu0 0
      %1032 = vmatprep.mubr.bf16.mxu0 0
      %1033 = vmatmul.mubr.bf16.gmra.mxu0 %v992
      %v1034 = vpop.f32.mrf.mxu0
      %v1035 = vadd.f32 0.0, %v1034
      %v1036 = vpop.f32.mrf.mxu0
      %v1037 = vadd.f32 0.0, %v1036
      %v1038 = vpop.f32.mrf.mxu0
      %v1039 = vadd.f32 0.0, %v1038
      %v1040 = vpop.f32.mrf.mxu0
      %v1041 = vadd.f32 0.0, %v1040
      %1042 = vdwg.mxu0
      %v1043 = vadd.f32 %v972, %v1035
      %v1044 = vadd.f32 %v973, %v1037
      %v1045 = vadd.f32 %v974, %v1039
      %v1046 = vadd.f32 %v975, %v1041
      %v1047 = vld [vmem:[%s976] sm:$0xff]
      %v1048 = vld [vmem:[%s976 + $0x8] sm:$0xf]
      %s1049 = scalar_lea.vmem %s1, 112
      %v1050 = vld [vmem:[%s1049] sm:$0xf]
      %v1051 = vld [vmem:[%s1049 + $0x4] sm:$0xf]
      %v1054 = vunpack.c.l.b16 %v1050
      %v1055 = vunpack.c.l.b16 %v1051
      %v1056 = vpack.c.b16 %v1055, %v1054
      %v1059 = vunpack.c.l.b16 %v1047
      %v1060 = vunpack.c.h.b16 %v1047
      %v1061 = vunpack.c.l.b16 %v1048
      %v1062 = vpack.c.b16 %v1059, %v1059
      %v1063 = vpack.c.b16 %v1060, %v1060
      %v1064 = vpack.c.b16 %v1061, %v1061
      %1065 = vrot.lane.b32.xlu0 %v1062, 112
      %v1066 = vpop.permute.xlu0 %1065
      %1067 = vrot.lane.b32.xlu0 %v1063, 112
      %v1068 = vpop.permute.xlu0 %1067
      %1069 = vrot.lane.b32.xlu0 %v1064, 112
      %v1070 = vpop.permute.xlu0 %1069
      %v1071 = vsel %vm250, %v1066, %v1068
      %v1072 = vsel %vm250, %v1068, %v1070
      %v1074 = vsel %vm253, %v1056, 0
      %v1077 = vsel %vm257, %v1071, 0
      %v1080 = vsel %vm257, %v1072, 0
      %1082 = vmatprep.subr.bf16.mxu0 0
      %1083 = vmatpush1.bf16.msra.mxu0 0
      %1084 = vmatprep.subr.bf16.mxu0 0
      %1085 = vmatpush1.bf16.msra.mxu0 0
      %1086 = vmatprep.subr.bf16.mxu0 0
      %1087 = vmatpush1.bf16.msra.mxu0 0
      %1088 = vmatprep.subr.bf16.mxu0 0
      %1089 = vmatpush1.bf16.msra.mxu0 0
      %1090 = vmatprep.subr.bf16.mxu0 0
      %1091 = vmatpush1.bf16.msra.mxu0 0
      %1092 = vmatprep.subr.bf16.mxu0 0
      %1093 = vmatpush1.bf16.msra.mxu0 0
      %1094 = vmatprep.subr.bf16.mxu0 0
      %1095 = vmatpush1.bf16.msra.mxu0 0
      %1096 = vmatprep.subr.bf16.mxu0 %v1080
      %1097 = vmatpush1.bf16.msra.mxu0 %v1077
      %1098 = vmatprep.subr.bf16.mxu0 0
      %1099 = vmatpush2.bf16.msra.mxu0 0
      %1100 = vmatprep.subr.bf16.mxu0 0
      %1101 = vmatpush2.bf16.msra.mxu0 0
      %1102 = vmatprep.subr.bf16.mxu0 0
      %1103 = vmatpush2.bf16.msra.mxu0 0
      %1104 = vmatprep.subr.bf16.mxu0 0
      %1105 = vmatpush2.bf16.msra.mxu0 0
      %1106 = vmatprep.subr.bf16.mxu0 0
      %1107 = vmatpush2.bf16.msra.mxu0 0
      %1108 = vmatprep.subr.bf16.mxu0 0
      %1109 = vmatpush2.bf16.msra.mxu0 0
      %1110 = vmatprep.subr.bf16.mxu0 0
      %1111 = vmatpush2.bf16.msra.mxu0 0
      %1112 = vmatprep.subr.bf16.mxu0 0
      %1113 = vmatpush2.bf16.msra.mxu0 0
      %1114 = vmatprep.mubr.bf16.mxu0 0
      %1115 = vmatmul.mubr.bf16.gmra.mxu0 %v1074
      %v1116 = vpop.f32.mrf.mxu0
      %v1117 = vadd.f32 0.0, %v1116
      %v1118 = vpop.f32.mrf.mxu0
      %v1119 = vadd.f32 0.0, %v1118
      %v1120 = vpop.f32.mrf.mxu0
      %v1121 = vadd.f32 0.0, %v1120
      %v1122 = vpop.f32.mrf.mxu0
      %v1123 = vadd.f32 0.0, %v1122
      %1124 = vdwg.mxu0
      %v1125 = vadd.f32 %v1043, %v1117
      %v1126 = vadd.f32 %v1044, %v1119
      %v1127 = vadd.f32 %v1045, %v1121
      %v1128 = vadd.f32 %v1046, %v1123
      %s1129 = scalar_lea.vmem %s207, 72
      %v1130 = vld [vmem:[%s1129] sm:$0xff]
      %s1131 = scalar_lea.vmem %s1, 40
      %v1132 = vld [vmem:[%s1131] sm:$0xf]
      %v1133 = vld [vmem:[%s1131 + $0x4] sm:$0xf]
      %v1136 = vunpack.c.l.b16 %v1132
      %v1137 = vunpack.c.l.b16 %v1133
      %v1138 = vpack.c.b16 %v1137, %v1136
      %v1140 = vunpack.c.l.b16 %v1130
      %v1141 = vunpack.c.h.b16 %v1130
      %v1142 = vpack.c.b16 %v1140, %v1140
      %v1143 = vpack.c.b16 %v1141, %v1141
      %v1145 = vsel %vm253, %v1138, 0
      %v1148 = vsel %vm257, %v1142, 0
      %v1151 = vsel %vm257, %v1143, 0
      %1153 = vmatprep.subr.bf16.mxu0 0
      %1154 = vmatpush1.bf16.msra.mxu0 0
      %1155 = vmatprep.subr.bf16.mxu0 0
      %1156 = vmatpush1.bf16.msra.mxu0 0
      %1157 = vmatprep.subr.bf16.mxu0 0
      %1158 = vmatpush1.bf16.msra.mxu0 0
      %1159 = vmatprep.subr.bf16.mxu0 0
      %1160 = vmatpush1.bf16.msra.mxu0 0
      %1161 = vmatprep.subr.bf16.mxu0 0
      %1162 = vmatpush1.bf16.msra.mxu0 0
      %1163 = vmatprep.subr.bf16.mxu0 0
      %1164 = vmatpush1.bf16.msra.mxu0 0
      %1165 = vmatprep.subr.bf16.mxu0 0
      %1166 = vmatpush1.bf16.msra.mxu0 0
      %1167 = vmatprep.subr.bf16.mxu0 %v1151
      %1168 = vmatpush1.bf16.msra.mxu0 %v1148
      %1169 = vmatprep.subr.bf16.mxu0 0
      %1170 = vmatpush2.bf16.msra.mxu0 0
      %1171 = vmatprep.subr.bf16.mxu0 0
      %1172 = vmatpush2.bf16.msra.mxu0 0
      %1173 = vmatprep.subr.bf16.mxu0 0
      %1174 = vmatpush2.bf16.msra.mxu0 0
      %1175 = vmatprep.subr.bf16.mxu0 0
      %1176 = vmatpush2.bf16.msra.mxu0 0
      %1177 = vmatprep.subr.bf16.mxu0 0
      %1178 = vmatpush2.bf16.msra.mxu0 0
      %1179 = vmatprep.subr.bf16.mxu0 0
      %1180 = vmatpush2.bf16.msra.mxu0 0
      %1181 = vmatprep.subr.bf16.mxu0 0
      %1182 = vmatpush2.bf16.msra.mxu0 0
      %1183 = vmatprep.subr.bf16.mxu0 0
      %1184 = vmatpush2.bf16.msra.mxu0 0
      %1185 = vmatprep.mubr.bf16.mxu0 0
      %1186 = vmatmul.mubr.bf16.gmra.mxu0 %v1145
      %v1187 = vpop.f32.mrf.mxu0
      %v1188 = vadd.f32 0.0, %v1187
      %v1189 = vpop.f32.mrf.mxu0
      %v1190 = vadd.f32 0.0, %v1189
      %v1191 = vpop.f32.mrf.mxu0
      %v1192 = vadd.f32 0.0, %v1191
      %v1193 = vpop.f32.mrf.mxu0
      %v1194 = vadd.f32 0.0, %v1193
      %1195 = vdwg.mxu0
      %v1196 = vadd.f32 %v1125, %v1188
      %v1197 = vadd.f32 %v1126, %v1190
      %v1198 = vadd.f32 %v1127, %v1192
      %v1199 = vadd.f32 %v1128, %v1194
      %v1200 = vld [vmem:[%s1129] sm:$0xff]
      %v1201 = vld [vmem:[%s1129 + $0x8] sm:$0xf]
      %s1202 = scalar_lea.vmem %s1, 104
      %v1203 = vld [vmem:[%s1202] sm:$0xf]
      %v1204 = vld [vmem:[%s1202 + $0x4] sm:$0xf]
      %v1207 = vunpack.c.l.b16 %v1203
      %v1208 = vunpack.c.l.b16 %v1204
      %v1209 = vpack.c.b16 %v1208, %v1207
      %v1212 = vunpack.c.l.b16 %v1200
      %v1213 = vunpack.c.h.b16 %v1200
      %v1214 = vunpack.c.l.b16 %v1201
      %v1215 = vpack.c.b16 %v1212, %v1212
      %v1216 = vpack.c.b16 %v1213, %v1213
      %v1217 = vpack.c.b16 %v1214, %v1214
      %1218 = vrot.lane.b32.xlu0 %v1215, 112
      %v1219 = vpop.permute.xlu0 %1218
      %1220 = vrot.lane.b32.xlu0 %v1216, 112
      %v1221 = vpop.permute.xlu0 %1220
      %1222 = vrot.lane.b32.xlu0 %v1217, 112
      %v1223 = vpop.permute.xlu0 %1222
      %v1224 = vsel %vm250, %v1219, %v1221
      %v1225 = vsel %vm250, %v1221, %v1223
      %v1227 = vsel %vm253, %v1209, 0
      %v1230 = vsel %vm257, %v1224, 0
      %v1233 = vsel %vm257, %v1225, 0
      %1235 = vmatprep.subr.bf16.mxu0 0
      %1236 = vmatpush1.bf16.msra.mxu0 0
      %1237 = vmatprep.subr.bf16.mxu0 0
      %1238 = vmatpush1.bf16.msra.mxu0 0
      %1239 = vmatprep.subr.bf16.mxu0 0
      %1240 = vmatpush1.bf16.msra.mxu0 0
      %1241 = vmatprep.subr.bf16.mxu0 0
      %1242 = vmatpush1.bf16.msra.mxu0 0
      %1243 = vmatprep.subr.bf16.mxu0 0
      %1244 = vmatpush1.bf16.msra.mxu0 0
      %1245 = vmatprep.subr.bf16.mxu0 0
      %1246 = vmatpush1.bf16.msra.mxu0 0
      %1247 = vmatprep.subr.bf16.mxu0 0
      %1248 = vmatpush1.bf16.msra.mxu0 0
      %1249 = vmatprep.subr.bf16.mxu0 %v1233
      %1250 = vmatpush1.bf16.msra.mxu0 %v1230
      %1251 = vmatprep.subr.bf16.mxu0 0
      %1252 = vmatpush2.bf16.msra.mxu0 0
      %1253 = vmatprep.subr.bf16.mxu0 0
      %1254 = vmatpush2.bf16.msra.mxu0 0
      %1255 = vmatprep.subr.bf16.mxu0 0
      %1256 = vmatpush2.bf16.msra.mxu0 0
      %1257 = vmatprep.subr.bf16.mxu0 0
      %1258 = vmatpush2.bf16.msra.mxu0 0
      %1259 = vmatprep.subr.bf16.mxu0 0
      %1260 = vmatpush2.bf16.msra.mxu0 0
      %1261 = vmatprep.subr.bf16.mxu0 0
      %1262 = vmatpush2.bf16.msra.mxu0 0
      %1263 = vmatprep.subr.bf16.mxu0 0
      %1264 = vmatpush2.bf16.msra.mxu0 0
      %1265 = vmatprep.subr.bf16.mxu0 0
      %1266 = vmatpush2.bf16.msra.mxu0 0
      %1267 = vmatprep.mubr.bf16.mxu0 0
      %1268 = vmatmul.mubr.bf16.gmra.mxu0 %v1227
      %v1269 = vpop.f32.mrf.mxu0
      %v1270 = vadd.f32 0.0, %v1269
      %v1271 = vpop.f32.mrf.mxu0
      %v1272 = vadd.f32 0.0, %v1271
      %v1273 = vpop.f32.mrf.mxu0
      %v1274 = vadd.f32 0.0, %v1273
      %v1275 = vpop.f32.mrf.mxu0
      %v1276 = vadd.f32 0.0, %v1275
      %1277 = vdwg.mxu0
      %v1278 = vadd.f32 %v1196, %v1270
      %v1279 = vadd.f32 %v1197, %v1272
      %v1280 = vadd.f32 %v1198, %v1274
      %v1281 = vadd.f32 %v1199, %v1276
      %s1282 = scalar_lea.vmem %s207, 84
      %v1283 = vld [vmem:[%s1282] sm:$0xff]
      %s1284 = scalar_lea.vmem %s1, 56
      %v1285 = vld [vmem:[%s1284] sm:$0xf]
      %v1286 = vld [vmem:[%s1284 + $0x4] sm:$0xf]
      %v1289 = vunpack.c.l.b16 %v1285
      %v1290 = vunpack.c.l.b16 %v1286
      %v1291 = vpack.c.b16 %v1290, %v1289
      %v1293 = vunpack.c.l.b16 %v1283
      %v1294 = vunpack.c.h.b16 %v1283
      %v1295 = vpack.c.b16 %v1293, %v1293
      %v1296 = vpack.c.b16 %v1294, %v1294
      %v1298 = vsel %vm253, %v1291, 0
      %v1301 = vsel %vm257, %v1295, 0
      %v1304 = vsel %vm257, %v1296, 0
      %1306 = vmatprep.subr.bf16.mxu0 0
      %1307 = vmatpush1.bf16.msra.mxu0 0
      %1308 = vmatprep.subr.bf16.mxu0 0
      %1309 = vmatpush1.bf16.msra.mxu0 0
      %1310 = vmatprep.subr.bf16.mxu0 0
      %1311 = vmatpush1.bf16.msra.mxu0 0
      %1312 = vmatprep.subr.bf16.mxu0 0
      %1313 = vmatpush1.bf16.msra.mxu0 0
      %1314 = vmatprep.subr.bf16.mxu0 0
      %1315 = vmatpush1.bf16.msra.mxu0 0
      %1316 = vmatprep.subr.bf16.mxu0 0
      %1317 = vmatpush1.bf16.msra.mxu0 0
      %1318 = vmatprep.subr.bf16.mxu0 0
      %1319 = vmatpush1.bf16.msra.mxu0 0
      %1320 = vmatprep.subr.bf16.mxu0 %v1304
      %1321 = vmatpush1.bf16.msra.mxu0 %v1301
      %1322 = vmatprep.subr.bf16.mxu0 0
      %1323 = vmatpush2.bf16.msra.mxu0 0
      %1324 = vmatprep.subr.bf16.mxu0 0
      %1325 = vmatpush2.bf16.msra.mxu0 0
      %1326 = vmatprep.subr.bf16.mxu0 0
      %1327 = vmatpush2.bf16.msra.mxu0 0
      %1328 = vmatprep.subr.bf16.mxu0 0
      %1329 = vmatpush2.bf16.msra.mxu0 0
      %1330 = vmatprep.subr.bf16.mxu0 0
      %1331 = vmatpush2.bf16.msra.mxu0 0
      %1332 = vmatprep.subr.bf16.mxu0 0
      %1333 = vmatpush2.bf16.msra.mxu0 0
      %1334 = vmatprep.subr.bf16.mxu0 0
      %1335 = vmatpush2.bf16.msra.mxu0 0
      %1336 = vmatprep.subr.bf16.mxu0 0
      %1337 = vmatpush2.bf16.msra.mxu0 0
      %1338 = vmatprep.mubr.bf16.mxu0 0
      %1339 = vmatmul.mubr.bf16.gmra.mxu0 %v1298
      %v1340 = vpop.f32.mrf.mxu0
      %v1341 = vadd.f32 0.0, %v1340
      %v1342 = vpop.f32.mrf.mxu0
      %v1343 = vadd.f32 0.0, %v1342
      %v1344 = vpop.f32.mrf.mxu0
      %v1345 = vadd.f32 0.0, %v1344
      %v1346 = vpop.f32.mrf.mxu0
      %v1347 = vadd.f32 0.0, %v1346
      %1348 = vdwg.mxu0
      %v1349 = vadd.f32 %v1278, %v1341
      %v1350 = vadd.f32 %v1279, %v1343
      %v1351 = vadd.f32 %v1280, %v1345
      %v1352 = vadd.f32 %v1281, %v1347
      %v1353 = vld [vmem:[%s1282] sm:$0xff]
      %v1354 = vld [vmem:[%s1282 + $0x8] sm:$0xf]
      %s1355 = scalar_lea.vmem %s1, 120
      %v1356 = vld [vmem:[%s1355] sm:$0xf]
      %v1357 = vld [vmem:[%s1355 + $0x4] sm:$0xf]
      %v1360 = vunpack.c.l.b16 %v1356
      %v1361 = vunpack.c.l.b16 %v1357
      %v1362 = vpack.c.b16 %v1361, %v1360
      %v1365 = vunpack.c.l.b16 %v1353
      %v1366 = vunpack.c.h.b16 %v1353
      %v1367 = vunpack.c.l.b16 %v1354
      %v1368 = vpack.c.b16 %v1365, %v1365
      %v1369 = vpack.c.b16 %v1366, %v1366
      %v1370 = vpack.c.b16 %v1367, %v1367
      %1371 = vrot.lane.b32.xlu0 %v1368, 112
      %v1372 = vpop.permute.xlu0 %1371
      %1373 = vrot.lane.b32.xlu0 %v1369, 112
      %v1374 = vpop.permute.xlu0 %1373
      %1375 = vrot.lane.b32.xlu0 %v1370, 112
      %v1376 = vpop.permute.xlu0 %1375
      %v1377 = vsel %vm250, %v1372, %v1374
      %v1378 = vsel %vm250, %v1374, %v1376
      %v1380 = vsel %vm253, %v1362, 0
      %v1383 = vsel %vm257, %v1377, 0
      %v1386 = vsel %vm257, %v1378, 0
      %1388 = vmatprep.subr.bf16.mxu0 0
      %1389 = vmatpush1.bf16.msra.mxu0 0
      %1390 = vmatprep.subr.bf16.mxu0 0
      %1391 = vmatpush1.bf16.msra.mxu0 0
      %1392 = vmatprep.subr.bf16.mxu0 0
      %1393 = vmatpush1.bf16.msra.mxu0 0
      %1394 = vmatprep.subr.bf16.mxu0 0
      %1395 = vmatpush1.bf16.msra.mxu0 0
      %1396 = vmatprep.subr.bf16.mxu0 0
      %1397 = vmatpush1.bf16.msra.mxu0 0
      %1398 = vmatprep.subr.bf16.mxu0 0
      %1399 = vmatpush1.bf16.msra.mxu0 0
      %1400 = vmatprep.subr.bf16.mxu0 0
      %1401 = vmatpush1.bf16.msra.mxu0 0
      %1402 = vmatprep.subr.bf16.mxu0 %v1386
      %1403 = vmatpush1.bf16.msra.mxu0 %v1383
      %1404 = vmatprep.subr.bf16.mxu0 0
      %1405 = vmatpush2.bf16.msra.mxu0 0
      %1406 = vmatprep.subr.bf16.mxu0 0
      %1407 = vmatpush2.bf16.msra.mxu0 0
      %1408 = vmatprep.subr.bf16.mxu0 0
      %1409 = vmatpush2.bf16.msra.mxu0 0
      %1410 = vmatprep.subr.bf16.mxu0 0
      %1411 = vmatpush2.bf16.msra.mxu0 0
      %1412 = vmatprep.subr.bf16.mxu0 0
      %1413 = vmatpush2.bf16.msra.mxu0 0
      %1414 = vmatprep.subr.bf16.mxu0 0
      %1415 = vmatpush2.bf16.msra.mxu0 0
      %1416 = vmatprep.subr.bf16.mxu0 0
      %1417 = vmatpush2.bf16.msra.mxu0 0
      %1418 = vmatprep.subr.bf16.mxu0 0
      %1419 = vmatpush2.bf16.msra.mxu0 0
      %1420 = vmatprep.mubr.bf16.mxu0 0
      %1421 = vmatmul.mubr.bf16.gmra.mxu0 %v1380
      %v1422 = vpop.f32.mrf.mxu0
      %v1423 = vadd.f32 0.0, %v1422
      %v1424 = vpop.f32.mrf.mxu0
      %v1425 = vadd.f32 0.0, %v1424
      %v1426 = vpop.f32.mrf.mxu0
      %v1427 = vadd.f32 0.0, %v1426
      %v1428 = vpop.f32.mrf.mxu0
      %v1429 = vadd.f32 0.0, %v1428
      %1430 = vdwg.mxu0
      %v1431 = vadd.f32 %v1349, %v1423
      %v1432 = vadd.f32 %v1350, %v1425
      %v1433 = vadd.f32 %v1351, %v1427
      %v1434 = vadd.f32 %v1352, %v1429
      %v1435 = vadd.f32 %v1431, %v1432
      %1436 = vadd.xlane.f32.xlu0 %v1435
      %v1437 = vpop.xlane.xlu0 %1436
      %v1438 = vadd.f32 %v1433, %v1434
      %1439 = vadd.xlane.f32.xlu0 %v1438
      %v1440 = vpop.xlane.xlu0 %1439
      %vm1441 = vcmask 7168
      %1442 = vst.msk [vmem:[%s217] sm:$0xff] %vm1441, %v1437
      %1443 = vst.msk [vmem:[%s217 + $0x8] sm:$0xff] %vm1441, %v1440
      %v1444 = vmul.f32 %v1431, %v1431
      %v1445 = vmul.f32 %v1432, %v1432
      %v1446 = vmul.f32 %v1433, %v1433
      %v1447 = vmul.f32 %v1434, %v1434
      %v1448 = vadd.f32 %v1444, %v1445
      %1449 = vadd.xlane.f32.xlu0 %v1448
      %v1450 = vpop.xlane.xlu0 %1449
      %v1451 = vadd.f32 %v1446, %v1447
      %1452 = vadd.xlane.f32.xlu0 %v1451
      %v1453 = vpop.xlane.xlu0 %1452
      %1454 = vst.msk [vmem:[%s222] sm:$0xff] %vm1441, %v1450
      %1455 = vst.msk [vmem:[%s222 + $0x8] sm:$0xff] %vm1441, %v1453
      %v1456 = vpack.c.bf16 %v1433, %v1431
      %v1457 = vpack.c.bf16 %v1434, %v1432
      %v1460 = vunpack.c.l.b16 %v1456
      %v1461 = vunpack.c.l.b16 %v1457
      %v1462 = vunpack.c.h.b16 %v1456
      %v1463 = vunpack.c.h.b16 %v1457
      %v1464 = vpack.c.b16 %v1461, %v1460
      %v1465 = vpack.c.b16 %v1463, %v1462
      %1468 = vst [vmem:[%s212] sm:$0xff] %v1464
      %1469 = vst [vmem:[%s212 + $0x8] sm:$0xff] %v1465
      %p1470 = scmp.lt.s32.totalorder %s16, 1
      %s1471 = scalar_select %p1470, %s16, 1
      %s1472 = smul.addr %s1471, 4
      %s1473 = smul.addr %s1472, 4
      %s1474 = scalar_lea.vmem %s2, %s1473
      %p1475 = scmp.lt.s32.totalorder %s16, 1
      %s1476 = scalar_select %p1475, %s16, 1
      %s1477 = smul.addr %s1476, 2
      %s1478 = smul.addr %s1477, 8
      %s1479 = scalar_lea.vmem %s3, %s1478
      %p1480 = scmp.lt.s32.totalorder %s16, 1
      %s1481 = scalar_select %p1480, %s16, 1
      %s1482 = smul.addr %s1481, 2
      %s1483 = smul.addr %s1482, 8
      %s1484 = scalar_lea.vmem %s4, %s1483
      // Predicated region
      $region29: #{discriminator_forward.6} parent=27 // pred_check
        %p1485 = pneg %p81
      $region30: #{discriminator_forward.6} parent=27 // pred_check_branch
        %1487 = sbr.rel (%p1485) target = $region32
      $region31: #{discriminator_forward.6} parent=27 // pred_region
        _
      $region32: #{discriminator_forward.6} parent=27 // pred_fallthru
        _
      // Predicated region
      $region33: #{discriminator_forward.6} parent=27 // pred_check
        %p1488 = pneg %p107
      $region34: #{discriminator_forward.6} parent=27 // pred_check_branch
        %1490 = sbr.rel (%p1488) target = $region36
      $region35: #{discriminator_forward.6} parent=27 // pred_region
        _
      $region36: #{discriminator_forward.6} parent=27 // pred_fallthru
        _
      // Predicated region
      $region37: #{discriminator_forward.6} parent=27 // pred_check
        %p1491 = pneg %p133
      $region38: #{discriminator_forward.6} parent=27 // pred_check_branch
        %1493 = sbr.rel (%p1491) target = $region40
      $region39: #{discriminator_forward.6} parent=27 // pred_region
        _
      $region40: #{discriminator_forward.6} parent=27 // pred_fallthru
        _
    $region28: #{discriminator_forward.6} parent=5 // pred_fallthru
      _
    %p1494 = scmp.le.s32.totalorder 2, %s11
    // Predicated region
    $region41: #{discriminator_forward.6} parent=5 // pred_check
      %p1495 = pneg %p1494
    $region42: #{discriminator_forward.6} parent=5 // pred_check_branch
      %1497 = sbr.rel (%p1495) target = $region44
    $region43: #{discriminator_forward.6} parent=5 // pred_region
      %s1498 = ssub.s32 %s11, 2
      // Predicated region
      $region45: #{discriminator_forward.6} parent=43 // pred_check
        %p1499 = pneg %p87
      $region46: #{discriminator_forward.6} parent=43 // pred_check_branch
        %1501 = sbr.rel (%p1499) target = $region48
      $region47: #{discriminator_forward.6} parent=43 // pred_region
        %p1502 = scmp.lt.s32.totalorder %s17, 1
        %s1503 = scalar_select %p1502, %s17, 1
        %s1504 = smul.addr %s1503, 4
        %s1505 = smul.addr %s1504, 4
        %s1506 = scalar_lea.vmem %s2, %s1505
      $region48: #{discriminator_forward.6} parent=43 // pred_fallthru
        _
      // Predicated region
      $region49: #{discriminator_forward.6} parent=43 // pred_check
        %p1507 = pneg %p113
      $region50: #{discriminator_forward.6} parent=43 // pred_check_branch
        %1509 = sbr.rel (%p1507) target = $region52
      $region51: #{discriminator_forward.6} parent=43 // pred_region
        %p1510 = scmp.lt.s32.totalorder %s17, 1
        %s1511 = scalar_select %p1510, %s17, 1
        %s1512 = smul.addr %s1511, 2
        %s1513 = smul.addr %s1512, 8
        %s1514 = scalar_lea.vmem %s3, %s1513
      $region52: #{discriminator_forward.6} parent=43 // pred_fallthru
        _
      // Predicated region
      $region53: #{discriminator_forward.6} parent=43 // pred_check
        %p1515 = pneg %p139
      $region54: #{discriminator_forward.6} parent=43 // pred_check_branch
        %1517 = sbr.rel (%p1515) target = $region56
      $region55: #{discriminator_forward.6} parent=43 // pred_region
        %p1518 = scmp.lt.s32.totalorder %s17, 1
        %s1519 = scalar_select %p1518, %s17, 1
        %s1520 = smul.addr %s1519, 2
        %s1521 = smul.addr %s1520, 8
        %s1522 = scalar_lea.vmem %s4, %s1521
      $region56: #{discriminator_forward.6} parent=43 // pred_fallthru
        _
    $region44: #{discriminator_forward.6} parent=5 // pred_fallthru
      _
  $region6: #{discriminator_forward.6} parent=0 // loop_footer
    %s15 = sadd.s32 1, %s11
  $region7: #{discriminator_forward.6} parent=0 // loop_footer_branch
    %10 = sbr.rel target = $region3
  $region8: #{discriminator_forward.6} parent=0 // loop_exit
    _

// kernel: discriminator_forward.7
$region0: #{discriminator_forward.7}
  #allocation0 [shape = 'u32[]', space=smem, size = 0x4, offset = 0x4, fixed_abs, tag = 'smem constant byte address 0x4 - core index']
  #allocation1 [shape = 'u32[144,128]{1,0:T(1,128)}', space=vmem, size = 0x12000, scoped, tag = 'internal scratch']
  %s0 = inlined_call_operand.vmem [shape: bf16[2,8,16,72], index: 0, kind: input, shape index: {}]
  %s1 = inlined_call_operand.vmem [shape: bf16[16,32,16], index: 1, kind: input, shape index: {}]
  %s2 = inlined_call_operand.vmem [shape: bf16[2,32,64], index: 2, kind: output, shape index: {0}]
  %s3 = inlined_call_operand.vmem [shape: f32[2,32,1], index: 3, kind: output, shape index: {1}]
  %s4 = inlined_call_operand.vmem [shape: f32[2,32,1], index: 4, kind: output, shape index: {2}]
  %5 = xla_tuple %s2, %s3, %s4
  %s6 = sld [smem:[#allocation0]]
  $region57: #{discriminator_forward.7} parent=0
    _
  %s8 = ssub.s32 1, %s6
  %s9 = scalar_select 0, %s8, %s6
  loop: start=0, step=1, limit=4
  $region2: #{discriminator_forward.7} parent=0 // loop_pre_header
    _
  $region3: #{discriminator_forward.7} parent=0 // loop_header
    %s11 = sphi 0, %s15
    %p12 = scmp.ge.s32.totalorder %s11, 4
    %s21 = sphi 0, %s23
    %s24 = sphi 0, %s21
    %s25 = sphi 0, %s24
    %s41 = sphi 0, %s25
    %s45 = sphi 0, %s45
    %s47 = sphi 0, %s45
    %s48 = sphi 0, %s47
    %s62 = sphi 0, %s48
    %s68 = sphi 0, %s70
    %s71 = sphi 0, %s68
    %s72 = sphi 0, %s71
    %s88 = sphi 0, %s72
    %s94 = sphi 0, %s96
    %s97 = sphi 0, %s94
    %s98 = sphi 0, %s97
    %s114 = sphi 0, %s98
    %s120 = sphi 0, %s122
    %s123 = sphi 0, %s120
    %s124 = sphi 0, %s123
    %s140 = sphi 0, %s124
  $region4: #{discriminator_forward.7} parent=0 // loop_header_branch
    %14 = sbr.rel (%p12) target = $region8
  $region5: #{discriminator_forward.7} parent=0 // loop_body
    %s16 = ssub.s32 %s11, 1
    %s17 = ssub.s32 %s11, 2
    %s18 = sadd.s32 %s11, 1
    %s19 = ssub.s32 %s11, %s18
    %p20 = scmp.eq.s32.totalorder %s19, 0
    %s22 = sadd.s32 %s21, 1
    %s23 = scalar_select %p20, %s21, %s22
    %p26 = pneg %p20
    %p27 = scmp.eq.s32.totalorder %s11, 1
    %p28 = por %p26, %p27
    %p29 = scmp.ne.s32.totalorder %s21, %s24
    %p30 = scmp.eq.s32.totalorder %s11, 0
    %p31 = por %p29, %p30
    %p32 = scmp.ne.s32.totalorder %s21, %s24
    %p33 = scmp.eq.s32.totalorder %s16, 1
    %p34 = por %p32, %p33
    %p35 = scmp.ne.s32.totalorder %s24, %s25
    %p36 = scmp.eq.s32.totalorder %s16, 0
    %p37 = por %p35, %p36
    %p38 = scmp.ne.s32.totalorder %s24, %s25
    %p39 = scmp.eq.s32.totalorder %s17, 1
    %p40 = por %p38, %p39
    %p42 = scmp.ne.s32.totalorder %s25, %s41
    %p43 = scmp.eq.s32.totalorder %s17, 0
    %p44 = por %p42, %p43
    %s46 = sadd.s32 %s45, 1
    %p49 = scmp.eq.s32.totalorder %s11, 1
    %p50 = scmp.ne.s32.totalorder %s45, %s47
    %p51 = scmp.eq.s32.totalorder %s11, 0
    %p52 = por %p50, %p51
    %p53 = scmp.ne.s32.totalorder %s45, %s47
    %p54 = scmp.eq.s32.totalorder %s16, 1
    %p55 = por %p53, %p54
    %p56 = scmp.ne.s32.totalorder %s47, %s48
    %p57 = scmp.eq.s32.totalorder %s16, 0
    %p58 = por %p56, %p57
    %p59 = scmp.ne.s32.totalorder %s47, %s48
    %p60 = scmp.eq.s32.totalorder %s17, 1
    %p61 = por %p59, %p60
    %p63 = scmp.ne.s32.totalorder %s48, %s62
    %p64 = scmp.eq.s32.totalorder %s17, 0
    %p65 = por %p63, %p64
    %s66 = ssub.s32 %s11, %s18
    %p67 = scmp.eq.s32.totalorder %s66, 0
    %s69 = sadd.s32 %s68, 1
    %s70 = scalar_select %p67, %s68, %s69
    %p73 = pneg %p67
    %p74 = scmp.eq.s32.totalorder %s11, 1
    %p75 = por %p73, %p74
    %p76 = scmp.ne.s32.totalorder %s68, %s71
    %p77 = scmp.eq.s32.totalorder %s11, 0
    %p78 = por %p76, %p77
    %p79 = scmp.ne.s32.totalorder %s68, %s71
    %p80 = scmp.eq.s32.totalorder %s16, 1
    %p81 = por %p79, %p80
    %p82 = scmp.ne.s32.totalorder %s71, %s72
    %p83 = scmp.eq.s32.totalorder %s16, 0
    %p84 = por %p82, %p83
    %p85 = scmp.ne.s32.totalorder %s71, %s72
    %p86 = scmp.eq.s32.totalorder %s17, 1
    %p87 = por %p85, %p86
    %p89 = scmp.ne.s32.totalorder %s72, %s88
    %p90 = scmp.eq.s32.totalorder %s17, 0
    %p91 = por %p89, %p90
    %s92 = ssub.s32 %s11, %s18
    %p93 = scmp.eq.s32.totalorder %s92, 0
    %s95 = sadd.s32 %s94, 1
    %s96 = scalar_select %p93, %s94, %s95
    %p99 = pneg %p93
    %p100 = scmp.eq.s32.totalorder %s11, 1
    %p101 = por %p99, %p100
    %p102 = scmp.ne.s32.totalorder %s94, %s97
    %p103 = scmp.eq.s32.totalorder %s11, 0
    %p104 = por %p102, %p103
    %p105 = scmp.ne.s32.totalorder %s94, %s97
    %p106 = scmp.eq.s32.totalorder %s16, 1
    %p107 = por %p105, %p106
    %p108 = scmp.ne.s32.totalorder %s97, %s98
    %p109 = scmp.eq.s32.totalorder %s16, 0
    %p110 = por %p108, %p109
    %p111 = scmp.ne.s32.totalorder %s97, %s98
    %p112 = scmp.eq.s32.totalorder %s17, 1
    %p113 = por %p111, %p112
    %p115 = scmp.ne.s32.totalorder %s98, %s114
    %p116 = scmp.eq.s32.totalorder %s17, 0
    %p117 = por %p115, %p116
    %s118 = ssub.s32 %s11, %s18
    %p119 = scmp.eq.s32.totalorder %s118, 0
    %s121 = sadd.s32 %s120, 1
    %s122 = scalar_select %p119, %s120, %s121
    %p125 = pneg %p119
    %p126 = scmp.eq.s32.totalorder %s11, 1
    %p127 = por %p125, %p126
    %p128 = scmp.ne.s32.totalorder %s120, %s123
    %p129 = scmp.eq.s32.totalorder %s11, 0
    %p130 = por %p128, %p129
    %p131 = scmp.ne.s32.totalorder %s120, %s123
    %p132 = scmp.eq.s32.totalorder %s16, 1
    %p133 = por %p131, %p132
    %p134 = scmp.ne.s32.totalorder %s123, %s124
    %p135 = scmp.eq.s32.totalorder %s16, 0
    %p136 = por %p134, %p135
    %p137 = scmp.ne.s32.totalorder %s123, %s124
    %p138 = scmp.eq.s32.totalorder %s17, 1
    %p139 = por %p137, %p138
    %p141 = scmp.ne.s32.totalorder %s124, %s140
    %p142 = scmp.eq.s32.totalorder %s17, 0
    %p143 = por %p141, %p142
    %p144 = scmp.le.s32.totalorder 1, %s11
    %p145 = scmp.lt.s32.totalorder %s11, 3
    %p146 = pnand %p144, %p145
    %p147 = pneg %p146
    // Predicated region
    $region9: #{discriminator_forward.7} parent=5 // pred_check
      _
    $region10: #{discriminator_forward.7} parent=5 // pred_check_branch
      %149 = sbr.rel (%p146) target = $region12
    $region11: #{discriminator_forward.7} parent=5 // pred_region
      %s150 = ssub.s32 %s11, 1
      // Predicated region
      $region13: #{discriminator_forward.7} parent=11 // pred_check
        %p151 = pneg %p58
      $region14: #{discriminator_forward.7} parent=11 // pred_check_branch
        %153 = sbr.rel (%p151) target = $region16
      $region15: #{discriminator_forward.7} parent=11 // pred_region
        _
      $region16: #{discriminator_forward.7} parent=11 // pred_fallthru
        _
    $region12: #{discriminator_forward.7} parent=5 // pred_fallthru
      _
    %p154 = scmp.lt.s32.totalorder %s11, 2
    // Predicated region
    $region17: #{discriminator_forward.7} parent=5 // pred_check
      %p155 = pneg %p154
    $region18: #{discriminator_forward.7} parent=5 // pred_check_branch
      %157 = sbr.rel (%p155) target = $region20
    $region19: #{discriminator_forward.7} parent=5 // pred_region
      // Predicated region
      $region21: #{discriminator_forward.7} parent=19 // pred_check
        %p158 = pneg %p31
      $region22: #{discriminator_forward.7} parent=19 // pred_check_branch
        %160 = sbr.rel (%p158) target = $region24
      $region23: #{discriminator_forward.7} parent=19 // pred_region
        %p161 = scmp.lt.s32.totalorder %s11, 1
        %s162 = scalar_select %p161, %s11, 1
        %s163 = smul.addr %s162, 16
        %s164 = smul.addr %s163, 4
        %s165 = scalar_lea.vmem %s0, %s164
      $region24: #{discriminator_forward.7} parent=19 // pred_fallthru
        _
    $region20: #{discriminator_forward.7} parent=5 // pred_fallthru
      _
    %p166 = scmp.le.s32.totalorder 1, %s11
    %p167 = scmp.lt.s32.totalorder %s11, 3
    %p168 = pnand %p166, %p167
    %p169 = pneg %p168
    // Predicated region
    $region25: #{discriminator_forward.7} parent=5 // pred_check
      _
    $region26: #{discriminator_forward.7} parent=5 // pred_check_branch
      %171 = sbr.rel (%p168) target = $region28
    $region27: #{discriminator_forward.7} parent=5 // pred_region
      %s172 = ssub.s32 %s11, 1
      %p173 = scmp.lt.s32.totalorder %s16, 1
      %s174 = scalar_select %p173, %s16, 1
      %s175 = smul.addr %s174, 16
      %s176 = smul.addr %s175, 4
      %s177 = scalar_lea.vmem %s0, %s176
      %p178 = pneg %p37
      %p179 = pneg %p34
      %p180 = pneg %p58
      %p181 = pneg %p55
      %p182 = pneg %p84
      %p183 = pneg %p81
      %p184 = scmp.lt.s32.totalorder %s16, 1
      %s185 = scalar_select %p184, %s16, 1
      %s186 = smul.addr %s185, 4
      %s187 = smul.addr %s186, 4
      %s188 = scalar_lea.vmem %s2, %s187
      %p189 = pneg %p110
      %p190 = pneg %p107
      %p191 = scmp.lt.s32.totalorder %s16, 1
      %s192 = scalar_select %p191, %s16, 1
      %s193 = smul.addr %s192, 4
      %s194 = smul.addr %s193, 8
      %s195 = scalar_lea.vmem %s3, %s194
      %p196 = pneg %p136
      %p197 = pneg %p133
      %p198 = scmp.lt.s32.totalorder %s16, 1
      %s199 = scalar_select %p198, %s16, 1
      %s200 = smul.addr %s199, 4
      %s201 = smul.addr %s200, 8
      %s202 = scalar_lea.vmem %s4, %s201
      %p203 = scmp.lt.s32.totalorder %s16, 1
      %s204 = scalar_select %p203, %s16, 1
      %s205 = smul.addr %s204, 16
      %s206 = smul.addr %s205, 4
      %s207 = scalar_lea.vmem %s0, %s206
      %p208 = scmp.lt.s32.totalorder %s16, 1
      %s209 = scalar_select %p208, %s16, 1
      %s210 = smul.addr %s209, 4
      %s211 = smul.addr %s210, 4
      %s212 = scalar_lea.vmem %s2, %s211
      %p213 = scmp.lt.s32.totalorder %s16, 1
      %s214 = scalar_select %p213, %s16, 1
      %s215 = smul.addr %s214, 4
      %s216 = smul.addr %s215, 8
      %s217 = scalar_lea.vmem %s3, %s216
      %p218 = scmp.lt.s32.totalorder %s16, 1
      %s219 = scalar_select %p218, %s16, 1
      %s220 = smul.addr %s219, 4
      %s221 = smul.addr %s220, 8
      %s222 = scalar_lea.vmem %s4, %s221
      %v224 = vld [vmem:[%s207] sm:$0xf]
      %v225 = vld [vmem:[%s207 + $0x4] sm:$0xf]
      %v226 = vld [vmem:[%s1] sm:$0xf]
      %v227 = vld [vmem:[%s1 + $0x4] sm:$0xf]
      %v228 = vld [vmem:[%s1 + $0x8] sm:$0xf]
      %v229 = vld [vmem:[%s1 + $0xc] sm:$0xf]
      %s230 = scalar_lea.vmem %s1, 128
      %v231 = vld [vmem:[%s230] sm:$0xf]
      %v232 = vld [vmem:[%s230 + $0x4] sm:$0xf]
      %v233 = vld [vmem:[%s230 + $0x8] sm:$0xf]
      %v234 = vld [vmem:[%s230 + $0xc] sm:$0xf]
      %v239 = vunpack.c.l.b16 %v231
      %v240 = vunpack.c.l.b16 %v232
      %v241 = vunpack.c.l.b16 %v233
      %v242 = vunpack.c.l.b16 %v234
      %v243 = vpack.c.b16 %v240, %v239
      %v244 = vpack.c.b16 %v242, %v241
      %v247 = vunpack.c.l.b16 %v224
      %v248 = vunpack.c.l.b16 %v225
      %v249 = vpack.c.b16 %v248, %v247
      %250 = vrot.lane.b32.xlu0 %v249, 120
      %v251 = vpop.permute.xlu0 %250
      %vm253 = vcmask 130048
      %v255 = vsel %vm253, %v243, 0
      %v258 = vsel %vm253, %v244, 0
      %260 = vmatprep.subr.bf16.mxu0 0
      %261 = vmatpush1.bf16.msra.mxu0 0
      %262 = vmatprep.subr.bf16.mxu0 0
      %263 = vmatpush1.bf16.msra.mxu0 0
      %264 = vmatprep.subr.bf16.mxu0 0
      %265 = vmatpush1.bf16.msra.mxu0 0
      %266 = vmatprep.subr.bf16.mxu0 0
      %267 = vmatpush1.bf16.msra.mxu0 0
      %268 = vmatprep.subr.bf16.mxu0 0
      %269 = vmatpush1.bf16.msra.mxu0 0
      %270 = vmatprep.subr.bf16.mxu0 0
      %271 = vmatpush1.bf16.msra.mxu0 0
      %272 = vmatprep.subr.bf16.mxu0 0
      %273 = vmatpush1.bf16.msra.mxu0 0
      %274 = vmatprep.subr.bf16.mxu0 0
      %275 = vmatpush1.bf16.msra.mxu0 %v251
      %276 = vmatprep.subr.bf16.mxu0 0
      %277 = vmatpush2.bf16.msra.mxu0 0
      %278 = vmatprep.subr.bf16.mxu0 0
      %279 = vmatpush2.bf16.msra.mxu0 0
      %280 = vmatprep.subr.bf16.mxu0 0
      %281 = vmatpush2.bf16.msra.mxu0 0
      %282 = vmatprep.subr.bf16.mxu0 0
      %283 = vmatpush2.bf16.msra.mxu0 0
      %284 = vmatprep.subr.bf16.mxu0 0
      %285 = vmatpush2.bf16.msra.mxu0 0
      %286 = vmatprep.subr.bf16.mxu0 0
      %287 = vmatpush2.bf16.msra.mxu0 0
      %288 = vmatprep.subr.bf16.mxu0 0
      %289 = vmatpush2.bf16.msra.mxu0 0
      %290 = vmatprep.subr.bf16.mxu0 0
      %291 = vmatpush2.bf16.msra.mxu0 0
      %292 = vmatprep.mubr.bf16.mxu0 0
      %293 = vmatmul.mubr.bf16.gmra.mxu0 %v255
      %v294 = vpop.f32.mrf.mxu0
      %v295 = vadd.f32 0.0, %v294
      %v296 = vpop.f32.mrf.mxu0
      %v297 = vpop.f32.mrf.mxu0
      %v298 = vadd.f32 0.0, %v297
      %v299 = vpop.f32.mrf.mxu0
      %300 = vmatprep.mubr.bf16.mxu0 0
      %301 = vmatmul.mubr.bf16.gmra.mxu0 %v258
      %v302 = vpop.f32.mrf.mxu0
      %v303 = vadd.f32 0.0, %v302
      %v304 = vpop.f32.mrf.mxu0
      %v305 = vpop.f32.mrf.mxu0
      %v306 = vadd.f32 0.0, %v305
      %v307 = vpop.f32.mrf.mxu0
      %308 = vdwg.mxu0
      %v313 = vunpack.c.l.b16 %v226
      %v314 = vunpack.c.l.b16 %v227
      %v315 = vunpack.c.l.b16 %v228
      %v316 = vunpack.c.l.b16 %v229
      %v317 = vpack.c.b16 %v314, %v313
      %v318 = vpack.c.b16 %v316, %v315
      %v321 = vsel %vm253, %v317, 0
      %v324 = vsel %vm253, %v318, 0
      %326 = vmatprep.subr.bf16.mxu0 0
      %327 = vmatpush1.bf16.msra.mxu0 0
      %328 = vmatprep.subr.bf16.mxu0 0
      %329 = vmatpush1.bf16.msra.mxu0 0
      %330 = vmatprep.subr.bf16.mxu0 0
      %331 = vmatpush1.bf16.msra.mxu0 0
      %332 = vmatprep.subr.bf16.mxu0 0
      %333 = vmatpush1.bf16.msra.mxu0 0
      %334 = vmatprep.subr.bf16.mxu0 0
      %335 = vmatpush1.bf16.msra.mxu0 0
      %336 = vmatprep.subr.bf16.mxu0 0
      %337 = vmatpush1.bf16.msra.mxu0 0
      %338 = vmatprep.subr.bf16.mxu0 0
      %339 = vmatpush1.bf16.msra.mxu0 0
      %340 = vmatprep.subr.bf16.mxu0 0
      %341 = vmatpush1.bf16.msra.mxu0 %v249
      %342 = vmatprep.subr.bf16.mxu0 0
      %343 = vmatpush2.bf16.msra.mxu0 0
      %344 = vmatprep.subr.bf16.mxu0 0
      %345 = vmatpush2.bf16.msra.mxu0 0
      %346 = vmatprep.subr.bf16.mxu0 0
      %347 = vmatpush2.bf16.msra.mxu0 0
      %348 = vmatprep.subr.bf16.mxu0 0
      %349 = vmatpush2.bf16.msra.mxu0 0
      %350 = vmatprep.subr.bf16.mxu0 0
      %351 = vmatpush2.bf16.msra.mxu0 0
      %352 = vmatprep.subr.bf16.mxu0 0
      %353 = vmatpush2.bf16.msra.mxu0 0
      %354 = vmatprep.subr.bf16.mxu0 0
      %355 = vmatpush2.bf16.msra.mxu0 0
      %356 = vmatprep.subr.bf16.mxu0 0
      %357 = vmatpush2.bf16.msra.mxu0 0
      %358 = vmatprep.mubr.bf16.mxu0 0
      %359 = vmatmul.mubr.bf16.gmra.mxu0 %v321
      %v360 = vpop.f32.mrf.mxu0
      %v361 = vadd.f32 %v295, %v360
      %v362 = vpop.f32.mrf.mxu0
      %v363 = vpop.f32.mrf.mxu0
      %v364 = vadd.f32 %v298, %v363
      %v365 = vpop.f32.mrf.mxu0
      %366 = vmatprep.mubr.bf16.mxu0 0
      %367 = vmatmul.mubr.bf16.gmra.mxu0 %v324
      %v368 = vpop.f32.mrf.mxu0
      %v369 = vadd.f32 %v303, %v368
      %v370 = vpop.f32.mrf.mxu0
      %v371 = vpop.f32.mrf.mxu0
      %v372 = vadd.f32 %v306, %v371
      %v373 = vpop.f32.mrf.mxu0
      %374 = vdwg.mxu0
      %s375 = scalar_lea.vmem %s207, 8
      %v376 = vld [vmem:[%s375] sm:$0xf]
      %v377 = vld [vmem:[%s375 + $0x4] sm:$0xf]
      %s378 = scalar_lea.vmem %s1, 32
      %v379 = vld [vmem:[%s378] sm:$0xf]
      %v380 = vld [vmem:[%s378 + $0x4] sm:$0xf]
      %v381 = vld [vmem:[%s378 + $0x8] sm:$0xf]
      %v382 = vld [vmem:[%s378 + $0xc] sm:$0xf]
      %v387 = vunpack.c.l.b16 %v379
      %v388 = vunpack.c.l.b16 %v380
      %v389 = vunpack.c.l.b16 %v381
      %v390 = vunpack.c.l.b16 %v382
      %v391 = vpack.c.b16 %v388, %v387
      %v392 = vpack.c.b16 %v390, %v389
      %v395 = vunpack.c.l.b16 %v376
      %v396 = vunpack.c.l.b16 %v377
      %v397 = vpack.c.b16 %v396, %v395
      %v400 = vsel %vm253, %v391, 0
      %v403 = vsel %vm253, %v392, 0
      %405 = vmatprep.subr.bf16.mxu0 0
      %406 = vmatpush1.bf16.msra.mxu0 0
      %407 = vmatprep.subr.bf16.mxu0 0
      %408 = vmatpush1.bf16.msra.mxu0 0
      %409 = vmatprep.subr.bf16.mxu0 0
      %410 = vmatpush1.bf16.msra.mxu0 0
      %411 = vmatprep.subr.bf16.mxu0 0
      %412 = vmatpush1.bf16.msra.mxu0 0
      %413 = vmatprep.subr.bf16.mxu0 0
      %414 = vmatpush1.bf16.msra.mxu0 0
      %415 = vmatprep.subr.bf16.mxu0 0
      %416 = vmatpush1.bf16.msra.mxu0 0
      %417 = vmatprep.subr.bf16.mxu0 0
      %418 = vmatpush1.bf16.msra.mxu0 0
      %419 = vmatprep.subr.bf16.mxu0 0
      %420 = vmatpush1.bf16.msra.mxu0 %v397
      %421 = vmatprep.subr.bf16.mxu0 0
      %422 = vmatpush2.bf16.msra.mxu0 0
      %423 = vmatprep.subr.bf16.mxu0 0
      %424 = vmatpush2.bf16.msra.mxu0 0
      %425 = vmatprep.subr.bf16.mxu0 0
      %426 = vmatpush2.bf16.msra.mxu0 0
      %427 = vmatprep.subr.bf16.mxu0 0
      %428 = vmatpush2.bf16.msra.mxu0 0
      %429 = vmatprep.subr.bf16.mxu0 0
      %430 = vmatpush2.bf16.msra.mxu0 0
      %431 = vmatprep.subr.bf16.mxu0 0
      %432 = vmatpush2.bf16.msra.mxu0 0
      %433 = vmatprep.subr.bf16.mxu0 0
      %434 = vmatpush2.bf16.msra.mxu0 0
      %435 = vmatprep.subr.bf16.mxu0 0
      %436 = vmatpush2.bf16.msra.mxu0 0
      %437 = vmatprep.mubr.bf16.mxu0 0
      %438 = vmatmul.mubr.bf16.gmra.mxu0 %v400
      %v439 = vpop.f32.mrf.mxu0
      %v440 = vadd.f32 0.0, %v439
      %v441 = vpop.f32.mrf.mxu0
      %v442 = vpop.f32.mrf.mxu0
      %v443 = vadd.f32 0.0, %v442
      %v444 = vpop.f32.mrf.mxu0
      %445 = vmatprep.mubr.bf16.mxu0 0
      %446 = vmatmul.mubr.bf16.gmra.mxu0 %v403
      %v447 = vpop.f32.mrf.mxu0
      %v448 = vadd.f32 0.0, %v447
      %v449 = vpop.f32.mrf.mxu0
      %v450 = vpop.f32.mrf.mxu0
      %v451 = vadd.f32 0.0, %v450
      %v452 = vpop.f32.mrf.mxu0
      %453 = vdwg.mxu0
      %v454 = vadd.f32 %v361, %v440
      %v455 = vadd.f32 %v364, %v443
      %v456 = vadd.f32 %v369, %v448
      %v457 = vadd.f32 %v372, %v451
      %s458 = scalar_lea.vmem %s1, 160
      %v459 = vld [vmem:[%s458] sm:$0xf]
      %v460 = vld [vmem:[%s458 + $0x4] sm:$0xf]
      %v461 = vld [vmem:[%s458 + $0x8] sm:$0xf]
      %v462 = vld [vmem:[%s458 + $0xc] sm:$0xf]
      %v467 = vunpack.c.l.b16 %v459
      %v468 = vunpack.c.l.b16 %v460
      %v469 = vunpack.c.l.b16 %v461
      %v470 = vunpack.c.l.b16 %v462
      %v471 = vpack.c.b16 %v468, %v467
      %v472 = vpack.c.b16 %v470, %v469
      %473 = vrot.lane.b32.xlu0 %v397, 120
      %v474 = vpop.permute.xlu0 %473
      %v477 = vsel %vm253, %v471, 0
      %v480 = vsel %vm253, %v472, 0
      %482 = vmatprep.subr.bf16.mxu0 0
      %483 = vmatpush1.bf16.msra.mxu0 0
      %484 = vmatprep.subr.bf16.mxu0 0
      %485 = vmatpush1.bf16.msra.mxu0 0
      %486 = vmatprep.subr.bf16.mxu0 0
      %487 = vmatpush1.bf16.msra.mxu0 0
      %488 = vmatprep.subr.bf16.mxu0 0
      %489 = vmatpush1.bf16.msra.mxu0 0
      %490 = vmatprep.subr.bf16.mxu0 0
      %491 = vmatpush1.bf16.msra.mxu0 0
      %492 = vmatprep.subr.bf16.mxu0 0
      %493 = vmatpush1.bf16.msra.mxu0 0
      %494 = vmatprep.subr.bf16.mxu0 0
      %495 = vmatpush1.bf16.msra.mxu0 0
      %496 = vmatprep.subr.bf16.mxu0 0
      %497 = vmatpush1.bf16.msra.mxu0 %v474
      %498 = vmatprep.subr.bf16.mxu0 0
      %499 = vmatpush2.bf16.msra.mxu0 0
      %500 = vmatprep.subr.bf16.mxu0 0
      %501 = vmatpush2.bf16.msra.mxu0 0
      %502 = vmatprep.subr.bf16.mxu0 0
      %503 = vmatpush2.bf16.msra.mxu0 0
      %504 = vmatprep.subr.bf16.mxu0 0
      %505 = vmatpush2.bf16.msra.mxu0 0
      %506 = vmatprep.subr.bf16.mxu0 0
      %507 = vmatpush2.bf16.msra.mxu0 0
      %508 = vmatprep.subr.bf16.mxu0 0
      %509 = vmatpush2.bf16.msra.mxu0 0
      %510 = vmatprep.subr.bf16.mxu0 0
      %511 = vmatpush2.bf16.msra.mxu0 0
      %512 = vmatprep.subr.bf16.mxu0 0
      %513 = vmatpush2.bf16.msra.mxu0 0
      %514 = vmatprep.mubr.bf16.mxu0 0
      %515 = vmatmul.mubr.bf16.gmra.mxu0 %v477
      %v516 = vpop.f32.mrf.mxu0
      %v517 = vadd.f32 0.0, %v516
      %v518 = vpop.f32.mrf.mxu0
      %v519 = vpop.f32.mrf.mxu0
      %v520 = vadd.f32 0.0, %v519
      %v521 = vpop.f32.mrf.mxu0
      %522 = vmatprep.mubr.bf16.mxu0 0
      %523 = vmatmul.mubr.bf16.gmra.mxu0 %v480
      %v524 = vpop.f32.mrf.mxu0
      %v525 = vadd.f32 0.0, %v524
      %v526 = vpop.f32.mrf.mxu0
      %v527 = vpop.f32.mrf.mxu0
      %v528 = vadd.f32 0.0, %v527
      %v529 = vpop.f32.mrf.mxu0
      %530 = vdwg.mxu0
      %v531 = vadd.f32 %v454, %v517
      %v532 = vadd.f32 %v455, %v520
      %v533 = vadd.f32 %v456, %v525
      %v534 = vadd.f32 %v457, %v528
      %s535 = scalar_lea.vmem %s207, 16
      %v536 = vld [vmem:[%s535] sm:$0xf]
      %v537 = vld [vmem:[%s535 + $0x4] sm:$0xf]
      %s538 = scalar_lea.vmem %s1, 16
      %v539 = vld [vmem:[%s538] sm:$0xf]
      %v540 = vld [vmem:[%s538 + $0x4] sm:$0xf]
      %v541 = vld [vmem:[%s538 + $0x8] sm:$0xf]
      %v542 = vld [vmem:[%s538 + $0xc] sm:$0xf]
      %v547 = vunpack.c.l.b16 %v539
      %v548 = vunpack.c.l.b16 %v540
      %v549 = vunpack.c.l.b16 %v541
      %v550 = vunpack.c.l.b16 %v542
      %v551 = vpack.c.b16 %v548, %v547
      %v552 = vpack.c.b16 %v550, %v549
      %v555 = vunpack.c.l.b16 %v536
      %v556 = vunpack.c.l.b16 %v537
      %v557 = vpack.c.b16 %v556, %v555
      %v560 = vsel %vm253, %v551, 0
      %v563 = vsel %vm253, %v552, 0
      %565 = vmatprep.subr.bf16.mxu0 0
      %566 = vmatpush1.bf16.msra.mxu0 0
      %567 = vmatprep.subr.bf16.mxu0 0
      %568 = vmatpush1.bf16.msra.mxu0 0
      %569 = vmatprep.subr.bf16.mxu0 0
      %570 = vmatpush1.bf16.msra.mxu0 0
      %571 = vmatprep.subr.bf16.mxu0 0
      %572 = vmatpush1.bf16.msra.mxu0 0
      %573 = vmatprep.subr.bf16.mxu0 0
      %574 = vmatpush1.bf16.msra.mxu0 0
      %575 = vmatprep.subr.bf16.mxu0 0
      %576 = vmatpush1.bf16.msra.mxu0 0
      %577 = vmatprep.subr.bf16.mxu0 0
      %578 = vmatpush1.bf16.msra.mxu0 0
      %579 = vmatprep.subr.bf16.mxu0 0
      %580 = vmatpush1.bf16.msra.mxu0 %v557
      %581 = vmatprep.subr.bf16.mxu0 0
      %582 = vmatpush2.bf16.msra.mxu0 0
      %583 = vmatprep.subr.bf16.mxu0 0
      %584 = vmatpush2.bf16.msra.mxu0 0
      %585 = vmatprep.subr.bf16.mxu0 0
      %586 = vmatpush2.bf16.msra.mxu0 0
      %587 = vmatprep.subr.bf16.mxu0 0
      %588 = vmatpush2.bf16.msra.mxu0 0
      %589 = vmatprep.subr.bf16.mxu0 0
      %590 = vmatpush2.bf16.msra.mxu0 0
      %591 = vmatprep.subr.bf16.mxu0 0
      %592 = vmatpush2.bf16.msra.mxu0 0
      %593 = vmatprep.subr.bf16.mxu0 0
      %594 = vmatpush2.bf16.msra.mxu0 0
      %595 = vmatprep.subr.bf16.mxu0 0
      %596 = vmatpush2.bf16.msra.mxu0 0
      %597 = vmatprep.mubr.bf16.mxu0 0
      %598 = vmatmul.mubr.bf16.gmra.mxu0 %v560
      %v599 = vpop.f32.mrf.mxu0
      %v600 = vadd.f32 0.0, %v599
      %v601 = vpop.f32.mrf.mxu0
      %v602 = vpop.f32.mrf.mxu0
      %v603 = vadd.f32 0.0, %v602
      %v604 = vpop.f32.mrf.mxu0
      %605 = vmatprep.mubr.bf16.mxu0 0
      %606 = vmatmul.mubr.bf16.gmra.mxu0 %v563
      %v607 = vpop.f32.mrf.mxu0
      %v608 = vadd.f32 0.0, %v607
      %v609 = vpop.f32.mrf.mxu0
      %v610 = vpop.f32.mrf.mxu0
      %v611 = vadd.f32 0.0, %v610
      %v612 = vpop.f32.mrf.mxu0
      %613 = vdwg.mxu0
      %v614 = vadd.f32 %v531, %v600
      %v615 = vadd.f32 %v532, %v603
      %v616 = vadd.f32 %v533, %v608
      %v617 = vadd.f32 %v534, %v611
      %s618 = scalar_lea.vmem %s1, 144
      %v619 = vld [vmem:[%s618] sm:$0xf]
      %v620 = vld [vmem:[%s618 + $0x4] sm:$0xf]
      %v621 = vld [vmem:[%s618 + $0x8] sm:$0xf]
      %v622 = vld [vmem:[%s618 + $0xc] sm:$0xf]
      %v627 = vunpack.c.l.b16 %v619
      %v628 = vunpack.c.l.b16 %v620
      %v629 = vunpack.c.l.b16 %v621
      %v630 = vunpack.c.l.b16 %v622
      %v631 = vpack.c.b16 %v628, %v627
      %v632 = vpack.c.b16 %v630, %v629
      %633 = vrot.lane.b32.xlu0 %v557, 120
      %v634 = vpop.permute.xlu0 %633
      %v637 = vsel %vm253, %v631, 0
      %v640 = vsel %vm253, %v632, 0
      %642 = vmatprep.subr.bf16.mxu0 0
      %643 = vmatpush1.bf16.msra.mxu0 0
      %644 = vmatprep.subr.bf16.mxu0 0
      %645 = vmatpush1.bf16.msra.mxu0 0
      %646 = vmatprep.subr.bf16.mxu0 0
      %647 = vmatpush1.bf16.msra.mxu0 0
      %648 = vmatprep.subr.bf16.mxu0 0
      %649 = vmatpush1.bf16.msra.mxu0 0
      %650 = vmatprep.subr.bf16.mxu0 0
      %651 = vmatpush1.bf16.msra.mxu0 0
      %652 = vmatprep.subr.bf16.mxu0 0
      %653 = vmatpush1.bf16.msra.mxu0 0
      %654 = vmatprep.subr.bf16.mxu0 0
      %655 = vmatpush1.bf16.msra.mxu0 0
      %656 = vmatprep.subr.bf16.mxu0 0
      %657 = vmatpush1.bf16.msra.mxu0 %v634
      %658 = vmatprep.subr.bf16.mxu0 0
      %659 = vmatpush2.bf16.msra.mxu0 0
      %660 = vmatprep.subr.bf16.mxu0 0
      %661 = vmatpush2.bf16.msra.mxu0 0
      %662 = vmatprep.subr.bf16.mxu0 0
      %663 = vmatpush2.bf16.msra.mxu0 0
      %664 = vmatprep.subr.bf16.mxu0 0
      %665 = vmatpush2.bf16.msra.mxu0 0
      %666 = vmatprep.subr.bf16.mxu0 0
      %667 = vmatpush2.bf16.msra.mxu0 0
      %668 = vmatprep.subr.bf16.mxu0 0
      %669 = vmatpush2.bf16.msra.mxu0 0
      %670 = vmatprep.subr.bf16.mxu0 0
      %671 = vmatpush2.bf16.msra.mxu0 0
      %672 = vmatprep.subr.bf16.mxu0 0
      %673 = vmatpush2.bf16.msra.mxu0 0
      %674 = vmatprep.mubr.bf16.mxu0 0
      %675 = vmatmul.mubr.bf16.gmra.mxu0 %v637
      %v676 = vpop.f32.mrf.mxu0
      %v677 = vadd.f32 0.0, %v676
      %v678 = vpop.f32.mrf.mxu0
      %v679 = vpop.f32.mrf.mxu0
      %v680 = vadd.f32 0.0, %v679
      %v681 = vpop.f32.mrf.mxu0
      %682 = vmatprep.mubr.bf16.mxu0 0
      %683 = vmatmul.mubr.bf16.gmra.mxu0 %v640
      %v684 = vpop.f32.mrf.mxu0
      %v685 = vadd.f32 0.0, %v684
      %v686 = vpop.f32.mrf.mxu0
      %v687 = vpop.f32.mrf.mxu0
      %v688 = vadd.f32 0.0, %v687
      %v689 = vpop.f32.mrf.mxu0
      %690 = vdwg.mxu0
      %v691 = vadd.f32 %v614, %v677
      %v692 = vadd.f32 %v615, %v680
      %v693 = vadd.f32 %v616, %v685
      %v694 = vadd.f32 %v617, %v688
      %s695 = scalar_lea.vmem %s207, 24
      %v696 = vld [vmem:[%s695] sm:$0xf]
      %v697 = vld [vmem:[%s695 + $0x4] sm:$0xf]
      %s698 = scalar_lea.vmem %s1, 48
      %v699 = vld [vmem:[%s698] sm:$0xf]
      %v700 = vld [vmem:[%s698 + $0x4] sm:$0xf]
      %v701 = vld [vmem:[%s698 + $0x8] sm:$0xf]
      %v702 = vld [vmem:[%s698 + $0xc] sm:$0xf]
      %v707 = vunpack.c.l.b16 %v699
      %v708 = vunpack.c.l.b16 %v700
      %v709 = vunpack.c.l.b16 %v701
      %v710 = vunpack.c.l.b16 %v702
      %v711 = vpack.c.b16 %v708, %v707
      %v712 = vpack.c.b16 %v710, %v709
      %v715 = vunpack.c.l.b16 %v696
      %v716 = vunpack.c.l.b16 %v697
      %v717 = vpack.c.b16 %v716, %v715
      %v720 = vsel %vm253, %v711, 0
      %v723 = vsel %vm253, %v712, 0
      %725 = vmatprep.subr.bf16.mxu0 0
      %726 = vmatpush1.bf16.msra.mxu0 0
      %727 = vmatprep.subr.bf16.mxu0 0
      %728 = vmatpush1.bf16.msra.mxu0 0
      %729 = vmatprep.subr.bf16.mxu0 0
      %730 = vmatpush1.bf16.msra.mxu0 0
      %731 = vmatprep.subr.bf16.mxu0 0
      %732 = vmatpush1.bf16.msra.mxu0 0
      %733 = vmatprep.subr.bf16.mxu0 0
      %734 = vmatpush1.bf16.msra.mxu0 0
      %735 = vmatprep.subr.bf16.mxu0 0
      %736 = vmatpush1.bf16.msra.mxu0 0
      %737 = vmatprep.subr.bf16.mxu0 0
      %738 = vmatpush1.bf16.msra.mxu0 0
      %739 = vmatprep.subr.bf16.mxu0 0
      %740 = vmatpush1.bf16.msra.mxu0 %v717
      %741 = vmatprep.subr.bf16.mxu0 0
      %742 = vmatpush2.bf16.msra.mxu0 0
      %743 = vmatprep.subr.bf16.mxu0 0
      %744 = vmatpush2.bf16.msra.mxu0 0
      %745 = vmatprep.subr.bf16.mxu0 0
      %746 = vmatpush2.bf16.msra.mxu0 0
      %747 = vmatprep.subr.bf16.mxu0 0
      %748 = vmatpush2.bf16.msra.mxu0 0
      %749 = vmatprep.subr.bf16.mxu0 0
      %750 = vmatpush2.bf16.msra.mxu0 0
      %751 = vmatprep.subr.bf16.mxu0 0
      %752 = vmatpush2.bf16.msra.mxu0 0
      %753 = vmatprep.subr.bf16.mxu0 0
      %754 = vmatpush2.bf16.msra.mxu0 0
      %755 = vmatprep.subr.bf16.mxu0 0
      %756 = vmatpush2.bf16.msra.mxu0 0
      %757 = vmatprep.mubr.bf16.mxu0 0
      %758 = vmatmul.mubr.bf16.gmra.mxu0 %v720
      %v759 = vpop.f32.mrf.mxu0
      %v760 = vadd.f32 0.0, %v759
      %v761 = vpop.f32.mrf.mxu0
      %v762 = vpop.f32.mrf.mxu0
      %v763 = vadd.f32 0.0, %v762
      %v764 = vpop.f32.mrf.mxu0
      %765 = vmatprep.mubr.bf16.mxu0 0
      %766 = vmatmul.mubr.bf16.gmra.mxu0 %v723
      %v767 = vpop.f32.mrf.mxu0
      %v768 = vadd.f32 0.0, %v767
      %v769 = vpop.f32.mrf.mxu0
      %v770 = vpop.f32.mrf.mxu0
      %v771 = vadd.f32 0.0, %v770
      %v772 = vpop.f32.mrf.mxu0
      %773 = vdwg.mxu0
      %v774 = vadd.f32 %v691, %v760
      %v775 = vadd.f32 %v692, %v763
      %v776 = vadd.f32 %v693, %v768
      %v777 = vadd.f32 %v694, %v771
      %s778 = scalar_lea.vmem %s1, 176
      %v779 = vld [vmem:[%s778] sm:$0xf]
      %v780 = vld [vmem:[%s778 + $0x4] sm:$0xf]
      %v781 = vld [vmem:[%s778 + $0x8] sm:$0xf]
      %v782 = vld [vmem:[%s778 + $0xc] sm:$0xf]
      %v787 = vunpack.c.l.b16 %v779
      %v788 = vunpack.c.l.b16 %v780
      %v789 = vunpack.c.l.b16 %v781
      %v790 = vunpack.c.l.b16 %v782
      %v791 = vpack.c.b16 %v788, %v787
      %v792 = vpack.c.b16 %v790, %v789
      %793 = vrot.lane.b32.xlu0 %v717, 120
      %v794 = vpop.permute.xlu0 %793
      %v797 = vsel %vm253, %v791, 0
      %v800 = vsel %vm253, %v792, 0
      %802 = vmatprep.subr.bf16.mxu0 0
      %803 = vmatpush1.bf16.msra.mxu0 0
      %804 = vmatprep.subr.bf16.mxu0 0
      %805 = vmatpush1.bf16.msra.mxu0 0
      %806 = vmatprep.subr.bf16.mxu0 0
      %807 = vmatpush1.bf16.msra.mxu0 0
      %808 = vmatprep.subr.bf16.mxu0 0
      %809 = vmatpush1.bf16.msra.mxu0 0
      %810 = vmatprep.subr.bf16.mxu0 0
      %811 = vmatpush1.bf16.msra.mxu0 0
      %812 = vmatprep.subr.bf16.mxu0 0
      %813 = vmatpush1.bf16.msra.mxu0 0
      %814 = vmatprep.subr.bf16.mxu0 0
      %815 = vmatpush1.bf16.msra.mxu0 0
      %816 = vmatprep.subr.bf16.mxu0 0
      %817 = vmatpush1.bf16.msra.mxu0 %v794
      %818 = vmatprep.subr.bf16.mxu0 0
      %819 = vmatpush2.bf16.msra.mxu0 0
      %820 = vmatprep.subr.bf16.mxu0 0
      %821 = vmatpush2.bf16.msra.mxu0 0
      %822 = vmatprep.subr.bf16.mxu0 0
      %823 = vmatpush2.bf16.msra.mxu0 0
      %824 = vmatprep.subr.bf16.mxu0 0
      %825 = vmatpush2.bf16.msra.mxu0 0
      %826 = vmatprep.subr.bf16.mxu0 0
      %827 = vmatpush2.bf16.msra.mxu0 0
      %828 = vmatprep.subr.bf16.mxu0 0
      %829 = vmatpush2.bf16.msra.mxu0 0
      %830 = vmatprep.subr.bf16.mxu0 0
      %831 = vmatpush2.bf16.msra.mxu0 0
      %832 = vmatprep.subr.bf16.mxu0 0
      %833 = vmatpush2.bf16.msra.mxu0 0
      %834 = vmatprep.mubr.bf16.mxu0 0
      %835 = vmatmul.mubr.bf16.gmra.mxu0 %v797
      %v836 = vpop.f32.mrf.mxu0
      %v837 = vadd.f32 0.0, %v836
      %v838 = vpop.f32.mrf.mxu0
      %v839 = vpop.f32.mrf.mxu0
      %v840 = vadd.f32 0.0, %v839
      %v841 = vpop.f32.mrf.mxu0
      %842 = vmatprep.mubr.bf16.mxu0 0
      %843 = vmatmul.mubr.bf16.gmra.mxu0 %v800
      %v844 = vpop.f32.mrf.mxu0
      %v845 = vadd.f32 0.0, %v844
      %v846 = vpop.f32.mrf.mxu0
      %v847 = vpop.f32.mrf.mxu0
      %v848 = vadd.f32 0.0, %v847
      %v849 = vpop.f32.mrf.mxu0
      %850 = vdwg.mxu0
      %v851 = vadd.f32 %v774, %v837
      %v852 = vadd.f32 %v775, %v840
      %v853 = vadd.f32 %v776, %v845
      %v854 = vadd.f32 %v777, %v848
      %s855 = scalar_lea.vmem %s207, 32
      %v856 = vld [vmem:[%s855] sm:$0xf]
      %v857 = vld [vmem:[%s855 + $0x4] sm:$0xf]
      %s858 = scalar_lea.vmem %s1, 64
      %v859 = vld [vmem:[%s858] sm:$0xf]
      %v860 = vld [vmem:[%s858 + $0x4] sm:$0xf]
      %v861 = vld [vmem:[%s858 + $0x8] sm:$0xf]
      %v862 = vld [vmem:[%s858 + $0xc] sm:$0xf]
      %v867 = vunpack.c.l.b16 %v859
      %v868 = vunpack.c.l.b16 %v860
      %v869 = vunpack.c.l.b16 %v861
      %v870 = vunpack.c.l.b16 %v862
      %v871 = vpack.c.b16 %v868, %v867
      %v872 = vpack.c.b16 %v870, %v869
      %v875 = vunpack.c.l.b16 %v856
      %v876 = vunpack.c.l.b16 %v857
      %v877 = vpack.c.b16 %v876, %v875
      %v880 = vsel %vm253, %v871, 0
      %v883 = vsel %vm253, %v872, 0
      %885 = vmatprep.subr.bf16.mxu0 0
      %886 = vmatpush1.bf16.msra.mxu0 0
      %887 = vmatprep.subr.bf16.mxu0 0
      %888 = vmatpush1.bf16.msra.mxu0 0
      %889 = vmatprep.subr.bf16.mxu0 0
      %890 = vmatpush1.bf16.msra.mxu0 0
      %891 = vmatprep.subr.bf16.mxu0 0
      %892 = vmatpush1.bf16.msra.mxu0 0
      %893 = vmatprep.subr.bf16.mxu0 0
      %894 = vmatpush1.bf16.msra.mxu0 0
      %895 = vmatprep.subr.bf16.mxu0 0
      %896 = vmatpush1.bf16.msra.mxu0 0
      %897 = vmatprep.subr.bf16.mxu0 0
      %898 = vmatpush1.bf16.msra.mxu0 0
      %899 = vmatprep.subr.bf16.mxu0 0
      %900 = vmatpush1.bf16.msra.mxu0 %v877
      %901 = vmatprep.subr.bf16.mxu0 0
      %902 = vmatpush2.bf16.msra.mxu0 0
      %903 = vmatprep.subr.bf16.mxu0 0
      %904 = vmatpush2.bf16.msra.mxu0 0
      %905 = vmatprep.subr.bf16.mxu0 0
      %906 = vmatpush2.bf16.msra.mxu0 0
      %907 = vmatprep.subr.bf16.mxu0 0
      %908 = vmatpush2.bf16.msra.mxu0 0
      %909 = vmatprep.subr.bf16.mxu0 0
      %910 = vmatpush2.bf16.msra.mxu0 0
      %911 = vmatprep.subr.bf16.mxu0 0
      %912 = vmatpush2.bf16.msra.mxu0 0
      %913 = vmatprep.subr.bf16.mxu0 0
      %914 = vmatpush2.bf16.msra.mxu0 0
      %915 = vmatprep.subr.bf16.mxu0 0
      %916 = vmatpush2.bf16.msra.mxu0 0
      %917 = vmatprep.mubr.bf16.mxu0 0
      %918 = vmatmul.mubr.bf16.gmra.mxu0 %v880
      %v919 = vpop.f32.mrf.mxu0
      %v920 = vadd.f32 0.0, %v919
      %v921 = vpop.f32.mrf.mxu0
      %v922 = vpop.f32.mrf.mxu0
      %v923 = vadd.f32 0.0, %v922
      %v924 = vpop.f32.mrf.mxu0
      %925 = vmatprep.mubr.bf16.mxu0 0
      %926 = vmatmul.mubr.bf16.gmra.mxu0 %v883
      %v927 = vpop.f32.mrf.mxu0
      %v928 = vadd.f32 0.0, %v927
      %v929 = vpop.f32.mrf.mxu0
      %v930 = vpop.f32.mrf.mxu0
      %v931 = vadd.f32 0.0, %v930
      %v932 = vpop.f32.mrf.mxu0
      %933 = vdwg.mxu0
      %v934 = vadd.f32 %v851, %v920
      %v935 = vadd.f32 %v852, %v923
      %v936 = vadd.f32 %v853, %v928
      %v937 = vadd.f32 %v854, %v931
      %s938 = scalar_lea.vmem %s1, 192
      %v939 = vld [vmem:[%s938] sm:$0xf]
      %v940 = vld [vmem:[%s938 + $0x4] sm:$0xf]
      %v941 = vld [vmem:[%s938 + $0x8] sm:$0xf]
      %v942 = vld [vmem:[%s938 + $0xc] sm:$0xf]
      %v947 = vunpack.c.l.b16 %v939
      %v948 = vunpack.c.l.b16 %v940
      %v949 = vunpack.c.l.b16 %v941
      %v950 = vunpack.c.l.b16 %v942
      %v951 = vpack.c.b16 %v948, %v947
      %v952 = vpack.c.b16 %v950, %v949
      %953 = vrot.lane.b32.xlu0 %v877, 120
      %v954 = vpop.permute.xlu0 %953
      %v957 = vsel %vm253, %v951, 0
      %v960 = vsel %vm253, %v952, 0
      %962 = vmatprep.subr.bf16.mxu0 0
      %963 = vmatpush1.bf16.msra.mxu0 0
      %964 = vmatprep.subr.bf16.mxu0 0
      %965 = vmatpush1.bf16.msra.mxu0 0
      %966 = vmatprep.subr.bf16.mxu0 0
      %967 = vmatpush1.bf16.msra.mxu0 0
      %968 = vmatprep.subr.bf16.mxu0 0
      %969 = vmatpush1.bf16.msra.mxu0 0
      %970 = vmatprep.subr.bf16.mxu0 0
      %971 = vmatpush1.bf16.msra.mxu0 0
      %972 = vmatprep.subr.bf16.mxu0 0
      %973 = vmatpush1.bf16.msra.mxu0 0
      %974 = vmatprep.subr.bf16.mxu0 0
      %975 = vmatpush1.bf16.msra.mxu0 0
      %976 = vmatprep.subr.bf16.mxu0 0
      %977 = vmatpush1.bf16.msra.mxu0 %v954
      %978 = vmatprep.subr.bf16.mxu0 0
      %979 = vmatpush2.bf16.msra.mxu0 0
      %980 = vmatprep.subr.bf16.mxu0 0
      %981 = vmatpush2.bf16.msra.mxu0 0
      %982 = vmatprep.subr.bf16.mxu0 0
      %983 = vmatpush2.bf16.msra.mxu0 0
      %984 = vmatprep.subr.bf16.mxu0 0
      %985 = vmatpush2.bf16.msra.mxu0 0
      %986 = vmatprep.subr.bf16.mxu0 0
      %987 = vmatpush2.bf16.msra.mxu0 0
      %988 = vmatprep.subr.bf16.mxu0 0
      %989 = vmatpush2.bf16.msra.mxu0 0
      %990 = vmatprep.subr.bf16.mxu0 0
      %991 = vmatpush2.bf16.msra.mxu0 0
      %992 = vmatprep.subr.bf16.mxu0 0
      %993 = vmatpush2.bf16.msra.mxu0 0
      %994 = vmatprep.mubr.bf16.mxu0 0
      %995 = vmatmul.mubr.bf16.gmra.mxu0 %v957
      %v996 = vpop.f32.mrf.mxu0
      %v997 = vadd.f32 0.0, %v996
      %v998 = vpop.f32.mrf.mxu0
      %v999 = vpop.f32.mrf.mxu0
      %v1000 = vadd.f32 0.0, %v999
      %v1001 = vpop.f32.mrf.mxu0
      %1002 = vmatprep.mubr.bf16.mxu0 0
      %1003 = vmatmul.mubr.bf16.gmra.mxu0 %v960
      %v1004 = vpop.f32.mrf.mxu0
      %v1005 = vadd.f32 0.0, %v1004
      %v1006 = vpop.f32.mrf.mxu0
      %v1007 = vpop.f32.mrf.mxu0
      %v1008 = vadd.f32 0.0, %v1007
      %v1009 = vpop.f32.mrf.mxu0
      %1010 = vdwg.mxu0
      %v1011 = vadd.f32 %v934, %v997
      %v1012 = vadd.f32 %v935, %v1000
      %v1013 = vadd.f32 %v936, %v1005
      %v1014 = vadd.f32 %v937, %v1008
      %s1015 = scalar_lea.vmem %s207, 40
      %v1016 = vld [vmem:[%s1015] sm:$0xf]
      %v1017 = vld [vmem:[%s1015 + $0x4] sm:$0xf]
      %s1018 = scalar_lea.vmem %s1, 96
      %v1019 = vld [vmem:[%s1018] sm:$0xf]
      %v1020 = vld [vmem:[%s1018 + $0x4] sm:$0xf]
      %v1021 = vld [vmem:[%s1018 + $0x8] sm:$0xf]
      %v1022 = vld [vmem:[%s1018 + $0xc] sm:$0xf]
      %v1027 = vunpack.c.l.b16 %v1019
      %v1028 = vunpack.c.l.b16 %v1020
      %v1029 = vunpack.c.l.b16 %v1021
      %v1030 = vunpack.c.l.b16 %v1022
      %v1031 = vpack.c.b16 %v1028, %v1027
      %v1032 = vpack.c.b16 %v1030, %v1029
      %v1035 = vunpack.c.l.b16 %v1016
      %v1036 = vunpack.c.l.b16 %v1017
      %v1037 = vpack.c.b16 %v1036, %v1035
      %v1040 = vsel %vm253, %v1031, 0
      %v1043 = vsel %vm253, %v1032, 0
      %1045 = vmatprep.subr.bf16.mxu0 0
      %1046 = vmatpush1.bf16.msra.mxu0 0
      %1047 = vmatprep.subr.bf16.mxu0 0
      %1048 = vmatpush1.bf16.msra.mxu0 0
      %1049 = vmatprep.subr.bf16.mxu0 0
      %1050 = vmatpush1.bf16.msra.mxu0 0
      %1051 = vmatprep.subr.bf16.mxu0 0
      %1052 = vmatpush1.bf16.msra.mxu0 0
      %1053 = vmatprep.subr.bf16.mxu0 0
      %1054 = vmatpush1.bf16.msra.mxu0 0
      %1055 = vmatprep.subr.bf16.mxu0 0
      %1056 = vmatpush1.bf16.msra.mxu0 0
      %1057 = vmatprep.subr.bf16.mxu0 0
      %1058 = vmatpush1.bf16.msra.mxu0 0
      %1059 = vmatprep.subr.bf16.mxu0 0
      %1060 = vmatpush1.bf16.msra.mxu0 %v1037
      %1061 = vmatprep.subr.bf16.mxu0 0
      %1062 = vmatpush2.bf16.msra.mxu0 0
      %1063 = vmatprep.subr.bf16.mxu0 0
      %1064 = vmatpush2.bf16.msra.mxu0 0
      %1065 = vmatprep.subr.bf16.mxu0 0
      %1066 = vmatpush2.bf16.msra.mxu0 0
      %1067 = vmatprep.subr.bf16.mxu0 0
      %1068 = vmatpush2.bf16.msra.mxu0 0
      %1069 = vmatprep.subr.bf16.mxu0 0
      %1070 = vmatpush2.bf16.msra.mxu0 0
      %1071 = vmatprep.subr.bf16.mxu0 0
      %1072 = vmatpush2.bf16.msra.mxu0 0
      %1073 = vmatprep.subr.bf16.mxu0 0
      %1074 = vmatpush2.bf16.msra.mxu0 0
      %1075 = vmatprep.subr.bf16.mxu0 0
      %1076 = vmatpush2.bf16.msra.mxu0 0
      %1077 = vmatprep.mubr.bf16.mxu0 0
      %1078 = vmatmul.mubr.bf16.gmra.mxu0 %v1040
      %v1079 = vpop.f32.mrf.mxu0
      %v1080 = vadd.f32 0.0, %v1079
      %v1081 = vpop.f32.mrf.mxu0
      %v1082 = vpop.f32.mrf.mxu0
      %v1083 = vadd.f32 0.0, %v1082
      %v1084 = vpop.f32.mrf.mxu0
      %1085 = vmatprep.mubr.bf16.mxu0 0
      %1086 = vmatmul.mubr.bf16.gmra.mxu0 %v1043
      %v1087 = vpop.f32.mrf.mxu0
      %v1088 = vadd.f32 0.0, %v1087
      %v1089 = vpop.f32.mrf.mxu0
      %v1090 = vpop.f32.mrf.mxu0
      %v1091 = vadd.f32 0.0, %v1090
      %v1092 = vpop.f32.mrf.mxu0
      %1093 = vdwg.mxu0
      %v1094 = vadd.f32 %v1011, %v1080
      %v1095 = vadd.f32 %v1012, %v1083
      %v1096 = vadd.f32 %v1013, %v1088
      %v1097 = vadd.f32 %v1014, %v1091
      %s1098 = scalar_lea.vmem %s1, 224
      %v1099 = vld [vmem:[%s1098] sm:$0xf]
      %v1100 = vld [vmem:[%s1098 + $0x4] sm:$0xf]
      %v1101 = vld [vmem:[%s1098 + $0x8] sm:$0xf]
      %v1102 = vld [vmem:[%s1098 + $0xc] sm:$0xf]
      %v1107 = vunpack.c.l.b16 %v1099
      %v1108 = vunpack.c.l.b16 %v1100
      %v1109 = vunpack.c.l.b16 %v1101
      %v1110 = vunpack.c.l.b16 %v1102
      %v1111 = vpack.c.b16 %v1108, %v1107
      %v1112 = vpack.c.b16 %v1110, %v1109
      %1113 = vrot.lane.b32.xlu0 %v1037, 120
      %v1114 = vpop.permute.xlu0 %1113
      %v1117 = vsel %vm253, %v1111, 0
      %v1120 = vsel %vm253, %v1112, 0
      %1122 = vmatprep.subr.bf16.mxu0 0
      %1123 = vmatpush1.bf16.msra.mxu0 0
      %1124 = vmatprep.subr.bf16.mxu0 0
      %1125 = vmatpush1.bf16.msra.mxu0 0
      %1126 = vmatprep.subr.bf16.mxu0 0
      %1127 = vmatpush1.bf16.msra.mxu0 0
      %1128 = vmatprep.subr.bf16.mxu0 0
      %1129 = vmatpush1.bf16.msra.mxu0 0
      %1130 = vmatprep.subr.bf16.mxu0 0
      %1131 = vmatpush1.bf16.msra.mxu0 0
      %1132 = vmatprep.subr.bf16.mxu0 0
      %1133 = vmatpush1.bf16.msra.mxu0 0
      %1134 = vmatprep.subr.bf16.mxu0 0
      %1135 = vmatpush1.bf16.msra.mxu0 0
      %1136 = vmatprep.subr.bf16.mxu0 0
      %1137 = vmatpush1.bf16.msra.mxu0 %v1114
      %1138 = vmatprep.subr.bf16.mxu0 0
      %1139 = vmatpush2.bf16.msra.mxu0 0
      %1140 = vmatprep.subr.bf16.mxu0 0
      %1141 = vmatpush2.bf16.msra.mxu0 0
      %1142 = vmatprep.subr.bf16.mxu0 0
      %1143 = vmatpush2.bf16.msra.mxu0 0
      %1144 = vmatprep.subr.bf16.mxu0 0
      %1145 = vmatpush2.bf16.msra.mxu0 0
      %1146 = vmatprep.subr.bf16.mxu0 0
      %1147 = vmatpush2.bf16.msra.mxu0 0
      %1148 = vmatprep.subr.bf16.mxu0 0
      %1149 = vmatpush2.bf16.msra.mxu0 0
      %1150 = vmatprep.subr.bf16.mxu0 0
      %1151 = vmatpush2.bf16.msra.mxu0 0
      %1152 = vmatprep.subr.bf16.mxu0 0
      %1153 = vmatpush2.bf16.msra.mxu0 0
      %1154 = vmatprep.mubr.bf16.mxu0 0
      %1155 = vmatmul.mubr.bf16.gmra.mxu0 %v1117
      %v1156 = vpop.f32.mrf.mxu0
      %v1157 = vadd.f32 0.0, %v1156
      %v1158 = vpop.f32.mrf.mxu0
      %v1159 = vpop.f32.mrf.mxu0
      %v1160 = vadd.f32 0.0, %v1159
      %v1161 = vpop.f32.mrf.mxu0
      %1162 = vmatprep.mubr.bf16.mxu0 0
      %1163 = vmatmul.mubr.bf16.gmra.mxu0 %v1120
      %v1164 = vpop.f32.mrf.mxu0
      %v1165 = vadd.f32 0.0, %v1164
      %v1166 = vpop.f32.mrf.mxu0
      %v1167 = vpop.f32.mrf.mxu0
      %v1168 = vadd.f32 0.0, %v1167
      %v1169 = vpop.f32.mrf.mxu0
      %1170 = vdwg.mxu0
      %v1171 = vadd.f32 %v1094, %v1157
      %v1172 = vadd.f32 %v1095, %v1160
      %v1173 = vadd.f32 %v1096, %v1165
      %v1174 = vadd.f32 %v1097, %v1168
      %s1175 = scalar_lea.vmem %s207, 48
      %v1176 = vld [vmem:[%s1175] sm:$0xf]
      %v1177 = vld [vmem:[%s1175 + $0x4] sm:$0xf]
      %s1178 = scalar_lea.vmem %s1, 80
      %v1179 = vld [vmem:[%s1178] sm:$0xf]
      %v1180 = vld [vmem:[%s1178 + $0x4] sm:$0xf]
      %v1181 = vld [vmem:[%s1178 + $0x8] sm:$0xf]
      %v1182 = vld [vmem:[%s1178 + $0xc] sm:$0xf]
      %v1187 = vunpack.c.l.b16 %v1179
      %v1188 = vunpack.c.l.b16 %v1180
      %v1189 = vunpack.c.l.b16 %v1181
      %v1190 = vunpack.c.l.b16 %v1182
      %v1191 = vpack.c.b16 %v1188, %v1187
      %v1192 = vpack.c.b16 %v1190, %v1189
      %v1195 = vunpack.c.l.b16 %v1176
      %v1196 = vunpack.c.l.b16 %v1177
      %v1197 = vpack.c.b16 %v1196, %v1195
      %v1200 = vsel %vm253, %v1191, 0
      %v1203 = vsel %vm253, %v1192, 0
      %1205 = vmatprep.subr.bf16.mxu0 0
      %1206 = vmatpush1.bf16.msra.mxu0 0
      %1207 = vmatprep.subr.bf16.mxu0 0
      %1208 = vmatpush1.bf16.msra.mxu0 0
      %1209 = vmatprep.subr.bf16.mxu0 0
      %1210 = vmatpush1.bf16.msra.mxu0 0
      %1211 = vmatprep.subr.bf16.mxu0 0
      %1212 = vmatpush1.bf16.msra.mxu0 0
      %1213 = vmatprep.subr.bf16.mxu0 0
      %1214 = vmatpush1.bf16.msra.mxu0 0
      %1215 = vmatprep.subr.bf16.mxu0 0
      %1216 = vmatpush1.bf16.msra.mxu0 0
      %1217 = vmatprep.subr.bf16.mxu0 0
      %1218 = vmatpush1.bf16.msra.mxu0 0
      %1219 = vmatprep.subr.bf16.mxu0 0
      %1220 = vmatpush1.bf16.msra.mxu0 %v1197
      %1221 = vmatprep.subr.bf16.mxu0 0
      %1222 = vmatpush2.bf16.msra.mxu0 0
      %1223 = vmatprep.subr.bf16.mxu0 0
      %1224 = vmatpush2.bf16.msra.mxu0 0
      %1225 = vmatprep.subr.bf16.mxu0 0
      %1226 = vmatpush2.bf16.msra.mxu0 0
      %1227 = vmatprep.subr.bf16.mxu0 0
      %1228 = vmatpush2.bf16.msra.mxu0 0
      %1229 = vmatprep.subr.bf16.mxu0 0
      %1230 = vmatpush2.bf16.msra.mxu0 0
      %1231 = vmatprep.subr.bf16.mxu0 0
      %1232 = vmatpush2.bf16.msra.mxu0 0
      %1233 = vmatprep.subr.bf16.mxu0 0
      %1234 = vmatpush2.bf16.msra.mxu0 0
      %1235 = vmatprep.subr.bf16.mxu0 0
      %1236 = vmatpush2.bf16.msra.mxu0 0
      %1237 = vmatprep.mubr.bf16.mxu0 0
      %1238 = vmatmul.mubr.bf16.gmra.mxu0 %v1200
      %v1239 = vpop.f32.mrf.mxu0
      %v1240 = vadd.f32 0.0, %v1239
      %v1241 = vpop.f32.mrf.mxu0
      %v1242 = vpop.f32.mrf.mxu0
      %v1243 = vadd.f32 0.0, %v1242
      %v1244 = vpop.f32.mrf.mxu0
      %1245 = vmatprep.mubr.bf16.mxu0 0
      %1246 = vmatmul.mubr.bf16.gmra.mxu0 %v1203
      %v1247 = vpop.f32.mrf.mxu0
      %v1248 = vadd.f32 0.0, %v1247
      %v1249 = vpop.f32.mrf.mxu0
      %v1250 = vpop.f32.mrf.mxu0
      %v1251 = vadd.f32 0.0, %v1250
      %v1252 = vpop.f32.mrf.mxu0
      %1253 = vdwg.mxu0
      %v1254 = vadd.f32 %v1171, %v1240
      %v1255 = vadd.f32 %v1172, %v1243
      %v1256 = vadd.f32 %v1173, %v1248
      %v1257 = vadd.f32 %v1174, %v1251
      %s1258 = scalar_lea.vmem %s1, 208
      %v1259 = vld [vmem:[%s1258] sm:$0xf]
      %v1260 = vld [vmem:[%s1258 + $0x4] sm:$0xf]
      %v1261 = vld [vmem:[%s1258 + $0x8] sm:$0xf]
      %v1262 = vld [vmem:[%s1258 + $0xc] sm:$0xf]
      %v1267 = vunpack.c.l.b16 %v1259
      %v1268 = vunpack.c.l.b16 %v1260
      %v1269 = vunpack.c.l.b16 %v1261
      %v1270 = vunpack.c.l.b16 %v1262
      %v1271 = vpack.c.b16 %v1268, %v1267
      %v1272 = vpack.c.b16 %v1270, %v1269
      %1273 = vrot.lane.b32.xlu0 %v1197, 120
      %v1274 = vpop.permute.xlu0 %1273
      %v1277 = vsel %vm253, %v1271, 0
      %v1280 = vsel %vm253, %v1272, 0
      %1282 = vmatprep.subr.bf16.mxu0 0
      %1283 = vmatpush1.bf16.msra.mxu0 0
      %1284 = vmatprep.subr.bf16.mxu0 0
      %1285 = vmatpush1.bf16.msra.mxu0 0
      %1286 = vmatprep.subr.bf16.mxu0 0
      %1287 = vmatpush1.bf16.msra.mxu0 0
      %1288 = vmatprep.subr.bf16.mxu0 0
      %1289 = vmatpush1.bf16.msra.mxu0 0
      %1290 = vmatprep.subr.bf16.mxu0 0
      %1291 = vmatpush1.bf16.msra.mxu0 0
      %1292 = vmatprep.subr.bf16.mxu0 0
      %1293 = vmatpush1.bf16.msra.mxu0 0
      %1294 = vmatprep.subr.bf16.mxu0 0
      %1295 = vmatpush1.bf16.msra.mxu0 0
      %1296 = vmatprep.subr.bf16.mxu0 0
      %1297 = vmatpush1.bf16.msra.mxu0 %v1274
      %1298 = vmatprep.subr.bf16.mxu0 0
      %1299 = vmatpush2.bf16.msra.mxu0 0
      %1300 = vmatprep.subr.bf16.mxu0 0
      %1301 = vmatpush2.bf16.msra.mxu0 0
      %1302 = vmatprep.subr.bf16.mxu0 0
      %1303 = vmatpush2.bf16.msra.mxu0 0
      %1304 = vmatprep.subr.bf16.mxu0 0
      %1305 = vmatpush2.bf16.msra.mxu0 0
      %1306 = vmatprep.subr.bf16.mxu0 0
      %1307 = vmatpush2.bf16.msra.mxu0 0
      %1308 = vmatprep.subr.bf16.mxu0 0
      %1309 = vmatpush2.bf16.msra.mxu0 0
      %1310 = vmatprep.subr.bf16.mxu0 0
      %1311 = vmatpush2.bf16.msra.mxu0 0
      %1312 = vmatprep.subr.bf16.mxu0 0
      %1313 = vmatpush2.bf16.msra.mxu0 0
      %1314 = vmatprep.mubr.bf16.mxu0 0
      %1315 = vmatmul.mubr.bf16.gmra.mxu0 %v1277
      %v1316 = vpop.f32.mrf.mxu0
      %v1317 = vadd.f32 0.0, %v1316
      %v1318 = vpop.f32.mrf.mxu0
      %v1319 = vpop.f32.mrf.mxu0
      %v1320 = vadd.f32 0.0, %v1319
      %v1321 = vpop.f32.mrf.mxu0
      %1322 = vmatprep.mubr.bf16.mxu0 0
      %1323 = vmatmul.mubr.bf16.gmra.mxu0 %v1280
      %v1324 = vpop.f32.mrf.mxu0
      %v1325 = vadd.f32 0.0, %v1324
      %v1326 = vpop.f32.mrf.mxu0
      %v1327 = vpop.f32.mrf.mxu0
      %v1328 = vadd.f32 0.0, %v1327
      %v1329 = vpop.f32.mrf.mxu0
      %1330 = vdwg.mxu0
      %v1331 = vadd.f32 %v1254, %v1317
      %v1332 = vadd.f32 %v1255, %v1320
      %v1333 = vadd.f32 %v1256, %v1325
      %v1334 = vadd.f32 %v1257, %v1328
      %s1335 = scalar_lea.vmem %s207, 56
      %v1336 = vld [vmem:[%s1335] sm:$0xf]
      %v1337 = vld [vmem:[%s1335 + $0x4] sm:$0xf]
      %s1338 = scalar_lea.vmem %s1, 112
      %v1339 = vld [vmem:[%s1338] sm:$0xf]
      %v1340 = vld [vmem:[%s1338 + $0x4] sm:$0xf]
      %v1341 = vld [vmem:[%s1338 + $0x8] sm:$0xf]
      %v1342 = vld [vmem:[%s1338 + $0xc] sm:$0xf]
      %v1347 = vunpack.c.l.b16 %v1339
      %v1348 = vunpack.c.l.b16 %v1340
      %v1349 = vunpack.c.l.b16 %v1341
      %v1350 = vunpack.c.l.b16 %v1342
      %v1351 = vpack.c.b16 %v1348, %v1347
      %v1352 = vpack.c.b16 %v1350, %v1349
      %v1355 = vunpack.c.l.b16 %v1336
      %v1356 = vunpack.c.l.b16 %v1337
      %v1357 = vpack.c.b16 %v1356, %v1355
      %v1360 = vsel %vm253, %v1351, 0
      %v1363 = vsel %vm253, %v1352, 0
      %1365 = vmatprep.subr.bf16.mxu0 0
      %1366 = vmatpush1.bf16.msra.mxu0 0
      %1367 = vmatprep.subr.bf16.mxu0 0
      %1368 = vmatpush1.bf16.msra.mxu0 0
      %1369 = vmatprep.subr.bf16.mxu0 0
      %1370 = vmatpush1.bf16.msra.mxu0 0
      %1371 = vmatprep.subr.bf16.mxu0 0
      %1372 = vmatpush1.bf16.msra.mxu0 0
      %1373 = vmatprep.subr.bf16.mxu0 0
      %1374 = vmatpush1.bf16.msra.mxu0 0
      %1375 = vmatprep.subr.bf16.mxu0 0
      %1376 = vmatpush1.bf16.msra.mxu0 0
      %1377 = vmatprep.subr.bf16.mxu0 0
      %1378 = vmatpush1.bf16.msra.mxu0 0
      %1379 = vmatprep.subr.bf16.mxu0 0
      %1380 = vmatpush1.bf16.msra.mxu0 %v1357
      %1381 = vmatprep.subr.bf16.mxu0 0
      %1382 = vmatpush2.bf16.msra.mxu0 0
      %1383 = vmatprep.subr.bf16.mxu0 0
      %1384 = vmatpush2.bf16.msra.mxu0 0
      %1385 = vmatprep.subr.bf16.mxu0 0
      %1386 = vmatpush2.bf16.msra.mxu0 0
      %1387 = vmatprep.subr.bf16.mxu0 0
      %1388 = vmatpush2.bf16.msra.mxu0 0
      %1389 = vmatprep.subr.bf16.mxu0 0
      %1390 = vmatpush2.bf16.msra.mxu0 0
      %1391 = vmatprep.subr.bf16.mxu0 0
      %1392 = vmatpush2.bf16.msra.mxu0 0
      %1393 = vmatprep.subr.bf16.mxu0 0
      %1394 = vmatpush2.bf16.msra.mxu0 0
      %1395 = vmatprep.subr.bf16.mxu0 0
      %1396 = vmatpush2.bf16.msra.mxu0 0
      %1397 = vmatprep.mubr.bf16.mxu0 0
      %1398 = vmatmul.mubr.bf16.gmra.mxu0 %v1360
      %v1399 = vpop.f32.mrf.mxu0
      %v1400 = vadd.f32 0.0, %v1399
      %v1401 = vpop.f32.mrf.mxu0
      %v1402 = vpop.f32.mrf.mxu0
      %v1403 = vadd.f32 0.0, %v1402
      %v1404 = vpop.f32.mrf.mxu0
      %1405 = vmatprep.mubr.bf16.mxu0 0
      %1406 = vmatmul.mubr.bf16.gmra.mxu0 %v1363
      %v1407 = vpop.f32.mrf.mxu0
      %v1408 = vadd.f32 0.0, %v1407
      %v1409 = vpop.f32.mrf.mxu0
      %v1410 = vpop.f32.mrf.mxu0
      %v1411 = vadd.f32 0.0, %v1410
      %v1412 = vpop.f32.mrf.mxu0
      %1413 = vdwg.mxu0
      %v1414 = vadd.f32 %v1331, %v1400
      %v1415 = vadd.f32 %v1332, %v1403
      %v1416 = vadd.f32 %v1333, %v1408
      %v1417 = vadd.f32 %v1334, %v1411
      %s1418 = scalar_lea.vmem %s1, 240
      %v1419 = vld [vmem:[%s1418] sm:$0xf]
      %v1420 = vld [vmem:[%s1418 + $0x4] sm:$0xf]
      %v1421 = vld [vmem:[%s1418 + $0x8] sm:$0xf]
      %v1422 = vld [vmem:[%s1418 + $0xc] sm:$0xf]
      %v1427 = vunpack.c.l.b16 %v1419
      %v1428 = vunpack.c.l.b16 %v1420
      %v1429 = vunpack.c.l.b16 %v1421
      %v1430 = vunpack.c.l.b16 %v1422
      %v1431 = vpack.c.b16 %v1428, %v1427
      %v1432 = vpack.c.b16 %v1430, %v1429
      %1433 = vrot.lane.b32.xlu0 %v1357, 120
      %v1434 = vpop.permute.xlu0 %1433
      %v1437 = vsel %vm253, %v1431, 0
      %v1440 = vsel %vm253, %v1432, 0
      %1442 = vmatprep.subr.bf16.mxu0 0
      %1443 = vmatpush1.bf16.msra.mxu0 0
      %1444 = vmatprep.subr.bf16.mxu0 0
      %1445 = vmatpush1.bf16.msra.mxu0 0
      %1446 = vmatprep.subr.bf16.mxu0 0
      %1447 = vmatpush1.bf16.msra.mxu0 0
      %1448 = vmatprep.subr.bf16.mxu0 0
      %1449 = vmatpush1.bf16.msra.mxu0 0
      %1450 = vmatprep.subr.bf16.mxu0 0
      %1451 = vmatpush1.bf16.msra.mxu0 0
      %1452 = vmatprep.subr.bf16.mxu0 0
      %1453 = vmatpush1.bf16.msra.mxu0 0
      %1454 = vmatprep.subr.bf16.mxu0 0
      %1455 = vmatpush1.bf16.msra.mxu0 0
      %1456 = vmatprep.subr.bf16.mxu0 0
      %1457 = vmatpush1.bf16.msra.mxu0 %v1434
      %1458 = vmatprep.subr.bf16.mxu0 0
      %1459 = vmatpush2.bf16.msra.mxu0 0
      %1460 = vmatprep.subr.bf16.mxu0 0
      %1461 = vmatpush2.bf16.msra.mxu0 0
      %1462 = vmatprep.subr.bf16.mxu0 0
      %1463 = vmatpush2.bf16.msra.mxu0 0
      %1464 = vmatprep.subr.bf16.mxu0 0
      %1465 = vmatpush2.bf16.msra.mxu0 0
      %1466 = vmatprep.subr.bf16.mxu0 0
      %1467 = vmatpush2.bf16.msra.mxu0 0
      %1468 = vmatprep.subr.bf16.mxu0 0
      %1469 = vmatpush2.bf16.msra.mxu0 0
      %1470 = vmatprep.subr.bf16.mxu0 0
      %1471 = vmatpush2.bf16.msra.mxu0 0
      %1472 = vmatprep.subr.bf16.mxu0 0
      %1473 = vmatpush2.bf16.msra.mxu0 0
      %1474 = vmatprep.mubr.bf16.mxu0 0
      %1475 = vmatmul.mubr.bf16.gmra.mxu0 %v1437
      %v1476 = vpop.f32.mrf.mxu0
      %v1477 = vadd.f32 0.0, %v1476
      %v1478 = vpop.f32.mrf.mxu0
      %v1479 = vpop.f32.mrf.mxu0
      %v1480 = vadd.f32 0.0, %v1479
      %v1481 = vpop.f32.mrf.mxu0
      %1482 = vmatprep.mubr.bf16.mxu0 0
      %1483 = vmatmul.mubr.bf16.gmra.mxu0 %v1440
      %v1484 = vpop.f32.mrf.mxu0
      %v1485 = vadd.f32 0.0, %v1484
      %v1486 = vpop.f32.mrf.mxu0
      %v1487 = vpop.f32.mrf.mxu0
      %v1488 = vadd.f32 0.0, %v1487
      %v1489 = vpop.f32.mrf.mxu0
      %1490 = vdwg.mxu0
      %v1491 = vadd.f32 %v1414, %v1477
      %v1492 = vadd.f32 %v1415, %v1480
      %v1493 = vadd.f32 %v1416, %v1485
      %v1494 = vadd.f32 %v1417, %v1488
      %vm1495 = vcmask 523264
      %v1496 = vsel %vm1495, %v1491, 0.0
      %1497 = vadd.xlane.f32.xlu0 %v1496
      %v1498 = vpop.xlane.xlu0 %1497
      %v1499 = vsel %vm1495, %v1492, 0.0
      %1500 = vadd.xlane.f32.xlu0 %v1499
      %v1501 = vpop.xlane.xlu0 %1500
      %v1502 = vsel %vm1495, %v1493, 0.0
      %1503 = vadd.xlane.f32.xlu0 %v1502
      %v1504 = vpop.xlane.xlu0 %1503
      %v1505 = vsel %vm1495, %v1494, 0.0
      %1506 = vadd.xlane.f32.xlu0 %v1505
      %v1507 = vpop.xlane.xlu0 %1506
      %vm1508 = vcmask 7168
      %1509 = vst.msk [vmem:[%s217] sm:$0xff] %vm1508, %v1498
      %1510 = vst.msk [vmem:[%s217 + $0x8] sm:$0xff] %vm1508, %v1501
      %1511 = vst.msk [vmem:[%s217 + $0x10] sm:$0xff] %vm1508, %v1504
      %1512 = vst.msk [vmem:[%s217 + $0x18] sm:$0xff] %vm1508, %v1507
      %v1513 = vmul.f32 %v1491, %v1491
      %v1514 = vmul.f32 %v1492, %v1492
      %v1515 = vmul.f32 %v1493, %v1493
      %v1516 = vmul.f32 %v1494, %v1494
      %v1517 = vsel %vm1495, %v1513, 0.0
      %1518 = vadd.xlane.f32.xlu0 %v1517
      %v1519 = vpop.xlane.xlu0 %1518
      %v1520 = vsel %vm1495, %v1514, 0.0
      %1521 = vadd.xlane.f32.xlu0 %v1520
      %v1522 = vpop.xlane.xlu0 %1521
      %v1523 = vsel %vm1495, %v1515, 0.0
      %1524 = vadd.xlane.f32.xlu0 %v1523
      %v1525 = vpop.xlane.xlu0 %1524
      %v1526 = vsel %vm1495, %v1516, 0.0
      %1527 = vadd.xlane.f32.xlu0 %v1526
      %v1528 = vpop.xlane.xlu0 %1527
      %1529 = vst.msk [vmem:[%s222] sm:$0xff] %vm1508, %v1519
      %1530 = vst.msk [vmem:[%s222 + $0x8] sm:$0xff] %vm1508, %v1522
      %1531 = vst.msk [vmem:[%s222 + $0x10] sm:$0xff] %vm1508, %v1525
      %1532 = vst.msk [vmem:[%s222 + $0x18] sm:$0xff] %vm1508, %v1528
      %v1533 = vpack.c.bf16 %v1492, %v1491
      %v1534 = vpack.c.bf16 %v1494, %v1493
      %v1537 = vunpack.c.l.b16 %v1533
      %v1538 = vunpack.c.h.b16 %v1533
      %v1539 = vunpack.c.l.b16 %v1534
      %v1540 = vunpack.c.h.b16 %v1534
      %v1541 = vpack.c.b16 %v1537, %v1537
      %v1542 = vpack.c.b16 %v1538, %v1538
      %v1543 = vpack.c.b16 %v1539, %v1539
      %v1544 = vpack.c.b16 %v1540, %v1540
      %vm1549 = vcmask 519168
      %1550 = vst.msk [vmem:[%s212] sm:$0xf] %vm1549, %v1541
      %1551 = vst.msk [vmem:[%s212 + $0x4] sm:$0xf] %vm1549, %v1542
      %1552 = vst.msk [vmem:[%s212 + $0x8] sm:$0xf] %vm1549, %v1543
      %1553 = vst.msk [vmem:[%s212 + $0xc] sm:$0xf] %vm1549, %v1544
      %p1554 = scmp.lt.s32.totalorder %s16, 1
      %s1555 = scalar_select %p1554, %s16, 1
      %s1556 = smul.addr %s1555, 4
      %s1557 = smul.addr %s1556, 4
      %s1558 = scalar_lea.vmem %s2, %s1557
      %p1559 = scmp.lt.s32.totalorder %s16, 1
      %s1560 = scalar_select %p1559, %s16, 1
      %s1561 = smul.addr %s1560, 4
      %s1562 = smul.addr %s1561, 8
      %s1563 = scalar_lea.vmem %s3, %s1562
      %p1564 = scmp.lt.s32.totalorder %s16, 1
      %s1565 = scalar_select %p1564, %s16, 1
      %s1566 = smul.addr %s1565, 4
      %s1567 = smul.addr %s1566, 8
      %s1568 = scalar_lea.vmem %s4, %s1567
      // Predicated region
      $region29: #{discriminator_forward.7} parent=27 // pred_check
        %p1569 = pneg %p81
      $region30: #{discriminator_forward.7} parent=27 // pred_check_branch
        %1571 = sbr.rel (%p1569) target = $region32
      $region31: #{discriminator_forward.7} parent=27 // pred_region
        _
      $region32: #{discriminator_forward.7} parent=27 // pred_fallthru
        _
      // Predicated region
      $region33: #{discriminator_forward.7} parent=27 // pred_check
        %p1572 = pneg %p107
      $region34: #{discriminator_forward.7} parent=27 // pred_check_branch
        %1574 = sbr.rel (%p1572) target = $region36
      $region35: #{discriminator_forward.7} parent=27 // pred_region
        _
      $region36: #{discriminator_forward.7} parent=27 // pred_fallthru
        _
      // Predicated region
      $region37: #{discriminator_forward.7} parent=27 // pred_check
        %p1575 = pneg %p133
      $region38: #{discriminator_forward.7} parent=27 // pred_check_branch
        %1577 = sbr.rel (%p1575) target = $region40
      $region39: #{discriminator_forward.7} parent=27 // pred_region
        _
      $region40: #{discriminator_forward.7} parent=27 // pred_fallthru
        _
    $region28: #{discriminator_forward.7} parent=5 // pred_fallthru
      _
    %p1578 = scmp.le.s32.totalorder 2, %s11
    // Predicated region
    $region41: #{discriminator_forward.7} parent=5 // pred_check
      %p1579 = pneg %p1578
    $region42: #{discriminator_forward.7} parent=5 // pred_check_branch
      %1581 = sbr.rel (%p1579) target = $region44
    $region43: #{discriminator_forward.7} parent=5 // pred_region
      %s1582 = ssub.s32 %s11, 2
      // Predicated region
      $region45: #{discriminator_forward.7} parent=43 // pred_check
        %p1583 = pneg %p87
      $region46: #{discriminator_forward.7} parent=43 // pred_check_branch
        %1585 = sbr.rel (%p1583) target = $region48
      $region47: #{discriminator_forward.7} parent=43 // pred_region
        %p1586 = scmp.lt.s32.totalorder %s17, 1
        %s1587 = scalar_select %p1586, %s17, 1
        %s1588 = smul.addr %s1587, 4
        %s1589 = smul.addr %s1588, 4
        %s1590 = scalar_lea.vmem %s2, %s1589
      $region48: #{discriminator_forward.7} parent=43 // pred_fallthru
        _
      // Predicated region
      $region49: #{discriminator_forward.7} parent=43 // pred_check
        %p1591 = pneg %p113
      $region50: #{discriminator_forward.7} parent=43 // pred_check_branch
        %1593 = sbr.rel (%p1591) target = $region52
      $region51: #{discriminator_forward.7} parent=43 // pred_region
        %p1594 = scmp.lt.s32.totalorder %s17, 1
        %s1595 = scalar_select %p1594, %s17, 1
        %s1596 = smul.addr %s1595, 4
        %s1597 = smul.addr %s1596, 8
        %s1598 = scalar_lea.vmem %s3, %s1597
      $region52: #{discriminator_forward.7} parent=43 // pred_fallthru
        _
      // Predicated region
      $region53: #{discriminator_forward.7} parent=43 // pred_check
        %p1599 = pneg %p139
      $region54: #{discriminator_forward.7} parent=43 // pred_check_branch
        %1601 = sbr.rel (%p1599) target = $region56
      $region55: #{discriminator_forward.7} parent=43 // pred_region
        %p1602 = scmp.lt.s32.totalorder %s17, 1
        %s1603 = scalar_select %p1602, %s17, 1
        %s1604 = smul.addr %s1603, 4
        %s1605 = smul.addr %s1604, 8
        %s1606 = scalar_lea.vmem %s4, %s1605
      $region56: #{discriminator_forward.7} parent=43 // pred_fallthru
        _
    $region44: #{discriminator_forward.7} parent=5 // pred_fallthru
      _
  $region6: #{discriminator_forward.7} parent=0 // loop_footer
    %s15 = sadd.s32 1, %s11
  $region7: #{discriminator_forward.7} parent=0 // loop_footer_branch
    %10 = sbr.rel target = $region3
  $region8: #{discriminator_forward.7} parent=0 // loop_exit
    _

// kernel: discriminator_forward.8
$region0: #{discriminator_forward.8}
  #allocation0 [shape = 'u32[]', space=smem, size = 0x4, offset = 0x4, fixed_abs, tag = 'smem constant byte address 0x4 - core index']
  #allocation1 [shape = 'u32[144,128]{1,0:T(1,128)}', space=vmem, size = 0x12000, scoped, tag = 'internal scratch']
  %s0 = inlined_call_operand.vmem [shape: bf16[2,8,32,20], index: 0, kind: input, shape index: {}]
  %s1 = inlined_call_operand.vmem [shape: bf16[16,64,32], index: 1, kind: input, shape index: {}]
  %s2 = inlined_call_operand.vmem [shape: bf16[2,64,16], index: 2, kind: output, shape index: {0}]
  %s3 = inlined_call_operand.vmem [shape: f32[2,64,1], index: 3, kind: output, shape index: {1}]
  %s4 = inlined_call_operand.vmem [shape: f32[2,64,1], index: 4, kind: output, shape index: {2}]
  %5 = xla_tuple %s2, %s3, %s4
  %s6 = sld [smem:[#allocation0]]
  $region57: #{discriminator_forward.8} parent=0
    _
  %s8 = ssub.s32 1, %s6
  %s9 = scalar_select 0, %s8, %s6
  loop: start=0, step=1, limit=4
  $region2: #{discriminator_forward.8} parent=0 // loop_pre_header
    _
  $region3: #{discriminator_forward.8} parent=0 // loop_header
    %s11 = sphi 0, %s15
    %p12 = scmp.ge.s32.totalorder %s11, 4
    %s21 = sphi 0, %s23
    %s24 = sphi 0, %s21
    %s25 = sphi 0, %s24
    %s41 = sphi 0, %s25
    %s45 = sphi 0, %s45
    %s47 = sphi 0, %s45
    %s48 = sphi 0, %s47
    %s62 = sphi 0, %s48
    %s68 = sphi 0, %s70
    %s71 = sphi 0, %s68
    %s72 = sphi 0, %s71
    %s88 = sphi 0, %s72
    %s94 = sphi 0, %s96
    %s97 = sphi 0, %s94
    %s98 = sphi 0, %s97
    %s114 = sphi 0, %s98
    %s120 = sphi 0, %s122
    %s123 = sphi 0, %s120
    %s124 = sphi 0, %s123
    %s140 = sphi 0, %s124
  $region4: #{discriminator_forward.8} parent=0 // loop_header_branch
    %14 = sbr.rel (%p12) target = $region8
  $region5: #{discriminator_forward.8} parent=0 // loop_body
    %s16 = ssub.s32 %s11, 1
    %s17 = ssub.s32 %s11, 2
    %s18 = sadd.s32 %s11, 1
    %s19 = ssub.s32 %s11, %s18
    %p20 = scmp.eq.s32.totalorder %s19, 0
    %s22 = sadd.s32 %s21, 1
    %s23 = scalar_select %p20, %s21, %s22
    %p26 = pneg %p20
    %p27 = scmp.eq.s32.totalorder %s11, 1
    %p28 = por %p26, %p27
    %p29 = scmp.ne.s32.totalorder %s21, %s24
    %p30 = scmp.eq.s32.totalorder %s11, 0
    %p31 = por %p29, %p30
    %p32 = scmp.ne.s32.totalorder %s21, %s24
    %p33 = scmp.eq.s32.totalorder %s16, 1
    %p34 = por %p32, %p33
    %p35 = scmp.ne.s32.totalorder %s24, %s25
    %p36 = scmp.eq.s32.totalorder %s16, 0
    %p37 = por %p35, %p36
    %p38 = scmp.ne.s32.totalorder %s24, %s25
    %p39 = scmp.eq.s32.totalorder %s17, 1
    %p40 = por %p38, %p39
    %p42 = scmp.ne.s32.totalorder %s25, %s41
    %p43 = scmp.eq.s32.totalorder %s17, 0
    %p44 = por %p42, %p43
    %s46 = sadd.s32 %s45, 1
    %p49 = scmp.eq.s32.totalorder %s11, 1
    %p50 = scmp.ne.s32.totalorder %s45, %s47
    %p51 = scmp.eq.s32.totalorder %s11, 0
    %p52 = por %p50, %p51
    %p53 = scmp.ne.s32.totalorder %s45, %s47
    %p54 = scmp.eq.s32.totalorder %s16, 1
    %p55 = por %p53, %p54
    %p56 = scmp.ne.s32.totalorder %s47, %s48
    %p57 = scmp.eq.s32.totalorder %s16, 0
    %p58 = por %p56, %p57
    %p59 = scmp.ne.s32.totalorder %s47, %s48
    %p60 = scmp.eq.s32.totalorder %s17, 1
    %p61 = por %p59, %p60
    %p63 = scmp.ne.s32.totalorder %s48, %s62
    %p64 = scmp.eq.s32.totalorder %s17, 0
    %p65 = por %p63, %p64
    %s66 = ssub.s32 %s11, %s18
    %p67 = scmp.eq.s32.totalorder %s66, 0
    %s69 = sadd.s32 %s68, 1
    %s70 = scalar_select %p67, %s68, %s69
    %p73 = pneg %p67
    %p74 = scmp.eq.s32.totalorder %s11, 1
    %p75 = por %p73, %p74
    %p76 = scmp.ne.s32.totalorder %s68, %s71
    %p77 = scmp.eq.s32.totalorder %s11, 0
    %p78 = por %p76, %p77
    %p79 = scmp.ne.s32.totalorder %s68, %s71
    %p80 = scmp.eq.s32.totalorder %s16, 1
    %p81 = por %p79, %p80
    %p82 = scmp.ne.s32.totalorder %s71, %s72
    %p83 = scmp.eq.s32.totalorder %s16, 0
    %p84 = por %p82, %p83
    %p85 = scmp.ne.s32.totalorder %s71, %s72
    %p86 = scmp.eq.s32.totalorder %s17, 1
    %p87 = por %p85, %p86
    %p89 = scmp.ne.s32.totalorder %s72, %s88
    %p90 = scmp.eq.s32.totalorder %s17, 0
    %p91 = por %p89, %p90
    %s92 = ssub.s32 %s11, %s18
    %p93 = scmp.eq.s32.totalorder %s92, 0
    %s95 = sadd.s32 %s94, 1
    %s96 = scalar_select %p93, %s94, %s95
    %p99 = pneg %p93
    %p100 = scmp.eq.s32.totalorder %s11, 1
    %p101 = por %p99, %p100
    %p102 = scmp.ne.s32.totalorder %s94, %s97
    %p103 = scmp.eq.s32.totalorder %s11, 0
    %p104 = por %p102, %p103
    %p105 = scmp.ne.s32.totalorder %s94, %s97
    %p106 = scmp.eq.s32.totalorder %s16, 1
    %p107 = por %p105, %p106
    %p108 = scmp.ne.s32.totalorder %s97, %s98
    %p109 = scmp.eq.s32.totalorder %s16, 0
    %p110 = por %p108, %p109
    %p111 = scmp.ne.s32.totalorder %s97, %s98
    %p112 = scmp.eq.s32.totalorder %s17, 1
    %p113 = por %p111, %p112
    %p115 = scmp.ne.s32.totalorder %s98, %s114
    %p116 = scmp.eq.s32.totalorder %s17, 0
    %p117 = por %p115, %p116
    %s118 = ssub.s32 %s11, %s18
    %p119 = scmp.eq.s32.totalorder %s118, 0
    %s121 = sadd.s32 %s120, 1
    %s122 = scalar_select %p119, %s120, %s121
    %p125 = pneg %p119
    %p126 = scmp.eq.s32.totalorder %s11, 1
    %p127 = por %p125, %p126
    %p128 = scmp.ne.s32.totalorder %s120, %s123
    %p129 = scmp.eq.s32.totalorder %s11, 0
    %p130 = por %p128, %p129
    %p131 = scmp.ne.s32.totalorder %s120, %s123
    %p132 = scmp.eq.s32.totalorder %s16, 1
    %p133 = por %p131, %p132
    %p134 = scmp.ne.s32.totalorder %s123, %s124
    %p135 = scmp.eq.s32.totalorder %s16, 0
    %p136 = por %p134, %p135
    %p137 = scmp.ne.s32.totalorder %s123, %s124
    %p138 = scmp.eq.s32.totalorder %s17, 1
    %p139 = por %p137, %p138
    %p141 = scmp.ne.s32.totalorder %s124, %s140
    %p142 = scmp.eq.s32.totalorder %s17, 0
    %p143 = por %p141, %p142
    %p144 = scmp.le.s32.totalorder 1, %s11
    %p145 = scmp.lt.s32.totalorder %s11, 3
    %p146 = pnand %p144, %p145
    %p147 = pneg %p146
    // Predicated region
    $region9: #{discriminator_forward.8} parent=5 // pred_check
      _
    $region10: #{discriminator_forward.8} parent=5 // pred_check_branch
      %149 = sbr.rel (%p146) target = $region12
    $region11: #{discriminator_forward.8} parent=5 // pred_region
      %s150 = ssub.s32 %s11, 1
      // Predicated region
      $region13: #{discriminator_forward.8} parent=11 // pred_check
        %p151 = pneg %p58
      $region14: #{discriminator_forward.8} parent=11 // pred_check_branch
        %153 = sbr.rel (%p151) target = $region16
      $region15: #{discriminator_forward.8} parent=11 // pred_region
        _
      $region16: #{discriminator_forward.8} parent=11 // pred_fallthru
        _
    $region12: #{discriminator_forward.8} parent=5 // pred_fallthru
      _
    %p154 = scmp.lt.s32.totalorder %s11, 2
    // Predicated region
    $region17: #{discriminator_forward.8} parent=5 // pred_check
      %p155 = pneg %p154
    $region18: #{discriminator_forward.8} parent=5 // pred_check_branch
      %157 = sbr.rel (%p155) target = $region20
    $region19: #{discriminator_forward.8} parent=5 // pred_region
      // Predicated region
      $region21: #{discriminator_forward.8} parent=19 // pred_check
        %p158 = pneg %p31
      $region22: #{discriminator_forward.8} parent=19 // pred_check_branch
        %160 = sbr.rel (%p158) target = $region24
      $region23: #{discriminator_forward.8} parent=19 // pred_region
        %p161 = scmp.lt.s32.totalorder %s11, 1
        %s162 = scalar_select %p161, %s11, 1
        %s163 = smul.addr %s162, 32
        %s164 = smul.addr %s163, 4
        %s165 = scalar_lea.vmem %s0, %s164
      $region24: #{discriminator_forward.8} parent=19 // pred_fallthru
        _
    $region20: #{discriminator_forward.8} parent=5 // pred_fallthru
      _
    %p166 = scmp.le.s32.totalorder 1, %s11
    %p167 = scmp.lt.s32.totalorder %s11, 3
    %p168 = pnand %p166, %p167
    %p169 = pneg %p168
    // Predicated region
    $region25: #{discriminator_forward.8} parent=5 // pred_check
      _
    $region26: #{discriminator_forward.8} parent=5 // pred_check_branch
      %171 = sbr.rel (%p168) target = $region28
    $region27: #{discriminator_forward.8} parent=5 // pred_region
      %s172 = ssub.s32 %s11, 1
      %p173 = scmp.lt.s32.totalorder %s16, 1
      %s174 = scalar_select %p173, %s16, 1
      %s175 = smul.addr %s174, 32
      %s176 = smul.addr %s175, 4
      %s177 = scalar_lea.vmem %s0, %s176
      %p178 = pneg %p37
      %p179 = pneg %p34
      %p180 = pneg %p58
      %p181 = pneg %p55
      %p182 = pneg %p84
      %p183 = pneg %p81
      %p184 = scmp.lt.s32.totalorder %s16, 1
      %s185 = scalar_select %p184, %s16, 1
      %s186 = smul.addr %s185, 8
      %s187 = smul.addr %s186, 4
      %s188 = scalar_lea.vmem %s2, %s187
      %p189 = pneg %p110
      %p190 = pneg %p107
      %p191 = scmp.lt.s32.totalorder %s16, 1
      %s192 = scalar_select %p191, %s16, 1
      %s193 = smul.addr %s192, 8
      %s194 = smul.addr %s193, 8
      %s195 = scalar_lea.vmem %s3, %s194
      %p196 = pneg %p136
      %p197 = pneg %p133
      %p198 = scmp.lt.s32.totalorder %s16, 1
      %s199 = scalar_select %p198, %s16, 1
      %s200 = smul.addr %s199, 8
      %s201 = smul.addr %s200, 8
      %s202 = scalar_lea.vmem %s4, %s201
      %p203 = scmp.lt.s32.totalorder %s16, 1
      %s204 = scalar_select %p203, %s16, 1
      %s205 = smul.addr %s204, 32
      %s206 = smul.addr %s205, 4
      %s207 = scalar_lea.vmem %s0, %s206
      %p208 = scmp.lt.s32.totalorder %s16, 1
      %s209 = scalar_select %p208, %s16, 1
      %s210 = smul.addr %s209, 8
      %s211 = smul.addr %s210, 4
      %s212 = scalar_lea.vmem %s2, %s211
      %p213 = scmp.lt.s32.totalorder %s16, 1
      %s214 = scalar_select %p213, %s16, 1
      %s215 = smul.addr %s214, 8
      %s216 = smul.addr %s215, 8
      %s217 = scalar_lea.vmem %s3, %s216
      %p218 = scmp.lt.s32.totalorder %s16, 1
      %s219 = scalar_select %p218, %s16, 1
      %s220 = smul.addr %s219, 8
      %s221 = smul.addr %s220, 8
      %s222 = scalar_lea.vmem %s4, %s221
      %v224 = vld [vmem:[%s207] sm:$0xf]
      %v225 = vld [vmem:[%s207 + $0x4] sm:$0xf]
      %v226 = vld [vmem:[%s207 + $0x8] sm:$0xf]
      %v227 = vld [vmem:[%s207 + $0xc] sm:$0xf]
      %v228 = vld [vmem:[%s1] sm:$0xf]
      %v229 = vld [vmem:[%s1 + $0x4] sm:$0xf]
      %v230 = vld [vmem:[%s1 + $0x8] sm:$0xf]
      %v231 = vld [vmem:[%s1 + $0xc] sm:$0xf]
      %v232 = vld [vmem:[%s1 + $0x10] sm:$0xf]
      %v233 = vld [vmem:[%s1 + $0x14] sm:$0xf]
      %v234 = vld [vmem:[%s1 + $0x18] sm:$0xf]
      %v235 = vld [vmem:[%s1 + $0x1c] sm:$0xf]
      %s236 = scalar_lea.vmem %s1, 256
      %v237 = vld [vmem:[%s236] sm:$0xf]
      %v238 = vld [vmem:[%s236 + $0x4] sm:$0xf]
      %v239 = vld [vmem:[%s236 + $0x8] sm:$0xf]
      %v240 = vld [vmem:[%s236 + $0xc] sm:$0xf]
      %v241 = vld [vmem:[%s236 + $0x10] sm:$0xf]
      %v242 = vld [vmem:[%s236 + $0x14] sm:$0xf]
      %v243 = vld [vmem:[%s236 + $0x18] sm:$0xf]
      %v244 = vld [vmem:[%s236 + $0x1c] sm:$0xf]
      %v253 = vunpack.c.l.b16 %v237
      %v254 = vunpack.c.l.b16 %v238
      %v255 = vunpack.c.l.b16 %v239
      %v256 = vunpack.c.l.b16 %v240
      %v257 = vunpack.c.l.b16 %v241
      %v258 = vunpack.c.l.b16 %v242
      %v259 = vunpack.c.l.b16 %v243
      %v260 = vunpack.c.l.b16 %v244
      %v261 = vpack.c.b16 %v254, %v253
      %v262 = vpack.c.b16 %v256, %v255
      %v263 = vpack.c.b16 %v258, %v257
      %v264 = vpack.c.b16 %v260, %v259
      %v269 = vunpack.c.l.b16 %v224
      %v270 = vunpack.c.l.b16 %v225
      %v271 = vunpack.c.l.b16 %v226
      %v272 = vunpack.c.l.b16 %v227
      %v273 = vpack.c.b16 %v270, %v269
      %v274 = vpack.c.b16 %v272, %v271
      %275 = vrot.lane.b32.xlu0 %v273, 124
      %v276 = vpop.permute.xlu0 %275
      %277 = vrot.lane.b32.xlu0 %v274, 124
      %v278 = vpop.permute.xlu0 %277
      %vm281 = vcmask 261120
      %v283 = vsel %vm281, %v261, 0
      %v286 = vsel %vm281, %v262, 0
      %v289 = vsel %vm281, %v263, 0
      %v292 = vsel %vm281, %v264, 0
      %294 = vmatprep.subr.bf16.mxu0 0
      %295 = vmatpush1.bf16.msra.mxu0 0
      %296 = vmatprep.subr.bf16.mxu0 0
      %297 = vmatpush1.bf16.msra.mxu0 0
      %298 = vmatprep.subr.bf16.mxu0 0
      %299 = vmatpush1.bf16.msra.mxu0 0
      %300 = vmatprep.subr.bf16.mxu0 0
      %301 = vmatpush1.bf16.msra.mxu0 0
      %302 = vmatprep.subr.bf16.mxu0 0
      %303 = vmatpush1.bf16.msra.mxu0 0
      %304 = vmatprep.subr.bf16.mxu0 0
      %305 = vmatpush1.bf16.msra.mxu0 0
      %306 = vmatprep.subr.bf16.mxu0 0
      %307 = vmatpush1.bf16.msra.mxu0 %v278
      %308 = vmatprep.subr.bf16.mxu0 0
      %309 = vmatpush1.bf16.msra.mxu0 %v276
      %310 = vmatprep.subr.bf16.mxu0 0
      %311 = vmatpush2.bf16.msra.mxu0 0
      %312 = vmatprep.subr.bf16.mxu0 0
      %313 = vmatpush2.bf16.msra.mxu0 0
      %314 = vmatprep.subr.bf16.mxu0 0
      %315 = vmatpush2.bf16.msra.mxu0 0
      %316 = vmatprep.subr.bf16.mxu0 0
      %317 = vmatpush2.bf16.msra.mxu0 0
      %318 = vmatprep.subr.bf16.mxu0 0
      %319 = vmatpush2.bf16.msra.mxu0 0
      %320 = vmatprep.subr.bf16.mxu0 0
      %321 = vmatpush2.bf16.msra.mxu0 0
      %322 = vmatprep.subr.bf16.mxu0 0
      %323 = vmatpush2.bf16.msra.mxu0 0
      %324 = vmatprep.subr.bf16.mxu0 0
      %325 = vmatpush2.bf16.msra.mxu0 0
      %326 = vmatprep.mubr.bf16.mxu0 0
      %327 = vmatmul.mubr.bf16.gmra.mxu0 %v283
      %v328 = vpop.f32.mrf.mxu0
      %v329 = vadd.f32 0.0, %v328
      %v330 = vpop.f32.mrf.mxu0
      %v331 = vpop.f32.mrf.mxu0
      %v332 = vadd.f32 0.0, %v331
      %v333 = vpop.f32.mrf.mxu0
      %334 = vmatprep.mubr.bf16.mxu0 0
      %335 = vmatmul.mubr.bf16.gmra.mxu0 %v286
      %v336 = vpop.f32.mrf.mxu0
      %v337 = vadd.f32 0.0, %v336
      %v338 = vpop.f32.mrf.mxu0
      %v339 = vpop.f32.mrf.mxu0
      %v340 = vadd.f32 0.0, %v339
      %v341 = vpop.f32.mrf.mxu0
      %342 = vmatprep.mubr.bf16.mxu0 0
      %343 = vmatmul.mubr.bf16.gmra.mxu0 %v289
      %v344 = vpop.f32.mrf.mxu0
      %v345 = vadd.f32 0.0, %v344
      %v346 = vpop.f32.mrf.mxu0
      %v347 = vpop.f32.mrf.mxu0
      %v348 = vadd.f32 0.0, %v347
      %v349 = vpop.f32.mrf.mxu0
      %350 = vmatprep.mubr.bf16.mxu0 0
      %351 = vmatmul.mubr.bf16.gmra.mxu0 %v292
      %v352 = vpop.f32.mrf.mxu0
      %v353 = vadd.f32 0.0, %v352
      %v354 = vpop.f32.mrf.mxu0
      %v355 = vpop.f32.mrf.mxu0
      %v356 = vadd.f32 0.0, %v355
      %v357 = vpop.f32.mrf.mxu0
      %358 = vdwg.mxu0
      %v367 = vunpack.c.l.b16 %v228
      %v368 = vunpack.c.l.b16 %v229
      %v369 = vunpack.c.l.b16 %v230
      %v370 = vunpack.c.l.b16 %v231
      %v371 = vunpack.c.l.b16 %v232
      %v372 = vunpack.c.l.b16 %v233
      %v373 = vunpack.c.l.b16 %v234
      %v374 = vunpack.c.l.b16 %v235
      %v375 = vpack.c.b16 %v368, %v367
      %v376 = vpack.c.b16 %v370, %v369
      %v377 = vpack.c.b16 %v372, %v371
      %v378 = vpack.c.b16 %v374, %v373
      %v382 = vsel %vm281, %v375, 0
      %v385 = vsel %vm281, %v376, 0
      %v388 = vsel %vm281, %v377, 0
      %v391 = vsel %vm281, %v378, 0
      %393 = vmatprep.subr.bf16.mxu0 0
      %394 = vmatpush1.bf16.msra.mxu0 0
      %395 = vmatprep.subr.bf16.mxu0 0
      %396 = vmatpush1.bf16.msra.mxu0 0
      %397 = vmatprep.subr.bf16.mxu0 0
      %398 = vmatpush1.bf16.msra.mxu0 0
      %399 = vmatprep.subr.bf16.mxu0 0
      %400 = vmatpush1.bf16.msra.mxu0 0
      %401 = vmatprep.subr.bf16.mxu0 0
      %402 = vmatpush1.bf16.msra.mxu0 0
      %403 = vmatprep.subr.bf16.mxu0 0
      %404 = vmatpush1.bf16.msra.mxu0 0
      %405 = vmatprep.subr.bf16.mxu0 0
      %406 = vmatpush1.bf16.msra.mxu0 %v274
      %407 = vmatprep.subr.bf16.mxu0 0
      %408 = vmatpush1.bf16.msra.mxu0 %v273
      %409 = vmatprep.subr.bf16.mxu0 0
      %410 = vmatpush2.bf16.msra.mxu0 0
      %411 = vmatprep.subr.bf16.mxu0 0
      %412 = vmatpush2.bf16.msra.mxu0 0
      %413 = vmatprep.subr.bf16.mxu0 0
      %414 = vmatpush2.bf16.msra.mxu0 0
      %415 = vmatprep.subr.bf16.mxu0 0
      %416 = vmatpush2.bf16.msra.mxu0 0
      %417 = vmatprep.subr.bf16.mxu0 0
      %418 = vmatpush2.bf16.msra.mxu0 0
      %419 = vmatprep.subr.bf16.mxu0 0
      %420 = vmatpush2.bf16.msra.mxu0 0
      %421 = vmatprep.subr.bf16.mxu0 0
      %422 = vmatpush2.bf16.msra.mxu0 0
      %423 = vmatprep.subr.bf16.mxu0 0
      %424 = vmatpush2.bf16.msra.mxu0 0
      %425 = vmatprep.mubr.bf16.mxu0 0
      %426 = vmatmul.mubr.bf16.gmra.mxu0 %v382
      %v427 = vpop.f32.mrf.mxu0
      %v428 = vadd.f32 %v329, %v427
      %v429 = vpop.f32.mrf.mxu0
      %v430 = vpop.f32.mrf.mxu0
      %v431 = vadd.f32 %v332, %v430
      %v432 = vpop.f32.mrf.mxu0
      %433 = vmatprep.mubr.bf16.mxu0 0
      %434 = vmatmul.mubr.bf16.gmra.mxu0 %v385
      %v435 = vpop.f32.mrf.mxu0
      %v436 = vadd.f32 %v337, %v435
      %v437 = vpop.f32.mrf.mxu0
      %v438 = vpop.f32.mrf.mxu0
      %v439 = vadd.f32 %v340, %v438
      %v440 = vpop.f32.mrf.mxu0
      %441 = vmatprep.mubr.bf16.mxu0 0
      %442 = vmatmul.mubr.bf16.gmra.mxu0 %v388
      %v443 = vpop.f32.mrf.mxu0
      %v444 = vadd.f32 %v345, %v443
      %v445 = vpop.f32.mrf.mxu0
      %v446 = vpop.f32.mrf.mxu0
      %v447 = vadd.f32 %v348, %v446
      %v448 = vpop.f32.mrf.mxu0
      %449 = vmatprep.mubr.bf16.mxu0 0
      %450 = vmatmul.mubr.bf16.gmra.mxu0 %v391
      %v451 = vpop.f32.mrf.mxu0
      %v452 = vadd.f32 %v353, %v451
      %v453 = vpop.f32.mrf.mxu0
      %v454 = vpop.f32.mrf.mxu0
      %v455 = vadd.f32 %v356, %v454
      %v456 = vpop.f32.mrf.mxu0
      %457 = vdwg.mxu0
      %s458 = scalar_lea.vmem %s207, 16
      %v459 = vld [vmem:[%s458] sm:$0xf]
      %v460 = vld [vmem:[%s458 + $0x4] sm:$0xf]
      %v461 = vld [vmem:[%s458 + $0x8] sm:$0xf]
      %v462 = vld [vmem:[%s458 + $0xc] sm:$0xf]
      %s463 = scalar_lea.vmem %s1, 64
      %v464 = vld [vmem:[%s463] sm:$0xf]
      %v465 = vld [vmem:[%s463 + $0x4] sm:$0xf]
      %v466 = vld [vmem:[%s463 + $0x8] sm:$0xf]
      %v467 = vld [vmem:[%s463 + $0xc] sm:$0xf]
      %v468 = vld [vmem:[%s463 + $0x10] sm:$0xf]
      %v469 = vld [vmem:[%s463 + $0x14] sm:$0xf]
      %v470 = vld [vmem:[%s463 + $0x18] sm:$0xf]
      %v471 = vld [vmem:[%s463 + $0x1c] sm:$0xf]
      %v480 = vunpack.c.l.b16 %v464
      %v481 = vunpack.c.l.b16 %v465
      %v482 = vunpack.c.l.b16 %v466
      %v483 = vunpack.c.l.b16 %v467
      %v484 = vunpack.c.l.b16 %v468
      %v485 = vunpack.c.l.b16 %v469
      %v486 = vunpack.c.l.b16 %v470
      %v487 = vunpack.c.l.b16 %v471
      %v488 = vpack.c.b16 %v481, %v480
      %v489 = vpack.c.b16 %v483, %v482
      %v490 = vpack.c.b16 %v485, %v484
      %v491 = vpack.c.b16 %v487, %v486
      %v496 = vunpack.c.l.b16 %v459
      %v497 = vunpack.c.l.b16 %v460
      %v498 = vunpack.c.l.b16 %v461
      %v499 = vunpack.c.l.b16 %v462
      %v500 = vpack.c.b16 %v497, %v496
      %v501 = vpack.c.b16 %v499, %v498
      %v505 = vsel %vm281, %v488, 0
      %v508 = vsel %vm281, %v489, 0
      %v511 = vsel %vm281, %v490, 0
      %v514 = vsel %vm281, %v491, 0
      %516 = vmatprep.subr.bf16.mxu0 0
      %517 = vmatpush1.bf16.msra.mxu0 0
      %518 = vmatprep.subr.bf16.mxu0 0
      %519 = vmatpush1.bf16.msra.mxu0 0
      %520 = vmatprep.subr.bf16.mxu0 0
      %521 = vmatpush1.bf16.msra.mxu0 0
      %522 = vmatprep.subr.bf16.mxu0 0
      %523 = vmatpush1.bf16.msra.mxu0 0
      %524 = vmatprep.subr.bf16.mxu0 0
      %525 = vmatpush1.bf16.msra.mxu0 0
      %526 = vmatprep.subr.bf16.mxu0 0
      %527 = vmatpush1.bf16.msra.mxu0 0
      %528 = vmatprep.subr.bf16.mxu0 0
      %529 = vmatpush1.bf16.msra.mxu0 %v501
      %530 = vmatprep.subr.bf16.mxu0 0
      %531 = vmatpush1.bf16.msra.mxu0 %v500
      %532 = vmatprep.subr.bf16.mxu0 0
      %533 = vmatpush2.bf16.msra.mxu0 0
      %534 = vmatprep.subr.bf16.mxu0 0
      %535 = vmatpush2.bf16.msra.mxu0 0
      %536 = vmatprep.subr.bf16.mxu0 0
      %537 = vmatpush2.bf16.msra.mxu0 0
      %538 = vmatprep.subr.bf16.mxu0 0
      %539 = vmatpush2.bf16.msra.mxu0 0
      %540 = vmatprep.subr.bf16.mxu0 0
      %541 = vmatpush2.bf16.msra.mxu0 0
      %542 = vmatprep.subr.bf16.mxu0 0
      %543 = vmatpush2.bf16.msra.mxu0 0
      %544 = vmatprep.subr.bf16.mxu0 0
      %545 = vmatpush2.bf16.msra.mxu0 0
      %546 = vmatprep.subr.bf16.mxu0 0
      %547 = vmatpush2.bf16.msra.mxu0 0
      %548 = vmatprep.mubr.bf16.mxu0 0
      %549 = vmatmul.mubr.bf16.gmra.mxu0 %v505
      %v550 = vpop.f32.mrf.mxu0
      %v551 = vadd.f32 0.0, %v550
      %v552 = vpop.f32.mrf.mxu0
      %v553 = vpop.f32.mrf.mxu0
      %v554 = vadd.f32 0.0, %v553
      %v555 = vpop.f32.mrf.mxu0
      %556 = vmatprep.mubr.bf16.mxu0 0
      %557 = vmatmul.mubr.bf16.gmra.mxu0 %v508
      %v558 = vpop.f32.mrf.mxu0
      %v559 = vadd.f32 0.0, %v558
      %v560 = vpop.f32.mrf.mxu0
      %v561 = vpop.f32.mrf.mxu0
      %v562 = vadd.f32 0.0, %v561
      %v563 = vpop.f32.mrf.mxu0
      %564 = vmatprep.mubr.bf16.mxu0 0
      %565 = vmatmul.mubr.bf16.gmra.mxu0 %v511
      %v566 = vpop.f32.mrf.mxu0
      %v567 = vadd.f32 0.0, %v566
      %v568 = vpop.f32.mrf.mxu0
      %v569 = vpop.f32.mrf.mxu0
      %v570 = vadd.f32 0.0, %v569
      %v571 = vpop.f32.mrf.mxu0
      %572 = vmatprep.mubr.bf16.mxu0 0
      %573 = vmatmul.mubr.bf16.gmra.mxu0 %v514
      %v574 = vpop.f32.mrf.mxu0
      %v575 = vadd.f32 0.0, %v574
      %v576 = vpop.f32.mrf.mxu0
      %v577 = vpop.f32.mrf.mxu0
      %v578 = vadd.f32 0.0, %v577
      %v579 = vpop.f32.mrf.mxu0
      %580 = vdwg.mxu0
      %v581 = vadd.f32 %v428, %v551
      %v582 = vadd.f32 %v431, %v554
      %v583 = vadd.f32 %v436, %v559
      %v584 = vadd.f32 %v439, %v562
      %v585 = vadd.f32 %v444, %v567
      %v586 = vadd.f32 %v447, %v570
      %v587 = vadd.f32 %v452, %v575
      %v588 = vadd.f32 %v455, %v578
      %s589 = scalar_lea.vmem %s1, 320
      %v590 = vld [vmem:[%s589] sm:$0xf]
      %v591 = vld [vmem:[%s589 + $0x4] sm:$0xf]
      %v592 = vld [vmem:[%s589 + $0x8] sm:$0xf]
      %v593 = vld [vmem:[%s589 + $0xc] sm:$0xf]
      %v594 = vld [vmem:[%s589 + $0x10] sm:$0xf]
      %v595 = vld [vmem:[%s589 + $0x14] sm:$0xf]
      %v596 = vld [vmem:[%s589 + $0x18] sm:$0xf]
      %v597 = vld [vmem:[%s589 + $0x1c] sm:$0xf]
      %v606 = vunpack.c.l.b16 %v590
      %v607 = vunpack.c.l.b16 %v591
      %v608 = vunpack.c.l.b16 %v592
      %v609 = vunpack.c.l.b16 %v593
      %v610 = vunpack.c.l.b16 %v594
      %v611 = vunpack.c.l.b16 %v595
      %v612 = vunpack.c.l.b16 %v596
      %v613 = vunpack.c.l.b16 %v597
      %v614 = vpack.c.b16 %v607, %v606
      %v615 = vpack.c.b16 %v609, %v608
      %v616 = vpack.c.b16 %v611, %v610
      %v617 = vpack.c.b16 %v613, %v612
      %618 = vrot.lane.b32.xlu0 %v500, 124
      %v619 = vpop.permute.xlu0 %618
      %620 = vrot.lane.b32.xlu0 %v501, 124
      %v621 = vpop.permute.xlu0 %620
      %v625 = vsel %vm281, %v614, 0
      %v628 = vsel %vm281, %v615, 0
      %v631 = vsel %vm281, %v616, 0
      %v634 = vsel %vm281, %v617, 0
      %636 = vmatprep.subr.bf16.mxu0 0
      %637 = vmatpush1.bf16.msra.mxu0 0
      %638 = vmatprep.subr.bf16.mxu0 0
      %639 = vmatpush1.bf16.msra.mxu0 0
      %640 = vmatprep.subr.bf16.mxu0 0
      %641 = vmatpush1.bf16.msra.mxu0 0
      %642 = vmatprep.subr.bf16.mxu0 0
      %643 = vmatpush1.bf16.msra.mxu0 0
      %644 = vmatprep.subr.bf16.mxu0 0
      %645 = vmatpush1.bf16.msra.mxu0 0
      %646 = vmatprep.subr.bf16.mxu0 0
      %647 = vmatpush1.bf16.msra.mxu0 0
      %648 = vmatprep.subr.bf16.mxu0 0
      %649 = vmatpush1.bf16.msra.mxu0 %v621
      %650 = vmatprep.subr.bf16.mxu0 0
      %651 = vmatpush1.bf16.msra.mxu0 %v619
      %652 = vmatprep.subr.bf16.mxu0 0
      %653 = vmatpush2.bf16.msra.mxu0 0
      %654 = vmatprep.subr.bf16.mxu0 0
      %655 = vmatpush2.bf16.msra.mxu0 0
      %656 = vmatprep.subr.bf16.mxu0 0
      %657 = vmatpush2.bf16.msra.mxu0 0
      %658 = vmatprep.subr.bf16.mxu0 0
      %659 = vmatpush2.bf16.msra.mxu0 0
      %660 = vmatprep.subr.bf16.mxu0 0
      %661 = vmatpush2.bf16.msra.mxu0 0
      %662 = vmatprep.subr.bf16.mxu0 0
      %663 = vmatpush2.bf16.msra.mxu0 0
      %664 = vmatprep.subr.bf16.mxu0 0
      %665 = vmatpush2.bf16.msra.mxu0 0
      %666 = vmatprep.subr.bf16.mxu0 0
      %667 = vmatpush2.bf16.msra.mxu0 0
      %668 = vmatprep.mubr.bf16.mxu0 0
      %669 = vmatmul.mubr.bf16.gmra.mxu0 %v625
      %v670 = vpop.f32.mrf.mxu0
      %v671 = vadd.f32 0.0, %v670
      %v672 = vpop.f32.mrf.mxu0
      %v673 = vpop.f32.mrf.mxu0
      %v674 = vadd.f32 0.0, %v673
      %v675 = vpop.f32.mrf.mxu0
      %676 = vmatprep.mubr.bf16.mxu0 0
      %677 = vmatmul.mubr.bf16.gmra.mxu0 %v628
      %v678 = vpop.f32.mrf.mxu0
      %v679 = vadd.f32 0.0, %v678
      %v680 = vpop.f32.mrf.mxu0
      %v681 = vpop.f32.mrf.mxu0
      %v682 = vadd.f32 0.0, %v681
      %v683 = vpop.f32.mrf.mxu0
      %684 = vmatprep.mubr.bf16.mxu0 0
      %685 = vmatmul.mubr.bf16.gmra.mxu0 %v631
      %v686 = vpop.f32.mrf.mxu0
      %v687 = vadd.f32 0.0, %v686
      %v688 = vpop.f32.mrf.mxu0
      %v689 = vpop.f32.mrf.mxu0
      %v690 = vadd.f32 0.0, %v689
      %v691 = vpop.f32.mrf.mxu0
      %692 = vmatprep.mubr.bf16.mxu0 0
      %693 = vmatmul.mubr.bf16.gmra.mxu0 %v634
      %v694 = vpop.f32.mrf.mxu0
      %v695 = vadd.f32 0.0, %v694
      %v696 = vpop.f32.mrf.mxu0
      %v697 = vpop.f32.mrf.mxu0
      %v698 = vadd.f32 0.0, %v697
      %v699 = vpop.f32.mrf.mxu0
      %700 = vdwg.mxu0
      %v701 = vadd.f32 %v581, %v671
      %v702 = vadd.f32 %v582, %v674
      %v703 = vadd.f32 %v583, %v679
      %v704 = vadd.f32 %v584, %v682
      %v705 = vadd.f32 %v585, %v687
      %v706 = vadd.f32 %v586, %v690
      %v707 = vadd.f32 %v587, %v695
      %v708 = vadd.f32 %v588, %v698
      %s709 = scalar_lea.vmem %s207, 32
      %v710 = vld [vmem:[%s709] sm:$0xf]
      %v711 = vld [vmem:[%s709 + $0x4] sm:$0xf]
      %v712 = vld [vmem:[%s709 + $0x8] sm:$0xf]
      %v713 = vld [vmem:[%s709 + $0xc] sm:$0xf]
      %s714 = scalar_lea.vmem %s1, 32
      %v715 = vld [vmem:[%s714] sm:$0xf]
      %v716 = vld [vmem:[%s714 + $0x4] sm:$0xf]
      %v717 = vld [vmem:[%s714 + $0x8] sm:$0xf]
      %v718 = vld [vmem:[%s714 + $0xc] sm:$0xf]
      %v719 = vld [vmem:[%s714 + $0x10] sm:$0xf]
      %v720 = vld [vmem:[%s714 + $0x14] sm:$0xf]
      %v721 = vld [vmem:[%s714 + $0x18] sm:$0xf]
      %v722 = vld [vmem:[%s714 + $0x1c] sm:$0xf]
      %v731 = vunpack.c.l.b16 %v715
      %v732 = vunpack.c.l.b16 %v716
      %v733 = vunpack.c.l.b16 %v717
      %v734 = vunpack.c.l.b16 %v718
      %v735 = vunpack.c.l.b16 %v719
      %v736 = vunpack.c.l.b16 %v720
      %v737 = vunpack.c.l.b16 %v721
      %v738 = vunpack.c.l.b16 %v722
      %v739 = vpack.c.b16 %v732, %v731
      %v740 = vpack.c.b16 %v734, %v733
      %v741 = vpack.c.b16 %v736, %v735
      %v742 = vpack.c.b16 %v738, %v737
      %v747 = vunpack.c.l.b16 %v710
      %v748 = vunpack.c.l.b16 %v711
      %v749 = vunpack.c.l.b16 %v712
      %v750 = vunpack.c.l.b16 %v713
      %v751 = vpack.c.b16 %v748, %v747
      %v752 = vpack.c.b16 %v750, %v749
      %v756 = vsel %vm281, %v739, 0
      %v759 = vsel %vm281, %v740, 0
      %v762 = vsel %vm281, %v741, 0
      %v765 = vsel %vm281, %v742, 0
      %767 = vmatprep.subr.bf16.mxu0 0
      %768 = vmatpush1.bf16.msra.mxu0 0
      %769 = vmatprep.subr.bf16.mxu0 0
      %770 = vmatpush1.bf16.msra.mxu0 0
      %771 = vmatprep.subr.bf16.mxu0 0
      %772 = vmatpush1.bf16.msra.mxu0 0
      %773 = vmatprep.subr.bf16.mxu0 0
      %774 = vmatpush1.bf16.msra.mxu0 0
      %775 = vmatprep.subr.bf16.mxu0 0
      %776 = vmatpush1.bf16.msra.mxu0 0
      %777 = vmatprep.subr.bf16.mxu0 0
      %778 = vmatpush1.bf16.msra.mxu0 0
      %779 = vmatprep.subr.bf16.mxu0 0
      %780 = vmatpush1.bf16.msra.mxu0 %v752
      %781 = vmatprep.subr.bf16.mxu0 0
      %782 = vmatpush1.bf16.msra.mxu0 %v751
      %783 = vmatprep.subr.bf16.mxu0 0
      %784 = vmatpush2.bf16.msra.mxu0 0
      %785 = vmatprep.subr.bf16.mxu0 0
      %786 = vmatpush2.bf16.msra.mxu0 0
      %787 = vmatprep.subr.bf16.mxu0 0
      %788 = vmatpush2.bf16.msra.mxu0 0
      %789 = vmatprep.subr.bf16.mxu0 0
      %790 = vmatpush2.bf16.msra.mxu0 0
      %791 = vmatprep.subr.bf16.mxu0 0
      %792 = vmatpush2.bf16.msra.mxu0 0
      %793 = vmatprep.subr.bf16.mxu0 0
      %794 = vmatpush2.bf16.msra.mxu0 0
      %795 = vmatprep.subr.bf16.mxu0 0
      %796 = vmatpush2.bf16.msra.mxu0 0
      %797 = vmatprep.subr.bf16.mxu0 0
      %798 = vmatpush2.bf16.msra.mxu0 0
      %799 = vmatprep.mubr.bf16.mxu0 0
      %800 = vmatmul.mubr.bf16.gmra.mxu0 %v756
      %v801 = vpop.f32.mrf.mxu0
      %v802 = vadd.f32 0.0, %v801
      %v803 = vpop.f32.mrf.mxu0
      %v804 = vpop.f32.mrf.mxu0
      %v805 = vadd.f32 0.0, %v804
      %v806 = vpop.f32.mrf.mxu0
      %807 = vmatprep.mubr.bf16.mxu0 0
      %808 = vmatmul.mubr.bf16.gmra.mxu0 %v759
      %v809 = vpop.f32.mrf.mxu0
      %v810 = vadd.f32 0.0, %v809
      %v811 = vpop.f32.mrf.mxu0
      %v812 = vpop.f32.mrf.mxu0
      %v813 = vadd.f32 0.0, %v812
      %v814 = vpop.f32.mrf.mxu0
      %815 = vmatprep.mubr.bf16.mxu0 0
      %816 = vmatmul.mubr.bf16.gmra.mxu0 %v762
      %v817 = vpop.f32.mrf.mxu0
      %v818 = vadd.f32 0.0, %v817
      %v819 = vpop.f32.mrf.mxu0
      %v820 = vpop.f32.mrf.mxu0
      %v821 = vadd.f32 0.0, %v820
      %v822 = vpop.f32.mrf.mxu0
      %823 = vmatprep.mubr.bf16.mxu0 0
      %824 = vmatmul.mubr.bf16.gmra.mxu0 %v765
      %v825 = vpop.f32.mrf.mxu0
      %v826 = vadd.f32 0.0, %v825
      %v827 = vpop.f32.mrf.mxu0
      %v828 = vpop.f32.mrf.mxu0
      %v829 = vadd.f32 0.0, %v828
      %v830 = vpop.f32.mrf.mxu0
      %831 = vdwg.mxu0
      %v832 = vadd.f32 %v701, %v802
      %v833 = vadd.f32 %v702, %v805
      %v834 = vadd.f32 %v703, %v810
      %v835 = vadd.f32 %v704, %v813
      %v836 = vadd.f32 %v705, %v818
      %v837 = vadd.f32 %v706, %v821
      %v838 = vadd.f32 %v707, %v826
      %v839 = vadd.f32 %v708, %v829
      %s840 = scalar_lea.vmem %s1, 288
      %v841 = vld [vmem:[%s840] sm:$0xf]
      %v842 = vld [vmem:[%s840 + $0x4] sm:$0xf]
      %v843 = vld [vmem:[%s840 + $0x8] sm:$0xf]
      %v844 = vld [vmem:[%s840 + $0xc] sm:$0xf]
      %v845 = vld [vmem:[%s840 + $0x10] sm:$0xf]
      %v846 = vld [vmem:[%s840 + $0x14] sm:$0xf]
      %v847 = vld [vmem:[%s840 + $0x18] sm:$0xf]
      %v848 = vld [vmem:[%s840 + $0x1c] sm:$0xf]
      %v857 = vunpack.c.l.b16 %v841
      %v858 = vunpack.c.l.b16 %v842
      %v859 = vunpack.c.l.b16 %v843
      %v860 = vunpack.c.l.b16 %v844
      %v861 = vunpack.c.l.b16 %v845
      %v862 = vunpack.c.l.b16 %v846
      %v863 = vunpack.c.l.b16 %v847
      %v864 = vunpack.c.l.b16 %v848
      %v865 = vpack.c.b16 %v858, %v857
      %v866 = vpack.c.b16 %v860, %v859
      %v867 = vpack.c.b16 %v862, %v861
      %v868 = vpack.c.b16 %v864, %v863
      %869 = vrot.lane.b32.xlu0 %v751, 124
      %v870 = vpop.permute.xlu0 %869
      %871 = vrot.lane.b32.xlu0 %v752, 124
      %v872 = vpop.permute.xlu0 %871
      %v876 = vsel %vm281, %v865, 0
      %v879 = vsel %vm281, %v866, 0
      %v882 = vsel %vm281, %v867, 0
      %v885 = vsel %vm281, %v868, 0
      %887 = vmatprep.subr.bf16.mxu0 0
      %888 = vmatpush1.bf16.msra.mxu0 0
      %889 = vmatprep.subr.bf16.mxu0 0
      %890 = vmatpush1.bf16.msra.mxu0 0
      %891 = vmatprep.subr.bf16.mxu0 0
      %892 = vmatpush1.bf16.msra.mxu0 0
      %893 = vmatprep.subr.bf16.mxu0 0
      %894 = vmatpush1.bf16.msra.mxu0 0
      %895 = vmatprep.subr.bf16.mxu0 0
      %896 = vmatpush1.bf16.msra.mxu0 0
      %897 = vmatprep.subr.bf16.mxu0 0
      %898 = vmatpush1.bf16.msra.mxu0 0
      %899 = vmatprep.subr.bf16.mxu0 0
      %900 = vmatpush1.bf16.msra.mxu0 %v872
      %901 = vmatprep.subr.bf16.mxu0 0
      %902 = vmatpush1.bf16.msra.mxu0 %v870
      %903 = vmatprep.subr.bf16.mxu0 0
      %904 = vmatpush2.bf16.msra.mxu0 0
      %905 = vmatprep.subr.bf16.mxu0 0
      %906 = vmatpush2.bf16.msra.mxu0 0
      %907 = vmatprep.subr.bf16.mxu0 0
      %908 = vmatpush2.bf16.msra.mxu0 0
      %909 = vmatprep.subr.bf16.mxu0 0
      %910 = vmatpush2.bf16.msra.mxu0 0
      %911 = vmatprep.subr.bf16.mxu0 0
      %912 = vmatpush2.bf16.msra.mxu0 0
      %913 = vmatprep.subr.bf16.mxu0 0
      %914 = vmatpush2.bf16.msra.mxu0 0
      %915 = vmatprep.subr.bf16.mxu0 0
      %916 = vmatpush2.bf16.msra.mxu0 0
      %917 = vmatprep.subr.bf16.mxu0 0
      %918 = vmatpush2.bf16.msra.mxu0 0
      %919 = vmatprep.mubr.bf16.mxu0 0
      %920 = vmatmul.mubr.bf16.gmra.mxu0 %v876
      %v921 = vpop.f32.mrf.mxu0
      %v922 = vadd.f32 0.0, %v921
      %v923 = vpop.f32.mrf.mxu0
      %v924 = vpop.f32.mrf.mxu0
      %v925 = vadd.f32 0.0, %v924
      %v926 = vpop.f32.mrf.mxu0
      %927 = vmatprep.mubr.bf16.mxu0 0
      %928 = vmatmul.mubr.bf16.gmra.mxu0 %v879
      %v929 = vpop.f32.mrf.mxu0
      %v930 = vadd.f32 0.0, %v929
      %v931 = vpop.f32.mrf.mxu0
      %v932 = vpop.f32.mrf.mxu0
      %v933 = vadd.f32 0.0, %v932
      %v934 = vpop.f32.mrf.mxu0
      %935 = vmatprep.mubr.bf16.mxu0 0
      %936 = vmatmul.mubr.bf16.gmra.mxu0 %v882
      %v937 = vpop.f32.mrf.mxu0
      %v938 = vadd.f32 0.0, %v937
      %v939 = vpop.f32.mrf.mxu0
      %v940 = vpop.f32.mrf.mxu0
      %v941 = vadd.f32 0.0, %v940
      %v942 = vpop.f32.mrf.mxu0
      %943 = vmatprep.mubr.bf16.mxu0 0
      %944 = vmatmul.mubr.bf16.gmra.mxu0 %v885
      %v945 = vpop.f32.mrf.mxu0
      %v946 = vadd.f32 0.0, %v945
      %v947 = vpop.f32.mrf.mxu0
      %v948 = vpop.f32.mrf.mxu0
      %v949 = vadd.f32 0.0, %v948
      %v950 = vpop.f32.mrf.mxu0
      %951 = vdwg.mxu0
      %v952 = vadd.f32 %v832, %v922
      %v953 = vadd.f32 %v833, %v925
      %v954 = vadd.f32 %v834, %v930
      %v955 = vadd.f32 %v835, %v933
      %v956 = vadd.f32 %v836, %v938
      %v957 = vadd.f32 %v837, %v941
      %v958 = vadd.f32 %v838, %v946
      %v959 = vadd.f32 %v839, %v949
      %s960 = scalar_lea.vmem %s207, 48
      %v961 = vld [vmem:[%s960] sm:$0xf]
      %v962 = vld [vmem:[%s960 + $0x4] sm:$0xf]
      %v963 = vld [vmem:[%s960 + $0x8] sm:$0xf]
      %v964 = vld [vmem:[%s960 + $0xc] sm:$0xf]
      %s965 = scalar_lea.vmem %s1, 96
      %v966 = vld [vmem:[%s965] sm:$0xf]
      %v967 = vld [vmem:[%s965 + $0x4] sm:$0xf]
      %v968 = vld [vmem:[%s965 + $0x8] sm:$0xf]
      %v969 = vld [vmem:[%s965 + $0xc] sm:$0xf]
      %v970 = vld [vmem:[%s965 + $0x10] sm:$0xf]
      %v971 = vld [vmem:[%s965 + $0x14] sm:$0xf]
      %v972 = vld [vmem:[%s965 + $0x18] sm:$0xf]
      %v973 = vld [vmem:[%s965 + $0x1c] sm:$0xf]
      %v982 = vunpack.c.l.b16 %v966
      %v983 = vunpack.c.l.b16 %v967
      %v984 = vunpack.c.l.b16 %v968
      %v985 = vunpack.c.l.b16 %v969
      %v986 = vunpack.c.l.b16 %v970
      %v987 = vunpack.c.l.b16 %v971
      %v988 = vunpack.c.l.b16 %v972
      %v989 = vunpack.c.l.b16 %v973
      %v990 = vpack.c.b16 %v983, %v982
      %v991 = vpack.c.b16 %v985, %v984
      %v992 = vpack.c.b16 %v987, %v986
      %v993 = vpack.c.b16 %v989, %v988
      %v998 = vunpack.c.l.b16 %v961
      %v999 = vunpack.c.l.b16 %v962
      %v1000 = vunpack.c.l.b16 %v963
      %v1001 = vunpack.c.l.b16 %v964
      %v1002 = vpack.c.b16 %v999, %v998
      %v1003 = vpack.c.b16 %v1001, %v1000
      %v1007 = vsel %vm281, %v990, 0
      %v1010 = vsel %vm281, %v991, 0
      %v1013 = vsel %vm281, %v992, 0
      %v1016 = vsel %vm281, %v993, 0
      %1018 = vmatprep.subr.bf16.mxu0 0
      %1019 = vmatpush1.bf16.msra.mxu0 0
      %1020 = vmatprep.subr.bf16.mxu0 0
      %1021 = vmatpush1.bf16.msra.mxu0 0
      %1022 = vmatprep.subr.bf16.mxu0 0
      %1023 = vmatpush1.bf16.msra.mxu0 0
      %1024 = vmatprep.subr.bf16.mxu0 0
      %1025 = vmatpush1.bf16.msra.mxu0 0
      %1026 = vmatprep.subr.bf16.mxu0 0
      %1027 = vmatpush1.bf16.msra.mxu0 0
      %1028 = vmatprep.subr.bf16.mxu0 0
      %1029 = vmatpush1.bf16.msra.mxu0 0
      %1030 = vmatprep.subr.bf16.mxu0 0
      %1031 = vmatpush1.bf16.msra.mxu0 %v1003
      %1032 = vmatprep.subr.bf16.mxu0 0
      %1033 = vmatpush1.bf16.msra.mxu0 %v1002
      %1034 = vmatprep.subr.bf16.mxu0 0
      %1035 = vmatpush2.bf16.msra.mxu0 0
      %1036 = vmatprep.subr.bf16.mxu0 0
      %1037 = vmatpush2.bf16.msra.mxu0 0
      %1038 = vmatprep.subr.bf16.mxu0 0
      %1039 = vmatpush2.bf16.msra.mxu0 0
      %1040 = vmatprep.subr.bf16.mxu0 0
      %1041 = vmatpush2.bf16.msra.mxu0 0
      %1042 = vmatprep.subr.bf16.mxu0 0
      %1043 = vmatpush2.bf16.msra.mxu0 0
      %1044 = vmatprep.subr.bf16.mxu0 0
      %1045 = vmatpush2.bf16.msra.mxu0 0
      %1046 = vmatprep.subr.bf16.mxu0 0
      %1047 = vmatpush2.bf16.msra.mxu0 0
      %1048 = vmatprep.subr.bf16.mxu0 0
      %1049 = vmatpush2.bf16.msra.mxu0 0
      %1050 = vmatprep.mubr.bf16.mxu0 0
      %1051 = vmatmul.mubr.bf16.gmra.mxu0 %v1007
      %v1052 = vpop.f32.mrf.mxu0
      %v1053 = vadd.f32 0.0, %v1052
      %v1054 = vpop.f32.mrf.mxu0
      %v1055 = vpop.f32.mrf.mxu0
      %v1056 = vadd.f32 0.0, %v1055
      %v1057 = vpop.f32.mrf.mxu0
      %1058 = vmatprep.mubr.bf16.mxu0 0
      %1059 = vmatmul.mubr.bf16.gmra.mxu0 %v1010
      %v1060 = vpop.f32.mrf.mxu0
      %v1061 = vadd.f32 0.0, %v1060
      %v1062 = vpop.f32.mrf.mxu0
      %v1063 = vpop.f32.mrf.mxu0
      %v1064 = vadd.f32 0.0, %v1063
      %v1065 = vpop.f32.mrf.mxu0
      %1066 = vmatprep.mubr.bf16.mxu0 0
      %1067 = vmatmul.mubr.bf16.gmra.mxu0 %v1013
      %v1068 = vpop.f32.mrf.mxu0
      %v1069 = vadd.f32 0.0, %v1068
      %v1070 = vpop.f32.mrf.mxu0
      %v1071 = vpop.f32.mrf.mxu0
      %v1072 = vadd.f32 0.0, %v1071
      %v1073 = vpop.f32.mrf.mxu0
      %1074 = vmatprep.mubr.bf16.mxu0 0
      %1075 = vmatmul.mubr.bf16.gmra.mxu0 %v1016
      %v1076 = vpop.f32.mrf.mxu0
      %v1077 = vadd.f32 0.0, %v1076
      %v1078 = vpop.f32.mrf.mxu0
      %v1079 = vpop.f32.mrf.mxu0
      %v1080 = vadd.f32 0.0, %v1079
      %v1081 = vpop.f32.mrf.mxu0
      %1082 = vdwg.mxu0
      %v1083 = vadd.f32 %v952, %v1053
      %v1084 = vadd.f32 %v953, %v1056
      %v1085 = vadd.f32 %v954, %v1061
      %v1086 = vadd.f32 %v955, %v1064
      %v1087 = vadd.f32 %v956, %v1069
      %v1088 = vadd.f32 %v957, %v1072
      %v1089 = vadd.f32 %v958, %v1077
      %v1090 = vadd.f32 %v959, %v1080
      %s1091 = scalar_lea.vmem %s1, 352
      %v1092 = vld [vmem:[%s1091] sm:$0xf]
      %v1093 = vld [vmem:[%s1091 + $0x4] sm:$0xf]
      %v1094 = vld [vmem:[%s1091 + $0x8] sm:$0xf]
      %v1095 = vld [vmem:[%s1091 + $0xc] sm:$0xf]
      %v1096 = vld [vmem:[%s1091 + $0x10] sm:$0xf]
      %v1097 = vld [vmem:[%s1091 + $0x14] sm:$0xf]
      %v1098 = vld [vmem:[%s1091 + $0x18] sm:$0xf]
      %v1099 = vld [vmem:[%s1091 + $0x1c] sm:$0xf]
      %v1108 = vunpack.c.l.b16 %v1092
      %v1109 = vunpack.c.l.b16 %v1093
      %v1110 = vunpack.c.l.b16 %v1094
      %v1111 = vunpack.c.l.b16 %v1095
      %v1112 = vunpack.c.l.b16 %v1096
      %v1113 = vunpack.c.l.b16 %v1097
      %v1114 = vunpack.c.l.b16 %v1098
      %v1115 = vunpack.c.l.b16 %v1099
      %v1116 = vpack.c.b16 %v1109, %v1108
      %v1117 = vpack.c.b16 %v1111, %v1110
      %v1118 = vpack.c.b16 %v1113, %v1112
      %v1119 = vpack.c.b16 %v1115, %v1114
      %1120 = vrot.lane.b32.xlu0 %v1002, 124
      %v1121 = vpop.permute.xlu0 %1120
      %1122 = vrot.lane.b32.xlu0 %v1003, 124
      %v1123 = vpop.permute.xlu0 %1122
      %v1127 = vsel %vm281, %v1116, 0
      %v1130 = vsel %vm281, %v1117, 0
      %v1133 = vsel %vm281, %v1118, 0
      %v1136 = vsel %vm281, %v1119, 0
      %1138 = vmatprep.subr.bf16.mxu0 0
      %1139 = vmatpush1.bf16.msra.mxu0 0
      %1140 = vmatprep.subr.bf16.mxu0 0
      %1141 = vmatpush1.bf16.msra.mxu0 0
      %1142 = vmatprep.subr.bf16.mxu0 0
      %1143 = vmatpush1.bf16.msra.mxu0 0
      %1144 = vmatprep.subr.bf16.mxu0 0
      %1145 = vmatpush1.bf16.msra.mxu0 0
      %1146 = vmatprep.subr.bf16.mxu0 0
      %1147 = vmatpush1.bf16.msra.mxu0 0
      %1148 = vmatprep.subr.bf16.mxu0 0
      %1149 = vmatpush1.bf16.msra.mxu0 0
      %1150 = vmatprep.subr.bf16.mxu0 0
      %1151 = vmatpush1.bf16.msra.mxu0 %v1123
      %1152 = vmatprep.subr.bf16.mxu0 0
      %1153 = vmatpush1.bf16.msra.mxu0 %v1121
      %1154 = vmatprep.subr.bf16.mxu0 0
      %1155 = vmatpush2.bf16.msra.mxu0 0
      %1156 = vmatprep.subr.bf16.mxu0 0
      %1157 = vmatpush2.bf16.msra.mxu0 0
      %1158 = vmatprep.subr.bf16.mxu0 0
      %1159 = vmatpush2.bf16.msra.mxu0 0
      %1160 = vmatprep.subr.bf16.mxu0 0
      %1161 = vmatpush2.bf16.msra.mxu0 0
      %1162 = vmatprep.subr.bf16.mxu0 0
      %1163 = vmatpush2.bf16.msra.mxu0 0
      %1164 = vmatprep.subr.bf16.mxu0 0
      %1165 = vmatpush2.bf16.msra.mxu0 0
      %1166 = vmatprep.subr.bf16.mxu0 0
      %1167 = vmatpush2.bf16.msra.mxu0 0
      %1168 = vmatprep.subr.bf16.mxu0 0
      %1169 = vmatpush2.bf16.msra.mxu0 0
      %1170 = vmatprep.mubr.bf16.mxu0 0
      %1171 = vmatmul.mubr.bf16.gmra.mxu0 %v1127
      %v1172 = vpop.f32.mrf.mxu0
      %v1173 = vadd.f32 0.0, %v1172
      %v1174 = vpop.f32.mrf.mxu0
      %v1175 = vpop.f32.mrf.mxu0
      %v1176 = vadd.f32 0.0, %v1175
      %v1177 = vpop.f32.mrf.mxu0
      %1178 = vmatprep.mubr.bf16.mxu0 0
      %1179 = vmatmul.mubr.bf16.gmra.mxu0 %v1130
      %v1180 = vpop.f32.mrf.mxu0
      %v1181 = vadd.f32 0.0, %v1180
      %v1182 = vpop.f32.mrf.mxu0
      %v1183 = vpop.f32.mrf.mxu0
      %v1184 = vadd.f32 0.0, %v1183
      %v1185 = vpop.f32.mrf.mxu0
      %1186 = vmatprep.mubr.bf16.mxu0 0
      %1187 = vmatmul.mubr.bf16.gmra.mxu0 %v1133
      %v1188 = vpop.f32.mrf.mxu0
      %v1189 = vadd.f32 0.0, %v1188
      %v1190 = vpop.f32.mrf.mxu0
      %v1191 = vpop.f32.mrf.mxu0
      %v1192 = vadd.f32 0.0, %v1191
      %v1193 = vpop.f32.mrf.mxu0
      %1194 = vmatprep.mubr.bf16.mxu0 0
      %1195 = vmatmul.mubr.bf16.gmra.mxu0 %v1136
      %v1196 = vpop.f32.mrf.mxu0
      %v1197 = vadd.f32 0.0, %v1196
      %v1198 = vpop.f32.mrf.mxu0
      %v1199 = vpop.f32.mrf.mxu0
      %v1200 = vadd.f32 0.0, %v1199
      %v1201 = vpop.f32.mrf.mxu0
      %1202 = vdwg.mxu0
      %v1203 = vadd.f32 %v1083, %v1173
      %v1204 = vadd.f32 %v1084, %v1176
      %v1205 = vadd.f32 %v1085, %v1181
      %v1206 = vadd.f32 %v1086, %v1184
      %v1207 = vadd.f32 %v1087, %v1189
      %v1208 = vadd.f32 %v1088, %v1192
      %v1209 = vadd.f32 %v1089, %v1197
      %v1210 = vadd.f32 %v1090, %v1200
      %s1211 = scalar_lea.vmem %s207, 64
      %v1212 = vld [vmem:[%s1211] sm:$0xf]
      %v1213 = vld [vmem:[%s1211 + $0x4] sm:$0xf]
      %v1214 = vld [vmem:[%s1211 + $0x8] sm:$0xf]
      %v1215 = vld [vmem:[%s1211 + $0xc] sm:$0xf]
      %s1216 = scalar_lea.vmem %s1, 128
      %v1217 = vld [vmem:[%s1216] sm:$0xf]
      %v1218 = vld [vmem:[%s1216 + $0x4] sm:$0xf]
      %v1219 = vld [vmem:[%s1216 + $0x8] sm:$0xf]
      %v1220 = vld [vmem:[%s1216 + $0xc] sm:$0xf]
      %v1221 = vld [vmem:[%s1216 + $0x10] sm:$0xf]
      %v1222 = vld [vmem:[%s1216 + $0x14] sm:$0xf]
      %v1223 = vld [vmem:[%s1216 + $0x18] sm:$0xf]
      %v1224 = vld [vmem:[%s1216 + $0x1c] sm:$0xf]
      %v1233 = vunpack.c.l.b16 %v1217
      %v1234 = vunpack.c.l.b16 %v1218
      %v1235 = vunpack.c.l.b16 %v1219
      %v1236 = vunpack.c.l.b16 %v1220
      %v1237 = vunpack.c.l.b16 %v1221
      %v1238 = vunpack.c.l.b16 %v1222
      %v1239 = vunpack.c.l.b16 %v1223
      %v1240 = vunpack.c.l.b16 %v1224
      %v1241 = vpack.c.b16 %v1234, %v1233
      %v1242 = vpack.c.b16 %v1236, %v1235
      %v1243 = vpack.c.b16 %v1238, %v1237
      %v1244 = vpack.c.b16 %v1240, %v1239
      %v1249 = vunpack.c.l.b16 %v1212
      %v1250 = vunpack.c.l.b16 %v1213
      %v1251 = vunpack.c.l.b16 %v1214
      %v1252 = vunpack.c.l.b16 %v1215
      %v1253 = vpack.c.b16 %v1250, %v1249
      %v1254 = vpack.c.b16 %v1252, %v1251
      %v1258 = vsel %vm281, %v1241, 0
      %v1261 = vsel %vm281, %v1242, 0
      %v1264 = vsel %vm281, %v1243, 0
      %v1267 = vsel %vm281, %v1244, 0
      %1269 = vmatprep.subr.bf16.mxu0 0
      %1270 = vmatpush1.bf16.msra.mxu0 0
      %1271 = vmatprep.subr.bf16.mxu0 0
      %1272 = vmatpush1.bf16.msra.mxu0 0
      %1273 = vmatprep.subr.bf16.mxu0 0
      %1274 = vmatpush1.bf16.msra.mxu0 0
      %1275 = vmatprep.subr.bf16.mxu0 0
      %1276 = vmatpush1.bf16.msra.mxu0 0
      %1277 = vmatprep.subr.bf16.mxu0 0
      %1278 = vmatpush1.bf16.msra.mxu0 0
      %1279 = vmatprep.subr.bf16.mxu0 0
      %1280 = vmatpush1.bf16.msra.mxu0 0
      %1281 = vmatprep.subr.bf16.mxu0 0
      %1282 = vmatpush1.bf16.msra.mxu0 %v1254
      %1283 = vmatprep.subr.bf16.mxu0 0
      %1284 = vmatpush1.bf16.msra.mxu0 %v1253
      %1285 = vmatprep.subr.bf16.mxu0 0
      %1286 = vmatpush2.bf16.msra.mxu0 0
      %1287 = vmatprep.subr.bf16.mxu0 0
      %1288 = vmatpush2.bf16.msra.mxu0 0
      %1289 = vmatprep.subr.bf16.mxu0 0
      %1290 = vmatpush2.bf16.msra.mxu0 0
      %1291 = vmatprep.subr.bf16.mxu0 0
      %1292 = vmatpush2.bf16.msra.mxu0 0
      %1293 = vmatprep.subr.bf16.mxu0 0
      %1294 = vmatpush2.bf16.msra.mxu0 0
      %1295 = vmatprep.subr.bf16.mxu0 0
      %1296 = vmatpush2.bf16.msra.mxu0 0
      %1297 = vmatprep.subr.bf16.mxu0 0
      %1298 = vmatpush2.bf16.msra.mxu0 0
      %1299 = vmatprep.subr.bf16.mxu0 0
      %1300 = vmatpush2.bf16.msra.mxu0 0
      %1301 = vmatprep.mubr.bf16.mxu0 0
      %1302 = vmatmul.mubr.bf16.gmra.mxu0 %v1258
      %v1303 = vpop.f32.mrf.mxu0
      %v1304 = vadd.f32 0.0, %v1303
      %v1305 = vpop.f32.mrf.mxu0
      %v1306 = vpop.f32.mrf.mxu0
      %v1307 = vadd.f32 0.0, %v1306
      %v1308 = vpop.f32.mrf.mxu0
      %1309 = vmatprep.mubr.bf16.mxu0 0
      %1310 = vmatmul.mubr.bf16.gmra.mxu0 %v1261
      %v1311 = vpop.f32.mrf.mxu0
      %v1312 = vadd.f32 0.0, %v1311
      %v1313 = vpop.f32.mrf.mxu0
      %v1314 = vpop.f32.mrf.mxu0
      %v1315 = vadd.f32 0.0, %v1314
      %v1316 = vpop.f32.mrf.mxu0
      %1317 = vmatprep.mubr.bf16.mxu0 0
      %1318 = vmatmul.mubr.bf16.gmra.mxu0 %v1264
      %v1319 = vpop.f32.mrf.mxu0
      %v1320 = vadd.f32 0.0, %v1319
      %v1321 = vpop.f32.mrf.mxu0
      %v1322 = vpop.f32.mrf.mxu0
      %v1323 = vadd.f32 0.0, %v1322
      %v1324 = vpop.f32.mrf.mxu0
      %1325 = vmatprep.mubr.bf16.mxu0 0
      %1326 = vmatmul.mubr.bf16.gmra.mxu0 %v1267
      %v1327 = vpop.f32.mrf.mxu0
      %v1328 = vadd.f32 0.0, %v1327
      %v1329 = vpop.f32.mrf.mxu0
      %v1330 = vpop.f32.mrf.mxu0
      %v1331 = vadd.f32 0.0, %v1330
      %v1332 = vpop.f32.mrf.mxu0
      %1333 = vdwg.mxu0
      %v1334 = vadd.f32 %v1203, %v1304
      %v1335 = vadd.f32 %v1204, %v1307
      %v1336 = vadd.f32 %v1205, %v1312
      %v1337 = vadd.f32 %v1206, %v1315
      %v1338 = vadd.f32 %v1207, %v1320
      %v1339 = vadd.f32 %v1208, %v1323
      %v1340 = vadd.f32 %v1209, %v1328
      %v1341 = vadd.f32 %v1210, %v1331
      %s1342 = scalar_lea.vmem %s1, 384
      %v1343 = vld [vmem:[%s1342] sm:$0xf]
      %v1344 = vld [vmem:[%s1342 + $0x4] sm:$0xf]
      %v1345 = vld [vmem:[%s1342 + $0x8] sm:$0xf]
      %v1346 = vld [vmem:[%s1342 + $0xc] sm:$0xf]
      %v1347 = vld [vmem:[%s1342 + $0x10] sm:$0xf]
      %v1348 = vld [vmem:[%s1342 + $0x14] sm:$0xf]
      %v1349 = vld [vmem:[%s1342 + $0x18] sm:$0xf]
      %v1350 = vld [vmem:[%s1342 + $0x1c] sm:$0xf]
      %v1359 = vunpack.c.l.b16 %v1343
      %v1360 = vunpack.c.l.b16 %v1344
      %v1361 = vunpack.c.l.b16 %v1345
      %v1362 = vunpack.c.l.b16 %v1346
      %v1363 = vunpack.c.l.b16 %v1347
      %v1364 = vunpack.c.l.b16 %v1348
      %v1365 = vunpack.c.l.b16 %v1349
      %v1366 = vunpack.c.l.b16 %v1350
      %v1367 = vpack.c.b16 %v1360, %v1359
      %v1368 = vpack.c.b16 %v1362, %v1361
      %v1369 = vpack.c.b16 %v1364, %v1363
      %v1370 = vpack.c.b16 %v1366, %v1365
      %1371 = vrot.lane.b32.xlu0 %v1253, 124
      %v1372 = vpop.permute.xlu0 %1371
      %1373 = vrot.lane.b32.xlu0 %v1254, 124
      %v1374 = vpop.permute.xlu0 %1373
      %v1378 = vsel %vm281, %v1367, 0
      %v1381 = vsel %vm281, %v1368, 0
      %v1384 = vsel %vm281, %v1369, 0
      %v1387 = vsel %vm281, %v1370, 0
      %1389 = vmatprep.subr.bf16.mxu0 0
      %1390 = vmatpush1.bf16.msra.mxu0 0
      %1391 = vmatprep.subr.bf16.mxu0 0
      %1392 = vmatpush1.bf16.msra.mxu0 0
      %1393 = vmatprep.subr.bf16.mxu0 0
      %1394 = vmatpush1.bf16.msra.mxu0 0
      %1395 = vmatprep.subr.bf16.mxu0 0
      %1396 = vmatpush1.bf16.msra.mxu0 0
      %1397 = vmatprep.subr.bf16.mxu0 0
      %1398 = vmatpush1.bf16.msra.mxu0 0
      %1399 = vmatprep.subr.bf16.mxu0 0
      %1400 = vmatpush1.bf16.msra.mxu0 0
      %1401 = vmatprep.subr.bf16.mxu0 0
      %1402 = vmatpush1.bf16.msra.mxu0 %v1374
      %1403 = vmatprep.subr.bf16.mxu0 0
      %1404 = vmatpush1.bf16.msra.mxu0 %v1372
      %1405 = vmatprep.subr.bf16.mxu0 0
      %1406 = vmatpush2.bf16.msra.mxu0 0
      %1407 = vmatprep.subr.bf16.mxu0 0
      %1408 = vmatpush2.bf16.msra.mxu0 0
      %1409 = vmatprep.subr.bf16.mxu0 0
      %1410 = vmatpush2.bf16.msra.mxu0 0
      %1411 = vmatprep.subr.bf16.mxu0 0
      %1412 = vmatpush2.bf16.msra.mxu0 0
      %1413 = vmatprep.subr.bf16.mxu0 0
      %1414 = vmatpush2.bf16.msra.mxu0 0
      %1415 = vmatprep.subr.bf16.mxu0 0
      %1416 = vmatpush2.bf16.msra.mxu0 0
      %1417 = vmatprep.subr.bf16.mxu0 0
      %1418 = vmatpush2.bf16.msra.mxu0 0
      %1419 = vmatprep.subr.bf16.mxu0 0
      %1420 = vmatpush2.bf16.msra.mxu0 0
      %1421 = vmatprep.mubr.bf16.mxu0 0
      %1422 = vmatmul.mubr.bf16.gmra.mxu0 %v1378
      %v1423 = vpop.f32.mrf.mxu0
      %v1424 = vadd.f32 0.0, %v1423
      %v1425 = vpop.f32.mrf.mxu0
      %v1426 = vpop.f32.mrf.mxu0
      %v1427 = vadd.f32 0.0, %v1426
      %v1428 = vpop.f32.mrf.mxu0
      %1429 = vmatprep.mubr.bf16.mxu0 0
      %1430 = vmatmul.mubr.bf16.gmra.mxu0 %v1381
      %v1431 = vpop.f32.mrf.mxu0
      %v1432 = vadd.f32 0.0, %v1431
      %v1433 = vpop.f32.mrf.mxu0
      %v1434 = vpop.f32.mrf.mxu0
      %v1435 = vadd.f32 0.0, %v1434
      %v1436 = vpop.f32.mrf.mxu0
      %1437 = vmatprep.mubr.bf16.mxu0 0
      %1438 = vmatmul.mubr.bf16.gmra.mxu0 %v1384
      %v1439 = vpop.f32.mrf.mxu0
      %v1440 = vadd.f32 0.0, %v1439
      %v1441 = vpop.f32.mrf.mxu0
      %v1442 = vpop.f32.mrf.mxu0
      %v1443 = vadd.f32 0.0, %v1442
      %v1444 = vpop.f32.mrf.mxu0
      %1445 = vmatprep.mubr.bf16.mxu0 0
      %1446 = vmatmul.mubr.bf16.gmra.mxu0 %v1387
      %v1447 = vpop.f32.mrf.mxu0
      %v1448 = vadd.f32 0.0, %v1447
      %v1449 = vpop.f32.mrf.mxu0
      %v1450 = vpop.f32.mrf.mxu0
      %v1451 = vadd.f32 0.0, %v1450
      %v1452 = vpop.f32.mrf.mxu0
      %1453 = vdwg.mxu0
      %v1454 = vadd.f32 %v1334, %v1424
      %v1455 = vadd.f32 %v1335, %v1427
      %v1456 = vadd.f32 %v1336, %v1432
      %v1457 = vadd.f32 %v1337, %v1435
      %v1458 = vadd.f32 %v1338, %v1440
      %v1459 = vadd.f32 %v1339, %v1443
      %v1460 = vadd.f32 %v1340, %v1448
      %v1461 = vadd.f32 %v1341, %v1451
      %s1462 = scalar_lea.vmem %s207, 80
      %v1463 = vld [vmem:[%s1462] sm:$0xf]
      %v1464 = vld [vmem:[%s1462 + $0x4] sm:$0xf]
      %v1465 = vld [vmem:[%s1462 + $0x8] sm:$0xf]
      %v1466 = vld [vmem:[%s1462 + $0xc] sm:$0xf]
      %s1467 = scalar_lea.vmem %s1, 192
      %v1468 = vld [vmem:[%s1467] sm:$0xf]
      %v1469 = vld [vmem:[%s1467 + $0x4] sm:$0xf]
      %v1470 = vld [vmem:[%s1467 + $0x8] sm:$0xf]
      %v1471 = vld [vmem:[%s1467 + $0xc] sm:$0xf]
      %v1472 = vld [vmem:[%s1467 + $0x10] sm:$0xf]
      %v1473 = vld [vmem:[%s1467 + $0x14] sm:$0xf]
      %v1474 = vld [vmem:[%s1467 + $0x18] sm:$0xf]
      %v1475 = vld [vmem:[%s1467 + $0x1c] sm:$0xf]
      %v1484 = vunpack.c.l.b16 %v1468
      %v1485 = vunpack.c.l.b16 %v1469
      %v1486 = vunpack.c.l.b16 %v1470
      %v1487 = vunpack.c.l.b16 %v1471
      %v1488 = vunpack.c.l.b16 %v1472
      %v1489 = vunpack.c.l.b16 %v1473
      %v1490 = vunpack.c.l.b16 %v1474
      %v1491 = vunpack.c.l.b16 %v1475
      %v1492 = vpack.c.b16 %v1485, %v1484
      %v1493 = vpack.c.b16 %v1487, %v1486
      %v1494 = vpack.c.b16 %v1489, %v1488
      %v1495 = vpack.c.b16 %v1491, %v1490
      %v1500 = vunpack.c.l.b16 %v1463
      %v1501 = vunpack.c.l.b16 %v1464
      %v1502 = vunpack.c.l.b16 %v1465
      %v1503 = vunpack.c.l.b16 %v1466
      %v1504 = vpack.c.b16 %v1501, %v1500
      %v1505 = vpack.c.b16 %v1503, %v1502
      %v1509 = vsel %vm281, %v1492, 0
      %v1512 = vsel %vm281, %v1493, 0
      %v1515 = vsel %vm281, %v1494, 0
      %v1518 = vsel %vm281, %v1495, 0
      %1520 = vmatprep.subr.bf16.mxu0 0
      %1521 = vmatpush1.bf16.msra.mxu0 0
      %1522 = vmatprep.subr.bf16.mxu0 0
      %1523 = vmatpush1.bf16.msra.mxu0 0
      %1524 = vmatprep.subr.bf16.mxu0 0
      %1525 = vmatpush1.bf16.msra.mxu0 0
      %1526 = vmatprep.subr.bf16.mxu0 0
      %1527 = vmatpush1.bf16.msra.mxu0 0
      %1528 = vmatprep.subr.bf16.mxu0 0
      %1529 = vmatpush1.bf16.msra.mxu0 0
      %1530 = vmatprep.subr.bf16.mxu0 0
      %1531 = vmatpush1.bf16.msra.mxu0 0
      %1532 = vmatprep.subr.bf16.mxu0 0
      %1533 = vmatpush1.bf16.msra.mxu0 %v1505
      %1534 = vmatprep.subr.bf16.mxu0 0
      %1535 = vmatpush1.bf16.msra.mxu0 %v1504
      %1536 = vmatprep.subr.bf16.mxu0 0
      %1537 = vmatpush2.bf16.msra.mxu0 0
      %1538 = vmatprep.subr.bf16.mxu0 0
      %1539 = vmatpush2.bf16.msra.mxu0 0
      %1540 = vmatprep.subr.bf16.mxu0 0
      %1541 = vmatpush2.bf16.msra.mxu0 0
      %1542 = vmatprep.subr.bf16.mxu0 0
      %1543 = vmatpush2.bf16.msra.mxu0 0
      %1544 = vmatprep.subr.bf16.mxu0 0
      %1545 = vmatpush2.bf16.msra.mxu0 0
      %1546 = vmatprep.subr.bf16.mxu0 0
      %1547 = vmatpush2.bf16.msra.mxu0 0
      %1548 = vmatprep.subr.bf16.mxu0 0
      %1549 = vmatpush2.bf16.msra.mxu0 0
      %1550 = vmatprep.subr.bf16.mxu0 0
      %1551 = vmatpush2.bf16.msra.mxu0 0
      %1552 = vmatprep.mubr.bf16.mxu0 0
      %1553 = vmatmul.mubr.bf16.gmra.mxu0 %v1509
      %v1554 = vpop.f32.mrf.mxu0
      %v1555 = vadd.f32 0.0, %v1554
      %v1556 = vpop.f32.mrf.mxu0
      %v1557 = vpop.f32.mrf.mxu0
      %v1558 = vadd.f32 0.0, %v1557
      %v1559 = vpop.f32.mrf.mxu0
      %1560 = vmatprep.mubr.bf16.mxu0 0
      %1561 = vmatmul.mubr.bf16.gmra.mxu0 %v1512
      %v1562 = vpop.f32.mrf.mxu0
      %v1563 = vadd.f32 0.0, %v1562
      %v1564 = vpop.f32.mrf.mxu0
      %v1565 = vpop.f32.mrf.mxu0
      %v1566 = vadd.f32 0.0, %v1565
      %v1567 = vpop.f32.mrf.mxu0
      %1568 = vmatprep.mubr.bf16.mxu0 0
      %1569 = vmatmul.mubr.bf16.gmra.mxu0 %v1515
      %v1570 = vpop.f32.mrf.mxu0
      %v1571 = vadd.f32 0.0, %v1570
      %v1572 = vpop.f32.mrf.mxu0
      %v1573 = vpop.f32.mrf.mxu0
      %v1574 = vadd.f32 0.0, %v1573
      %v1575 = vpop.f32.mrf.mxu0
      %1576 = vmatprep.mubr.bf16.mxu0 0
      %1577 = vmatmul.mubr.bf16.gmra.mxu0 %v1518
      %v1578 = vpop.f32.mrf.mxu0
      %v1579 = vadd.f32 0.0, %v1578
      %v1580 = vpop.f32.mrf.mxu0
      %v1581 = vpop.f32.mrf.mxu0
      %v1582 = vadd.f32 0.0, %v1581
      %v1583 = vpop.f32.mrf.mxu0
      %1584 = vdwg.mxu0
      %v1585 = vadd.f32 %v1454, %v1555
      %v1586 = vadd.f32 %v1455, %v1558
      %v1587 = vadd.f32 %v1456, %v1563
      %v1588 = vadd.f32 %v1457, %v1566
      %v1589 = vadd.f32 %v1458, %v1571
      %v1590 = vadd.f32 %v1459, %v1574
      %v1591 = vadd.f32 %v1460, %v1579
      %v1592 = vadd.f32 %v1461, %v1582
      %s1593 = scalar_lea.vmem %s1, 448
      %v1594 = vld [vmem:[%s1593] sm:$0xf]
      %v1595 = vld [vmem:[%s1593 + $0x4] sm:$0xf]
      %v1596 = vld [vmem:[%s1593 + $0x8] sm:$0xf]
      %v1597 = vld [vmem:[%s1593 + $0xc] sm:$0xf]
      %v1598 = vld [vmem:[%s1593 + $0x10] sm:$0xf]
      %v1599 = vld [vmem:[%s1593 + $0x14] sm:$0xf]
      %v1600 = vld [vmem:[%s1593 + $0x18] sm:$0xf]
      %v1601 = vld [vmem:[%s1593 + $0x1c] sm:$0xf]
      %v1610 = vunpack.c.l.b16 %v1594
      %v1611 = vunpack.c.l.b16 %v1595
      %v1612 = vunpack.c.l.b16 %v1596
      %v1613 = vunpack.c.l.b16 %v1597
      %v1614 = vunpack.c.l.b16 %v1598
      %v1615 = vunpack.c.l.b16 %v1599
      %v1616 = vunpack.c.l.b16 %v1600
      %v1617 = vunpack.c.l.b16 %v1601
      %v1618 = vpack.c.b16 %v1611, %v1610
      %v1619 = vpack.c.b16 %v1613, %v1612
      %v1620 = vpack.c.b16 %v1615, %v1614
      %v1621 = vpack.c.b16 %v1617, %v1616
      %1622 = vrot.lane.b32.xlu0 %v1504, 124
      %v1623 = vpop.permute.xlu0 %1622
      %1624 = vrot.lane.b32.xlu0 %v1505, 124
      %v1625 = vpop.permute.xlu0 %1624
      %v1629 = vsel %vm281, %v1618, 0
      %v1632 = vsel %vm281, %v1619, 0
      %v1635 = vsel %vm281, %v1620, 0
      %v1638 = vsel %vm281, %v1621, 0
      %1640 = vmatprep.subr.bf16.mxu0 0
      %1641 = vmatpush1.bf16.msra.mxu0 0
      %1642 = vmatprep.subr.bf16.mxu0 0
      %1643 = vmatpush1.bf16.msra.mxu0 0
      %1644 = vmatprep.subr.bf16.mxu0 0
      %1645 = vmatpush1.bf16.msra.mxu0 0
      %1646 = vmatprep.subr.bf16.mxu0 0
      %1647 = vmatpush1.bf16.msra.mxu0 0
      %1648 = vmatprep.subr.bf16.mxu0 0
      %1649 = vmatpush1.bf16.msra.mxu0 0
      %1650 = vmatprep.subr.bf16.mxu0 0
      %1651 = vmatpush1.bf16.msra.mxu0 0
      %1652 = vmatprep.subr.bf16.mxu0 0
      %1653 = vmatpush1.bf16.msra.mxu0 %v1625
      %1654 = vmatprep.subr.bf16.mxu0 0
      %1655 = vmatpush1.bf16.msra.mxu0 %v1623
      %1656 = vmatprep.subr.bf16.mxu0 0
      %1657 = vmatpush2.bf16.msra.mxu0 0
      %1658 = vmatprep.subr.bf16.mxu0 0
      %1659 = vmatpush2.bf16.msra.mxu0 0
      %1660 = vmatprep.subr.bf16.mxu0 0
      %1661 = vmatpush2.bf16.msra.mxu0 0
      %1662 = vmatprep.subr.bf16.mxu0 0
      %1663 = vmatpush2.bf16.msra.mxu0 0
      %1664 = vmatprep.subr.bf16.mxu0 0
      %1665 = vmatpush2.bf16.msra.mxu0 0
      %1666 = vmatprep.subr.bf16.mxu0 0
      %1667 = vmatpush2.bf16.msra.mxu0 0
      %1668 = vmatprep.subr.bf16.mxu0 0
      %1669 = vmatpush2.bf16.msra.mxu0 0
      %1670 = vmatprep.subr.bf16.mxu0 0
      %1671 = vmatpush2.bf16.msra.mxu0 0
      %1672 = vmatprep.mubr.bf16.mxu0 0
      %1673 = vmatmul.mubr.bf16.gmra.mxu0 %v1629
      %v1674 = vpop.f32.mrf.mxu0
      %v1675 = vadd.f32 0.0, %v1674
      %v1676 = vpop.f32.mrf.mxu0
      %v1677 = vpop.f32.mrf.mxu0
      %v1678 = vadd.f32 0.0, %v1677
      %v1679 = vpop.f32.mrf.mxu0
      %1680 = vmatprep.mubr.bf16.mxu0 0
      %1681 = vmatmul.mubr.bf16.gmra.mxu0 %v1632
      %v1682 = vpop.f32.mrf.mxu0
      %v1683 = vadd.f32 0.0, %v1682
      %v1684 = vpop.f32.mrf.mxu0
      %v1685 = vpop.f32.mrf.mxu0
      %v1686 = vadd.f32 0.0, %v1685
      %v1687 = vpop.f32.mrf.mxu0
      %1688 = vmatprep.mubr.bf16.mxu0 0
      %1689 = vmatmul.mubr.bf16.gmra.mxu0 %v1635
      %v1690 = vpop.f32.mrf.mxu0
      %v1691 = vadd.f32 0.0, %v1690
      %v1692 = vpop.f32.mrf.mxu0
      %v1693 = vpop.f32.mrf.mxu0
      %v1694 = vadd.f32 0.0, %v1693
      %v1695 = vpop.f32.mrf.mxu0
      %1696 = vmatprep.mubr.bf16.mxu0 0
      %1697 = vmatmul.mubr.bf16.gmra.mxu0 %v1638
      %v1698 = vpop.f32.mrf.mxu0
      %v1699 = vadd.f32 0.0, %v1698
      %v1700 = vpop.f32.mrf.mxu0
      %v1701 = vpop.f32.mrf.mxu0
      %v1702 = vadd.f32 0.0, %v1701
      %v1703 = vpop.f32.mrf.mxu0
      %1704 = vdwg.mxu0
      %v1705 = vadd.f32 %v1585, %v1675
      %v1706 = vadd.f32 %v1586, %v1678
      %v1707 = vadd.f32 %v1587, %v1683
      %v1708 = vadd.f32 %v1588, %v1686
      %v1709 = vadd.f32 %v1589, %v1691
      %v1710 = vadd.f32 %v1590, %v1694
      %v1711 = vadd.f32 %v1591, %v1699
      %v1712 = vadd.f32 %v1592, %v1702
      %s1713 = scalar_lea.vmem %s207, 96
      %v1714 = vld [vmem:[%s1713] sm:$0xf]
      %v1715 = vld [vmem:[%s1713 + $0x4] sm:$0xf]
      %v1716 = vld [vmem:[%s1713 + $0x8] sm:$0xf]
      %v1717 = vld [vmem:[%s1713 + $0xc] sm:$0xf]
      %s1718 = scalar_lea.vmem %s1, 160
      %v1719 = vld [vmem:[%s1718] sm:$0xf]
      %v1720 = vld [vmem:[%s1718 + $0x4] sm:$0xf]
      %v1721 = vld [vmem:[%s1718 + $0x8] sm:$0xf]
      %v1722 = vld [vmem:[%s1718 + $0xc] sm:$0xf]
      %v1723 = vld [vmem:[%s1718 + $0x10] sm:$0xf]
      %v1724 = vld [vmem:[%s1718 + $0x14] sm:$0xf]
      %v1725 = vld [vmem:[%s1718 + $0x18] sm:$0xf]
      %v1726 = vld [vmem:[%s1718 + $0x1c] sm:$0xf]
      %v1735 = vunpack.c.l.b16 %v1719
      %v1736 = vunpack.c.l.b16 %v1720
      %v1737 = vunpack.c.l.b16 %v1721
      %v1738 = vunpack.c.l.b16 %v1722
      %v1739 = vunpack.c.l.b16 %v1723
      %v1740 = vunpack.c.l.b16 %v1724
      %v1741 = vunpack.c.l.b16 %v1725
      %v1742 = vunpack.c.l.b16 %v1726
      %v1743 = vpack.c.b16 %v1736, %v1735
      %v1744 = vpack.c.b16 %v1738, %v1737
      %v1745 = vpack.c.b16 %v1740, %v1739
      %v1746 = vpack.c.b16 %v1742, %v1741
      %v1751 = vunpack.c.l.b16 %v1714
      %v1752 = vunpack.c.l.b16 %v1715
      %v1753 = vunpack.c.l.b16 %v1716
      %v1754 = vunpack.c.l.b16 %v1717
      %v1755 = vpack.c.b16 %v1752, %v1751
      %v1756 = vpack.c.b16 %v1754, %v1753
      %v1760 = vsel %vm281, %v1743, 0
      %v1763 = vsel %vm281, %v1744, 0
      %v1766 = vsel %vm281, %v1745, 0
      %v1769 = vsel %vm281, %v1746, 0
      %1771 = vmatprep.subr.bf16.mxu0 0
      %1772 = vmatpush1.bf16.msra.mxu0 0
      %1773 = vmatprep.subr.bf16.mxu0 0
      %1774 = vmatpush1.bf16.msra.mxu0 0
      %1775 = vmatprep.subr.bf16.mxu0 0
      %1776 = vmatpush1.bf16.msra.mxu0 0
      %1777 = vmatprep.subr.bf16.mxu0 0
      %1778 = vmatpush1.bf16.msra.mxu0 0
      %1779 = vmatprep.subr.bf16.mxu0 0
      %1780 = vmatpush1.bf16.msra.mxu0 0
      %1781 = vmatprep.subr.bf16.mxu0 0
      %1782 = vmatpush1.bf16.msra.mxu0 0
      %1783 = vmatprep.subr.bf16.mxu0 0
      %1784 = vmatpush1.bf16.msra.mxu0 %v1756
      %1785 = vmatprep.subr.bf16.mxu0 0
      %1786 = vmatpush1.bf16.msra.mxu0 %v1755
      %1787 = vmatprep.subr.bf16.mxu0 0
      %1788 = vmatpush2.bf16.msra.mxu0 0
      %1789 = vmatprep.subr.bf16.mxu0 0
      %1790 = vmatpush2.bf16.msra.mxu0 0
      %1791 = vmatprep.subr.bf16.mxu0 0
      %1792 = vmatpush2.bf16.msra.mxu0 0
      %1793 = vmatprep.subr.bf16.mxu0 0
      %1794 = vmatpush2.bf16.msra.mxu0 0
      %1795 = vmatprep.subr.bf16.mxu0 0
      %1796 = vmatpush2.bf16.msra.mxu0 0
      %1797 = vmatprep.subr.bf16.mxu0 0
      %1798 = vmatpush2.bf16.msra.mxu0 0
      %1799 = vmatprep.subr.bf16.mxu0 0
      %1800 = vmatpush2.bf16.msra.mxu0 0
      %1801 = vmatprep.subr.bf16.mxu0 0
      %1802 = vmatpush2.bf16.msra.mxu0 0
      %1803 = vmatprep.mubr.bf16.mxu0 0
      %1804 = vmatmul.mubr.bf16.gmra.mxu0 %v1760
      %v1805 = vpop.f32.mrf.mxu0
      %v1806 = vadd.f32 0.0, %v1805
      %v1807 = vpop.f32.mrf.mxu0
      %v1808 = vpop.f32.mrf.mxu0
      %v1809 = vadd.f32 0.0, %v1808
      %v1810 = vpop.f32.mrf.mxu0
      %1811 = vmatprep.mubr.bf16.mxu0 0
      %1812 = vmatmul.mubr.bf16.gmra.mxu0 %v1763
      %v1813 = vpop.f32.mrf.mxu0
      %v1814 = vadd.f32 0.0, %v1813
      %v1815 = vpop.f32.mrf.mxu0
      %v1816 = vpop.f32.mrf.mxu0
      %v1817 = vadd.f32 0.0, %v1816
      %v1818 = vpop.f32.mrf.mxu0
      %1819 = vmatprep.mubr.bf16.mxu0 0
      %1820 = vmatmul.mubr.bf16.gmra.mxu0 %v1766
      %v1821 = vpop.f32.mrf.mxu0
      %v1822 = vadd.f32 0.0, %v1821
      %v1823 = vpop.f32.mrf.mxu0
      %v1824 = vpop.f32.mrf.mxu0
      %v1825 = vadd.f32 0.0, %v1824
      %v1826 = vpop.f32.mrf.mxu0
      %1827 = vmatprep.mubr.bf16.mxu0 0
      %1828 = vmatmul.mubr.bf16.gmra.mxu0 %v1769
      %v1829 = vpop.f32.mrf.mxu0
      %v1830 = vadd.f32 0.0, %v1829
      %v1831 = vpop.f32.mrf.mxu0
      %v1832 = vpop.f32.mrf.mxu0
      %v1833 = vadd.f32 0.0, %v1832
      %v1834 = vpop.f32.mrf.mxu0
      %1835 = vdwg.mxu0
      %v1836 = vadd.f32 %v1705, %v1806
      %v1837 = vadd.f32 %v1706, %v1809
      %v1838 = vadd.f32 %v1707, %v1814
      %v1839 = vadd.f32 %v1708, %v1817
      %v1840 = vadd.f32 %v1709, %v1822
      %v1841 = vadd.f32 %v1710, %v1825
      %v1842 = vadd.f32 %v1711, %v1830
      %v1843 = vadd.f32 %v1712, %v1833
      %s1844 = scalar_lea.vmem %s1, 416
      %v1845 = vld [vmem:[%s1844] sm:$0xf]
      %v1846 = vld [vmem:[%s1844 + $0x4] sm:$0xf]
      %v1847 = vld [vmem:[%s1844 + $0x8] sm:$0xf]
      %v1848 = vld [vmem:[%s1844 + $0xc] sm:$0xf]
      %v1849 = vld [vmem:[%s1844 + $0x10] sm:$0xf]
      %v1850 = vld [vmem:[%s1844 + $0x14] sm:$0xf]
      %v1851 = vld [vmem:[%s1844 + $0x18] sm:$0xf]
      %v1852 = vld [vmem:[%s1844 + $0x1c] sm:$0xf]
      %v1861 = vunpack.c.l.b16 %v1845
      %v1862 = vunpack.c.l.b16 %v1846
      %v1863 = vunpack.c.l.b16 %v1847
      %v1864 = vunpack.c.l.b16 %v1848
      %v1865 = vunpack.c.l.b16 %v1849
      %v1866 = vunpack.c.l.b16 %v1850
      %v1867 = vunpack.c.l.b16 %v1851
      %v1868 = vunpack.c.l.b16 %v1852
      %v1869 = vpack.c.b16 %v1862, %v1861
      %v1870 = vpack.c.b16 %v1864, %v1863
      %v1871 = vpack.c.b16 %v1866, %v1865
      %v1872 = vpack.c.b16 %v1868, %v1867
      %1873 = vrot.lane.b32.xlu0 %v1755, 124
      %v1874 = vpop.permute.xlu0 %1873
      %1875 = vrot.lane.b32.xlu0 %v1756, 124
      %v1876 = vpop.permute.xlu0 %1875
      %v1880 = vsel %vm281, %v1869, 0
      %v1883 = vsel %vm281, %v1870, 0
      %v1886 = vsel %vm281, %v1871, 0
      %v1889 = vsel %vm281, %v1872, 0
      %1891 = vmatprep.subr.bf16.mxu0 0
      %1892 = vmatpush1.bf16.msra.mxu0 0
      %1893 = vmatprep.subr.bf16.mxu0 0
      %1894 = vmatpush1.bf16.msra.mxu0 0
      %1895 = vmatprep.subr.bf16.mxu0 0
      %1896 = vmatpush1.bf16.msra.mxu0 0
      %1897 = vmatprep.subr.bf16.mxu0 0
      %1898 = vmatpush1.bf16.msra.mxu0 0
      %1899 = vmatprep.subr.bf16.mxu0 0
      %1900 = vmatpush1.bf16.msra.mxu0 0
      %1901 = vmatprep.subr.bf16.mxu0 0
      %1902 = vmatpush1.bf16.msra.mxu0 0
      %1903 = vmatprep.subr.bf16.mxu0 0
      %1904 = vmatpush1.bf16.msra.mxu0 %v1876
      %1905 = vmatprep.subr.bf16.mxu0 0
      %1906 = vmatpush1.bf16.msra.mxu0 %v1874
      %1907 = vmatprep.subr.bf16.mxu0 0
      %1908 = vmatpush2.bf16.msra.mxu0 0
      %1909 = vmatprep.subr.bf16.mxu0 0
      %1910 = vmatpush2.bf16.msra.mxu0 0
      %1911 = vmatprep.subr.bf16.mxu0 0
      %1912 = vmatpush2.bf16.msra.mxu0 0
      %1913 = vmatprep.subr.bf16.mxu0 0
      %1914 = vmatpush2.bf16.msra.mxu0 0
      %1915 = vmatprep.subr.bf16.mxu0 0
      %1916 = vmatpush2.bf16.msra.mxu0 0
      %1917 = vmatprep.subr.bf16.mxu0 0
      %1918 = vmatpush2.bf16.msra.mxu0 0
      %1919 = vmatprep.subr.bf16.mxu0 0
      %1920 = vmatpush2.bf16.msra.mxu0 0
      %1921 = vmatprep.subr.bf16.mxu0 0
      %1922 = vmatpush2.bf16.msra.mxu0 0
      %1923 = vmatprep.mubr.bf16.mxu0 0
      %1924 = vmatmul.mubr.bf16.gmra.mxu0 %v1880
      %v1925 = vpop.f32.mrf.mxu0
      %v1926 = vadd.f32 0.0, %v1925
      %v1927 = vpop.f32.mrf.mxu0
      %v1928 = vpop.f32.mrf.mxu0
      %v1929 = vadd.f32 0.0, %v1928
      %v1930 = vpop.f32.mrf.mxu0
      %1931 = vmatprep.mubr.bf16.mxu0 0
      %1932 = vmatmul.mubr.bf16.gmra.mxu0 %v1883
      %v1933 = vpop.f32.mrf.mxu0
      %v1934 = vadd.f32 0.0, %v1933
      %v1935 = vpop.f32.mrf.mxu0
      %v1936 = vpop.f32.mrf.mxu0
      %v1937 = vadd.f32 0.0, %v1936
      %v1938 = vpop.f32.mrf.mxu0
      %1939 = vmatprep.mubr.bf16.mxu0 0
      %1940 = vmatmul.mubr.bf16.gmra.mxu0 %v1886
      %v1941 = vpop.f32.mrf.mxu0
      %v1942 = vadd.f32 0.0, %v1941
      %v1943 = vpop.f32.mrf.mxu0
      %v1944 = vpop.f32.mrf.mxu0
      %v1945 = vadd.f32 0.0, %v1944
      %v1946 = vpop.f32.mrf.mxu0
      %1947 = vmatprep.mubr.bf16.mxu0 0
      %1948 = vmatmul.mubr.bf16.gmra.mxu0 %v1889
      %v1949 = vpop.f32.mrf.mxu0
      %v1950 = vadd.f32 0.0, %v1949
      %v1951 = vpop.f32.mrf.mxu0
      %v1952 = vpop.f32.mrf.mxu0
      %v1953 = vadd.f32 0.0, %v1952
      %v1954 = vpop.f32.mrf.mxu0
      %1955 = vdwg.mxu0
      %v1956 = vadd.f32 %v1836, %v1926
      %v1957 = vadd.f32 %v1837, %v1929
      %v1958 = vadd.f32 %v1838, %v1934
      %v1959 = vadd.f32 %v1839, %v1937
      %v1960 = vadd.f32 %v1840, %v1942
      %v1961 = vadd.f32 %v1841, %v1945
      %v1962 = vadd.f32 %v1842, %v1950
      %v1963 = vadd.f32 %v1843, %v1953
      %s1964 = scalar_lea.vmem %s207, 112
      %v1965 = vld [vmem:[%s1964] sm:$0xf]
      %v1966 = vld [vmem:[%s1964 + $0x4] sm:$0xf]
      %v1967 = vld [vmem:[%s1964 + $0x8] sm:$0xf]
      %v1968 = vld [vmem:[%s1964 + $0xc] sm:$0xf]
      %s1969 = scalar_lea.vmem %s1, 224
      %v1970 = vld [vmem:[%s1969] sm:$0xf]
      %v1971 = vld [vmem:[%s1969 + $0x4] sm:$0xf]
      %v1972 = vld [vmem:[%s1969 + $0x8] sm:$0xf]
      %v1973 = vld [vmem:[%s1969 + $0xc] sm:$0xf]
      %v1974 = vld [vmem:[%s1969 + $0x10] sm:$0xf]
      %v1975 = vld [vmem:[%s1969 + $0x14] sm:$0xf]
      %v1976 = vld [vmem:[%s1969 + $0x18] sm:$0xf]
      %v1977 = vld [vmem:[%s1969 + $0x1c] sm:$0xf]
      %v1986 = vunpack.c.l.b16 %v1970
      %v1987 = vunpack.c.l.b16 %v1971
      %v1988 = vunpack.c.l.b16 %v1972
      %v1989 = vunpack.c.l.b16 %v1973
      %v1990 = vunpack.c.l.b16 %v1974
      %v1991 = vunpack.c.l.b16 %v1975
      %v1992 = vunpack.c.l.b16 %v1976
      %v1993 = vunpack.c.l.b16 %v1977
      %v1994 = vpack.c.b16 %v1987, %v1986
      %v1995 = vpack.c.b16 %v1989, %v1988
      %v1996 = vpack.c.b16 %v1991, %v1990
      %v1997 = vpack.c.b16 %v1993, %v1992
      %v2002 = vunpack.c.l.b16 %v1965
      %v2003 = vunpack.c.l.b16 %v1966
      %v2004 = vunpack.c.l.b16 %v1967
      %v2005 = vunpack.c.l.b16 %v1968
      %v2006 = vpack.c.b16 %v2003, %v2002
      %v2007 = vpack.c.b16 %v2005, %v2004
      %v2011 = vsel %vm281, %v1994, 0
      %v2014 = vsel %vm281, %v1995, 0
      %v2017 = vsel %vm281, %v1996, 0
      %v2020 = vsel %vm281, %v1997, 0
      %2022 = vmatprep.subr.bf16.mxu0 0
      %2023 = vmatpush1.bf16.msra.mxu0 0
      %2024 = vmatprep.subr.bf16.mxu0 0
      %2025 = vmatpush1.bf16.msra.mxu0 0
      %2026 = vmatprep.subr.bf16.mxu0 0
      %2027 = vmatpush1.bf16.msra.mxu0 0
      %2028 = vmatprep.subr.bf16.mxu0 0
      %2029 = vmatpush1.bf16.msra.mxu0 0
      %2030 = vmatprep.subr.bf16.mxu0 0
      %2031 = vmatpush1.bf16.msra.mxu0 0
      %2032 = vmatprep.subr.bf16.mxu0 0
      %2033 = vmatpush1.bf16.msra.mxu0 0
      %2034 = vmatprep.subr.bf16.mxu0 0
      %2035 = vmatpush1.bf16.msra.mxu0 %v2007
      %2036 = vmatprep.subr.bf16.mxu0 0
      %2037 = vmatpush1.bf16.msra.mxu0 %v2006
      %2038 = vmatprep.subr.bf16.mxu0 0
      %2039 = vmatpush2.bf16.msra.mxu0 0
      %2040 = vmatprep.subr.bf16.mxu0 0
      %2041 = vmatpush2.bf16.msra.mxu0 0
      %2042 = vmatprep.subr.bf16.mxu0 0
      %2043 = vmatpush2.bf16.msra.mxu0 0
      %2044 = vmatprep.subr.bf16.mxu0 0
      %2045 = vmatpush2.bf16.msra.mxu0 0
      %2046 = vmatprep.subr.bf16.mxu0 0
      %2047 = vmatpush2.bf16.msra.mxu0 0
      %2048 = vmatprep.subr.bf16.mxu0 0
      %2049 = vmatpush2.bf16.msra.mxu0 0
      %2050 = vmatprep.subr.bf16.mxu0 0
      %2051 = vmatpush2.bf16.msra.mxu0 0
      %2052 = vmatprep.subr.bf16.mxu0 0
      %2053 = vmatpush2.bf16.msra.mxu0 0
      %2054 = vmatprep.mubr.bf16.mxu0 0
      %2055 = vmatmul.mubr.bf16.gmra.mxu0 %v2011
      %v2056 = vpop.f32.mrf.mxu0
      %v2057 = vadd.f32 0.0, %v2056
      %v2058 = vpop.f32.mrf.mxu0
      %v2059 = vpop.f32.mrf.mxu0
      %v2060 = vadd.f32 0.0, %v2059
      %v2061 = vpop.f32.mrf.mxu0
      %2062 = vmatprep.mubr.bf16.mxu0 0
      %2063 = vmatmul.mubr.bf16.gmra.mxu0 %v2014
      %v2064 = vpop.f32.mrf.mxu0
      %v2065 = vadd.f32 0.0, %v2064
      %v2066 = vpop.f32.mrf.mxu0
      %v2067 = vpop.f32.mrf.mxu0
      %v2068 = vadd.f32 0.0, %v2067
      %v2069 = vpop.f32.mrf.mxu0
      %2070 = vmatprep.mubr.bf16.mxu0 0
      %2071 = vmatmul.mubr.bf16.gmra.mxu0 %v2017
      %v2072 = vpop.f32.mrf.mxu0
      %v2073 = vadd.f32 0.0, %v2072
      %v2074 = vpop.f32.mrf.mxu0
      %v2075 = vpop.f32.mrf.mxu0
      %v2076 = vadd.f32 0.0, %v2075
      %v2077 = vpop.f32.mrf.mxu0
      %2078 = vmatprep.mubr.bf16.mxu0 0
      %2079 = vmatmul.mubr.bf16.gmra.mxu0 %v2020
      %v2080 = vpop.f32.mrf.mxu0
      %v2081 = vadd.f32 0.0, %v2080
      %v2082 = vpop.f32.mrf.mxu0
      %v2083 = vpop.f32.mrf.mxu0
      %v2084 = vadd.f32 0.0, %v2083
      %v2085 = vpop.f32.mrf.mxu0
      %2086 = vdwg.mxu0
      %v2087 = vadd.f32 %v1956, %v2057
      %v2088 = vadd.f32 %v1957, %v2060
      %v2089 = vadd.f32 %v1958, %v2065
      %v2090 = vadd.f32 %v1959, %v2068
      %v2091 = vadd.f32 %v1960, %v2073
      %v2092 = vadd.f32 %v1961, %v2076
      %v2093 = vadd.f32 %v1962, %v2081
      %v2094 = vadd.f32 %v1963, %v2084
      %s2095 = scalar_lea.vmem %s1, 480
      %v2096 = vld [vmem:[%s2095] sm:$0xf]
      %v2097 = vld [vmem:[%s2095 + $0x4] sm:$0xf]
      %v2098 = vld [vmem:[%s2095 + $0x8] sm:$0xf]
      %v2099 = vld [vmem:[%s2095 + $0xc] sm:$0xf]
      %v2100 = vld [vmem:[%s2095 + $0x10] sm:$0xf]
      %v2101 = vld [vmem:[%s2095 + $0x14] sm:$0xf]
      %v2102 = vld [vmem:[%s2095 + $0x18] sm:$0xf]
      %v2103 = vld [vmem:[%s2095 + $0x1c] sm:$0xf]
      %v2112 = vunpack.c.l.b16 %v2096
      %v2113 = vunpack.c.l.b16 %v2097
      %v2114 = vunpack.c.l.b16 %v2098
      %v2115 = vunpack.c.l.b16 %v2099
      %v2116 = vunpack.c.l.b16 %v2100
      %v2117 = vunpack.c.l.b16 %v2101
      %v2118 = vunpack.c.l.b16 %v2102
      %v2119 = vunpack.c.l.b16 %v2103
      %v2120 = vpack.c.b16 %v2113, %v2112
      %v2121 = vpack.c.b16 %v2115, %v2114
      %v2122 = vpack.c.b16 %v2117, %v2116
      %v2123 = vpack.c.b16 %v2119, %v2118
      %2124 = vrot.lane.b32.xlu0 %v2006, 124
      %v2125 = vpop.permute.xlu0 %2124
      %2126 = vrot.lane.b32.xlu0 %v2007, 124
      %v2127 = vpop.permute.xlu0 %2126
      %v2131 = vsel %vm281, %v2120, 0
      %v2134 = vsel %vm281, %v2121, 0
      %v2137 = vsel %vm281, %v2122, 0
      %v2140 = vsel %vm281, %v2123, 0
      %2142 = vmatprep.subr.bf16.mxu0 0
      %2143 = vmatpush1.bf16.msra.mxu0 0
      %2144 = vmatprep.subr.bf16.mxu0 0
      %2145 = vmatpush1.bf16.msra.mxu0 0
      %2146 = vmatprep.subr.bf16.mxu0 0
      %2147 = vmatpush1.bf16.msra.mxu0 0
      %2148 = vmatprep.subr.bf16.mxu0 0
      %2149 = vmatpush1.bf16.msra.mxu0 0
      %2150 = vmatprep.subr.bf16.mxu0 0
      %2151 = vmatpush1.bf16.msra.mxu0 0
      %2152 = vmatprep.subr.bf16.mxu0 0
      %2153 = vmatpush1.bf16.msra.mxu0 0
      %2154 = vmatprep.subr.bf16.mxu0 0
      %2155 = vmatpush1.bf16.msra.mxu0 %v2127
      %2156 = vmatprep.subr.bf16.mxu0 0
      %2157 = vmatpush1.bf16.msra.mxu0 %v2125
      %2158 = vmatprep.subr.bf16.mxu0 0
      %2159 = vmatpush2.bf16.msra.mxu0 0
      %2160 = vmatprep.subr.bf16.mxu0 0
      %2161 = vmatpush2.bf16.msra.mxu0 0
      %2162 = vmatprep.subr.bf16.mxu0 0
      %2163 = vmatpush2.bf16.msra.mxu0 0
      %2164 = vmatprep.subr.bf16.mxu0 0
      %2165 = vmatpush2.bf16.msra.mxu0 0
      %2166 = vmatprep.subr.bf16.mxu0 0
      %2167 = vmatpush2.bf16.msra.mxu0 0
      %2168 = vmatprep.subr.bf16.mxu0 0
      %2169 = vmatpush2.bf16.msra.mxu0 0
      %2170 = vmatprep.subr.bf16.mxu0 0
      %2171 = vmatpush2.bf16.msra.mxu0 0
      %2172 = vmatprep.subr.bf16.mxu0 0
      %2173 = vmatpush2.bf16.msra.mxu0 0
      %2174 = vmatprep.mubr.bf16.mxu0 0
      %2175 = vmatmul.mubr.bf16.gmra.mxu0 %v2131
      %v2176 = vpop.f32.mrf.mxu0
      %v2177 = vadd.f32 0.0, %v2176
      %v2178 = vpop.f32.mrf.mxu0
      %v2179 = vpop.f32.mrf.mxu0
      %v2180 = vadd.f32 0.0, %v2179
      %v2181 = vpop.f32.mrf.mxu0
      %2182 = vmatprep.mubr.bf16.mxu0 0
      %2183 = vmatmul.mubr.bf16.gmra.mxu0 %v2134
      %v2184 = vpop.f32.mrf.mxu0
      %v2185 = vadd.f32 0.0, %v2184
      %v2186 = vpop.f32.mrf.mxu0
      %v2187 = vpop.f32.mrf.mxu0
      %v2188 = vadd.f32 0.0, %v2187
      %v2189 = vpop.f32.mrf.mxu0
      %2190 = vmatprep.mubr.bf16.mxu0 0
      %2191 = vmatmul.mubr.bf16.gmra.mxu0 %v2137
      %v2192 = vpop.f32.mrf.mxu0
      %v2193 = vadd.f32 0.0, %v2192
      %v2194 = vpop.f32.mrf.mxu0
      %v2195 = vpop.f32.mrf.mxu0
      %v2196 = vadd.f32 0.0, %v2195
      %v2197 = vpop.f32.mrf.mxu0
      %2198 = vmatprep.mubr.bf16.mxu0 0
      %2199 = vmatmul.mubr.bf16.gmra.mxu0 %v2140
      %v2200 = vpop.f32.mrf.mxu0
      %v2201 = vadd.f32 0.0, %v2200
      %v2202 = vpop.f32.mrf.mxu0
      %v2203 = vpop.f32.mrf.mxu0
      %v2204 = vadd.f32 0.0, %v2203
      %v2205 = vpop.f32.mrf.mxu0
      %2206 = vdwg.mxu0
      %v2207 = vadd.f32 %v2087, %v2177
      %v2208 = vadd.f32 %v2088, %v2180
      %v2209 = vadd.f32 %v2089, %v2185
      %v2210 = vadd.f32 %v2090, %v2188
      %v2211 = vadd.f32 %v2091, %v2193
      %v2212 = vadd.f32 %v2092, %v2196
      %v2213 = vadd.f32 %v2093, %v2201
      %v2214 = vadd.f32 %v2094, %v2204
      %vm2215 = vcmask 130048
      %v2216 = vsel %vm2215, %v2207, 0.0
      %2217 = vadd.xlane.f32.xlu0 %v2216
      %v2218 = vpop.xlane.xlu0 %2217
      %v2219 = vsel %vm2215, %v2208, 0.0
      %2220 = vadd.xlane.f32.xlu0 %v2219
      %v2221 = vpop.xlane.xlu0 %2220
      %v2222 = vsel %vm2215, %v2209, 0.0
      %2223 = vadd.xlane.f32.xlu0 %v2222
      %v2224 = vpop.xlane.xlu0 %2223
      %v2225 = vsel %vm2215, %v2210, 0.0
      %2226 = vadd.xlane.f32.xlu0 %v2225
      %v2227 = vpop.xlane.xlu0 %2226
      %v2228 = vsel %vm2215, %v2211, 0.0
      %2229 = vadd.xlane.f32.xlu0 %v2228
      %v2230 = vpop.xlane.xlu0 %2229
      %v2231 = vsel %vm2215, %v2212, 0.0
      %2232 = vadd.xlane.f32.xlu0 %v2231
      %v2233 = vpop.xlane.xlu0 %2232
      %v2234 = vsel %vm2215, %v2213, 0.0
      %2235 = vadd.xlane.f32.xlu0 %v2234
      %v2236 = vpop.xlane.xlu0 %2235
      %v2237 = vsel %vm2215, %v2214, 0.0
      %2238 = vadd.xlane.f32.xlu0 %v2237
      %v2239 = vpop.xlane.xlu0 %2238
      %vm2240 = vcmask 7168
      %2241 = vst.msk [vmem:[%s217] sm:$0xff] %vm2240, %v2218
      %2242 = vst.msk [vmem:[%s217 + $0x8] sm:$0xff] %vm2240, %v2221
      %2243 = vst.msk [vmem:[%s217 + $0x10] sm:$0xff] %vm2240, %v2224
      %2244 = vst.msk [vmem:[%s217 + $0x18] sm:$0xff] %vm2240, %v2227
      %2245 = vst.msk [vmem:[%s217 + $0x20] sm:$0xff] %vm2240, %v2230
      %2246 = vst.msk [vmem:[%s217 + $0x28] sm:$0xff] %vm2240, %v2233
      %2247 = vst.msk [vmem:[%s217 + $0x30] sm:$0xff] %vm2240, %v2236
      %2248 = vst.msk [vmem:[%s217 + $0x38] sm:$0xff] %vm2240, %v2239
      %v2249 = vmul.f32 %v2207, %v2207
      %v2250 = vmul.f32 %v2208, %v2208
      %v2251 = vmul.f32 %v2209, %v2209
      %v2252 = vmul.f32 %v2210, %v2210
      %v2253 = vmul.f32 %v2211, %v2211
      %v2254 = vmul.f32 %v2212, %v2212
      %v2255 = vmul.f32 %v2213, %v2213
      %v2256 = vmul.f32 %v2214, %v2214
      %v2257 = vsel %vm2215, %v2249, 0.0
      %2258 = vadd.xlane.f32.xlu0 %v2257
      %v2259 = vpop.xlane.xlu0 %2258
      %v2260 = vsel %vm2215, %v2250, 0.0
      %2261 = vadd.xlane.f32.xlu0 %v2260
      %v2262 = vpop.xlane.xlu0 %2261
      %v2263 = vsel %vm2215, %v2251, 0.0
      %2264 = vadd.xlane.f32.xlu0 %v2263
      %v2265 = vpop.xlane.xlu0 %2264
      %v2266 = vsel %vm2215, %v2252, 0.0
      %2267 = vadd.xlane.f32.xlu0 %v2266
      %v2268 = vpop.xlane.xlu0 %2267
      %v2269 = vsel %vm2215, %v2253, 0.0
      %2270 = vadd.xlane.f32.xlu0 %v2269
      %v2271 = vpop.xlane.xlu0 %2270
      %v2272 = vsel %vm2215, %v2254, 0.0
      %2273 = vadd.xlane.f32.xlu0 %v2272
      %v2274 = vpop.xlane.xlu0 %2273
      %v2275 = vsel %vm2215, %v2255, 0.0
      %2276 = vadd.xlane.f32.xlu0 %v2275
      %v2277 = vpop.xlane.xlu0 %2276
      %v2278 = vsel %vm2215, %v2256, 0.0
      %2279 = vadd.xlane.f32.xlu0 %v2278
      %v2280 = vpop.xlane.xlu0 %2279
      %2281 = vst.msk [vmem:[%s222] sm:$0xff] %vm2240, %v2259
      %2282 = vst.msk [vmem:[%s222 + $0x8] sm:$0xff] %vm2240, %v2262
      %2283 = vst.msk [vmem:[%s222 + $0x10] sm:$0xff] %vm2240, %v2265
      %2284 = vst.msk [vmem:[%s222 + $0x18] sm:$0xff] %vm2240, %v2268
      %2285 = vst.msk [vmem:[%s222 + $0x20] sm:$0xff] %vm2240, %v2271
      %2286 = vst.msk [vmem:[%s222 + $0x28] sm:$0xff] %vm2240, %v2274
      %2287 = vst.msk [vmem:[%s222 + $0x30] sm:$0xff] %vm2240, %v2277
      %2288 = vst.msk [vmem:[%s222 + $0x38] sm:$0xff] %vm2240, %v2280
      %v2289 = vpack.c.bf16 %v2208, %v2207
      %v2290 = vpack.c.bf16 %v2210, %v2209
      %v2291 = vpack.c.bf16 %v2212, %v2211
      %v2292 = vpack.c.bf16 %v2214, %v2213
      %v2297 = vunpack.c.l.b16 %v2289
      %v2298 = vunpack.c.h.b16 %v2289
      %v2299 = vunpack.c.l.b16 %v2290
      %v2300 = vunpack.c.h.b16 %v2290
      %v2301 = vunpack.c.l.b16 %v2291
      %v2302 = vunpack.c.h.b16 %v2291
      %v2303 = vunpack.c.l.b16 %v2292
      %v2304 = vunpack.c.h.b16 %v2292
      %v2305 = vpack.c.b16 %v2297, %v2297
      %v2306 = vpack.c.b16 %v2298, %v2298
      %v2307 = vpack.c.b16 %v2299, %v2299
      %v2308 = vpack.c.b16 %v2300, %v2300
      %v2309 = vpack.c.b16 %v2301, %v2301
      %v2310 = vpack.c.b16 %v2302, %v2302
      %v2311 = vpack.c.b16 %v2303, %v2303
      %v2312 = vpack.c.b16 %v2304, %v2304
      %vm2321 = vcmask 125952
      %2322 = vst.msk [vmem:[%s212] sm:$0xf] %vm2321, %v2305
      %2323 = vst.msk [vmem:[%s212 + $0x4] sm:$0xf] %vm2321, %v2306
      %2324 = vst.msk [vmem:[%s212 + $0x8] sm:$0xf] %vm2321, %v2307
      %2325 = vst.msk [vmem:[%s212 + $0xc] sm:$0xf] %vm2321, %v2308
      %2326 = vst.msk [vmem:[%s212 + $0x10] sm:$0xf] %vm2321, %v2309
      %2327 = vst.msk [vmem:[%s212 + $0x14] sm:$0xf] %vm2321, %v2310
      %2328 = vst.msk [vmem:[%s212 + $0x18] sm:$0xf] %vm2321, %v2311
      %2329 = vst.msk [vmem:[%s212 + $0x1c] sm:$0xf] %vm2321, %v2312
      %p2330 = scmp.lt.s32.totalorder %s16, 1
      %s2331 = scalar_select %p2330, %s16, 1
      %s2332 = smul.addr %s2331, 8
      %s2333 = smul.addr %s2332, 4
      %s2334 = scalar_lea.vmem %s2, %s2333
      %p2335 = scmp.lt.s32.totalorder %s16, 1
      %s2336 = scalar_select %p2335, %s16, 1
      %s2337 = smul.addr %s2336, 8
      %s2338 = smul.addr %s2337, 8
      %s2339 = scalar_lea.vmem %s3, %s2338
      %p2340 = scmp.lt.s32.totalorder %s16, 1
      %s2341 = scalar_select %p2340, %s16, 1
      %s2342 = smul.addr %s2341, 8
      %s2343 = smul.addr %s2342, 8
      %s2344 = scalar_lea.vmem %s4, %s2343
      // Predicated region
      $region29: #{discriminator_forward.8} parent=27 // pred_check
        %p2345 = pneg %p81
      $region30: #{discriminator_forward.8} parent=27 // pred_check_branch
        %2347 = sbr.rel (%p2345) target = $region32
      $region31: #{discriminator_forward.8} parent=27 // pred_region
        _
      $region32: #{discriminator_forward.8} parent=27 // pred_fallthru
        _
      // Predicated region
      $region33: #{discriminator_forward.8} parent=27 // pred_check
        %p2348 = pneg %p107
      $region34: #{discriminator_forward.8} parent=27 // pred_check_branch
        %2350 = sbr.rel (%p2348) target = $region36
      $region35: #{discriminator_forward.8} parent=27 // pred_region
        _
      $region36: #{discriminator_forward.8} parent=27 // pred_fallthru
        _
      // Predicated region
      $region37: #{discriminator_forward.8} parent=27 // pred_check
        %p2351 = pneg %p133
      $region38: #{discriminator_forward.8} parent=27 // pred_check_branch
        %2353 = sbr.rel (%p2351) target = $region40
      $region39: #{discriminator_forward.8} parent=27 // pred_region
        _
      $region40: #{discriminator_forward.8} parent=27 // pred_fallthru
        _
    $region28: #{discriminator_forward.8} parent=5 // pred_fallthru
      _
    %p2354 = scmp.le.s32.totalorder 2, %s11
    // Predicated region
    $region41: #{discriminator_forward.8} parent=5 // pred_check
      %p2355 = pneg %p2354
    $region42: #{discriminator_forward.8} parent=5 // pred_check_branch
      %2357 = sbr.rel (%p2355) target = $region44
    $region43: #{discriminator_forward.8} parent=5 // pred_region
      %s2358 = ssub.s32 %s11, 2
      // Predicated region
      $region45: #{discriminator_forward.8} parent=43 // pred_check
        %p2359 = pneg %p87
      $region46: #{discriminator_forward.8} parent=43 // pred_check_branch
        %2361 = sbr.rel (%p2359) target = $region48
      $region47: #{discriminator_forward.8} parent=43 // pred_region
        %p2362 = scmp.lt.s32.totalorder %s17, 1
        %s2363 = scalar_select %p2362, %s17, 1
        %s2364 = smul.addr %s2363, 8
        %s2365 = smul.addr %s2364, 4
        %s2366 = scalar_lea.vmem %s2, %s2365
      $region48: #{discriminator_forward.8} parent=43 // pred_fallthru
        _
      // Predicated region
      $region49: #{discriminator_forward.8} parent=43 // pred_check
        %p2367 = pneg %p113
      $region50: #{discriminator_forward.8} parent=43 // pred_check_branch
        %2369 = sbr.rel (%p2367) target = $region52
      $region51: #{discriminator_forward.8} parent=43 // pred_region
        %p2370 = scmp.lt.s32.totalorder %s17, 1
        %s2371 = scalar_select %p2370, %s17, 1
        %s2372 = smul.addr %s2371, 8
        %s2373 = smul.addr %s2372, 8
        %s2374 = scalar_lea.vmem %s3, %s2373
      $region52: #{discriminator_forward.8} parent=43 // pred_fallthru
        _
      // Predicated region
      $region53: #{discriminator_forward.8} parent=43 // pred_check
        %p2375 = pneg %p139
      $region54: #{discriminator_forward.8} parent=43 // pred_check_branch
        %2377 = sbr.rel (%p2375) target = $region56
      $region55: #{discriminator_forward.8} parent=43 // pred_region
        %p2378 = scmp.lt.s32.totalorder %s17, 1
        %s2379 = scalar_select %p2378, %s17, 1
        %s2380 = smul.addr %s2379, 8
        %s2381 = smul.addr %s2380, 8
        %s2382 = scalar_lea.vmem %s4, %s2381
      $region56: #{discriminator_forward.8} parent=43 // pred_fallthru
        _
    $region44: #{discriminator_forward.8} parent=5 // pred_fallthru
      _
  $region6: #{discriminator_forward.8} parent=0 // loop_footer
    %s15 = sadd.s32 1, %s11
  $region7: #{discriminator_forward.8} parent=0 // loop_footer_branch
    %10 = sbr.rel target = $region3
  $region8: #{discriminator_forward.8} parent=0 // loop_exit
    _

// kernel: discriminator_forward.9
$region0: #{discriminator_forward.9}
  #allocation0 [shape = 'u32[]', space=smem, size = 0x4, offset = 0x4, fixed_abs, tag = 'smem constant byte address 0x4 - core index']
  #allocation1 [shape = 'u32[144,128]{1,0:T(1,128)}', space=vmem, size = 0x12000, scoped, tag = 'internal scratch']
  %s0 = inlined_call_operand.vmem [shape: bf16[8,1024], index: 0, kind: input, shape index: {}]
  %s1 = inlined_call_operand.vmem [shape: bf16[1024,2], index: 1, kind: input, shape index: {}]
  %s2 = inlined_call_operand.vmem [shape: f32[8,2], index: 2, kind: output, shape index: {}]
  %s3 = sld [smem:[#allocation0]]
  $region18: #{discriminator_forward.9} parent=0
    _
  %s5 = ssub.s32 1, %s3
  %s6 = scalar_select 0, %s5, %s3
  // Predicated region
  $region2: #{discriminator_forward.9} parent=0 // pred_check
    _
  $region3: #{discriminator_forward.9} parent=0 // pred_check_branch
    %8 = sbr.rel (0) target = $region5
  $region4: #{discriminator_forward.9} parent=0 // pred_region
    _
  $region5: #{discriminator_forward.9} parent=0 // pred_fallthru
    _
  // Predicated region
  $region6: #{discriminator_forward.9} parent=0 // pred_check
    _
  $region7: #{discriminator_forward.9} parent=0 // pred_check_branch
    %10 = sbr.rel (0) target = $region9
  $region8: #{discriminator_forward.9} parent=0 // pred_region
    _
  $region9: #{discriminator_forward.9} parent=0 // pred_fallthru
    _
  %v12 = vld [vmem:[%s0] sm:$0xff]
  %v13 = vld [vmem:[%s0 + $0x8] sm:$0xff]
  %v14 = vld [vmem:[%s0 + $0x10] sm:$0xff]
  %v15 = vld [vmem:[%s0 + $0x18] sm:$0xff]
  %v16 = vld [vmem:[%s1] sm:$0xf]
  %v17 = vld [vmem:[%s1 + $0x4] sm:$0xf]
  %v18 = vld [vmem:[%s1 + $0x8] sm:$0xf]
  %v19 = vld [vmem:[%s1 + $0xc] sm:$0xf]
  %v20 = vld [vmem:[%s1 + $0x10] sm:$0xf]
  %v21 = vld [vmem:[%s1 + $0x14] sm:$0xf]
  %v22 = vld [vmem:[%s1 + $0x18] sm:$0xf]
  %v23 = vld [vmem:[%s1 + $0x1c] sm:$0xf]
  %v24 = vld [vmem:[%s1 + $0x20] sm:$0xf]
  %v25 = vld [vmem:[%s1 + $0x24] sm:$0xf]
  %v26 = vld [vmem:[%s1 + $0x28] sm:$0xf]
  %v27 = vld [vmem:[%s1 + $0x2c] sm:$0xf]
  %v28 = vld [vmem:[%s1 + $0x30] sm:$0xf]
  %v29 = vld [vmem:[%s1 + $0x34] sm:$0xf]
  %v30 = vld [vmem:[%s1 + $0x38] sm:$0xf]
  %v31 = vld [vmem:[%s1 + $0x3c] sm:$0xf]
  %v32 = vld [vmem:[%s1 + $0x40] sm:$0xf]
  %v33 = vld [vmem:[%s1 + $0x44] sm:$0xf]
  %v34 = vld [vmem:[%s1 + $0x48] sm:$0xf]
  %v35 = vld [vmem:[%s1 + $0x4c] sm:$0xf]
  %v36 = vld [vmem:[%s1 + $0x50] sm:$0xf]
  %v37 = vld [vmem:[%s1 + $0x54] sm:$0xf]
  %v38 = vld [vmem:[%s1 + $0x58] sm:$0xf]
  %v39 = vld [vmem:[%s1 + $0x5c] sm:$0xf]
  %v40 = vld [vmem:[%s1 + $0x60] sm:$0xf]
  %v41 = vld [vmem:[%s1 + $0x64] sm:$0xf]
  %v42 = vld [vmem:[%s1 + $0x68] sm:$0xf]
  %v43 = vld [vmem:[%s1 + $0x6c] sm:$0xf]
  %v44 = vld [vmem:[%s1 + $0x70] sm:$0xf]
  %v45 = vld [vmem:[%s1 + $0x74] sm:$0xf]
  %v46 = vld [vmem:[%s1 + $0x78] sm:$0xf]
  %v47 = vld [vmem:[%s1 + $0x7c] sm:$0xf]
  %v48 = vld [vmem:[%s1 + $0x80] sm:$0xf]
  %v49 = vld [vmem:[%s1 + $0x84] sm:$0xf]
  %v50 = vld [vmem:[%s1 + $0x88] sm:$0xf]
  %v51 = vld [vmem:[%s1 + $0x8c] sm:$0xf]
  %v52 = vld [vmem:[%s1 + $0x90] sm:$0xf]
  %v53 = vld [vmem:[%s1 + $0x94] sm:$0xf]
  %v54 = vld [vmem:[%s1 + $0x98] sm:$0xf]
  %v55 = vld [vmem:[%s1 + $0x9c] sm:$0xf]
  %v56 = vld [vmem:[%s1 + $0xa0] sm:$0xf]
  %v57 = vld [vmem:[%s1 + $0xa4] sm:$0xf]
  %v58 = vld [vmem:[%s1 + $0xa8] sm:$0xf]
  %v59 = vld [vmem:[%s1 + $0xac] sm:$0xf]
  %v60 = vld [vmem:[%s1 + $0xb0] sm:$0xf]
  %v61 = vld [vmem:[%s1 + $0xb4] sm:$0xf]
  %v62 = vld [vmem:[%s1 + $0xb8] sm:$0xf]
  %v63 = vld [vmem:[%s1 + $0xbc] sm:$0xf]
  %v64 = vld [vmem:[%s1 + $0xc0] sm:$0xf]
  %v65 = vld [vmem:[%s1 + $0xc4] sm:$0xf]
  %v66 = vld [vmem:[%s1 + $0xc8] sm:$0xf]
  %v67 = vld [vmem:[%s1 + $0xcc] sm:$0xf]
  %v68 = vld [vmem:[%s1 + $0xd0] sm:$0xf]
  %v69 = vld [vmem:[%s1 + $0xd4] sm:$0xf]
  %v70 = vld [vmem:[%s1 + $0xd8] sm:$0xf]
  %v71 = vld [vmem:[%s1 + $0xdc] sm:$0xf]
  %v72 = vld [vmem:[%s1 + $0xe0] sm:$0xf]
  %v73 = vld [vmem:[%s1 + $0xe4] sm:$0xf]
  %v74 = vld [vmem:[%s1 + $0xe8] sm:$0xf]
  %v75 = vld [vmem:[%s1 + $0xec] sm:$0xf]
  %v76 = vld [vmem:[%s1 + $0xf0] sm:$0xf]
  %v77 = vld [vmem:[%s1 + $0xf4] sm:$0xf]
  %v78 = vld [vmem:[%s1 + $0xf8] sm:$0xf]
  %v79 = vld [vmem:[%s1 + $0xfc] sm:$0xf]
  %v80 = vld [vmem:[%s1 + $0x100] sm:$0xf]
  %v81 = vld [vmem:[%s1 + $0x104] sm:$0xf]
  %v82 = vld [vmem:[%s1 + $0x108] sm:$0xf]
  %v83 = vld [vmem:[%s1 + $0x10c] sm:$0xf]
  %v84 = vld [vmem:[%s1 + $0x110] sm:$0xf]
  %v85 = vld [vmem:[%s1 + $0x114] sm:$0xf]
  %v86 = vld [vmem:[%s1 + $0x118] sm:$0xf]
  %v87 = vld [vmem:[%s1 + $0x11c] sm:$0xf]
  %v88 = vld [vmem:[%s1 + $0x120] sm:$0xf]
  %v89 = vld [vmem:[%s1 + $0x124] sm:$0xf]
  %v90 = vld [vmem:[%s1 + $0x128] sm:$0xf]
  %v91 = vld [vmem:[%s1 + $0x12c] sm:$0xf]
  %v92 = vld [vmem:[%s1 + $0x130] sm:$0xf]
  %v93 = vld [vmem:[%s1 + $0x134] sm:$0xf]
  %v94 = vld [vmem:[%s1 + $0x138] sm:$0xf]
  %v95 = vld [vmem:[%s1 + $0x13c] sm:$0xf]
  %v96 = vld [vmem:[%s1 + $0x140] sm:$0xf]
  %v97 = vld [vmem:[%s1 + $0x144] sm:$0xf]
  %v98 = vld [vmem:[%s1 + $0x148] sm:$0xf]
  %v99 = vld [vmem:[%s1 + $0x14c] sm:$0xf]
  %v100 = vld [vmem:[%s1 + $0x150] sm:$0xf]
  %v101 = vld [vmem:[%s1 + $0x154] sm:$0xf]
  %v102 = vld [vmem:[%s1 + $0x158] sm:$0xf]
  %v103 = vld [vmem:[%s1 + $0x15c] sm:$0xf]
  %v104 = vld [vmem:[%s1 + $0x160] sm:$0xf]
  %v105 = vld [vmem:[%s1 + $0x164] sm:$0xf]
  %v106 = vld [vmem:[%s1 + $0x168] sm:$0xf]
  %v107 = vld [vmem:[%s1 + $0x16c] sm:$0xf]
  %v108 = vld [vmem:[%s1 + $0x170] sm:$0xf]
  %v109 = vld [vmem:[%s1 + $0x174] sm:$0xf]
  %v110 = vld [vmem:[%s1 + $0x178] sm:$0xf]
  %v111 = vld [vmem:[%s1 + $0x17c] sm:$0xf]
  %v112 = vld [vmem:[%s1 + $0x180] sm:$0xf]
  %v113 = vld [vmem:[%s1 + $0x184] sm:$0xf]
  %v114 = vld [vmem:[%s1 + $0x188] sm:$0xf]
  %v115 = vld [vmem:[%s1 + $0x18c] sm:$0xf]
  %v116 = vld [vmem:[%s1 + $0x190] sm:$0xf]
  %v117 = vld [vmem:[%s1 + $0x194] sm:$0xf]
  %v118 = vld [vmem:[%s1 + $0x198] sm:$0xf]
  %v119 = vld [vmem:[%s1 + $0x19c] sm:$0xf]
  %v120 = vld [vmem:[%s1 + $0x1a0] sm:$0xf]
  %v121 = vld [vmem:[%s1 + $0x1a4] sm:$0xf]
  %v122 = vld [vmem:[%s1 + $0x1a8] sm:$0xf]
  %v123 = vld [vmem:[%s1 + $0x1ac] sm:$0xf]
  %v124 = vld [vmem:[%s1 + $0x1b0] sm:$0xf]
  %v125 = vld [vmem:[%s1 + $0x1b4] sm:$0xf]
  %v126 = vld [vmem:[%s1 + $0x1b8] sm:$0xf]
  %v127 = vld [vmem:[%s1 + $0x1bc] sm:$0xf]
  %v128 = vld [vmem:[%s1 + $0x1c0] sm:$0xf]
  %v129 = vld [vmem:[%s1 + $0x1c4] sm:$0xf]
  %v130 = vld [vmem:[%s1 + $0x1c8] sm:$0xf]
  %v131 = vld [vmem:[%s1 + $0x1cc] sm:$0xf]
  %v132 = vld [vmem:[%s1 + $0x1d0] sm:$0xf]
  %v133 = vld [vmem:[%s1 + $0x1d4] sm:$0xf]
  %v134 = vld [vmem:[%s1 + $0x1d8] sm:$0xf]
  %v135 = vld [vmem:[%s1 + $0x1dc] sm:$0xf]
  %v136 = vld [vmem:[%s1 + $0x1e0] sm:$0xf]
  %v137 = vld [vmem:[%s1 + $0x1e4] sm:$0xf]
  %v138 = vld [vmem:[%s1 + $0x1e8] sm:$0xf]
  %v139 = vld [vmem:[%s1 + $0x1ec] sm:$0xf]
  %v140 = vld [vmem:[%s1 + $0x1f0] sm:$0xf]
  %v141 = vld [vmem:[%s1 + $0x1f4] sm:$0xf]
  %v142 = vld [vmem:[%s1 + $0x1f8] sm:$0xf]
  %v143 = vld [vmem:[%s1 + $0x1fc] sm:$0xf]
  %v148 = vunpack.c.l.b16 %v12
  %v149 = vunpack.c.h.b16 %v12
  %v150 = vunpack.c.l.b16 %v13
  %v151 = vunpack.c.h.b16 %v13
  %v152 = vunpack.c.l.b16 %v14
  %v153 = vunpack.c.h.b16 %v14
  %v154 = vunpack.c.l.b16 %v15
  %v155 = vunpack.c.h.b16 %v15
  %v156 = vpack.c.b16 %v148, %v148
  %v157 = vpack.c.b16 %v149, %v149
  %v158 = vpack.c.b16 %v150, %v150
  %v159 = vpack.c.b16 %v151, %v151
  %v160 = vpack.c.b16 %v152, %v152
  %v161 = vpack.c.b16 %v153, %v153
  %v162 = vpack.c.b16 %v154, %v154
  %v163 = vpack.c.b16 %v155, %v155
  %v300 = vunpack.c.l.b16 %v16
  %v301 = vunpack.c.l.b16 %v17
  %v302 = vunpack.c.l.b16 %v18
  %v303 = vunpack.c.l.b16 %v19
  %v304 = vunpack.c.l.b16 %v20
  %v305 = vunpack.c.l.b16 %v21
  %v306 = vunpack.c.l.b16 %v22
  %v307 = vunpack.c.l.b16 %v23
  %v308 = vunpack.c.l.b16 %v24
  %v309 = vunpack.c.l.b16 %v25
  %v310 = vunpack.c.l.b16 %v26
  %v311 = vunpack.c.l.b16 %v27
  %v312 = vunpack.c.l.b16 %v28
  %v313 = vunpack.c.l.b16 %v29
  %v314 = vunpack.c.l.b16 %v30
  %v315 = vunpack.c.l.b16 %v31
  %v316 = vunpack.c.l.b16 %v32
  %v317 = vunpack.c.l.b16 %v33
  %v318 = vunpack.c.l.b16 %v34
  %v319 = vunpack.c.l.b16 %v35
  %v320 = vunpack.c.l.b16 %v36
  %v321 = vunpack.c.l.b16 %v37
  %v322 = vunpack.c.l.b16 %v38
  %v323 = vunpack.c.l.b16 %v39
  %v324 = vunpack.c.l.b16 %v40
  %v325 = vunpack.c.l.b16 %v41
  %v326 = vunpack.c.l.b16 %v42
  %v327 = vunpack.c.l.b16 %v43
  %v328 = vunpack.c.l.b16 %v44
  %v329 = vunpack.c.l.b16 %v45
  %v330 = vunpack.c.l.b16 %v46
  %v331 = vunpack.c.l.b16 %v47
  %v332 = vunpack.c.l.b16 %v48
  %v333 = vunpack.c.l.b16 %v49
  %v334 = vunpack.c.l.b16 %v50
  %v335 = vunpack.c.l.b16 %v51
  %v336 = vunpack.c.l.b16 %v52
  %v337 = vunpack.c.l.b16 %v53
  %v338 = vunpack.c.l.b16 %v54
  %v339 = vunpack.c.l.b16 %v55
  %v340 = vunpack.c.l.b16 %v56
  %v341 = vunpack.c.l.b16 %v57
  %v342 = vunpack.c.l.b16 %v58
  %v343 = vunpack.c.l.b16 %v59
  %v344 = vunpack.c.l.b16 %v60
  %v345 = vunpack.c.l.b16 %v61
  %v346 = vunpack.c.l.b16 %v62
  %v347 = vunpack.c.l.b16 %v63
  %v348 = vunpack.c.l.b16 %v64
  %v349 = vunpack.c.l.b16 %v65
  %v350 = vunpack.c.l.b16 %v66
  %v351 = vunpack.c.l.b16 %v67
  %v352 = vunpack.c.l.b16 %v68
  %v353 = vunpack.c.l.b16 %v69
  %v354 = vunpack.c.l.b16 %v70
  %v355 = vunpack.c.l.b16 %v71
  %v356 = vunpack.c.l.b16 %v72
  %v357 = vunpack.c.l.b16 %v73
  %v358 = vunpack.c.l.b16 %v74
  %v359 = vunpack.c.l.b16 %v75
  %v360 = vunpack.c.l.b16 %v76
  %v361 = vunpack.c.l.b16 %v77
  %v362 = vunpack.c.l.b16 %v78
  %v363 = vunpack.c.l.b16 %v79
  %v364 = vunpack.c.l.b16 %v80
  %v365 = vunpack.c.l.b16 %v81
  %v366 = vunpack.c.l.b16 %v82
  %v367 = vunpack.c.l.b16 %v83
  %v368 = vunpack.c.l.b16 %v84
  %v369 = vunpack.c.l.b16 %v85
  %v370 = vunpack.c.l.b16 %v86
  %v371 = vunpack.c.l.b16 %v87
  %v372 = vunpack.c.l.b16 %v88
  %v373 = vunpack.c.l.b16 %v89
  %v374 = vunpack.c.l.b16 %v90
  %v375 = vunpack.c.l.b16 %v91
  %v376 = vunpack.c.l.b16 %v92
  %v377 = vunpack.c.l.b16 %v93
  %v378 = vunpack.c.l.b16 %v94
  %v379 = vunpack.c.l.b16 %v95
  %v380 = vunpack.c.l.b16 %v96
  %v381 = vunpack.c.l.b16 %v97
  %v382 = vunpack.c.l.b16 %v98
  %v383 = vunpack.c.l.b16 %v99
  %v384 = vunpack.c.l.b16 %v100
  %v385 = vunpack.c.l.b16 %v101
  %v386 = vunpack.c.l.b16 %v102
  %v387 = vunpack.c.l.b16 %v103
  %v388 = vunpack.c.l.b16 %v104
  %v389 = vunpack.c.l.b16 %v105
  %v390 = vunpack.c.l.b16 %v106
  %v391 = vunpack.c.l.b16 %v107
  %v392 = vunpack.c.l.b16 %v108
  %v393 = vunpack.c.l.b16 %v109
  %v394 = vunpack.c.l.b16 %v110
  %v395 = vunpack.c.l.b16 %v111
  %v396 = vunpack.c.l.b16 %v112
  %v397 = vunpack.c.l.b16 %v113
  %v398 = vunpack.c.l.b16 %v114
  %v399 = vunpack.c.l.b16 %v115
  %v400 = vunpack.c.l.b16 %v116
  %v401 = vunpack.c.l.b16 %v117
  %v402 = vunpack.c.l.b16 %v118
  %v403 = vunpack.c.l.b16 %v119
  %v404 = vunpack.c.l.b16 %v120
  %v405 = vunpack.c.l.b16 %v121
  %v406 = vunpack.c.l.b16 %v122
  %v407 = vunpack.c.l.b16 %v123
  %v408 = vunpack.c.l.b16 %v124
  %v409 = vunpack.c.l.b16 %v125
  %v410 = vunpack.c.l.b16 %v126
  %v411 = vunpack.c.l.b16 %v127
  %v412 = vunpack.c.l.b16 %v128
  %v413 = vunpack.c.l.b16 %v129
  %v414 = vunpack.c.l.b16 %v130
  %v415 = vunpack.c.l.b16 %v131
  %v416 = vunpack.c.l.b16 %v132
  %v417 = vunpack.c.l.b16 %v133
  %v418 = vunpack.c.l.b16 %v134
  %v419 = vunpack.c.l.b16 %v135
  %v420 = vunpack.c.l.b16 %v136
  %v421 = vunpack.c.l.b16 %v137
  %v422 = vunpack.c.l.b16 %v138
  %v423 = vunpack.c.l.b16 %v139
  %v424 = vunpack.c.l.b16 %v140
  %v425 = vunpack.c.l.b16 %v141
  %v426 = vunpack.c.l.b16 %v142
  %v427 = vunpack.c.l.b16 %v143
  %v428 = vpack.c.b16 %v301, %v300
  %v429 = vpack.c.b16 %v303, %v302
  %v430 = vpack.c.b16 %v305, %v304
  %v431 = vpack.c.b16 %v307, %v306
  %v432 = vpack.c.b16 %v309, %v308
  %v433 = vpack.c.b16 %v311, %v310
  %v434 = vpack.c.b16 %v313, %v312
  %v435 = vpack.c.b16 %v315, %v314
  %v436 = vpack.c.b16 %v317, %v316
  %v437 = vpack.c.b16 %v319, %v318
  %v438 = vpack.c.b16 %v321, %v320
  %v439 = vpack.c.b16 %v323, %v322
  %v440 = vpack.c.b16 %v325, %v324
  %v441 = vpack.c.b16 %v327, %v326
  %v442 = vpack.c.b16 %v329, %v328
  %v443 = vpack.c.b16 %v331, %v330
  %v444 = vpack.c.b16 %v333, %v332
  %v445 = vpack.c.b16 %v335, %v334
  %v446 = vpack.c.b16 %v337, %v336
  %v447 = vpack.c.b16 %v339, %v338
  %v448 = vpack.c.b16 %v341, %v340
  %v449 = vpack.c.b16 %v343, %v342
  %v450 = vpack.c.b16 %v345, %v344
  %v451 = vpack.c.b16 %v347, %v346
  %v452 = vpack.c.b16 %v349, %v348
  %v453 = vpack.c.b16 %v351, %v350
  %v454 = vpack.c.b16 %v353, %v352
  %v455 = vpack.c.b16 %v355, %v354
  %v456 = vpack.c.b16 %v357, %v356
  %v457 = vpack.c.b16 %v359, %v358
  %v458 = vpack.c.b16 %v361, %v360
  %v459 = vpack.c.b16 %v363, %v362
  %v460 = vpack.c.b16 %v365, %v364
  %v461 = vpack.c.b16 %v367, %v366
  %v462 = vpack.c.b16 %v369, %v368
  %v463 = vpack.c.b16 %v371, %v370
  %v464 = vpack.c.b16 %v373, %v372
  %v465 = vpack.c.b16 %v375, %v374
  %v466 = vpack.c.b16 %v377, %v376
  %v467 = vpack.c.b16 %v379, %v378
  %v468 = vpack.c.b16 %v381, %v380
  %v469 = vpack.c.b16 %v383, %v382
  %v470 = vpack.c.b16 %v385, %v384
  %v471 = vpack.c.b16 %v387, %v386
  %v472 = vpack.c.b16 %v389, %v388
  %v473 = vpack.c.b16 %v391, %v390
  %v474 = vpack.c.b16 %v393, %v392
  %v475 = vpack.c.b16 %v395, %v394
  %v476 = vpack.c.b16 %v397, %v396
  %v477 = vpack.c.b16 %v399, %v398
  %v478 = vpack.c.b16 %v401, %v400
  %v479 = vpack.c.b16 %v403, %v402
  %v480 = vpack.c.b16 %v405, %v404
  %v481 = vpack.c.b16 %v407, %v406
  %v482 = vpack.c.b16 %v409, %v408
  %v483 = vpack.c.b16 %v411, %v410
  %v484 = vpack.c.b16 %v413, %v412
  %v485 = vpack.c.b16 %v415, %v414
  %v486 = vpack.c.b16 %v417, %v416
  %v487 = vpack.c.b16 %v419, %v418
  %v488 = vpack.c.b16 %v421, %v420
  %v489 = vpack.c.b16 %v423, %v422
  %v490 = vpack.c.b16 %v425, %v424
  %v491 = vpack.c.b16 %v427, %v426
  %556 = vmatprep.subr.bf16.mxu0 0
  %557 = vmatpush1.bf16.msra.mxu0 %v435
  %558 = vmatprep.subr.bf16.mxu0 0
  %559 = vmatpush1.bf16.msra.mxu0 %v434
  %560 = vmatprep.subr.bf16.mxu0 0
  %561 = vmatpush1.bf16.msra.mxu0 %v433
  %562 = vmatprep.subr.bf16.mxu0 0
  %563 = vmatpush1.bf16.msra.mxu0 %v432
  %564 = vmatprep.subr.bf16.mxu0 0
  %565 = vmatpush1.bf16.msra.mxu0 %v431
  %566 = vmatprep.subr.bf16.mxu0 0
  %567 = vmatpush1.bf16.msra.mxu0 %v430
  %568 = vmatprep.subr.bf16.mxu0 0
  %569 = vmatpush1.bf16.msra.mxu0 %v429
  %570 = vmatprep.subr.bf16.mxu0 0
  %571 = vmatpush1.bf16.msra.mxu0 %v428
  %572 = vmatprep.subr.bf16.mxu0 0
  %573 = vmatpush2.bf16.msra.mxu0 %v443
  %574 = vmatprep.subr.bf16.mxu0 0
  %575 = vmatpush2.bf16.msra.mxu0 %v442
  %576 = vmatprep.subr.bf16.mxu0 0
  %577 = vmatpush2.bf16.msra.mxu0 %v441
  %578 = vmatprep.subr.bf16.mxu0 0
  %579 = vmatpush2.bf16.msra.mxu0 %v440
  %580 = vmatprep.subr.bf16.mxu0 0
  %581 = vmatpush2.bf16.msra.mxu0 %v439
  %582 = vmatprep.subr.bf16.mxu0 0
  %583 = vmatpush2.bf16.msra.mxu0 %v438
  %584 = vmatprep.subr.bf16.mxu0 0
  %585 = vmatpush2.bf16.msra.mxu0 %v437
  %586 = vmatprep.subr.bf16.mxu0 0
  %587 = vmatpush2.bf16.msra.mxu0 %v436
  %588 = vmatprep.mubr.bf16.mxu0 %v157
  %589 = vmatmul.mubr.bf16.gmra.mxu0 %v156
  %v590 = vpop.f32.mrf.mxu0
  %v591 = vadd.f32 0.0, %v590
  %v592 = vpop.f32.mrf.mxu0
  %v593 = vpop.f32.mrf.mxu0
  %v594 = vpop.f32.mrf.mxu0
  %595 = vdwg.mxu0
  %596 = vmatprep.subr.bf16.mxu0 0
  %597 = vmatpush1.bf16.msra.mxu0 %v451
  %598 = vmatprep.subr.bf16.mxu0 0
  %599 = vmatpush1.bf16.msra.mxu0 %v450
  %600 = vmatprep.subr.bf16.mxu0 0
  %601 = vmatpush1.bf16.msra.mxu0 %v449
  %602 = vmatprep.subr.bf16.mxu0 0
  %603 = vmatpush1.bf16.msra.mxu0 %v448
  %604 = vmatprep.subr.bf16.mxu0 0
  %605 = vmatpush1.bf16.msra.mxu0 %v447
  %606 = vmatprep.subr.bf16.mxu0 0
  %607 = vmatpush1.bf16.msra.mxu0 %v446
  %608 = vmatprep.subr.bf16.mxu0 0
  %609 = vmatpush1.bf16.msra.mxu0 %v445
  %610 = vmatprep.subr.bf16.mxu0 0
  %611 = vmatpush1.bf16.msra.mxu0 %v444
  %612 = vmatprep.subr.bf16.mxu0 0
  %613 = vmatpush2.bf16.msra.mxu0 %v459
  %614 = vmatprep.subr.bf16.mxu0 0
  %615 = vmatpush2.bf16.msra.mxu0 %v458
  %616 = vmatprep.subr.bf16.mxu0 0
  %617 = vmatpush2.bf16.msra.mxu0 %v457
  %618 = vmatprep.subr.bf16.mxu0 0
  %619 = vmatpush2.bf16.msra.mxu0 %v456
  %620 = vmatprep.subr.bf16.mxu0 0
  %621 = vmatpush2.bf16.msra.mxu0 %v455
  %622 = vmatprep.subr.bf16.mxu0 0
  %623 = vmatpush2.bf16.msra.mxu0 %v454
  %624 = vmatprep.subr.bf16.mxu0 0
  %625 = vmatpush2.bf16.msra.mxu0 %v453
  %626 = vmatprep.subr.bf16.mxu0 0
  %627 = vmatpush2.bf16.msra.mxu0 %v452
  %628 = vmatprep.mubr.bf16.mxu0 %v159
  %629 = vmatmul.mubr.bf16.gmra.mxu0 %v158
  %v630 = vpop.f32.mrf.mxu0
  %v631 = vadd.f32 %v591, %v630
  %v632 = vpop.f32.mrf.mxu0
  %v633 = vpop.f32.mrf.mxu0
  %v634 = vpop.f32.mrf.mxu0
  %635 = vdwg.mxu0
  %636 = vmatprep.subr.bf16.mxu0 0
  %637 = vmatpush1.bf16.msra.mxu0 %v467
  %638 = vmatprep.subr.bf16.mxu0 0
  %639 = vmatpush1.bf16.msra.mxu0 %v466
  %640 = vmatprep.subr.bf16.mxu0 0
  %641 = vmatpush1.bf16.msra.mxu0 %v465
  %642 = vmatprep.subr.bf16.mxu0 0
  %643 = vmatpush1.bf16.msra.mxu0 %v464
  %644 = vmatprep.subr.bf16.mxu0 0
  %645 = vmatpush1.bf16.msra.mxu0 %v463
  %646 = vmatprep.subr.bf16.mxu0 0
  %647 = vmatpush1.bf16.msra.mxu0 %v462
  %648 = vmatprep.subr.bf16.mxu0 0
  %649 = vmatpush1.bf16.msra.mxu0 %v461
  %650 = vmatprep.subr.bf16.mxu0 0
  %651 = vmatpush1.bf16.msra.mxu0 %v460
  %652 = vmatprep.subr.bf16.mxu0 0
  %653 = vmatpush2.bf16.msra.mxu0 %v475
  %654 = vmatprep.subr.bf16.mxu0 0
  %655 = vmatpush2.bf16.msra.mxu0 %v474
  %656 = vmatprep.subr.bf16.mxu0 0
  %657 = vmatpush2.bf16.msra.mxu0 %v473
  %658 = vmatprep.subr.bf16.mxu0 0
  %659 = vmatpush2.bf16.msra.mxu0 %v472
  %660 = vmatprep.subr.bf16.mxu0 0
  %661 = vmatpush2.bf16.msra.mxu0 %v471
  %662 = vmatprep.subr.bf16.mxu0 0
  %663 = vmatpush2.bf16.msra.mxu0 %v470
  %664 = vmatprep.subr.bf16.mxu0 0
  %665 = vmatpush2.bf16.msra.mxu0 %v469
  %666 = vmatprep.subr.bf16.mxu0 0
  %667 = vmatpush2.bf16.msra.mxu0 %v468
  %668 = vmatprep.mubr.bf16.mxu0 %v161
  %669 = vmatmul.mubr.bf16.gmra.mxu0 %v160
  %v670 = vpop.f32.mrf.mxu0
  %v671 = vadd.f32 %v631, %v670
  %v672 = vpop.f32.mrf.mxu0
  %v673 = vpop.f32.mrf.mxu0
  %v674 = vpop.f32.mrf.mxu0
  %675 = vdwg.mxu0
  %676 = vmatprep.subr.bf16.mxu0 0
  %677 = vmatpush1.bf16.msra.mxu0 %v483
  %678 = vmatprep.subr.bf16.mxu0 0
  %679 = vmatpush1.bf16.msra.mxu0 %v482
  %680 = vmatprep.subr.bf16.mxu0 0
  %681 = vmatpush1.bf16.msra.mxu0 %v481
  %682 = vmatprep.subr.bf16.mxu0 0
  %683 = vmatpush1.bf16.msra.mxu0 %v480
  %684 = vmatprep.subr.bf16.mxu0 0
  %685 = vmatpush1.bf16.msra.mxu0 %v479
  %686 = vmatprep.subr.bf16.mxu0 0
  %687 = vmatpush1.bf16.msra.mxu0 %v478
  %688 = vmatprep.subr.bf16.mxu0 0
  %689 = vmatpush1.bf16.msra.mxu0 %v477
  %690 = vmatprep.subr.bf16.mxu0 0
  %691 = vmatpush1.bf16.msra.mxu0 %v476
  %692 = vmatprep.subr.bf16.mxu0 0
  %693 = vmatpush2.bf16.msra.mxu0 %v491
  %694 = vmatprep.subr.bf16.mxu0 0
  %695 = vmatpush2.bf16.msra.mxu0 %v490
  %696 = vmatprep.subr.bf16.mxu0 0
  %697 = vmatpush2.bf16.msra.mxu0 %v489
  %698 = vmatprep.subr.bf16.mxu0 0
  %699 = vmatpush2.bf16.msra.mxu0 %v488
  %700 = vmatprep.subr.bf16.mxu0 0
  %701 = vmatpush2.bf16.msra.mxu0 %v487
  %702 = vmatprep.subr.bf16.mxu0 0
  %703 = vmatpush2.bf16.msra.mxu0 %v486
  %704 = vmatprep.subr.bf16.mxu0 0
  %705 = vmatpush2.bf16.msra.mxu0 %v485
  %706 = vmatprep.subr.bf16.mxu0 0
  %707 = vmatpush2.bf16.msra.mxu0 %v484
  %708 = vmatprep.mubr.bf16.mxu0 %v163
  %709 = vmatmul.mubr.bf16.gmra.mxu0 %v162
  %v710 = vpop.f32.mrf.mxu0
  %v711 = vadd.f32 %v671, %v710
  %v712 = vpop.f32.mrf.mxu0
  %v713 = vpop.f32.mrf.mxu0
  %v714 = vpop.f32.mrf.mxu0
  %715 = vdwg.mxu0
  %v716 = vsub.f32 0.0, %v711
  %v717 = vmul.f32 %v716, 1.442695
  %v718 = vpow.pop %v717
  %v719 = vadd.f32 %v718, 1.0
  %v720 = vrcp.pop %v719
  %v721 = vmul.f32 1.0, %v720
  %vm722 = vcmask 15360
  %723 = vst.msk [vmem:[%s2] sm:$0xff] %vm722, %v721
  // Predicated region
  $region10: #{discriminator_forward.9} parent=0 // pred_check
    _
  $region11: #{discriminator_forward.9} parent=0 // pred_check_branch
    %725 = sbr.rel (0) target = $region13
  $region12: #{discriminator_forward.9} parent=0 // pred_region
    _
  $region13: #{discriminator_forward.9} parent=0 // pred_fallthru
    _
  // Predicated region
  $region14: #{discriminator_forward.9} parent=0 // pred_check
    _
  $region15: #{discriminator_forward.9} parent=0 // pred_check_branch
    %727 = sbr.rel (0) target = $region17
  $region16: #{discriminator_forward.9} parent=0 // pred_region
    _
  $region17: #{discriminator_forward.9} parent=0 // pred_fallthru
    _

</llo_original>
